<compile_context>
chip_gen: v7x
topology: tpu7x:2x2x1
jax: 0.10.0
libtpu: 0.0.40
codegen_flags: <defaults>
</compile_context>

<pallas_src>
from functools import partial

import jax
import jax.numpy as jnp
from jax import lax
from jax.experimental import pallas as pl
from jax.experimental.pallas import tpu as pltpu


TIME_CHUNK = 32  # timesteps per grid step (amortizes ~0.35us/step dispatch)


# ----------------------------------------------------------------------------
# Pallas kernel: one grid step == TIME_CHUNK LSTM timesteps.
# ----------------------------------------------------------------------------
def lstm_chunk_kernel(x_ref, m_ref, whh_ref, out_ref, h_out_ref, c_out_ref,
                      h_scr, c_scr):
    """Chunked packed-LSTM recurrence with fused gates.

    x_ref   : (Tc, B, 4H)  gathered pre-projected inputs (E@W_ih^T + b)[tok]
    m_ref   : (Tc, B, 1)   1.0 where t < length else 0.0
    whh_ref : (H, 4H)      fused recurrent weights, gate order (i, f, g, o)
    out_ref : (Tc, B, H)   per-timestep hidden output (zero past length)
    h_out_ref/c_out_ref : (B, H) final state (resident; written every chunk)
    h_scr/c_scr         : (B, H) VMEM-resident state carried across chunks
    """
    chunk = pl.program_id(0)
    tc, b, four_h = x_ref.shape
    h_dim = four_h // 4

    @pl.when(chunk == 0)
    def _init():
        h_scr[...] = jnp.zeros_like(h_scr)
        c_scr[...] = jnp.zeros_like(c_scr)

    # Loop-invariant fused recurrent weights: one (H, 4H) tile, loaded once.
    w_hh = whh_ref[...]

    # Static lane mask selecting the g (cell candidate) gate lanes [2H, 3H).
    lane = lax.broadcasted_iota(jnp.int32, (b, four_h), 1)
    g_lane = (lane >= 2 * h_dim) & (lane < 3 * h_dim)

    def step(s, carry):
        h_prev, c_prev = carry
        # One lane-dense (B, 4H) pre-activation: single MXU push per step.
        z = x_ref[s] + jnp.dot(h_prev, w_hh,
                               preferred_element_type=jnp.float32)
        # Two full-vreg EUP passes (sigmoid + tanh) selected per lane.
        act = jnp.where(g_lane, jnp.tanh(z), jax.nn.sigmoid(z))
        i_g = act[:, 0 * h_dim:1 * h_dim]
        f_g = act[:, 1 * h_dim:2 * h_dim]
        g_g = act[:, 2 * h_dim:3 * h_dim]
        o_g = act[:, 3 * h_dim:4 * h_dim]

        c_new = f_g * c_prev + i_g * g_g
        h_new = o_g * jnp.tanh(c_new)

        # Packed-sequence semantics: freeze state / zero output past length.
        valid = m_ref[s] > 0.5                       # (B, 1) bool
        h_nxt = jnp.where(valid, h_new, h_prev)
        c_nxt = jnp.where(valid, c_new, c_prev)
        out_ref[s] = jnp.where(valid, h_new, 0.0)
        return h_nxt, c_nxt

    h_fin, c_fin = lax.fori_loop(0, tc, step, (h_scr[...], c_scr[...]),
                                 unroll=True)

    # Persist recurrent state for the next chunk (once per chunk).
    h_scr[...] = h_fin
    c_scr[...] = c_fin

    # Resident final-state outputs: unconditional per-chunk write (free,
    # robust against output-revisit semantics).
    h_out_ref[...] = h_fin
    c_out_ref[...] = c_fin


def run_lstm_pallas(x_proj, mask, w_hh, time_chunk):
    """x_proj: (T_pad, B, 4H), mask: (T_pad, B, 1), w_hh: (H, 4H)."""
    t_pad, b, four_h = x_proj.shape
    h = four_h // 4
    n_chunks = t_pad // time_chunk

    grid_spec = pltpu.PrefetchScalarGridSpec(
        num_scalar_prefetch=0,
        grid=(n_chunks,),
        in_specs=[
            pl.BlockSpec((time_chunk, b, four_h), lambda c: (c, 0, 0)),  # x
            pl.BlockSpec((time_chunk, b, 1), lambda c: (c, 0, 0)),       # mask
            pl.BlockSpec((h, four_h), lambda c: (0, 0)),                 # W_hh
        ],
        out_specs=[
            pl.BlockSpec((time_chunk, b, h), lambda c: (c, 0, 0)),       # out
            pl.BlockSpec((b, h), lambda c: (0, 0)),                      # h_n
            pl.BlockSpec((b, h), lambda c: (0, 0)),                      # c_n
        ],
        scratch_shapes=[
            pltpu.VMEM((b, h), jnp.float32),                             # h
            pltpu.VMEM((b, h), jnp.float32),                             # c
        ],
    )

    return pl.pallas_call(
        lstm_chunk_kernel,
        out_shape=(
            jax.ShapeDtypeStruct((t_pad, b, h), jnp.float32),
            jax.ShapeDtypeStruct((b, h), jnp.float32),
            jax.ShapeDtypeStruct((b, h), jnp.float32),
        ),
        grid_spec=grid_spec,
        compiler_params=pltpu.CompilerParams(
            dimension_semantics=("arbitrary",)),  # sequential recurrence
    )(x_proj, mask, w_hh)


# ----------------------------------------------------------------------------
# Jitted array-side pipeline: gather from the pre-projected embedding table,
# build the length mask, run the Pallas recurrence.
# ----------------------------------------------------------------------------
@partial(jax.jit, static_argnames=("time_chunk",))
def encoder_forward_arrays(tokens_p, lens_p, emb_proj, w_hh, *, time_chunk):
    # tokens_p: (B_pad, T_pad) int32; emb_proj: (V, 4H); w_hh: (H, 4H)
    b_pad, t_pad = tokens_p.shape

    # Time-major token matrix (tiny int32 transpose), then a single gather
    # from the pre-projected table gives the lane-dense (T, B, 4H) kernel
    # input directly -- no per-call input matmul, no big transpose.
    tokens_tb = tokens_p.T                               # (T_pad, B_pad)
    # TODO(synk): nn.Dropout(p=0.1) applied as identity (eval mode only);
    # training-mode dropout would invalidate the pre-projected table.
    x_proj = emb_proj[tokens_tb]                         # (T_pad, B_pad, 4H)

    # Float mask (1.0 valid / 0.0 padding).
    mask = (jnp.arange(t_pad, dtype=jnp.int32)[:, None]
            < lens_p[None, :]).astype(jnp.float32)[:, :, None]  # (T,B,1)

    return run_lstm_pallas(x_proj, mask, w_hh, time_chunk)


# ----------------------------------------------------------------------------
# EncoderLSTM forward (host-side glue + Pallas hot path)
# ----------------------------------------------------------------------------
class EncoderLSTMPallas:
    def __init__(self, vocabulary_size, embedding_dim=32, hidden_dim=32,
                 dropout_p=0.1, key=None):
        # bidir=False, num_layers=1 (module defaults)
        self.embedding_dim = embedding_dim
        self.hidden_dim = hidden_dim
        self.dropout_p = dropout_p
        key = jax.random.PRNGKey(0) if key is None else key
        k_emb, k_wih, k_whh, k_bih, k_bhh = jax.random.split(key, 5)
        k = 1.0 / jnp.sqrt(hidden_dim)
        self.embedding = jax.random.normal(
            k_emb, (vocabulary_size, embedding_dim), jnp.float32)
        # Stored transposed relative to PyTorch (4H, E)/(4H, H); gate order
        # i, f, g, o -- fused along the last dim.
        self.w_ih_t = jax.random.uniform(
            k_wih, (embedding_dim, 4 * hidden_dim), jnp.float32, -k, k)
        self.w_hh_t = jax.random.uniform(
            k_whh, (hidden_dim, 4 * hidden_dim), jnp.float32, -k, k)
        b_ih = jax.random.uniform(k_bih, (4 * hidden_dim,), jnp.float32, -k, k)
        b_hh = jax.random.uniform(k_bhh, (4 * hidden_dim,), jnp.float32, -k, k)
        self.bias = b_ih + b_hh
        # Pre-projected embedding table (V, 4H): exact under eval-mode dropout.
        self.emb_proj = self.embedding @ self.w_ih_t + self.bias
        # NOTE: self.attn (nn.Linear) is unused in the original forward (and
        # depends on an undefined attn_length), so it is omitted.

    def forward(self, input_batch, batch_size=None, pack=True):
        # pad_batch + sort by length descending (the original module also
        # returns results in sorted order without un-permuting).
        lengths = [len(seq) for seq in input_batch]
        max_len = max(lengths)
        padded = [seq + [0] * (max_len - len(seq)) for seq in input_batch]
        perm = sorted(range(len(lengths)), key=lambda i: -lengths[i])
        tokens = jnp.asarray([padded[i] for i in perm], jnp.int32)    # (B, T)
        lens_sorted = jnp.asarray([lengths[i] for i in perm], jnp.int32)

        b_real, t = tokens.shape
        b_pad = max(8, ((b_real + 7) // 8) * 8)           # sublane minimum
        t_pad = ((t + TIME_CHUNK - 1) // TIME_CHUNK) * TIME_CHUNK

        tokens_p = jnp.zeros((b_pad, t_pad), jnp.int32).at[:b_real, :t].set(tokens)
        lens_p = jnp.zeros((b_pad,), jnp.int32).at[:b_real].set(lens_sorted)

        out_p, h_p, c_p = encoder_forward_arrays(
            tokens_p, lens_p, self.emb_proj, self.w_hh_t,
            time_chunk=TIME_CHUNK)

        lstm_out = out_p[:t, :b_real, :]     # (T, B, H), time-major
        h_n = h_p[:b_real][None, :, :]       # (1, B, H)
        c_n = c_p[:b_real][None, :, :]
        return lstm_out, (h_n, c_n)


# ----------------------------------------------------------------------------
# Pure-JAX reference of the packed LSTM (for correctness check)
# ----------------------------------------------------------------------------
def ref_packed_lstm(x_tbe, lengths, w_ih_t, w_hh_t, bias):
    T, B, E = x_tbe.shape
    H = w_hh_t.shape[0]

    def step(carry, inp):
        h, c = carry
        x_t, t = inp
        gates = x_t @ w_ih_t + h @ w_hh_t + bias
        i = jax.nn.sigmoid(gates[:, :H])
        f = jax.nn.sigmoid(gates[:, H:2 * H])
        g = jnp.tanh(gates[:, 2 * H:3 * H])
        o = jax.nn.sigmoid(gates[:, 3 * H:])
        c_new = f * c + i * g
        h_new = o * jnp.tanh(c_new)
        mask = (lengths > t)[:, None]
        h2 = jnp.where(mask, h_new, h)
        c2 = jnp.where(mask, c_new, c)
        out = jnp.where(mask, h_new, 0.0)
        return (h2, c2), out

    init = (jnp.zeros((B, H), jnp.float32), jnp.zeros((B, H), jnp.float32))
    (h, c), outs = lax.scan(step, init, (x_tbe, jnp.arange(T)))
    return outs, h, c


if __name__ == "__main__":
    import numpy as np

    vocab_size = 50
    embedding_dim = 32
    hidden_dim = 32

    key = jax.random.PRNGKey(0)
    k_model, k_tok = jax.random.split(key)

    model = EncoderLSTMPallas(vocab_size, embedding_dim, hidden_dim, key=k_model)

    # Deterministic variable-length token batch (list of lists, like PyTorch).
    # max_len = 37 -> padded to 64 -> exercises 2 time chunks (state carry).
    seq_lens = [5, 37, 20, 9]
    tok_flat = np.array(jax.random.randint(k_tok, (sum(seq_lens),), 1, vocab_size))
    input_batch, off = [], 0
    for L in seq_lens:
        input_batch.append([int(v) for v in tok_flat[off:off + L]])
        off += L

    lstm_out, (h_n, c_n) = model.forward(input_batch)
    jax.block_until_ready((lstm_out, h_n, c_n))

    # Verify against pure-JAX reference of the same forward semantics.
    lengths = [len(seq) for seq in input_batch]
    max_len = max(lengths)
    perm = sorted(range(len(lengths)), key=lambda i: -lengths[i])
    padded = [input_batch[i] + [0] * (max_len - len(input_batch[i])) for i in perm]
    tokens = jnp.asarray(padded, jnp.int32)
    lens_sorted = jnp.asarray([lengths[i] for i in perm], jnp.int32)
    x_tbe = jnp.transpose(model.embedding[tokens], (1, 0, 2))
    ref_out, ref_h, ref_c = ref_packed_lstm(
        x_tbe, lens_sorted, model.w_ih_t, model.w_hh_t, model.bias)

    assert lstm_out.shape == (max_len, len(input_batch), hidden_dim)
    assert h_n.shape == (1, len(input_batch), hidden_dim)
    np.testing.assert_allclose(np.array(lstm_out), np.array(ref_out),
                               rtol=2e-4, atol=1e-4)
    np.testing.assert_allclose(np.array(h_n[0]), np.array(ref_h),
                               rtol=2e-4, atol=1e-4)
    np.testing.assert_allclose(np.array(c_n[0]), np.array(ref_c),
                               rtol=2e-4, atol=1e-4)

    print("KERNEL_OK")
</pallas_src>

<mosaic_0001>
module attributes {stable_mosaic.version = 11 : i64} {
  func.func @lstm_chunk_kernel(%arg0: i32, %arg1: memref<32x8x128xf32, #tpu.memory_space<vmem>>, %arg2: memref<32x8x1xf32, #tpu.memory_space<vmem>>, %arg3: memref<32x128xf32, #tpu.memory_space<vmem>>, %arg4: memref<32x8x32xf32, #tpu.memory_space<vmem>>, %arg5: memref<8x32xf32, #tpu.memory_space<vmem>>, %arg6: memref<8x32xf32, #tpu.memory_space<vmem>>, %arg7: memref<8x32xf32, #tpu.memory_space<vmem>>, %arg8: memref<8x32xf32, #tpu.memory_space<vmem>>) attributes {dimension_semantics = [#tpu.dimension_semantics<arbitrary>], iteration_bounds = array<i64: 2>, scalar_prefetch = 0 : i64, scratch_operands = 2 : i64, tpu.core_type = #tpu.core_type<tc>, window_params = [{transform_indices = @transform_0, window_bounds = array<i64: 32, 8, 128>}, {transform_indices = @transform_1, window_bounds = array<i64: 32, 8, 1>}, {pipeline_mode = #tpu.pipeline_mode<synchronous>, transform_indices = @transform_2, window_bounds = array<i64: 32, 128>}, {transform_indices = @transform_3, window_bounds = array<i64: 32, 8, 32>}, {pipeline_mode = #tpu.pipeline_mode<synchronous>, transform_indices = @transform_4, window_bounds = array<i64: 8, 32>}, {pipeline_mode = #tpu.pipeline_mode<synchronous>, transform_indices = @transform_5, window_bounds = array<i64: 8, 32>}]} {
    %c0_i32 = arith.constant 0 : i32
    %0 = arith.cmpi eq, %arg0, %c0_i32 : i32
    %1 = arith.extui %0 : i1 to i32
    %c0_i32_0 = arith.constant 0 : i32
    %2 = arith.cmpi ne, %1, %c0_i32_0 : i32
    scf.if %2 {
      %cst_334 = arith.constant 0.000000e+00 : f32
      %1296 = vector.broadcast %cst_334 : f32 to vector<8x32xf32>
      %c0_335 = arith.constant 0 : index
      %c0_336 = arith.constant 0 : index
      %1297 = vector.load %arg7[%c0_335, %c0_336] : memref<8x32xf32, #tpu.memory_space<vmem>>, vector<8x32xf32>
      tpu.vector_store %arg7[%c0_335, %c0_336], %1296 {strides = array<i32>} : memref<8x32xf32, #tpu.memory_space<vmem>>, vector<8x32xf32>,
      %cst_337 = arith.constant 0.000000e+00 : f32
      %1298 = vector.broadcast %cst_337 : f32 to vector<8x32xf32>
      %c0_338 = arith.constant 0 : index
      %c0_339 = arith.constant 0 : index
      %1299 = vector.load %arg8[%c0_338, %c0_339] : memref<8x32xf32, #tpu.memory_space<vmem>>, vector<8x32xf32>
      tpu.vector_store %arg8[%c0_338, %c0_339], %1298 {strides = array<i32>} : memref<8x32xf32, #tpu.memory_space<vmem>>, vector<8x32xf32>,
    } else {
    }
    %c0 = arith.constant 0 : index
    %c0_1 = arith.constant 0 : index
    %3 = vector.load %arg3[%c0, %c0_1] : memref<32x128xf32, #tpu.memory_space<vmem>>, vector<32x128xf32>
    %4 = tpu.iota {dimensions = array<i32: 1>} : vector<8x128xi32>
    %c64_i32 = arith.constant 64 : i32
    %5 = vector.broadcast %c64_i32 : i32 to vector<8x128xi32>
    %6 = arith.cmpi sge, %4, %5 : vector<8x128xi32>
    %c96_i32 = arith.constant 96 : i32
    %7 = vector.broadcast %c96_i32 : i32 to vector<8x128xi32>
    %8 = arith.cmpi slt, %4, %7 : vector<8x128xi32>
    %9 = arith.andi %6, %8 : vector<8x128xi1>
    %c0_2 = arith.constant 0 : index
    %c0_3 = arith.constant 0 : index
    %10 = vector.load %arg7[%c0_2, %c0_3] : memref<8x32xf32, #tpu.memory_space<vmem>>, vector<8x32xf32>
    %c0_4 = arith.constant 0 : index
    %c0_5 = arith.constant 0 : index
    %11 = vector.load %arg8[%c0_4, %c0_5] : memref<8x32xf32, #tpu.memory_space<vmem>>, vector<8x32xf32>
    %c0_i32_6 = arith.constant 0 : i32
    %12 = arith.index_cast %c0_i32_6 : i32 to index
    %c0_7 = arith.constant 0 : index
    %c0_8 = arith.constant 0 : index
    %13 = vector.load %arg1[%12, %c0_7, %c0_8] : memref<32x8x128xf32, #tpu.memory_space<vmem>>, vector<1x8x128xf32>
    %14 = vector.shape_cast %13 : vector<1x8x128xf32> to vector<8x128xf32>
    %cst = arith.constant dense<0.000000e+00> : vector<8x128xf32>
    %15 = tpu.matmul %10, %3, %cst {dimension_numbers = #tpu.dot_dimension_numbers<[1], [0], [0], [1], [0, 0, 1, 1], [], []>} : vector<8x32xf32>, vector<32x128xf32>, vector<8x128xf32> -> vector<8x128xf32>
    %16 = arith.addf %14, %15 : vector<8x128xf32>
    %17 = math.tanh %16 : vector<8x128xf32>
    %18 = arith.negf %16 : vector<8x128xf32>
    %19 = math.exp %18 : vector<8x128xf32>
    %cst_9 = arith.constant 1.000000e+00 : f32
    %20 = vector.broadcast %cst_9 : f32 to vector<8x128xf32>
    %21 = arith.addf %20, %19 : vector<8x128xf32>
    %22 = arith.divf %20, %21 : vector<8x128xf32>
    %23 = arith.select %9, %17, %22 : vector<8x128xi1>, vector<8x128xf32>
    %24 = vector.extract_strided_slice %23 {offsets = [0, 0], sizes = [8, 32], strides = [1, 1]} : vector<8x128xf32> to vector<8x32xf32>
    %25 = vector.extract_strided_slice %23 {offsets = [0, 32], sizes = [8, 32], strides = [1, 1]} : vector<8x128xf32> to vector<8x32xf32>
    %26 = vector.extract_strided_slice %23 {offsets = [0, 64], sizes = [8, 32], strides = [1, 1]} : vector<8x128xf32> to vector<8x32xf32>
    %27 = vector.extract_strided_slice %23 {offsets = [0, 96], sizes = [8, 32], strides = [1, 1]} : vector<8x128xf32> to vector<8x32xf32>
    %28 = arith.mulf %25, %11 : vector<8x32xf32>
    %29 = arith.mulf %24, %26 : vector<8x32xf32>
    %30 = arith.addf %28, %29 : vector<8x32xf32>
    %31 = math.tanh %30 : vector<8x32xf32>
    %32 = arith.mulf %27, %31 : vector<8x32xf32>
    %33 = arith.index_cast %c0_i32_6 : i32 to index
    %c0_10 = arith.constant 0 : index
    %c0_11 = arith.constant 0 : index
    %34 = vector.load %arg2[%33, %c0_10, %c0_11] : memref<32x8x1xf32, #tpu.memory_space<vmem>>, vector<1x8x1xf32>
    %35 = vector.shape_cast %34 : vector<1x8x1xf32> to vector<8x1xf32>
    %cst_12 = arith.constant 5.000000e-01 : f32
    %36 = vector.broadcast %cst_12 : f32 to vector<8x1xf32>
    %37 = arith.cmpf ogt, %35, %36 : vector<8x1xf32>
    %38 = vector.shape_cast %37 : vector<8x1xi1> to vector<8x1xi1>
    %39 = vector.broadcast %38 : vector<8x1xi1> to vector<8x32xi1>
    %40 = arith.select %39, %32, %10 : vector<8x32xi1>, vector<8x32xf32>
    %41 = vector.shape_cast %37 : vector<8x1xi1> to vector<8x1xi1>
    %42 = vector.broadcast %41 : vector<8x1xi1> to vector<8x32xi1>
    %43 = arith.select %42, %30, %11 : vector<8x32xi1>, vector<8x32xf32>
    %cst_13 = arith.constant 0.000000e+00 : f32
    %44 = vector.shape_cast %37 : vector<8x1xi1> to vector<8x1xi1>
    %45 = vector.broadcast %44 : vector<8x1xi1> to vector<8x32xi1>
    %46 = vector.broadcast %cst_13 : f32 to vector<8x32xf32>
    %47 = arith.select %45, %32, %46 : vector<8x32xi1>, vector<8x32xf32>
    %48 = arith.index_cast %c0_i32_6 : i32 to index
    %c0_14 = arith.constant 0 : index
    %c0_15 = arith.constant 0 : index
    %49 = vector.load %arg4[%48, %c0_14, %c0_15] : memref<32x8x32xf32, #tpu.memory_space<vmem>>, vector<1x8x32xf32>
    %50 = vector.shape_cast %49 : vector<1x8x32xf32> to vector<8x32xf32>
    %51 = vector.shape_cast %47 : vector<8x32xf32> to vector<1x8x32xf32>
    tpu.vector_store %arg4[%48, %c0_14, %c0_15], %51 {strides = array<i32>} : memref<32x8x32xf32, #tpu.memory_space<vmem>>, vector<1x8x32xf32>,
    %c1_i32 = arith.constant 1 : i32
    %52 = arith.index_cast %c1_i32 : i32 to index
    %c0_16 = arith.constant 0 : index
    %c0_17 = arith.constant 0 : index
    %53 = vector.load %arg1[%52, %c0_16, %c0_17] : memref<32x8x128xf32, #tpu.memory_space<vmem>>, vector<1x8x128xf32>
    %54 = vector.shape_cast %53 : vector<1x8x128xf32> to vector<8x128xf32>
    %cst_18 = arith.constant dense<0.000000e+00> : vector<8x128xf32>
    %55 = tpu.matmul %40, %3, %cst_18 {dimension_numbers = #tpu.dot_dimension_numbers<[1], [0], [0], [1], [0, 0, 1, 1], [], []>} : vector<8x32xf32>, vector<32x128xf32>, vector<8x128xf32> -> vector<8x128xf32>
    %56 = arith.addf %54, %55 : vector<8x128xf32>
    %57 = math.tanh %56 : vector<8x128xf32>
    %58 = arith.negf %56 : vector<8x128xf32>
    %59 = math.exp %58 : vector<8x128xf32>
    %cst_19 = arith.constant 1.000000e+00 : f32
    %60 = vector.broadcast %cst_19 : f32 to vector<8x128xf32>
    %61 = arith.addf %60, %59 : vector<8x128xf32>
    %62 = arith.divf %60, %61 : vector<8x128xf32>
    %63 = arith.select %9, %57, %62 : vector<8x128xi1>, vector<8x128xf32>
    %64 = vector.extract_strided_slice %63 {offsets = [0, 0], sizes = [8, 32], strides = [1, 1]} : vector<8x128xf32> to vector<8x32xf32>
    %65 = vector.extract_strided_slice %63 {offsets = [0, 32], sizes = [8, 32], strides = [1, 1]} : vector<8x128xf32> to vector<8x32xf32>
    %66 = vector.extract_strided_slice %63 {offsets = [0, 64], sizes = [8, 32], strides = [1, 1]} : vector<8x128xf32> to vector<8x32xf32>
    %67 = vector.extract_strided_slice %63 {offsets = [0, 96], sizes = [8, 32], strides = [1, 1]} : vector<8x128xf32> to vector<8x32xf32>
    %68 = arith.mulf %65, %43 : vector<8x32xf32>
    %69 = arith.mulf %64, %66 : vector<8x32xf32>
    %70 = arith.addf %68, %69 : vector<8x32xf32>
    %71 = math.tanh %70 : vector<8x32xf32>
    %72 = arith.mulf %67, %71 : vector<8x32xf32>
    %73 = arith.index_cast %c1_i32 : i32 to index
    %c0_20 = arith.constant 0 : index
    %c0_21 = arith.constant 0 : index
    %74 = vector.load %arg2[%73, %c0_20, %c0_21] : memref<32x8x1xf32, #tpu.memory_space<vmem>>, vector<1x8x1xf32>
    %75 = vector.shape_cast %74 : vector<1x8x1xf32> to vector<8x1xf32>
    %cst_22 = arith.constant 5.000000e-01 : f32
    %76 = vector.broadcast %cst_22 : f32 to vector<8x1xf32>
    %77 = arith.cmpf ogt, %75, %76 : vector<8x1xf32>
    %78 = vector.shape_cast %77 : vector<8x1xi1> to vector<8x1xi1>
    %79 = vector.broadcast %78 : vector<8x1xi1> to vector<8x32xi1>
    %80 = arith.select %79, %72, %40 : vector<8x32xi1>, vector<8x32xf32>
    %81 = vector.shape_cast %77 : vector<8x1xi1> to vector<8x1xi1>
    %82 = vector.broadcast %81 : vector<8x1xi1> to vector<8x32xi1>
    %83 = arith.select %82, %70, %43 : vector<8x32xi1>, vector<8x32xf32>
    %cst_23 = arith.constant 0.000000e+00 : f32
    %84 = vector.shape_cast %77 : vector<8x1xi1> to vector<8x1xi1>
    %85 = vector.broadcast %84 : vector<8x1xi1> to vector<8x32xi1>
    %86 = vector.broadcast %cst_23 : f32 to vector<8x32xf32>
    %87 = arith.select %85, %72, %86 : vector<8x32xi1>, vector<8x32xf32>
    %88 = arith.index_cast %c1_i32 : i32 to index
    %c0_24 = arith.constant 0 : index
    %c0_25 = arith.constant 0 : index
    %89 = vector.load %arg4[%88, %c0_24, %c0_25] : memref<32x8x32xf32, #tpu.memory_space<vmem>>, vector<1x8x32xf32>
    %90 = vector.shape_cast %89 : vector<1x8x32xf32> to vector<8x32xf32>
    %91 = vector.shape_cast %87 : vector<8x32xf32> to vector<1x8x32xf32>
    tpu.vector_store %arg4[%88, %c0_24, %c0_25], %91 {strides = array<i32>} : memref<32x8x32xf32, #tpu.memory_space<vmem>>, vector<1x8x32xf32>,
    %c2_i32 = arith.constant 2 : i32
    %92 = arith.index_cast %c2_i32 : i32 to index
    %c0_26 = arith.constant 0 : index
    %c0_27 = arith.constant 0 : index
    %93 = vector.load %arg1[%92, %c0_26, %c0_27] : memref<32x8x128xf32, #tpu.memory_space<vmem>>, vector<1x8x128xf32>
    %94 = vector.shape_cast %93 : vector<1x8x128xf32> to vector<8x128xf32>
    %cst_28 = arith.constant dense<0.000000e+00> : vector<8x128xf32>
    %95 = tpu.matmul %80, %3, %cst_28 {dimension_numbers = #tpu.dot_dimension_numbers<[1], [0], [0], [1], [0, 0, 1, 1], [], []>} : vector<8x32xf32>, vector<32x128xf32>, vector<8x128xf32> -> vector<8x128xf32>
    %96 = arith.addf %94, %95 : vector<8x128xf32>
    %97 = math.tanh %96 : vector<8x128xf32>
    %98 = arith.negf %96 : vector<8x128xf32>
    %99 = math.exp %98 : vector<8x128xf32>
    %cst_29 = arith.constant 1.000000e+00 : f32
    %100 = vector.broadcast %cst_29 : f32 to vector<8x128xf32>
    %101 = arith.addf %100, %99 : vector<8x128xf32>
    %102 = arith.divf %100, %101 : vector<8x128xf32>
    %103 = arith.select %9, %97, %102 : vector<8x128xi1>, vector<8x128xf32>
    %104 = vector.extract_strided_slice %103 {offsets = [0, 0], sizes = [8, 32], strides = [1, 1]} : vector<8x128xf32> to vector<8x32xf32>
    %105 = vector.extract_strided_slice %103 {offsets = [0, 32], sizes = [8, 32], strides = [1, 1]} : vector<8x128xf32> to vector<8x32xf32>
    %106 = vector.extract_strided_slice %103 {offsets = [0, 64], sizes = [8, 32], strides = [1, 1]} : vector<8x128xf32> to vector<8x32xf32>
    %107 = vector.extract_strided_slice %103 {offsets = [0, 96], sizes = [8, 32], strides = [1, 1]} : vector<8x128xf32> to vector<8x32xf32>
    %108 = arith.mulf %105, %83 : vector<8x32xf32>
    %109 = arith.mulf %104, %106 : vector<8x32xf32>
    %110 = arith.addf %108, %109 : vector<8x32xf32>
    %111 = math.tanh %110 : vector<8x32xf32>
    %112 = arith.mulf %107, %111 : vector<8x32xf32>
    %113 = arith.index_cast %c2_i32 : i32 to index
    %c0_30 = arith.constant 0 : index
    %c0_31 = arith.constant 0 : index
    %114 = vector.load %arg2[%113, %c0_30, %c0_31] : memref<32x8x1xf32, #tpu.memory_space<vmem>>, vector<1x8x1xf32>
    %115 = vector.shape_cast %114 : vector<1x8x1xf32> to vector<8x1xf32>
    %cst_32 = arith.constant 5.000000e-01 : f32
    %116 = vector.broadcast %cst_32 : f32 to vector<8x1xf32>
    %117 = arith.cmpf ogt, %115, %116 : vector<8x1xf32>
    %118 = vector.shape_cast %117 : vector<8x1xi1> to vector<8x1xi1>
    %119 = vector.broadcast %118 : vector<8x1xi1> to vector<8x32xi1>
    %120 = arith.select %119, %112, %80 : vector<8x32xi1>, vector<8x32xf32>
    %121 = vector.shape_cast %117 : vector<8x1xi1> to vector<8x1xi1>
    %122 = vector.broadcast %121 : vector<8x1xi1> to vector<8x32xi1>
    %123 = arith.select %122, %110, %83 : vector<8x32xi1>, vector<8x32xf32>
    %cst_33 = arith.constant 0.000000e+00 : f32
    %124 = vector.shape_cast %117 : vector<8x1xi1> to vector<8x1xi1>
    %125 = vector.broadcast %124 : vector<8x1xi1> to vector<8x32xi1>
    %126 = vector.broadcast %cst_33 : f32 to vector<8x32xf32>
    %127 = arith.select %125, %112, %126 : vector<8x32xi1>, vector<8x32xf32>
    %128 = arith.index_cast %c2_i32 : i32 to index
    %c0_34 = arith.constant 0 : index
    %c0_35 = arith.constant 0 : index
    %129 = vector.load %arg4[%128, %c0_34, %c0_35] : memref<32x8x32xf32, #tpu.memory_space<vmem>>, vector<1x8x32xf32>
    %130 = vector.shape_cast %129 : vector<1x8x32xf32> to vector<8x32xf32>
    %131 = vector.shape_cast %127 : vector<8x32xf32> to vector<1x8x32xf32>
    tpu.vector_store %arg4[%128, %c0_34, %c0_35], %131 {strides = array<i32>} : memref<32x8x32xf32, #tpu.memory_space<vmem>>, vector<1x8x32xf32>,
    %c3_i32 = arith.constant 3 : i32
    %132 = arith.index_cast %c3_i32 : i32 to index
    %c0_36 = arith.constant 0 : index
    %c0_37 = arith.constant 0 : index
    %133 = vector.load %arg1[%132, %c0_36, %c0_37] : memref<32x8x128xf32, #tpu.memory_space<vmem>>, vector<1x8x128xf32>
    %134 = vector.shape_cast %133 : vector<1x8x128xf32> to vector<8x128xf32>
    %cst_38 = arith.constant dense<0.000000e+00> : vector<8x128xf32>
    %135 = tpu.matmul %120, %3, %cst_38 {dimension_numbers = #tpu.dot_dimension_numbers<[1], [0], [0], [1], [0, 0, 1, 1], [], []>} : vector<8x32xf32>, vector<32x128xf32>, vector<8x128xf32> -> vector<8x128xf32>
    %136 = arith.addf %134, %135 : vector<8x128xf32>
    %137 = math.tanh %136 : vector<8x128xf32>
    %138 = arith.negf %136 : vector<8x128xf32>
    %139 = math.exp %138 : vector<8x128xf32>
    %cst_39 = arith.constant 1.000000e+00 : f32
    %140 = vector.broadcast %cst_39 : f32 to vector<8x128xf32>
    %141 = arith.addf %140, %139 : vector<8x128xf32>
    %142 = arith.divf %140, %141 : vector<8x128xf32>
    %143 = arith.select %9, %137, %142 : vector<8x128xi1>, vector<8x128xf32>
    %144 = vector.extract_strided_slice %143 {offsets = [0, 0], sizes = [8, 32], strides = [1, 1]} : vector<8x128xf32> to vector<8x32xf32>
    %145 = vector.extract_strided_slice %143 {offsets = [0, 32], sizes = [8, 32], strides = [1, 1]} : vector<8x128xf32> to vector<8x32xf32>
    %146 = vector.extract_strided_slice %143 {offsets = [0, 64], sizes = [8, 32], strides = [1, 1]} : vector<8x128xf32> to vector<8x32xf32>
    %147 = vector.extract_strided_slice %143 {offsets = [0, 96], sizes = [8, 32], strides = [1, 1]} : vector<8x128xf32> to vector<8x32xf32>
    %148 = arith.mulf %145, %123 : vector<8x32xf32>
    %149 = arith.mulf %144, %146 : vector<8x32xf32>
    %150 = arith.addf %148, %149 : vector<8x32xf32>
    %151 = math.tanh %150 : vector<8x32xf32>
    %152 = arith.mulf %147, %151 : vector<8x32xf32>
    %153 = arith.index_cast %c3_i32 : i32 to index
    %c0_40 = arith.constant 0 : index
    %c0_41 = arith.constant 0 : index
    %154 = vector.load %arg2[%153, %c0_40, %c0_41] : memref<32x8x1xf32, #tpu.memory_space<vmem>>, vector<1x8x1xf32>
    %155 = vector.shape_cast %154 : vector<1x8x1xf32> to vector<8x1xf32>
    %cst_42 = arith.constant 5.000000e-01 : f32
    %156 = vector.broadcast %cst_42 : f32 to vector<8x1xf32>
    %157 = arith.cmpf ogt, %155, %156 : vector<8x1xf32>
    %158 = vector.shape_cast %157 : vector<8x1xi1> to vector<8x1xi1>
    %159 = vector.broadcast %158 : vector<8x1xi1> to vector<8x32xi1>
    %160 = arith.select %159, %152, %120 : vector<8x32xi1>, vector<8x32xf32>
    %161 = vector.shape_cast %157 : vector<8x1xi1> to vector<8x1xi1>
    %162 = vector.broadcast %161 : vector<8x1xi1> to vector<8x32xi1>
    %163 = arith.select %162, %150, %123 : vector<8x32xi1>, vector<8x32xf32>
    %cst_43 = arith.constant 0.000000e+00 : f32
    %164 = vector.shape_cast %157 : vector<8x1xi1> to vector<8x1xi1>
    %165 = vector.broadcast %164 : vector<8x1xi1> to vector<8x32xi1>
    %166 = vector.broadcast %cst_43 : f32 to vector<8x32xf32>
    %167 = arith.select %165, %152, %166 : vector<8x32xi1>, vector<8x32xf32>
    %168 = arith.index_cast %c3_i32 : i32 to index
    %c0_44 = arith.constant 0 : index
    %c0_45 = arith.constant 0 : index
    %169 = vector.load %arg4[%168, %c0_44, %c0_45] : memref<32x8x32xf32, #tpu.memory_space<vmem>>, vector<1x8x32xf32>
    %170 = vector.shape_cast %169 : vector<1x8x32xf32> to vector<8x32xf32>
    %171 = vector.shape_cast %167 : vector<8x32xf32> to vector<1x8x32xf32>
    tpu.vector_store %arg4[%168, %c0_44, %c0_45], %171 {strides = array<i32>} : memref<32x8x32xf32, #tpu.memory_space<vmem>>, vector<1x8x32xf32>,
    %c4_i32 = arith.constant 4 : i32
    %172 = arith.index_cast %c4_i32 : i32 to index
    %c0_46 = arith.constant 0 : index
    %c0_47 = arith.constant 0 : index
    %173 = vector.load %arg1[%172, %c0_46, %c0_47] : memref<32x8x128xf32, #tpu.memory_space<vmem>>, vector<1x8x128xf32>
    %174 = vector.shape_cast %173 : vector<1x8x128xf32> to vector<8x128xf32>
    %cst_48 = arith.constant dense<0.000000e+00> : vector<8x128xf32>
    %175 = tpu.matmul %160, %3, %cst_48 {dimension_numbers = #tpu.dot_dimension_numbers<[1], [0], [0], [1], [0, 0, 1, 1], [], []>} : vector<8x32xf32>, vector<32x128xf32>, vector<8x128xf32> -> vector<8x128xf32>
    %176 = arith.addf %174, %175 : vector<8x128xf32>
    %177 = math.tanh %176 : vector<8x128xf32>
    %178 = arith.negf %176 : vector<8x128xf32>
    %179 = math.exp %178 : vector<8x128xf32>
    %cst_49 = arith.constant 1.000000e+00 : f32
    %180 = vector.broadcast %cst_49 : f32 to vector<8x128xf32>
    %181 = arith.addf %180, %179 : vector<8x128xf32>
    %182 = arith.divf %180, %181 : vector<8x128xf32>
    %183 = arith.select %9, %177, %182 : vector<8x128xi1>, vector<8x128xf32>
    %184 = vector.extract_strided_slice %183 {offsets = [0, 0], sizes = [8, 32], strides = [1, 1]} : vector<8x128xf32> to vector<8x32xf32>
    %185 = vector.extract_strided_slice %183 {offsets = [0, 32], sizes = [8, 32], strides = [1, 1]} : vector<8x128xf32> to vector<8x32xf32>
    %186 = vector.extract_strided_slice %183 {offsets = [0, 64], sizes = [8, 32], strides = [1, 1]} : vector<8x128xf32> to vector<8x32xf32>
    %187 = vector.extract_strided_slice %183 {offsets = [0, 96], sizes = [8, 32], strides = [1, 1]} : vector<8x128xf32> to vector<8x32xf32>
    %188 = arith.mulf %185, %163 : vector<8x32xf32>
    %189 = arith.mulf %184, %186 : vector<8x32xf32>
    %190 = arith.addf %188, %189 : vector<8x32xf32>
    %191 = math.tanh %190 : vector<8x32xf32>
    %192 = arith.mulf %187, %191 : vector<8x32xf32>
    %193 = arith.index_cast %c4_i32 : i32 to index
    %c0_50 = arith.constant 0 : index
    %c0_51 = arith.constant 0 : index
    %194 = vector.load %arg2[%193, %c0_50, %c0_51] : memref<32x8x1xf32, #tpu.memory_space<vmem>>, vector<1x8x1xf32>
    %195 = vector.shape_cast %194 : vector<1x8x1xf32> to vector<8x1xf32>
    %cst_52 = arith.constant 5.000000e-01 : f32
    %196 = vector.broadcast %cst_52 : f32 to vector<8x1xf32>
    %197 = arith.cmpf ogt, %195, %196 : vector<8x1xf32>
    %198 = vector.shape_cast %197 : vector<8x1xi1> to vector<8x1xi1>
    %199 = vector.broadcast %198 : vector<8x1xi1> to vector<8x32xi1>
    %200 = arith.select %199, %192, %160 : vector<8x32xi1>, vector<8x32xf32>
    %201 = vector.shape_cast %197 : vector<8x1xi1> to vector<8x1xi1>
    %202 = vector.broadcast %201 : vector<8x1xi1> to vector<8x32xi1>
    %203 = arith.select %202, %190, %163 : vector<8x32xi1>, vector<8x32xf32>
    %cst_53 = arith.constant 0.000000e+00 : f32
    %204 = vector.shape_cast %197 : vector<8x1xi1> to vector<8x1xi1>
    %205 = vector.broadcast %204 : vector<8x1xi1> to vector<8x32xi1>
    %206 = vector.broadcast %cst_53 : f32 to vector<8x32xf32>
    %207 = arith.select %205, %192, %206 : vector<8x32xi1>, vector<8x32xf32>
    %208 = arith.index_cast %c4_i32 : i32 to index
    %c0_54 = arith.constant 0 : index
    %c0_55 = arith.constant 0 : index
    %209 = vector.load %arg4[%208, %c0_54, %c0_55] : memref<32x8x32xf32, #tpu.memory_space<vmem>>, vector<1x8x32xf32>
    %210 = vector.shape_cast %209 : vector<1x8x32xf32> to vector<8x32xf32>
    %211 = vector.shape_cast %207 : vector<8x32xf32> to vector<1x8x32xf32>
    tpu.vector_store %arg4[%208, %c0_54, %c0_55], %211 {strides = array<i32>} : memref<32x8x32xf32, #tpu.memory_space<vmem>>, vector<1x8x32xf32>,
    %c5_i32 = arith.constant 5 : i32
    %212 = arith.index_cast %c5_i32 : i32 to index
    %c0_56 = arith.constant 0 : index
    %c0_57 = arith.constant 0 : index
    %213 = vector.load %arg1[%212, %c0_56, %c0_57] : memref<32x8x128xf32, #tpu.memory_space<vmem>>, vector<1x8x128xf32>
    %214 = vector.shape_cast %213 : vector<1x8x128xf32> to vector<8x128xf32>
    %cst_58 = arith.constant dense<0.000000e+00> : vector<8x128xf32>
    %215 = tpu.matmul %200, %3, %cst_58 {dimension_numbers = #tpu.dot_dimension_numbers<[1], [0], [0], [1], [0, 0, 1, 1], [], []>} : vector<8x32xf32>, vector<32x128xf32>, vector<8x128xf32> -> vector<8x128xf32>
    %216 = arith.addf %214, %215 : vector<8x128xf32>
    %217 = math.tanh %216 : vector<8x128xf32>
    %218 = arith.negf %216 : vector<8x128xf32>
    %219 = math.exp %218 : vector<8x128xf32>
    %cst_59 = arith.constant 1.000000e+00 : f32
    %220 = vector.broadcast %cst_59 : f32 to vector<8x128xf32>
    %221 = arith.addf %220, %219 : vector<8x128xf32>
    %222 = arith.divf %220, %221 : vector<8x128xf32>
    %223 = arith.select %9, %217, %222 : vector<8x128xi1>, vector<8x128xf32>
    %224 = vector.extract_strided_slice %223 {offsets = [0, 0], sizes = [8, 32], strides = [1, 1]} : vector<8x128xf32> to vector<8x32xf32>
    %225 = vector.extract_strided_slice %223 {offsets = [0, 32], sizes = [8, 32], strides = [1, 1]} : vector<8x128xf32> to vector<8x32xf32>
    %226 = vector.extract_strided_slice %223 {offsets = [0, 64], sizes = [8, 32], strides = [1, 1]} : vector<8x128xf32> to vector<8x32xf32>
    %227 = vector.extract_strided_slice %223 {offsets = [0, 96], sizes = [8, 32], strides = [1, 1]} : vector<8x128xf32> to vector<8x32xf32>
    %228 = arith.mulf %225, %203 : vector<8x32xf32>
    %229 = arith.mulf %224, %226 : vector<8x32xf32>
    %230 = arith.addf %228, %229 : vector<8x32xf32>
    %231 = math.tanh %230 : vector<8x32xf32>
    %232 = arith.mulf %227, %231 : vector<8x32xf32>
    %233 = arith.index_cast %c5_i32 : i32 to index
    %c0_60 = arith.constant 0 : index
    %c0_61 = arith.constant 0 : index
    %234 = vector.load %arg2[%233, %c0_60, %c0_61] : memref<32x8x1xf32, #tpu.memory_space<vmem>>, vector<1x8x1xf32>
    %235 = vector.shape_cast %234 : vector<1x8x1xf32> to vector<8x1xf32>
    %cst_62 = arith.constant 5.000000e-01 : f32
    %236 = vector.broadcast %cst_62 : f32 to vector<8x1xf32>
    %237 = arith.cmpf ogt, %235, %236 : vector<8x1xf32>
    %238 = vector.shape_cast %237 : vector<8x1xi1> to vector<8x1xi1>
    %239 = vector.broadcast %238 : vector<8x1xi1> to vector<8x32xi1>
    %240 = arith.select %239, %232, %200 : vector<8x32xi1>, vector<8x32xf32>
    %241 = vector.shape_cast %237 : vector<8x1xi1> to vector<8x1xi1>
    %242 = vector.broadcast %241 : vector<8x1xi1> to vector<8x32xi1>
    %243 = arith.select %242, %230, %203 : vector<8x32xi1>, vector<8x32xf32>
    %cst_63 = arith.constant 0.000000e+00 : f32
    %244 = vector.shape_cast %237 : vector<8x1xi1> to vector<8x1xi1>
    %245 = vector.broadcast %244 : vector<8x1xi1> to vector<8x32xi1>
    %246 = vector.broadcast %cst_63 : f32 to vector<8x32xf32>
    %247 = arith.select %245, %232, %246 : vector<8x32xi1>, vector<8x32xf32>
    %248 = arith.index_cast %c5_i32 : i32 to index
    %c0_64 = arith.constant 0 : index
    %c0_65 = arith.constant 0 : index
    %249 = vector.load %arg4[%248, %c0_64, %c0_65] : memref<32x8x32xf32, #tpu.memory_space<vmem>>, vector<1x8x32xf32>
    %250 = vector.shape_cast %249 : vector<1x8x32xf32> to vector<8x32xf32>
    %251 = vector.shape_cast %247 : vector<8x32xf32> to vector<1x8x32xf32>
    tpu.vector_store %arg4[%248, %c0_64, %c0_65], %251 {strides = array<i32>} : memref<32x8x32xf32, #tpu.memory_space<vmem>>, vector<1x8x32xf32>,
    %c6_i32 = arith.constant 6 : i32
    %252 = arith.index_cast %c6_i32 : i32 to index
    %c0_66 = arith.constant 0 : index
    %c0_67 = arith.constant 0 : index
    %253 = vector.load %arg1[%252, %c0_66, %c0_67] : memref<32x8x128xf32, #tpu.memory_space<vmem>>, vector<1x8x128xf32>
    %254 = vector.shape_cast %253 : vector<1x8x128xf32> to vector<8x128xf32>
    %cst_68 = arith.constant dense<0.000000e+00> : vector<8x128xf32>
    %255 = tpu.matmul %240, %3, %cst_68 {dimension_numbers = #tpu.dot_dimension_numbers<[1], [0], [0], [1], [0, 0, 1, 1], [], []>} : vector<8x32xf32>, vector<32x128xf32>, vector<8x128xf32> -> vector<8x128xf32>
    %256 = arith.addf %254, %255 : vector<8x128xf32>
    %257 = math.tanh %256 : vector<8x128xf32>
    %258 = arith.negf %256 : vector<8x128xf32>
    %259 = math.exp %258 : vector<8x128xf32>
    %cst_69 = arith.constant 1.000000e+00 : f32
    %260 = vector.broadcast %cst_69 : f32 to vector<8x128xf32>
    %261 = arith.addf %260, %259 : vector<8x128xf32>
    %262 = arith.divf %260, %261 : vector<8x128xf32>
    %263 = arith.select %9, %257, %262 : vector<8x128xi1>, vector<8x128xf32>
    %264 = vector.extract_strided_slice %263 {offsets = [0, 0], sizes = [8, 32], strides = [1, 1]} : vector<8x128xf32> to vector<8x32xf32>
    %265 = vector.extract_strided_slice %263 {offsets = [0, 32], sizes = [8, 32], strides = [1, 1]} : vector<8x128xf32> to vector<8x32xf32>
    %266 = vector.extract_strided_slice %263 {offsets = [0, 64], sizes = [8, 32], strides = [1, 1]} : vector<8x128xf32> to vector<8x32xf32>
    %267 = vector.extract_strided_slice %263 {offsets = [0, 96], sizes = [8, 32], strides = [1, 1]} : vector<8x128xf32> to vector<8x32xf32>
    %268 = arith.mulf %265, %243 : vector<8x32xf32>
    %269 = arith.mulf %264, %266 : vector<8x32xf32>
    %270 = arith.addf %268, %269 : vector<8x32xf32>
    %271 = math.tanh %270 : vector<8x32xf32>
    %272 = arith.mulf %267, %271 : vector<8x32xf32>
    %273 = arith.index_cast %c6_i32 : i32 to index
    %c0_70 = arith.constant 0 : index
    %c0_71 = arith.constant 0 : index
    %274 = vector.load %arg2[%273, %c0_70, %c0_71] : memref<32x8x1xf32, #tpu.memory_space<vmem>>, vector<1x8x1xf32>
    %275 = vector.shape_cast %274 : vector<1x8x1xf32> to vector<8x1xf32>
    %cst_72 = arith.constant 5.000000e-01 : f32
    %276 = vector.broadcast %cst_72 : f32 to vector<8x1xf32>
    %277 = arith.cmpf ogt, %275, %276 : vector<8x1xf32>
    %278 = vector.shape_cast %277 : vector<8x1xi1> to vector<8x1xi1>
    %279 = vector.broadcast %278 : vector<8x1xi1> to vector<8x32xi1>
    %280 = arith.select %279, %272, %240 : vector<8x32xi1>, vector<8x32xf32>
    %281 = vector.shape_cast %277 : vector<8x1xi1> to vector<8x1xi1>
    %282 = vector.broadcast %281 : vector<8x1xi1> to vector<8x32xi1>
    %283 = arith.select %282, %270, %243 : vector<8x32xi1>, vector<8x32xf32>
    %cst_73 = arith.constant 0.000000e+00 : f32
    %284 = vector.shape_cast %277 : vector<8x1xi1> to vector<8x1xi1>
    %285 = vector.broadcast %284 : vector<8x1xi1> to vector<8x32xi1>
    %286 = vector.broadcast %cst_73 : f32 to vector<8x32xf32>
    %287 = arith.select %285, %272, %286 : vector<8x32xi1>, vector<8x32xf32>
    %288 = arith.index_cast %c6_i32 : i32 to index
    %c0_74 = arith.constant 0 : index
    %c0_75 = arith.constant 0 : index
    %289 = vector.load %arg4[%288, %c0_74, %c0_75] : memref<32x8x32xf32, #tpu.memory_space<vmem>>, vector<1x8x32xf32>
    %290 = vector.shape_cast %289 : vector<1x8x32xf32> to vector<8x32xf32>
    %291 = vector.shape_cast %287 : vector<8x32xf32> to vector<1x8x32xf32>
    tpu.vector_store %arg4[%288, %c0_74, %c0_75], %291 {strides = array<i32>} : memref<32x8x32xf32, #tpu.memory_space<vmem>>, vector<1x8x32xf32>,
    %c7_i32 = arith.constant 7 : i32
    %292 = arith.index_cast %c7_i32 : i32 to index
    %c0_76 = arith.constant 0 : index
    %c0_77 = arith.constant 0 : index
    %293 = vector.load %arg1[%292, %c0_76, %c0_77] : memref<32x8x128xf32, #tpu.memory_space<vmem>>, vector<1x8x128xf32>
    %294 = vector.shape_cast %293 : vector<1x8x128xf32> to vector<8x128xf32>
    %cst_78 = arith.constant dense<0.000000e+00> : vector<8x128xf32>
    %295 = tpu.matmul %280, %3, %cst_78 {dimension_numbers = #tpu.dot_dimension_numbers<[1], [0], [0], [1], [0, 0, 1, 1], [], []>} : vector<8x32xf32>, vector<32x128xf32>, vector<8x128xf32> -> vector<8x128xf32>
    %296 = arith.addf %294, %295 : vector<8x128xf32>
    %297 = math.tanh %296 : vector<8x128xf32>
    %298 = arith.negf %296 : vector<8x128xf32>
    %299 = math.exp %298 : vector<8x128xf32>
    %cst_79 = arith.constant 1.000000e+00 : f32
    %300 = vector.broadcast %cst_79 : f32 to vector<8x128xf32>
    %301 = arith.addf %300, %299 : vector<8x128xf32>
    %302 = arith.divf %300, %301 : vector<8x128xf32>
    %303 = arith.select %9, %297, %302 : vector<8x128xi1>, vector<8x128xf32>
    %304 = vector.extract_strided_slice %303 {offsets = [0, 0], sizes = [8, 32], strides = [1, 1]} : vector<8x128xf32> to vector<8x32xf32>
    %305 = vector.extract_strided_slice %303 {offsets = [0, 32], sizes = [8, 32], strides = [1, 1]} : vector<8x128xf32> to vector<8x32xf32>
    %306 = vector.extract_strided_slice %303 {offsets = [0, 64], sizes = [8, 32], strides = [1, 1]} : vector<8x128xf32> to vector<8x32xf32>
    %307 = vector.extract_strided_slice %303 {offsets = [0, 96], sizes = [8, 32], strides = [1, 1]} : vector<8x128xf32> to vector<8x32xf32>
    %308 = arith.mulf %305, %283 : vector<8x32xf32>
    %309 = arith.mulf %304, %306 : vector<8x32xf32>
    %310 = arith.addf %308, %309 : vector<8x32xf32>
    %311 = math.tanh %310 : vector<8x32xf32>
    %312 = arith.mulf %307, %311 : vector<8x32xf32>
    %313 = arith.index_cast %c7_i32 : i32 to index
    %c0_80 = arith.constant 0 : index
    %c0_81 = arith.constant 0 : index
    %314 = vector.load %arg2[%313, %c0_80, %c0_81] : memref<32x8x1xf32, #tpu.memory_space<vmem>>, vector<1x8x1xf32>
    %315 = vector.shape_cast %314 : vector<1x8x1xf32> to vector<8x1xf32>
    %cst_82 = arith.constant 5.000000e-01 : f32
    %316 = vector.broadcast %cst_82 : f32 to vector<8x1xf32>
    %317 = arith.cmpf ogt, %315, %316 : vector<8x1xf32>
    %318 = vector.shape_cast %317 : vector<8x1xi1> to vector<8x1xi1>
    %319 = vector.broadcast %318 : vector<8x1xi1> to vector<8x32xi1>
    %320 = arith.select %319, %312, %280 : vector<8x32xi1>, vector<8x32xf32>
    %321 = vector.shape_cast %317 : vector<8x1xi1> to vector<8x1xi1>
    %322 = vector.broadcast %321 : vector<8x1xi1> to vector<8x32xi1>
    %323 = arith.select %322, %310, %283 : vector<8x32xi1>, vector<8x32xf32>
    %cst_83 = arith.constant 0.000000e+00 : f32
    %324 = vector.shape_cast %317 : vector<8x1xi1> to vector<8x1xi1>
    %325 = vector.broadcast %324 : vector<8x1xi1> to vector<8x32xi1>
    %326 = vector.broadcast %cst_83 : f32 to vector<8x32xf32>
    %327 = arith.select %325, %312, %326 : vector<8x32xi1>, vector<8x32xf32>
    %328 = arith.index_cast %c7_i32 : i32 to index
    %c0_84 = arith.constant 0 : index
    %c0_85 = arith.constant 0 : index
    %329 = vector.load %arg4[%328, %c0_84, %c0_85] : memref<32x8x32xf32, #tpu.memory_space<vmem>>, vector<1x8x32xf32>
    %330 = vector.shape_cast %329 : vector<1x8x32xf32> to vector<8x32xf32>
    %331 = vector.shape_cast %327 : vector<8x32xf32> to vector<1x8x32xf32>
    tpu.vector_store %arg4[%328, %c0_84, %c0_85], %331 {strides = array<i32>} : memref<32x8x32xf32, #tpu.memory_space<vmem>>, vector<1x8x32xf32>,
    %c8_i32 = arith.constant 8 : i32
    %332 = arith.index_cast %c8_i32 : i32 to index
    %c0_86 = arith.constant 0 : index
    %c0_87 = arith.constant 0 : index
    %333 = vector.load %arg1[%332, %c0_86, %c0_87] : memref<32x8x128xf32, #tpu.memory_space<vmem>>, vector<1x8x128xf32>
    %334 = vector.shape_cast %333 : vector<1x8x128xf32> to vector<8x128xf32>
    %cst_88 = arith.constant dense<0.000000e+00> : vector<8x128xf32>
    %335 = tpu.matmul %320, %3, %cst_88 {dimension_numbers = #tpu.dot_dimension_numbers<[1], [0], [0], [1], [0, 0, 1, 1], [], []>} : vector<8x32xf32>, vector<32x128xf32>, vector<8x128xf32> -> vector<8x128xf32>
    %336 = arith.addf %334, %335 : vector<8x128xf32>
    %337 = math.tanh %336 : vector<8x128xf32>
    %338 = arith.negf %336 : vector<8x128xf32>
    %339 = math.exp %338 : vector<8x128xf32>
    %cst_89 = arith.constant 1.000000e+00 : f32
    %340 = vector.broadcast %cst_89 : f32 to vector<8x128xf32>
    %341 = arith.addf %340, %339 : vector<8x128xf32>
    %342 = arith.divf %340, %341 : vector<8x128xf32>
    %343 = arith.select %9, %337, %342 : vector<8x128xi1>, vector<8x128xf32>
    %344 = vector.extract_strided_slice %343 {offsets = [0, 0], sizes = [8, 32], strides = [1, 1]} : vector<8x128xf32> to vector<8x32xf32>
    %345 = vector.extract_strided_slice %343 {offsets = [0, 32], sizes = [8, 32], strides = [1, 1]} : vector<8x128xf32> to vector<8x32xf32>
    %346 = vector.extract_strided_slice %343 {offsets = [0, 64], sizes = [8, 32], strides = [1, 1]} : vector<8x128xf32> to vector<8x32xf32>
    %347 = vector.extract_strided_slice %343 {offsets = [0, 96], sizes = [8, 32], strides = [1, 1]} : vector<8x128xf32> to vector<8x32xf32>
    %348 = arith.mulf %345, %323 : vector<8x32xf32>
    %349 = arith.mulf %344, %346 : vector<8x32xf32>
    %350 = arith.addf %348, %349 : vector<8x32xf32>
    %351 = math.tanh %350 : vector<8x32xf32>
    %352 = arith.mulf %347, %351 : vector<8x32xf32>
    %353 = arith.index_cast %c8_i32 : i32 to index
    %c0_90 = arith.constant 0 : index
    %c0_91 = arith.constant 0 : index
    %354 = vector.load %arg2[%353, %c0_90, %c0_91] : memref<32x8x1xf32, #tpu.memory_space<vmem>>, vector<1x8x1xf32>
    %355 = vector.shape_cast %354 : vector<1x8x1xf32> to vector<8x1xf32>
    %cst_92 = arith.constant 5.000000e-01 : f32
    %356 = vector.broadcast %cst_92 : f32 to vector<8x1xf32>
    %357 = arith.cmpf ogt, %355, %356 : vector<8x1xf32>
    %358 = vector.shape_cast %357 : vector<8x1xi1> to vector<8x1xi1>
    %359 = vector.broadcast %358 : vector<8x1xi1> to vector<8x32xi1>
    %360 = arith.select %359, %352, %320 : vector<8x32xi1>, vector<8x32xf32>
    %361 = vector.shape_cast %357 : vector<8x1xi1> to vector<8x1xi1>
    %362 = vector.broadcast %361 : vector<8x1xi1> to vector<8x32xi1>
    %363 = arith.select %362, %350, %323 : vector<8x32xi1>, vector<8x32xf32>
    %cst_93 = arith.constant 0.000000e+00 : f32
    %364 = vector.shape_cast %357 : vector<8x1xi1> to vector<8x1xi1>
    %365 = vector.broadcast %364 : vector<8x1xi1> to vector<8x32xi1>
    %366 = vector.broadcast %cst_93 : f32 to vector<8x32xf32>
    %367 = arith.select %365, %352, %366 : vector<8x32xi1>, vector<8x32xf32>
    %368 = arith.index_cast %c8_i32 : i32 to index
    %c0_94 = arith.constant 0 : index
    %c0_95 = arith.constant 0 : index
    %369 = vector.load %arg4[%368, %c0_94, %c0_95] : memref<32x8x32xf32, #tpu.memory_space<vmem>>, vector<1x8x32xf32>
    %370 = vector.shape_cast %369 : vector<1x8x32xf32> to vector<8x32xf32>
    %371 = vector.shape_cast %367 : vector<8x32xf32> to vector<1x8x32xf32>
    tpu.vector_store %arg4[%368, %c0_94, %c0_95], %371 {strides = array<i32>} : memref<32x8x32xf32, #tpu.memory_space<vmem>>, vector<1x8x32xf32>,
    %c9_i32 = arith.constant 9 : i32
    %372 = arith.index_cast %c9_i32 : i32 to index
    %c0_96 = arith.constant 0 : index
    %c0_97 = arith.constant 0 : index
    %373 = vector.load %arg1[%372, %c0_96, %c0_97] : memref<32x8x128xf32, #tpu.memory_space<vmem>>, vector<1x8x128xf32>
    %374 = vector.shape_cast %373 : vector<1x8x128xf32> to vector<8x128xf32>
    %cst_98 = arith.constant dense<0.000000e+00> : vector<8x128xf32>
    %375 = tpu.matmul %360, %3, %cst_98 {dimension_numbers = #tpu.dot_dimension_numbers<[1], [0], [0], [1], [0, 0, 1, 1], [], []>} : vector<8x32xf32>, vector<32x128xf32>, vector<8x128xf32> -> vector<8x128xf32>
    %376 = arith.addf %374, %375 : vector<8x128xf32>
    %377 = math.tanh %376 : vector<8x128xf32>
    %378 = arith.negf %376 : vector<8x128xf32>
    %379 = math.exp %378 : vector<8x128xf32>
    %cst_99 = arith.constant 1.000000e+00 : f32
    %380 = vector.broadcast %cst_99 : f32 to vector<8x128xf32>
    %381 = arith.addf %380, %379 : vector<8x128xf32>
    %382 = arith.divf %380, %381 : vector<8x128xf32>
    %383 = arith.select %9, %377, %382 : vector<8x128xi1>, vector<8x128xf32>
    %384 = vector.extract_strided_slice %383 {offsets = [0, 0], sizes = [8, 32], strides = [1, 1]} : vector<8x128xf32> to vector<8x32xf32>
    %385 = vector.extract_strided_slice %383 {offsets = [0, 32], sizes = [8, 32], strides = [1, 1]} : vector<8x128xf32> to vector<8x32xf32>
    %386 = vector.extract_strided_slice %383 {offsets = [0, 64], sizes = [8, 32], strides = [1, 1]} : vector<8x128xf32> to vector<8x32xf32>
    %387 = vector.extract_strided_slice %383 {offsets = [0, 96], sizes = [8, 32], strides = [1, 1]} : vector<8x128xf32> to vector<8x32xf32>
    %388 = arith.mulf %385, %363 : vector<8x32xf32>
    %389 = arith.mulf %384, %386 : vector<8x32xf32>
    %390 = arith.addf %388, %389 : vector<8x32xf32>
    %391 = math.tanh %390 : vector<8x32xf32>
    %392 = arith.mulf %387, %391 : vector<8x32xf32>
    %393 = arith.index_cast %c9_i32 : i32 to index
    %c0_100 = arith.constant 0 : index
    %c0_101 = arith.constant 0 : index
    %394 = vector.load %arg2[%393, %c0_100, %c0_101] : memref<32x8x1xf32, #tpu.memory_space<vmem>>, vector<1x8x1xf32>
    %395 = vector.shape_cast %394 : vector<1x8x1xf32> to vector<8x1xf32>
    %cst_102 = arith.constant 5.000000e-01 : f32
    %396 = vector.broadcast %cst_102 : f32 to vector<8x1xf32>
    %397 = arith.cmpf ogt, %395, %396 : vector<8x1xf32>
    %398 = vector.shape_cast %397 : vector<8x1xi1> to vector<8x1xi1>
    %399 = vector.broadcast %398 : vector<8x1xi1> to vector<8x32xi1>
    %400 = arith.select %399, %392, %360 : vector<8x32xi1>, vector<8x32xf32>
    %401 = vector.shape_cast %397 : vector<8x1xi1> to vector<8x1xi1>
    %402 = vector.broadcast %401 : vector<8x1xi1> to vector<8x32xi1>
    %403 = arith.select %402, %390, %363 : vector<8x32xi1>, vector<8x32xf32>
    %cst_103 = arith.constant 0.000000e+00 : f32
    %404 = vector.shape_cast %397 : vector<8x1xi1> to vector<8x1xi1>
    %405 = vector.broadcast %404 : vector<8x1xi1> to vector<8x32xi1>
    %406 = vector.broadcast %cst_103 : f32 to vector<8x32xf32>
    %407 = arith.select %405, %392, %406 : vector<8x32xi1>, vector<8x32xf32>
    %408 = arith.index_cast %c9_i32 : i32 to index
    %c0_104 = arith.constant 0 : index
    %c0_105 = arith.constant 0 : index
    %409 = vector.load %arg4[%408, %c0_104, %c0_105] : memref<32x8x32xf32, #tpu.memory_space<vmem>>, vector<1x8x32xf32>
    %410 = vector.shape_cast %409 : vector<1x8x32xf32> to vector<8x32xf32>
    %411 = vector.shape_cast %407 : vector<8x32xf32> to vector<1x8x32xf32>
    tpu.vector_store %arg4[%408, %c0_104, %c0_105], %411 {strides = array<i32>} : memref<32x8x32xf32, #tpu.memory_space<vmem>>, vector<1x8x32xf32>,
    %c10_i32 = arith.constant 10 : i32
    %412 = arith.index_cast %c10_i32 : i32 to index
    %c0_106 = arith.constant 0 : index
    %c0_107 = arith.constant 0 : index
    %413 = vector.load %arg1[%412, %c0_106, %c0_107] : memref<32x8x128xf32, #tpu.memory_space<vmem>>, vector<1x8x128xf32>
    %414 = vector.shape_cast %413 : vector<1x8x128xf32> to vector<8x128xf32>
    %cst_108 = arith.constant dense<0.000000e+00> : vector<8x128xf32>
    %415 = tpu.matmul %400, %3, %cst_108 {dimension_numbers = #tpu.dot_dimension_numbers<[1], [0], [0], [1], [0, 0, 1, 1], [], []>} : vector<8x32xf32>, vector<32x128xf32>, vector<8x128xf32> -> vector<8x128xf32>
    %416 = arith.addf %414, %415 : vector<8x128xf32>
    %417 = math.tanh %416 : vector<8x128xf32>
    %418 = arith.negf %416 : vector<8x128xf32>
    %419 = math.exp %418 : vector<8x128xf32>
    %cst_109 = arith.constant 1.000000e+00 : f32
    %420 = vector.broadcast %cst_109 : f32 to vector<8x128xf32>
    %421 = arith.addf %420, %419 : vector<8x128xf32>
    %422 = arith.divf %420, %421 : vector<8x128xf32>
    %423 = arith.select %9, %417, %422 : vector<8x128xi1>, vector<8x128xf32>
    %424 = vector.extract_strided_slice %423 {offsets = [0, 0], sizes = [8, 32], strides = [1, 1]} : vector<8x128xf32> to vector<8x32xf32>
    %425 = vector.extract_strided_slice %423 {offsets = [0, 32], sizes = [8, 32], strides = [1, 1]} : vector<8x128xf32> to vector<8x32xf32>
    %426 = vector.extract_strided_slice %423 {offsets = [0, 64], sizes = [8, 32], strides = [1, 1]} : vector<8x128xf32> to vector<8x32xf32>
    %427 = vector.extract_strided_slice %423 {offsets = [0, 96], sizes = [8, 32], strides = [1, 1]} : vector<8x128xf32> to vector<8x32xf32>
    %428 = arith.mulf %425, %403 : vector<8x32xf32>
    %429 = arith.mulf %424, %426 : vector<8x32xf32>
    %430 = arith.addf %428, %429 : vector<8x32xf32>
    %431 = math.tanh %430 : vector<8x32xf32>
    %432 = arith.mulf %427, %431 : vector<8x32xf32>
    %433 = arith.index_cast %c10_i32 : i32 to index
    %c0_110 = arith.constant 0 : index
    %c0_111 = arith.constant 0 : index
    %434 = vector.load %arg2[%433, %c0_110, %c0_111] : memref<32x8x1xf32, #tpu.memory_space<vmem>>, vector<1x8x1xf32>
    %435 = vector.shape_cast %434 : vector<1x8x1xf32> to vector<8x1xf32>
    %cst_112 = arith.constant 5.000000e-01 : f32
    %436 = vector.broadcast %cst_112 : f32 to vector<8x1xf32>
    %437 = arith.cmpf ogt, %435, %436 : vector<8x1xf32>
    %438 = vector.shape_cast %437 : vector<8x1xi1> to vector<8x1xi1>
    %439 = vector.broadcast %438 : vector<8x1xi1> to vector<8x32xi1>
    %440 = arith.select %439, %432, %400 : vector<8x32xi1>, vector<8x32xf32>
    %441 = vector.shape_cast %437 : vector<8x1xi1> to vector<8x1xi1>
    %442 = vector.broadcast %441 : vector<8x1xi1> to vector<8x32xi1>
    %443 = arith.select %442, %430, %403 : vector<8x32xi1>, vector<8x32xf32>
    %cst_113 = arith.constant 0.000000e+00 : f32
    %444 = vector.shape_cast %437 : vector<8x1xi1> to vector<8x1xi1>
    %445 = vector.broadcast %444 : vector<8x1xi1> to vector<8x32xi1>
    %446 = vector.broadcast %cst_113 : f32 to vector<8x32xf32>
    %447 = arith.select %445, %432, %446 : vector<8x32xi1>, vector<8x32xf32>
    %448 = arith.index_cast %c10_i32 : i32 to index
    %c0_114 = arith.constant 0 : index
    %c0_115 = arith.constant 0 : index
    %449 = vector.load %arg4[%448, %c0_114, %c0_115] : memref<32x8x32xf32, #tpu.memory_space<vmem>>, vector<1x8x32xf32>
    %450 = vector.shape_cast %449 : vector<1x8x32xf32> to vector<8x32xf32>
    %451 = vector.shape_cast %447 : vector<8x32xf32> to vector<1x8x32xf32>
    tpu.vector_store %arg4[%448, %c0_114, %c0_115], %451 {strides = array<i32>} : memref<32x8x32xf32, #tpu.memory_space<vmem>>, vector<1x8x32xf32>,
    %c11_i32 = arith.constant 11 : i32
    %452 = arith.index_cast %c11_i32 : i32 to index
    %c0_116 = arith.constant 0 : index
    %c0_117 = arith.constant 0 : index
    %453 = vector.load %arg1[%452, %c0_116, %c0_117] : memref<32x8x128xf32, #tpu.memory_space<vmem>>, vector<1x8x128xf32>
    %454 = vector.shape_cast %453 : vector<1x8x128xf32> to vector<8x128xf32>
    %cst_118 = arith.constant dense<0.000000e+00> : vector<8x128xf32>
    %455 = tpu.matmul %440, %3, %cst_118 {dimension_numbers = #tpu.dot_dimension_numbers<[1], [0], [0], [1], [0, 0, 1, 1], [], []>} : vector<8x32xf32>, vector<32x128xf32>, vector<8x128xf32> -> vector<8x128xf32>
    %456 = arith.addf %454, %455 : vector<8x128xf32>
    %457 = math.tanh %456 : vector<8x128xf32>
    %458 = arith.negf %456 : vector<8x128xf32>
    %459 = math.exp %458 : vector<8x128xf32>
    %cst_119 = arith.constant 1.000000e+00 : f32
    %460 = vector.broadcast %cst_119 : f32 to vector<8x128xf32>
    %461 = arith.addf %460, %459 : vector<8x128xf32>
    %462 = arith.divf %460, %461 : vector<8x128xf32>
    %463 = arith.select %9, %457, %462 : vector<8x128xi1>, vector<8x128xf32>
    %464 = vector.extract_strided_slice %463 {offsets = [0, 0], sizes = [8, 32], strides = [1, 1]} : vector<8x128xf32> to vector<8x32xf32>
    %465 = vector.extract_strided_slice %463 {offsets = [0, 32], sizes = [8, 32], strides = [1, 1]} : vector<8x128xf32> to vector<8x32xf32>
    %466 = vector.extract_strided_slice %463 {offsets = [0, 64], sizes = [8, 32], strides = [1, 1]} : vector<8x128xf32> to vector<8x32xf32>
    %467 = vector.extract_strided_slice %463 {offsets = [0, 96], sizes = [8, 32], strides = [1, 1]} : vector<8x128xf32> to vector<8x32xf32>
    %468 = arith.mulf %465, %443 : vector<8x32xf32>
    %469 = arith.mulf %464, %466 : vector<8x32xf32>
    %470 = arith.addf %468, %469 : vector<8x32xf32>
    %471 = math.tanh %470 : vector<8x32xf32>
    %472 = arith.mulf %467, %471 : vector<8x32xf32>
    %473 = arith.index_cast %c11_i32 : i32 to index
    %c0_120 = arith.constant 0 : index
    %c0_121 = arith.constant 0 : index
    %474 = vector.load %arg2[%473, %c0_120, %c0_121] : memref<32x8x1xf32, #tpu.memory_space<vmem>>, vector<1x8x1xf32>
    %475 = vector.shape_cast %474 : vector<1x8x1xf32> to vector<8x1xf32>
    %cst_122 = arith.constant 5.000000e-01 : f32
    %476 = vector.broadcast %cst_122 : f32 to vector<8x1xf32>
    %477 = arith.cmpf ogt, %475, %476 : vector<8x1xf32>
    %478 = vector.shape_cast %477 : vector<8x1xi1> to vector<8x1xi1>
    %479 = vector.broadcast %478 : vector<8x1xi1> to vector<8x32xi1>
    %480 = arith.select %479, %472, %440 : vector<8x32xi1>, vector<8x32xf32>
    %481 = vector.shape_cast %477 : vector<8x1xi1> to vector<8x1xi1>
    %482 = vector.broadcast %481 : vector<8x1xi1> to vector<8x32xi1>
    %483 = arith.select %482, %470, %443 : vector<8x32xi1>, vector<8x32xf32>
    %cst_123 = arith.constant 0.000000e+00 : f32
    %484 = vector.shape_cast %477 : vector<8x1xi1> to vector<8x1xi1>
    %485 = vector.broadcast %484 : vector<8x1xi1> to vector<8x32xi1>
    %486 = vector.broadcast %cst_123 : f32 to vector<8x32xf32>
    %487 = arith.select %485, %472, %486 : vector<8x32xi1>, vector<8x32xf32>
    %488 = arith.index_cast %c11_i32 : i32 to index
    %c0_124 = arith.constant 0 : index
    %c0_125 = arith.constant 0 : index
    %489 = vector.load %arg4[%488, %c0_124, %c0_125] : memref<32x8x32xf32, #tpu.memory_space<vmem>>, vector<1x8x32xf32>
    %490 = vector.shape_cast %489 : vector<1x8x32xf32> to vector<8x32xf32>
    %491 = vector.shape_cast %487 : vector<8x32xf32> to vector<1x8x32xf32>
    tpu.vector_store %arg4[%488, %c0_124, %c0_125], %491 {strides = array<i32>} : memref<32x8x32xf32, #tpu.memory_space<vmem>>, vector<1x8x32xf32>,
    %c12_i32 = arith.constant 12 : i32
    %492 = arith.index_cast %c12_i32 : i32 to index
    %c0_126 = arith.constant 0 : index
    %c0_127 = arith.constant 0 : index
    %493 = vector.load %arg1[%492, %c0_126, %c0_127] : memref<32x8x128xf32, #tpu.memory_space<vmem>>, vector<1x8x128xf32>
    %494 = vector.shape_cast %493 : vector<1x8x128xf32> to vector<8x128xf32>
    %cst_128 = arith.constant dense<0.000000e+00> : vector<8x128xf32>
    %495 = tpu.matmul %480, %3, %cst_128 {dimension_numbers = #tpu.dot_dimension_numbers<[1], [0], [0], [1], [0, 0, 1, 1], [], []>} : vector<8x32xf32>, vector<32x128xf32>, vector<8x128xf32> -> vector<8x128xf32>
    %496 = arith.addf %494, %495 : vector<8x128xf32>
    %497 = math.tanh %496 : vector<8x128xf32>
    %498 = arith.negf %496 : vector<8x128xf32>
    %499 = math.exp %498 : vector<8x128xf32>
    %cst_129 = arith.constant 1.000000e+00 : f32
    %500 = vector.broadcast %cst_129 : f32 to vector<8x128xf32>
    %501 = arith.addf %500, %499 : vector<8x128xf32>
    %502 = arith.divf %500, %501 : vector<8x128xf32>
    %503 = arith.select %9, %497, %502 : vector<8x128xi1>, vector<8x128xf32>
    %504 = vector.extract_strided_slice %503 {offsets = [0, 0], sizes = [8, 32], strides = [1, 1]} : vector<8x128xf32> to vector<8x32xf32>
    %505 = vector.extract_strided_slice %503 {offsets = [0, 32], sizes = [8, 32], strides = [1, 1]} : vector<8x128xf32> to vector<8x32xf32>
    %506 = vector.extract_strided_slice %503 {offsets = [0, 64], sizes = [8, 32], strides = [1, 1]} : vector<8x128xf32> to vector<8x32xf32>
    %507 = vector.extract_strided_slice %503 {offsets = [0, 96], sizes = [8, 32], strides = [1, 1]} : vector<8x128xf32> to vector<8x32xf32>
    %508 = arith.mulf %505, %483 : vector<8x32xf32>
    %509 = arith.mulf %504, %506 : vector<8x32xf32>
    %510 = arith.addf %508, %509 : vector<8x32xf32>
    %511 = math.tanh %510 : vector<8x32xf32>
    %512 = arith.mulf %507, %511 : vector<8x32xf32>
    %513 = arith.index_cast %c12_i32 : i32 to index
    %c0_130 = arith.constant 0 : index
    %c0_131 = arith.constant 0 : index
    %514 = vector.load %arg2[%513, %c0_130, %c0_131] : memref<32x8x1xf32, #tpu.memory_space<vmem>>, vector<1x8x1xf32>
    %515 = vector.shape_cast %514 : vector<1x8x1xf32> to vector<8x1xf32>
    %cst_132 = arith.constant 5.000000e-01 : f32
    %516 = vector.broadcast %cst_132 : f32 to vector<8x1xf32>
    %517 = arith.cmpf ogt, %515, %516 : vector<8x1xf32>
    %518 = vector.shape_cast %517 : vector<8x1xi1> to vector<8x1xi1>
    %519 = vector.broadcast %518 : vector<8x1xi1> to vector<8x32xi1>
    %520 = arith.select %519, %512, %480 : vector<8x32xi1>, vector<8x32xf32>
    %521 = vector.shape_cast %517 : vector<8x1xi1> to vector<8x1xi1>
    %522 = vector.broadcast %521 : vector<8x1xi1> to vector<8x32xi1>
    %523 = arith.select %522, %510, %483 : vector<8x32xi1>, vector<8x32xf32>
    %cst_133 = arith.constant 0.000000e+00 : f32
    %524 = vector.shape_cast %517 : vector<8x1xi1> to vector<8x1xi1>
    %525 = vector.broadcast %524 : vector<8x1xi1> to vector<8x32xi1>
    %526 = vector.broadcast %cst_133 : f32 to vector<8x32xf32>
    %527 = arith.select %525, %512, %526 : vector<8x32xi1>, vector<8x32xf32>
    %528 = arith.index_cast %c12_i32 : i32 to index
    %c0_134 = arith.constant 0 : index
    %c0_135 = arith.constant 0 : index
    %529 = vector.load %arg4[%528, %c0_134, %c0_135] : memref<32x8x32xf32, #tpu.memory_space<vmem>>, vector<1x8x32xf32>
    %530 = vector.shape_cast %529 : vector<1x8x32xf32> to vector<8x32xf32>
    %531 = vector.shape_cast %527 : vector<8x32xf32> to vector<1x8x32xf32>
    tpu.vector_store %arg4[%528, %c0_134, %c0_135], %531 {strides = array<i32>} : memref<32x8x32xf32, #tpu.memory_space<vmem>>, vector<1x8x32xf32>,
    %c13_i32 = arith.constant 13 : i32
    %532 = arith.index_cast %c13_i32 : i32 to index
    %c0_136 = arith.constant 0 : index
    %c0_137 = arith.constant 0 : index
    %533 = vector.load %arg1[%532, %c0_136, %c0_137] : memref<32x8x128xf32, #tpu.memory_space<vmem>>, vector<1x8x128xf32>
    %534 = vector.shape_cast %533 : vector<1x8x128xf32> to vector<8x128xf32>
    %cst_138 = arith.constant dense<0.000000e+00> : vector<8x128xf32>
    %535 = tpu.matmul %520, %3, %cst_138 {dimension_numbers = #tpu.dot_dimension_numbers<[1], [0], [0], [1], [0, 0, 1, 1], [], []>} : vector<8x32xf32>, vector<32x128xf32>, vector<8x128xf32> -> vector<8x128xf32>
    %536 = arith.addf %534, %535 : vector<8x128xf32>
    %537 = math.tanh %536 : vector<8x128xf32>
    %538 = arith.negf %536 : vector<8x128xf32>
    %539 = math.exp %538 : vector<8x128xf32>
    %cst_139 = arith.constant 1.000000e+00 : f32
    %540 = vector.broadcast %cst_139 : f32 to vector<8x128xf32>
    %541 = arith.addf %540, %539 : vector<8x128xf32>
    %542 = arith.divf %540, %541 : vector<8x128xf32>
    %543 = arith.select %9, %537, %542 : vector<8x128xi1>, vector<8x128xf32>
    %544 = vector.extract_strided_slice %543 {offsets = [0, 0], sizes = [8, 32], strides = [1, 1]} : vector<8x128xf32> to vector<8x32xf32>
    %545 = vector.extract_strided_slice %543 {offsets = [0, 32], sizes = [8, 32], strides = [1, 1]} : vector<8x128xf32> to vector<8x32xf32>
    %546 = vector.extract_strided_slice %543 {offsets = [0, 64], sizes = [8, 32], strides = [1, 1]} : vector<8x128xf32> to vector<8x32xf32>
    %547 = vector.extract_strided_slice %543 {offsets = [0, 96], sizes = [8, 32], strides = [1, 1]} : vector<8x128xf32> to vector<8x32xf32>
    %548 = arith.mulf %545, %523 : vector<8x32xf32>
    %549 = arith.mulf %544, %546 : vector<8x32xf32>
    %550 = arith.addf %548, %549 : vector<8x32xf32>
    %551 = math.tanh %550 : vector<8x32xf32>
    %552 = arith.mulf %547, %551 : vector<8x32xf32>
    %553 = arith.index_cast %c13_i32 : i32 to index
    %c0_140 = arith.constant 0 : index
    %c0_141 = arith.constant 0 : index
    %554 = vector.load %arg2[%553, %c0_140, %c0_141] : memref<32x8x1xf32, #tpu.memory_space<vmem>>, vector<1x8x1xf32>
    %555 = vector.shape_cast %554 : vector<1x8x1xf32> to vector<8x1xf32>
    %cst_142 = arith.constant 5.000000e-01 : f32
    %556 = vector.broadcast %cst_142 : f32 to vector<8x1xf32>
    %557 = arith.cmpf ogt, %555, %556 : vector<8x1xf32>
    %558 = vector.shape_cast %557 : vector<8x1xi1> to vector<8x1xi1>
    %559 = vector.broadcast %558 : vector<8x1xi1> to vector<8x32xi1>
    %560 = arith.select %559, %552, %520 : vector<8x32xi1>, vector<8x32xf32>
    %561 = vector.shape_cast %557 : vector<8x1xi1> to vector<8x1xi1>
    %562 = vector.broadcast %561 : vector<8x1xi1> to vector<8x32xi1>
    %563 = arith.select %562, %550, %523 : vector<8x32xi1>, vector<8x32xf32>
    %cst_143 = arith.constant 0.000000e+00 : f32
    %564 = vector.shape_cast %557 : vector<8x1xi1> to vector<8x1xi1>
    %565 = vector.broadcast %564 : vector<8x1xi1> to vector<8x32xi1>
    %566 = vector.broadcast %cst_143 : f32 to vector<8x32xf32>
    %567 = arith.select %565, %552, %566 : vector<8x32xi1>, vector<8x32xf32>
    %568 = arith.index_cast %c13_i32 : i32 to index
    %c0_144 = arith.constant 0 : index
    %c0_145 = arith.constant 0 : index
    %569 = vector.load %arg4[%568, %c0_144, %c0_145] : memref<32x8x32xf32, #tpu.memory_space<vmem>>, vector<1x8x32xf32>
    %570 = vector.shape_cast %569 : vector<1x8x32xf32> to vector<8x32xf32>
    %571 = vector.shape_cast %567 : vector<8x32xf32> to vector<1x8x32xf32>
    tpu.vector_store %arg4[%568, %c0_144, %c0_145], %571 {strides = array<i32>} : memref<32x8x32xf32, #tpu.memory_space<vmem>>, vector<1x8x32xf32>,
    %c14_i32 = arith.constant 14 : i32
    %572 = arith.index_cast %c14_i32 : i32 to index
    %c0_146 = arith.constant 0 : index
    %c0_147 = arith.constant 0 : index
    %573 = vector.load %arg1[%572, %c0_146, %c0_147] : memref<32x8x128xf32, #tpu.memory_space<vmem>>, vector<1x8x128xf32>
    %574 = vector.shape_cast %573 : vector<1x8x128xf32> to vector<8x128xf32>
    %cst_148 = arith.constant dense<0.000000e+00> : vector<8x128xf32>
    %575 = tpu.matmul %560, %3, %cst_148 {dimension_numbers = #tpu.dot_dimension_numbers<[1], [0], [0], [1], [0, 0, 1, 1], [], []>} : vector<8x32xf32>, vector<32x128xf32>, vector<8x128xf32> -> vector<8x128xf32>
    %576 = arith.addf %574, %575 : vector<8x128xf32>
    %577 = math.tanh %576 : vector<8x128xf32>
    %578 = arith.negf %576 : vector<8x128xf32>
    %579 = math.exp %578 : vector<8x128xf32>
    %cst_149 = arith.constant 1.000000e+00 : f32
    %580 = vector.broadcast %cst_149 : f32 to vector<8x128xf32>
    %581 = arith.addf %580, %579 : vector<8x128xf32>
    %582 = arith.divf %580, %581 : vector<8x128xf32>
    %583 = arith.select %9, %577, %582 : vector<8x128xi1>, vector<8x128xf32>
    %584 = vector.extract_strided_slice %583 {offsets = [0, 0], sizes = [8, 32], strides = [1, 1]} : vector<8x128xf32> to vector<8x32xf32>
    %585 = vector.extract_strided_slice %583 {offsets = [0, 32], sizes = [8, 32], strides = [1, 1]} : vector<8x128xf32> to vector<8x32xf32>
    %586 = vector.extract_strided_slice %583 {offsets = [0, 64], sizes = [8, 32], strides = [1, 1]} : vector<8x128xf32> to vector<8x32xf32>
    %587 = vector.extract_strided_slice %583 {offsets = [0, 96], sizes = [8, 32], strides = [1, 1]} : vector<8x128xf32> to vector<8x32xf32>
    %588 = arith.mulf %585, %563 : vector<8x32xf32>
    %589 = arith.mulf %584, %586 : vector<8x32xf32>
    %590 = arith.addf %588, %589 : vector<8x32xf32>
    %591 = math.tanh %590 : vector<8x32xf32>
    %592 = arith.mulf %587, %591 : vector<8x32xf32>
    %593 = arith.index_cast %c14_i32 : i32 to index
    %c0_150 = arith.constant 0 : index
    %c0_151 = arith.constant 0 : index
    %594 = vector.load %arg2[%593, %c0_150, %c0_151] : memref<32x8x1xf32, #tpu.memory_space<vmem>>, vector<1x8x1xf32>
    %595 = vector.shape_cast %594 : vector<1x8x1xf32> to vector<8x1xf32>
    %cst_152 = arith.constant 5.000000e-01 : f32
    %596 = vector.broadcast %cst_152 : f32 to vector<8x1xf32>
    %597 = arith.cmpf ogt, %595, %596 : vector<8x1xf32>
    %598 = vector.shape_cast %597 : vector<8x1xi1> to vector<8x1xi1>
    %599 = vector.broadcast %598 : vector<8x1xi1> to vector<8x32xi1>
    %600 = arith.select %599, %592, %560 : vector<8x32xi1>, vector<8x32xf32>
    %601 = vector.shape_cast %597 : vector<8x1xi1> to vector<8x1xi1>
    %602 = vector.broadcast %601 : vector<8x1xi1> to vector<8x32xi1>
    %603 = arith.select %602, %590, %563 : vector<8x32xi1>, vector<8x32xf32>
    %cst_153 = arith.constant 0.000000e+00 : f32
    %604 = vector.shape_cast %597 : vector<8x1xi1> to vector<8x1xi1>
    %605 = vector.broadcast %604 : vector<8x1xi1> to vector<8x32xi1>
    %606 = vector.broadcast %cst_153 : f32 to vector<8x32xf32>
    %607 = arith.select %605, %592, %606 : vector<8x32xi1>, vector<8x32xf32>
    %608 = arith.index_cast %c14_i32 : i32 to index
    %c0_154 = arith.constant 0 : index
    %c0_155 = arith.constant 0 : index
    %609 = vector.load %arg4[%608, %c0_154, %c0_155] : memref<32x8x32xf32, #tpu.memory_space<vmem>>, vector<1x8x32xf32>
    %610 = vector.shape_cast %609 : vector<1x8x32xf32> to vector<8x32xf32>
    %611 = vector.shape_cast %607 : vector<8x32xf32> to vector<1x8x32xf32>
    tpu.vector_store %arg4[%608, %c0_154, %c0_155], %611 {strides = array<i32>} : memref<32x8x32xf32, #tpu.memory_space<vmem>>, vector<1x8x32xf32>,
    %c15_i32 = arith.constant 15 : i32
    %612 = arith.index_cast %c15_i32 : i32 to index
    %c0_156 = arith.constant 0 : index
    %c0_157 = arith.constant 0 : index
    %613 = vector.load %arg1[%612, %c0_156, %c0_157] : memref<32x8x128xf32, #tpu.memory_space<vmem>>, vector<1x8x128xf32>
    %614 = vector.shape_cast %613 : vector<1x8x128xf32> to vector<8x128xf32>
    %cst_158 = arith.constant dense<0.000000e+00> : vector<8x128xf32>
    %615 = tpu.matmul %600, %3, %cst_158 {dimension_numbers = #tpu.dot_dimension_numbers<[1], [0], [0], [1], [0, 0, 1, 1], [], []>} : vector<8x32xf32>, vector<32x128xf32>, vector<8x128xf32> -> vector<8x128xf32>
    %616 = arith.addf %614, %615 : vector<8x128xf32>
    %617 = math.tanh %616 : vector<8x128xf32>
    %618 = arith.negf %616 : vector<8x128xf32>
    %619 = math.exp %618 : vector<8x128xf32>
    %cst_159 = arith.constant 1.000000e+00 : f32
    %620 = vector.broadcast %cst_159 : f32 to vector<8x128xf32>
    %621 = arith.addf %620, %619 : vector<8x128xf32>
    %622 = arith.divf %620, %621 : vector<8x128xf32>
    %623 = arith.select %9, %617, %622 : vector<8x128xi1>, vector<8x128xf32>
    %624 = vector.extract_strided_slice %623 {offsets = [0, 0], sizes = [8, 32], strides = [1, 1]} : vector<8x128xf32> to vector<8x32xf32>
    %625 = vector.extract_strided_slice %623 {offsets = [0, 32], sizes = [8, 32], strides = [1, 1]} : vector<8x128xf32> to vector<8x32xf32>
    %626 = vector.extract_strided_slice %623 {offsets = [0, 64], sizes = [8, 32], strides = [1, 1]} : vector<8x128xf32> to vector<8x32xf32>
    %627 = vector.extract_strided_slice %623 {offsets = [0, 96], sizes = [8, 32], strides = [1, 1]} : vector<8x128xf32> to vector<8x32xf32>
    %628 = arith.mulf %625, %603 : vector<8x32xf32>
    %629 = arith.mulf %624, %626 : vector<8x32xf32>
    %630 = arith.addf %628, %629 : vector<8x32xf32>
    %631 = math.tanh %630 : vector<8x32xf32>
    %632 = arith.mulf %627, %631 : vector<8x32xf32>
    %633 = arith.index_cast %c15_i32 : i32 to index
    %c0_160 = arith.constant 0 : index
    %c0_161 = arith.constant 0 : index
    %634 = vector.load %arg2[%633, %c0_160, %c0_161] : memref<32x8x1xf32, #tpu.memory_space<vmem>>, vector<1x8x1xf32>
    %635 = vector.shape_cast %634 : vector<1x8x1xf32> to vector<8x1xf32>
    %cst_162 = arith.constant 5.000000e-01 : f32
    %636 = vector.broadcast %cst_162 : f32 to vector<8x1xf32>
    %637 = arith.cmpf ogt, %635, %636 : vector<8x1xf32>
    %638 = vector.shape_cast %637 : vector<8x1xi1> to vector<8x1xi1>
    %639 = vector.broadcast %638 : vector<8x1xi1> to vector<8x32xi1>
    %640 = arith.select %639, %632, %600 : vector<8x32xi1>, vector<8x32xf32>
    %641 = vector.shape_cast %637 : vector<8x1xi1> to vector<8x1xi1>
    %642 = vector.broadcast %641 : vector<8x1xi1> to vector<8x32xi1>
    %643 = arith.select %642, %630, %603 : vector<8x32xi1>, vector<8x32xf32>
    %cst_163 = arith.constant 0.000000e+00 : f32
    %644 = vector.shape_cast %637 : vector<8x1xi1> to vector<8x1xi1>
    %645 = vector.broadcast %644 : vector<8x1xi1> to vector<8x32xi1>
    %646 = vector.broadcast %cst_163 : f32 to vector<8x32xf32>
    %647 = arith.select %645, %632, %646 : vector<8x32xi1>, vector<8x32xf32>
    %648 = arith.index_cast %c15_i32 : i32 to index
    %c0_164 = arith.constant 0 : index
    %c0_165 = arith.constant 0 : index
    %649 = vector.load %arg4[%648, %c0_164, %c0_165] : memref<32x8x32xf32, #tpu.memory_space<vmem>>, vector<1x8x32xf32>
    %650 = vector.shape_cast %649 : vector<1x8x32xf32> to vector<8x32xf32>
    %651 = vector.shape_cast %647 : vector<8x32xf32> to vector<1x8x32xf32>
    tpu.vector_store %arg4[%648, %c0_164, %c0_165], %651 {strides = array<i32>} : memref<32x8x32xf32, #tpu.memory_space<vmem>>, vector<1x8x32xf32>,
    %c16_i32 = arith.constant 16 : i32
    %652 = arith.index_cast %c16_i32 : i32 to index
    %c0_166 = arith.constant 0 : index
    %c0_167 = arith.constant 0 : index
    %653 = vector.load %arg1[%652, %c0_166, %c0_167] : memref<32x8x128xf32, #tpu.memory_space<vmem>>, vector<1x8x128xf32>
    %654 = vector.shape_cast %653 : vector<1x8x128xf32> to vector<8x128xf32>
    %cst_168 = arith.constant dense<0.000000e+00> : vector<8x128xf32>
    %655 = tpu.matmul %640, %3, %cst_168 {dimension_numbers = #tpu.dot_dimension_numbers<[1], [0], [0], [1], [0, 0, 1, 1], [], []>} : vector<8x32xf32>, vector<32x128xf32>, vector<8x128xf32> -> vector<8x128xf32>
    %656 = arith.addf %654, %655 : vector<8x128xf32>
    %657 = math.tanh %656 : vector<8x128xf32>
    %658 = arith.negf %656 : vector<8x128xf32>
    %659 = math.exp %658 : vector<8x128xf32>
    %cst_169 = arith.constant 1.000000e+00 : f32
    %660 = vector.broadcast %cst_169 : f32 to vector<8x128xf32>
    %661 = arith.addf %660, %659 : vector<8x128xf32>
    %662 = arith.divf %660, %661 : vector<8x128xf32>
    %663 = arith.select %9, %657, %662 : vector<8x128xi1>, vector<8x128xf32>
    %664 = vector.extract_strided_slice %663 {offsets = [0, 0], sizes = [8, 32], strides = [1, 1]} : vector<8x128xf32> to vector<8x32xf32>
    %665 = vector.extract_strided_slice %663 {offsets = [0, 32], sizes = [8, 32], strides = [1, 1]} : vector<8x128xf32> to vector<8x32xf32>
    %666 = vector.extract_strided_slice %663 {offsets = [0, 64], sizes = [8, 32], strides = [1, 1]} : vector<8x128xf32> to vector<8x32xf32>
    %667 = vector.extract_strided_slice %663 {offsets = [0, 96], sizes = [8, 32], strides = [1, 1]} : vector<8x128xf32> to vector<8x32xf32>
    %668 = arith.mulf %665, %643 : vector<8x32xf32>
    %669 = arith.mulf %664, %666 : vector<8x32xf32>
    %670 = arith.addf %668, %669 : vector<8x32xf32>
    %671 = math.tanh %670 : vector<8x32xf32>
    %672 = arith.mulf %667, %671 : vector<8x32xf32>
    %673 = arith.index_cast %c16_i32 : i32 to index
    %c0_170 = arith.constant 0 : index
    %c0_171 = arith.constant 0 : index
    %674 = vector.load %arg2[%673, %c0_170, %c0_171] : memref<32x8x1xf32, #tpu.memory_space<vmem>>, vector<1x8x1xf32>
    %675 = vector.shape_cast %674 : vector<1x8x1xf32> to vector<8x1xf32>
    %cst_172 = arith.constant 5.000000e-01 : f32
    %676 = vector.broadcast %cst_172 : f32 to vector<8x1xf32>
    %677 = arith.cmpf ogt, %675, %676 : vector<8x1xf32>
    %678 = vector.shape_cast %677 : vector<8x1xi1> to vector<8x1xi1>
    %679 = vector.broadcast %678 : vector<8x1xi1> to vector<8x32xi1>
    %680 = arith.select %679, %672, %640 : vector<8x32xi1>, vector<8x32xf32>
    %681 = vector.shape_cast %677 : vector<8x1xi1> to vector<8x1xi1>
    %682 = vector.broadcast %681 : vector<8x1xi1> to vector<8x32xi1>
    %683 = arith.select %682, %670, %643 : vector<8x32xi1>, vector<8x32xf32>
    %cst_173 = arith.constant 0.000000e+00 : f32
    %684 = vector.shape_cast %677 : vector<8x1xi1> to vector<8x1xi1>
    %685 = vector.broadcast %684 : vector<8x1xi1> to vector<8x32xi1>
    %686 = vector.broadcast %cst_173 : f32 to vector<8x32xf32>
    %687 = arith.select %685, %672, %686 : vector<8x32xi1>, vector<8x32xf32>
    %688 = arith.index_cast %c16_i32 : i32 to index
    %c0_174 = arith.constant 0 : index
    %c0_175 = arith.constant 0 : index
    %689 = vector.load %arg4[%688, %c0_174, %c0_175] : memref<32x8x32xf32, #tpu.memory_space<vmem>>, vector<1x8x32xf32>
    %690 = vector.shape_cast %689 : vector<1x8x32xf32> to vector<8x32xf32>
    %691 = vector.shape_cast %687 : vector<8x32xf32> to vector<1x8x32xf32>
    tpu.vector_store %arg4[%688, %c0_174, %c0_175], %691 {strides = array<i32>} : memref<32x8x32xf32, #tpu.memory_space<vmem>>, vector<1x8x32xf32>,
    %c17_i32 = arith.constant 17 : i32
    %692 = arith.index_cast %c17_i32 : i32 to index
    %c0_176 = arith.constant 0 : index
    %c0_177 = arith.constant 0 : index
    %693 = vector.load %arg1[%692, %c0_176, %c0_177] : memref<32x8x128xf32, #tpu.memory_space<vmem>>, vector<1x8x128xf32>
    %694 = vector.shape_cast %693 : vector<1x8x128xf32> to vector<8x128xf32>
    %cst_178 = arith.constant dense<0.000000e+00> : vector<8x128xf32>
    %695 = tpu.matmul %680, %3, %cst_178 {dimension_numbers = #tpu.dot_dimension_numbers<[1], [0], [0], [1], [0, 0, 1, 1], [], []>} : vector<8x32xf32>, vector<32x128xf32>, vector<8x128xf32> -> vector<8x128xf32>
    %696 = arith.addf %694, %695 : vector<8x128xf32>
    %697 = math.tanh %696 : vector<8x128xf32>
    %698 = arith.negf %696 : vector<8x128xf32>
    %699 = math.exp %698 : vector<8x128xf32>
    %cst_179 = arith.constant 1.000000e+00 : f32
    %700 = vector.broadcast %cst_179 : f32 to vector<8x128xf32>
    %701 = arith.addf %700, %699 : vector<8x128xf32>
    %702 = arith.divf %700, %701 : vector<8x128xf32>
    %703 = arith.select %9, %697, %702 : vector<8x128xi1>, vector<8x128xf32>
    %704 = vector.extract_strided_slice %703 {offsets = [0, 0], sizes = [8, 32], strides = [1, 1]} : vector<8x128xf32> to vector<8x32xf32>
    %705 = vector.extract_strided_slice %703 {offsets = [0, 32], sizes = [8, 32], strides = [1, 1]} : vector<8x128xf32> to vector<8x32xf32>
    %706 = vector.extract_strided_slice %703 {offsets = [0, 64], sizes = [8, 32], strides = [1, 1]} : vector<8x128xf32> to vector<8x32xf32>
    %707 = vector.extract_strided_slice %703 {offsets = [0, 96], sizes = [8, 32], strides = [1, 1]} : vector<8x128xf32> to vector<8x32xf32>
    %708 = arith.mulf %705, %683 : vector<8x32xf32>
    %709 = arith.mulf %704, %706 : vector<8x32xf32>
    %710 = arith.addf %708, %709 : vector<8x32xf32>
    %711 = math.tanh %710 : vector<8x32xf32>
    %712 = arith.mulf %707, %711 : vector<8x32xf32>
    %713 = arith.index_cast %c17_i32 : i32 to index
    %c0_180 = arith.constant 0 : index
    %c0_181 = arith.constant 0 : index
    %714 = vector.load %arg2[%713, %c0_180, %c0_181] : memref<32x8x1xf32, #tpu.memory_space<vmem>>, vector<1x8x1xf32>
    %715 = vector.shape_cast %714 : vector<1x8x1xf32> to vector<8x1xf32>
    %cst_182 = arith.constant 5.000000e-01 : f32
    %716 = vector.broadcast %cst_182 : f32 to vector<8x1xf32>
    %717 = arith.cmpf ogt, %715, %716 : vector<8x1xf32>
    %718 = vector.shape_cast %717 : vector<8x1xi1> to vector<8x1xi1>
    %719 = vector.broadcast %718 : vector<8x1xi1> to vector<8x32xi1>
    %720 = arith.select %719, %712, %680 : vector<8x32xi1>, vector<8x32xf32>
    %721 = vector.shape_cast %717 : vector<8x1xi1> to vector<8x1xi1>
    %722 = vector.broadcast %721 : vector<8x1xi1> to vector<8x32xi1>
    %723 = arith.select %722, %710, %683 : vector<8x32xi1>, vector<8x32xf32>
    %cst_183 = arith.constant 0.000000e+00 : f32
    %724 = vector.shape_cast %717 : vector<8x1xi1> to vector<8x1xi1>
    %725 = vector.broadcast %724 : vector<8x1xi1> to vector<8x32xi1>
    %726 = vector.broadcast %cst_183 : f32 to vector<8x32xf32>
    %727 = arith.select %725, %712, %726 : vector<8x32xi1>, vector<8x32xf32>
    %728 = arith.index_cast %c17_i32 : i32 to index
    %c0_184 = arith.constant 0 : index
    %c0_185 = arith.constant 0 : index
    %729 = vector.load %arg4[%728, %c0_184, %c0_185] : memref<32x8x32xf32, #tpu.memory_space<vmem>>, vector<1x8x32xf32>
    %730 = vector.shape_cast %729 : vector<1x8x32xf32> to vector<8x32xf32>
    %731 = vector.shape_cast %727 : vector<8x32xf32> to vector<1x8x32xf32>
    tpu.vector_store %arg4[%728, %c0_184, %c0_185], %731 {strides = array<i32>} : memref<32x8x32xf32, #tpu.memory_space<vmem>>, vector<1x8x32xf32>,
    %c18_i32 = arith.constant 18 : i32
    %732 = arith.index_cast %c18_i32 : i32 to index
    %c0_186 = arith.constant 0 : index
    %c0_187 = arith.constant 0 : index
    %733 = vector.load %arg1[%732, %c0_186, %c0_187] : memref<32x8x128xf32, #tpu.memory_space<vmem>>, vector<1x8x128xf32>
    %734 = vector.shape_cast %733 : vector<1x8x128xf32> to vector<8x128xf32>
    %cst_188 = arith.constant dense<0.000000e+00> : vector<8x128xf32>
    %735 = tpu.matmul %720, %3, %cst_188 {dimension_numbers = #tpu.dot_dimension_numbers<[1], [0], [0], [1], [0, 0, 1, 1], [], []>} : vector<8x32xf32>, vector<32x128xf32>, vector<8x128xf32> -> vector<8x128xf32>
    %736 = arith.addf %734, %735 : vector<8x128xf32>
    %737 = math.tanh %736 : vector<8x128xf32>
    %738 = arith.negf %736 : vector<8x128xf32>
    %739 = math.exp %738 : vector<8x128xf32>
    %cst_189 = arith.constant 1.000000e+00 : f32
    %740 = vector.broadcast %cst_189 : f32 to vector<8x128xf32>
    %741 = arith.addf %740, %739 : vector<8x128xf32>
    %742 = arith.divf %740, %741 : vector<8x128xf32>
    %743 = arith.select %9, %737, %742 : vector<8x128xi1>, vector<8x128xf32>
    %744 = vector.extract_strided_slice %743 {offsets = [0, 0], sizes = [8, 32], strides = [1, 1]} : vector<8x128xf32> to vector<8x32xf32>
    %745 = vector.extract_strided_slice %743 {offsets = [0, 32], sizes = [8, 32], strides = [1, 1]} : vector<8x128xf32> to vector<8x32xf32>
    %746 = vector.extract_strided_slice %743 {offsets = [0, 64], sizes = [8, 32], strides = [1, 1]} : vector<8x128xf32> to vector<8x32xf32>
    %747 = vector.extract_strided_slice %743 {offsets = [0, 96], sizes = [8, 32], strides = [1, 1]} : vector<8x128xf32> to vector<8x32xf32>
    %748 = arith.mulf %745, %723 : vector<8x32xf32>
    %749 = arith.mulf %744, %746 : vector<8x32xf32>
    %750 = arith.addf %748, %749 : vector<8x32xf32>
    %751 = math.tanh %750 : vector<8x32xf32>
    %752 = arith.mulf %747, %751 : vector<8x32xf32>
    %753 = arith.index_cast %c18_i32 : i32 to index
    %c0_190 = arith.constant 0 : index
    %c0_191 = arith.constant 0 : index
    %754 = vector.load %arg2[%753, %c0_190, %c0_191] : memref<32x8x1xf32, #tpu.memory_space<vmem>>, vector<1x8x1xf32>
    %755 = vector.shape_cast %754 : vector<1x8x1xf32> to vector<8x1xf32>
    %cst_192 = arith.constant 5.000000e-01 : f32
    %756 = vector.broadcast %cst_192 : f32 to vector<8x1xf32>
    %757 = arith.cmpf ogt, %755, %756 : vector<8x1xf32>
    %758 = vector.shape_cast %757 : vector<8x1xi1> to vector<8x1xi1>
    %759 = vector.broadcast %758 : vector<8x1xi1> to vector<8x32xi1>
    %760 = arith.select %759, %752, %720 : vector<8x32xi1>, vector<8x32xf32>
    %761 = vector.shape_cast %757 : vector<8x1xi1> to vector<8x1xi1>
    %762 = vector.broadcast %761 : vector<8x1xi1> to vector<8x32xi1>
    %763 = arith.select %762, %750, %723 : vector<8x32xi1>, vector<8x32xf32>
    %cst_193 = arith.constant 0.000000e+00 : f32
    %764 = vector.shape_cast %757 : vector<8x1xi1> to vector<8x1xi1>
    %765 = vector.broadcast %764 : vector<8x1xi1> to vector<8x32xi1>
    %766 = vector.broadcast %cst_193 : f32 to vector<8x32xf32>
    %767 = arith.select %765, %752, %766 : vector<8x32xi1>, vector<8x32xf32>
    %768 = arith.index_cast %c18_i32 : i32 to index
    %c0_194 = arith.constant 0 : index
    %c0_195 = arith.constant 0 : index
    %769 = vector.load %arg4[%768, %c0_194, %c0_195] : memref<32x8x32xf32, #tpu.memory_space<vmem>>, vector<1x8x32xf32>
    %770 = vector.shape_cast %769 : vector<1x8x32xf32> to vector<8x32xf32>
    %771 = vector.shape_cast %767 : vector<8x32xf32> to vector<1x8x32xf32>
    tpu.vector_store %arg4[%768, %c0_194, %c0_195], %771 {strides = array<i32>} : memref<32x8x32xf32, #tpu.memory_space<vmem>>, vector<1x8x32xf32>,
    %c19_i32 = arith.constant 19 : i32
    %772 = arith.index_cast %c19_i32 : i32 to index
    %c0_196 = arith.constant 0 : index
    %c0_197 = arith.constant 0 : index
    %773 = vector.load %arg1[%772, %c0_196, %c0_197] : memref<32x8x128xf32, #tpu.memory_space<vmem>>, vector<1x8x128xf32>
    %774 = vector.shape_cast %773 : vector<1x8x128xf32> to vector<8x128xf32>
    %cst_198 = arith.constant dense<0.000000e+00> : vector<8x128xf32>
    %775 = tpu.matmul %760, %3, %cst_198 {dimension_numbers = #tpu.dot_dimension_numbers<[1], [0], [0], [1], [0, 0, 1, 1], [], []>} : vector<8x32xf32>, vector<32x128xf32>, vector<8x128xf32> -> vector<8x128xf32>
    %776 = arith.addf %774, %775 : vector<8x128xf32>
    %777 = math.tanh %776 : vector<8x128xf32>
    %778 = arith.negf %776 : vector<8x128xf32>
    %779 = math.exp %778 : vector<8x128xf32>
    %cst_199 = arith.constant 1.000000e+00 : f32
    %780 = vector.broadcast %cst_199 : f32 to vector<8x128xf32>
    %781 = arith.addf %780, %779 : vector<8x128xf32>
    %782 = arith.divf %780, %781 : vector<8x128xf32>
    %783 = arith.select %9, %777, %782 : vector<8x128xi1>, vector<8x128xf32>
    %784 = vector.extract_strided_slice %783 {offsets = [0, 0], sizes = [8, 32], strides = [1, 1]} : vector<8x128xf32> to vector<8x32xf32>
    %785 = vector.extract_strided_slice %783 {offsets = [0, 32], sizes = [8, 32], strides = [1, 1]} : vector<8x128xf32> to vector<8x32xf32>
    %786 = vector.extract_strided_slice %783 {offsets = [0, 64], sizes = [8, 32], strides = [1, 1]} : vector<8x128xf32> to vector<8x32xf32>
    %787 = vector.extract_strided_slice %783 {offsets = [0, 96], sizes = [8, 32], strides = [1, 1]} : vector<8x128xf32> to vector<8x32xf32>
    %788 = arith.mulf %785, %763 : vector<8x32xf32>
    %789 = arith.mulf %784, %786 : vector<8x32xf32>
    %790 = arith.addf %788, %789 : vector<8x32xf32>
    %791 = math.tanh %790 : vector<8x32xf32>
    %792 = arith.mulf %787, %791 : vector<8x32xf32>
    %793 = arith.index_cast %c19_i32 : i32 to index
    %c0_200 = arith.constant 0 : index
    %c0_201 = arith.constant 0 : index
    %794 = vector.load %arg2[%793, %c0_200, %c0_201] : memref<32x8x1xf32, #tpu.memory_space<vmem>>, vector<1x8x1xf32>
    %795 = vector.shape_cast %794 : vector<1x8x1xf32> to vector<8x1xf32>
    %cst_202 = arith.constant 5.000000e-01 : f32
    %796 = vector.broadcast %cst_202 : f32 to vector<8x1xf32>
    %797 = arith.cmpf ogt, %795, %796 : vector<8x1xf32>
    %798 = vector.shape_cast %797 : vector<8x1xi1> to vector<8x1xi1>
    %799 = vector.broadcast %798 : vector<8x1xi1> to vector<8x32xi1>
    %800 = arith.select %799, %792, %760 : vector<8x32xi1>, vector<8x32xf32>
    %801 = vector.shape_cast %797 : vector<8x1xi1> to vector<8x1xi1>
    %802 = vector.broadcast %801 : vector<8x1xi1> to vector<8x32xi1>
    %803 = arith.select %802, %790, %763 : vector<8x32xi1>, vector<8x32xf32>
    %cst_203 = arith.constant 0.000000e+00 : f32
    %804 = vector.shape_cast %797 : vector<8x1xi1> to vector<8x1xi1>
    %805 = vector.broadcast %804 : vector<8x1xi1> to vector<8x32xi1>
    %806 = vector.broadcast %cst_203 : f32 to vector<8x32xf32>
    %807 = arith.select %805, %792, %806 : vector<8x32xi1>, vector<8x32xf32>
    %808 = arith.index_cast %c19_i32 : i32 to index
    %c0_204 = arith.constant 0 : index
    %c0_205 = arith.constant 0 : index
    %809 = vector.load %arg4[%808, %c0_204, %c0_205] : memref<32x8x32xf32, #tpu.memory_space<vmem>>, vector<1x8x32xf32>
    %810 = vector.shape_cast %809 : vector<1x8x32xf32> to vector<8x32xf32>
    %811 = vector.shape_cast %807 : vector<8x32xf32> to vector<1x8x32xf32>
    tpu.vector_store %arg4[%808, %c0_204, %c0_205], %811 {strides = array<i32>} : memref<32x8x32xf32, #tpu.memory_space<vmem>>, vector<1x8x32xf32>,
    %c20_i32 = arith.constant 20 : i32
    %812 = arith.index_cast %c20_i32 : i32 to index
    %c0_206 = arith.constant 0 : index
    %c0_207 = arith.constant 0 : index
    %813 = vector.load %arg1[%812, %c0_206, %c0_207] : memref<32x8x128xf32, #tpu.memory_space<vmem>>, vector<1x8x128xf32>
    %814 = vector.shape_cast %813 : vector<1x8x128xf32> to vector<8x128xf32>
    %cst_208 = arith.constant dense<0.000000e+00> : vector<8x128xf32>
    %815 = tpu.matmul %800, %3, %cst_208 {dimension_numbers = #tpu.dot_dimension_numbers<[1], [0], [0], [1], [0, 0, 1, 1], [], []>} : vector<8x32xf32>, vector<32x128xf32>, vector<8x128xf32> -> vector<8x128xf32>
    %816 = arith.addf %814, %815 : vector<8x128xf32>
    %817 = math.tanh %816 : vector<8x128xf32>
    %818 = arith.negf %816 : vector<8x128xf32>
    %819 = math.exp %818 : vector<8x128xf32>
    %cst_209 = arith.constant 1.000000e+00 : f32
    %820 = vector.broadcast %cst_209 : f32 to vector<8x128xf32>
    %821 = arith.addf %820, %819 : vector<8x128xf32>
    %822 = arith.divf %820, %821 : vector<8x128xf32>
    %823 = arith.select %9, %817, %822 : vector<8x128xi1>, vector<8x128xf32>
    %824 = vector.extract_strided_slice %823 {offsets = [0, 0], sizes = [8, 32], strides = [1, 1]} : vector<8x128xf32> to vector<8x32xf32>
    %825 = vector.extract_strided_slice %823 {offsets = [0, 32], sizes = [8, 32], strides = [1, 1]} : vector<8x128xf32> to vector<8x32xf32>
    %826 = vector.extract_strided_slice %823 {offsets = [0, 64], sizes = [8, 32], strides = [1, 1]} : vector<8x128xf32> to vector<8x32xf32>
    %827 = vector.extract_strided_slice %823 {offsets = [0, 96], sizes = [8, 32], strides = [1, 1]} : vector<8x128xf32> to vector<8x32xf32>
    %828 = arith.mulf %825, %803 : vector<8x32xf32>
    %829 = arith.mulf %824, %826 : vector<8x32xf32>
    %830 = arith.addf %828, %829 : vector<8x32xf32>
    %831 = math.tanh %830 : vector<8x32xf32>
    %832 = arith.mulf %827, %831 : vector<8x32xf32>
    %833 = arith.index_cast %c20_i32 : i32 to index
    %c0_210 = arith.constant 0 : index
    %c0_211 = arith.constant 0 : index
    %834 = vector.load %arg2[%833, %c0_210, %c0_211] : memref<32x8x1xf32, #tpu.memory_space<vmem>>, vector<1x8x1xf32>
    %835 = vector.shape_cast %834 : vector<1x8x1xf32> to vector<8x1xf32>
    %cst_212 = arith.constant 5.000000e-01 : f32
    %836 = vector.broadcast %cst_212 : f32 to vector<8x1xf32>
    %837 = arith.cmpf ogt, %835, %836 : vector<8x1xf32>
    %838 = vector.shape_cast %837 : vector<8x1xi1> to vector<8x1xi1>
    %839 = vector.broadcast %838 : vector<8x1xi1> to vector<8x32xi1>
    %840 = arith.select %839, %832, %800 : vector<8x32xi1>, vector<8x32xf32>
    %841 = vector.shape_cast %837 : vector<8x1xi1> to vector<8x1xi1>
    %842 = vector.broadcast %841 : vector<8x1xi1> to vector<8x32xi1>
    %843 = arith.select %842, %830, %803 : vector<8x32xi1>, vector<8x32xf32>
    %cst_213 = arith.constant 0.000000e+00 : f32
    %844 = vector.shape_cast %837 : vector<8x1xi1> to vector<8x1xi1>
    %845 = vector.broadcast %844 : vector<8x1xi1> to vector<8x32xi1>
    %846 = vector.broadcast %cst_213 : f32 to vector<8x32xf32>
    %847 = arith.select %845, %832, %846 : vector<8x32xi1>, vector<8x32xf32>
    %848 = arith.index_cast %c20_i32 : i32 to index
    %c0_214 = arith.constant 0 : index
    %c0_215 = arith.constant 0 : index
    %849 = vector.load %arg4[%848, %c0_214, %c0_215] : memref<32x8x32xf32, #tpu.memory_space<vmem>>, vector<1x8x32xf32>
    %850 = vector.shape_cast %849 : vector<1x8x32xf32> to vector<8x32xf32>
    %851 = vector.shape_cast %847 : vector<8x32xf32> to vector<1x8x32xf32>
    tpu.vector_store %arg4[%848, %c0_214, %c0_215], %851 {strides = array<i32>} : memref<32x8x32xf32, #tpu.memory_space<vmem>>, vector<1x8x32xf32>,
    %c21_i32 = arith.constant 21 : i32
    %852 = arith.index_cast %c21_i32 : i32 to index
    %c0_216 = arith.constant 0 : index
    %c0_217 = arith.constant 0 : index
    %853 = vector.load %arg1[%852, %c0_216, %c0_217] : memref<32x8x128xf32, #tpu.memory_space<vmem>>, vector<1x8x128xf32>
    %854 = vector.shape_cast %853 : vector<1x8x128xf32> to vector<8x128xf32>
    %cst_218 = arith.constant dense<0.000000e+00> : vector<8x128xf32>
    %855 = tpu.matmul %840, %3, %cst_218 {dimension_numbers = #tpu.dot_dimension_numbers<[1], [0], [0], [1], [0, 0, 1, 1], [], []>} : vector<8x32xf32>, vector<32x128xf32>, vector<8x128xf32> -> vector<8x128xf32>
    %856 = arith.addf %854, %855 : vector<8x128xf32>
    %857 = math.tanh %856 : vector<8x128xf32>
    %858 = arith.negf %856 : vector<8x128xf32>
    %859 = math.exp %858 : vector<8x128xf32>
    %cst_219 = arith.constant 1.000000e+00 : f32
    %860 = vector.broadcast %cst_219 : f32 to vector<8x128xf32>
    %861 = arith.addf %860, %859 : vector<8x128xf32>
    %862 = arith.divf %860, %861 : vector<8x128xf32>
    %863 = arith.select %9, %857, %862 : vector<8x128xi1>, vector<8x128xf32>
    %864 = vector.extract_strided_slice %863 {offsets = [0, 0], sizes = [8, 32], strides = [1, 1]} : vector<8x128xf32> to vector<8x32xf32>
    %865 = vector.extract_strided_slice %863 {offsets = [0, 32], sizes = [8, 32], strides = [1, 1]} : vector<8x128xf32> to vector<8x32xf32>
    %866 = vector.extract_strided_slice %863 {offsets = [0, 64], sizes = [8, 32], strides = [1, 1]} : vector<8x128xf32> to vector<8x32xf32>
    %867 = vector.extract_strided_slice %863 {offsets = [0, 96], sizes = [8, 32], strides = [1, 1]} : vector<8x128xf32> to vector<8x32xf32>
    %868 = arith.mulf %865, %843 : vector<8x32xf32>
    %869 = arith.mulf %864, %866 : vector<8x32xf32>
    %870 = arith.addf %868, %869 : vector<8x32xf32>
    %871 = math.tanh %870 : vector<8x32xf32>
    %872 = arith.mulf %867, %871 : vector<8x32xf32>
    %873 = arith.index_cast %c21_i32 : i32 to index
    %c0_220 = arith.constant 0 : index
    %c0_221 = arith.constant 0 : index
    %874 = vector.load %arg2[%873, %c0_220, %c0_221] : memref<32x8x1xf32, #tpu.memory_space<vmem>>, vector<1x8x1xf32>
    %875 = vector.shape_cast %874 : vector<1x8x1xf32> to vector<8x1xf32>
    %cst_222 = arith.constant 5.000000e-01 : f32
    %876 = vector.broadcast %cst_222 : f32 to vector<8x1xf32>
    %877 = arith.cmpf ogt, %875, %876 : vector<8x1xf32>
    %878 = vector.shape_cast %877 : vector<8x1xi1> to vector<8x1xi1>
    %879 = vector.broadcast %878 : vector<8x1xi1> to vector<8x32xi1>
    %880 = arith.select %879, %872, %840 : vector<8x32xi1>, vector<8x32xf32>
    %881 = vector.shape_cast %877 : vector<8x1xi1> to vector<8x1xi1>
    %882 = vector.broadcast %881 : vector<8x1xi1> to vector<8x32xi1>
    %883 = arith.select %882, %870, %843 : vector<8x32xi1>, vector<8x32xf32>
    %cst_223 = arith.constant 0.000000e+00 : f32
    %884 = vector.shape_cast %877 : vector<8x1xi1> to vector<8x1xi1>
    %885 = vector.broadcast %884 : vector<8x1xi1> to vector<8x32xi1>
    %886 = vector.broadcast %cst_223 : f32 to vector<8x32xf32>
    %887 = arith.select %885, %872, %886 : vector<8x32xi1>, vector<8x32xf32>
    %888 = arith.index_cast %c21_i32 : i32 to index
    %c0_224 = arith.constant 0 : index
    %c0_225 = arith.constant 0 : index
    %889 = vector.load %arg4[%888, %c0_224, %c0_225] : memref<32x8x32xf32, #tpu.memory_space<vmem>>, vector<1x8x32xf32>
    %890 = vector.shape_cast %889 : vector<1x8x32xf32> to vector<8x32xf32>
    %891 = vector.shape_cast %887 : vector<8x32xf32> to vector<1x8x32xf32>
    tpu.vector_store %arg4[%888, %c0_224, %c0_225], %891 {strides = array<i32>} : memref<32x8x32xf32, #tpu.memory_space<vmem>>, vector<1x8x32xf32>,
    %c22_i32 = arith.constant 22 : i32
    %892 = arith.index_cast %c22_i32 : i32 to index
    %c0_226 = arith.constant 0 : index
    %c0_227 = arith.constant 0 : index
    %893 = vector.load %arg1[%892, %c0_226, %c0_227] : memref<32x8x128xf32, #tpu.memory_space<vmem>>, vector<1x8x128xf32>
    %894 = vector.shape_cast %893 : vector<1x8x128xf32> to vector<8x128xf32>
    %cst_228 = arith.constant dense<0.000000e+00> : vector<8x128xf32>
    %895 = tpu.matmul %880, %3, %cst_228 {dimension_numbers = #tpu.dot_dimension_numbers<[1], [0], [0], [1], [0, 0, 1, 1], [], []>} : vector<8x32xf32>, vector<32x128xf32>, vector<8x128xf32> -> vector<8x128xf32>
    %896 = arith.addf %894, %895 : vector<8x128xf32>
    %897 = math.tanh %896 : vector<8x128xf32>
    %898 = arith.negf %896 : vector<8x128xf32>
    %899 = math.exp %898 : vector<8x128xf32>
    %cst_229 = arith.constant 1.000000e+00 : f32
    %900 = vector.broadcast %cst_229 : f32 to vector<8x128xf32>
    %901 = arith.addf %900, %899 : vector<8x128xf32>
    %902 = arith.divf %900, %901 : vector<8x128xf32>
    %903 = arith.select %9, %897, %902 : vector<8x128xi1>, vector<8x128xf32>
    %904 = vector.extract_strided_slice %903 {offsets = [0, 0], sizes = [8, 32], strides = [1, 1]} : vector<8x128xf32> to vector<8x32xf32>
    %905 = vector.extract_strided_slice %903 {offsets = [0, 32], sizes = [8, 32], strides = [1, 1]} : vector<8x128xf32> to vector<8x32xf32>
    %906 = vector.extract_strided_slice %903 {offsets = [0, 64], sizes = [8, 32], strides = [1, 1]} : vector<8x128xf32> to vector<8x32xf32>
    %907 = vector.extract_strided_slice %903 {offsets = [0, 96], sizes = [8, 32], strides = [1, 1]} : vector<8x128xf32> to vector<8x32xf32>
    %908 = arith.mulf %905, %883 : vector<8x32xf32>
    %909 = arith.mulf %904, %906 : vector<8x32xf32>
    %910 = arith.addf %908, %909 : vector<8x32xf32>
    %911 = math.tanh %910 : vector<8x32xf32>
    %912 = arith.mulf %907, %911 : vector<8x32xf32>
    %913 = arith.index_cast %c22_i32 : i32 to index
    %c0_230 = arith.constant 0 : index
    %c0_231 = arith.constant 0 : index
    %914 = vector.load %arg2[%913, %c0_230, %c0_231] : memref<32x8x1xf32, #tpu.memory_space<vmem>>, vector<1x8x1xf32>
    %915 = vector.shape_cast %914 : vector<1x8x1xf32> to vector<8x1xf32>
    %cst_232 = arith.constant 5.000000e-01 : f32
    %916 = vector.broadcast %cst_232 : f32 to vector<8x1xf32>
    %917 = arith.cmpf ogt, %915, %916 : vector<8x1xf32>
    %918 = vector.shape_cast %917 : vector<8x1xi1> to vector<8x1xi1>
    %919 = vector.broadcast %918 : vector<8x1xi1> to vector<8x32xi1>
    %920 = arith.select %919, %912, %880 : vector<8x32xi1>, vector<8x32xf32>
    %921 = vector.shape_cast %917 : vector<8x1xi1> to vector<8x1xi1>
    %922 = vector.broadcast %921 : vector<8x1xi1> to vector<8x32xi1>
    %923 = arith.select %922, %910, %883 : vector<8x32xi1>, vector<8x32xf32>
    %cst_233 = arith.constant 0.000000e+00 : f32
    %924 = vector.shape_cast %917 : vector<8x1xi1> to vector<8x1xi1>
    %925 = vector.broadcast %924 : vector<8x1xi1> to vector<8x32xi1>
    %926 = vector.broadcast %cst_233 : f32 to vector<8x32xf32>
    %927 = arith.select %925, %912, %926 : vector<8x32xi1>, vector<8x32xf32>
    %928 = arith.index_cast %c22_i32 : i32 to index
    %c0_234 = arith.constant 0 : index
    %c0_235 = arith.constant 0 : index
    %929 = vector.load %arg4[%928, %c0_234, %c0_235] : memref<32x8x32xf32, #tpu.memory_space<vmem>>, vector<1x8x32xf32>
    %930 = vector.shape_cast %929 : vector<1x8x32xf32> to vector<8x32xf32>
    %931 = vector.shape_cast %927 : vector<8x32xf32> to vector<1x8x32xf32>
    tpu.vector_store %arg4[%928, %c0_234, %c0_235], %931 {strides = array<i32>} : memref<32x8x32xf32, #tpu.memory_space<vmem>>, vector<1x8x32xf32>,
    %c23_i32 = arith.constant 23 : i32
    %932 = arith.index_cast %c23_i32 : i32 to index
    %c0_236 = arith.constant 0 : index
    %c0_237 = arith.constant 0 : index
    %933 = vector.load %arg1[%932, %c0_236, %c0_237] : memref<32x8x128xf32, #tpu.memory_space<vmem>>, vector<1x8x128xf32>
    %934 = vector.shape_cast %933 : vector<1x8x128xf32> to vector<8x128xf32>
    %cst_238 = arith.constant dense<0.000000e+00> : vector<8x128xf32>
    %935 = tpu.matmul %920, %3, %cst_238 {dimension_numbers = #tpu.dot_dimension_numbers<[1], [0], [0], [1], [0, 0, 1, 1], [], []>} : vector<8x32xf32>, vector<32x128xf32>, vector<8x128xf32> -> vector<8x128xf32>
    %936 = arith.addf %934, %935 : vector<8x128xf32>
    %937 = math.tanh %936 : vector<8x128xf32>
    %938 = arith.negf %936 : vector<8x128xf32>
    %939 = math.exp %938 : vector<8x128xf32>
    %cst_239 = arith.constant 1.000000e+00 : f32
    %940 = vector.broadcast %cst_239 : f32 to vector<8x128xf32>
    %941 = arith.addf %940, %939 : vector<8x128xf32>
    %942 = arith.divf %940, %941 : vector<8x128xf32>
    %943 = arith.select %9, %937, %942 : vector<8x128xi1>, vector<8x128xf32>
    %944 = vector.extract_strided_slice %943 {offsets = [0, 0], sizes = [8, 32], strides = [1, 1]} : vector<8x128xf32> to vector<8x32xf32>
    %945 = vector.extract_strided_slice %943 {offsets = [0, 32], sizes = [8, 32], strides = [1, 1]} : vector<8x128xf32> to vector<8x32xf32>
    %946 = vector.extract_strided_slice %943 {offsets = [0, 64], sizes = [8, 32], strides = [1, 1]} : vector<8x128xf32> to vector<8x32xf32>
    %947 = vector.extract_strided_slice %943 {offsets = [0, 96], sizes = [8, 32], strides = [1, 1]} : vector<8x128xf32> to vector<8x32xf32>
    %948 = arith.mulf %945, %923 : vector<8x32xf32>
    %949 = arith.mulf %944, %946 : vector<8x32xf32>
    %950 = arith.addf %948, %949 : vector<8x32xf32>
    %951 = math.tanh %950 : vector<8x32xf32>
    %952 = arith.mulf %947, %951 : vector<8x32xf32>
    %953 = arith.index_cast %c23_i32 : i32 to index
    %c0_240 = arith.constant 0 : index
    %c0_241 = arith.constant 0 : index
    %954 = vector.load %arg2[%953, %c0_240, %c0_241] : memref<32x8x1xf32, #tpu.memory_space<vmem>>, vector<1x8x1xf32>
    %955 = vector.shape_cast %954 : vector<1x8x1xf32> to vector<8x1xf32>
    %cst_242 = arith.constant 5.000000e-01 : f32
    %956 = vector.broadcast %cst_242 : f32 to vector<8x1xf32>
    %957 = arith.cmpf ogt, %955, %956 : vector<8x1xf32>
    %958 = vector.shape_cast %957 : vector<8x1xi1> to vector<8x1xi1>
    %959 = vector.broadcast %958 : vector<8x1xi1> to vector<8x32xi1>
    %960 = arith.select %959, %952, %920 : vector<8x32xi1>, vector<8x32xf32>
    %961 = vector.shape_cast %957 : vector<8x1xi1> to vector<8x1xi1>
    %962 = vector.broadcast %961 : vector<8x1xi1> to vector<8x32xi1>
    %963 = arith.select %962, %950, %923 : vector<8x32xi1>, vector<8x32xf32>
    %cst_243 = arith.constant 0.000000e+00 : f32
    %964 = vector.shape_cast %957 : vector<8x1xi1> to vector<8x1xi1>
    %965 = vector.broadcast %964 : vector<8x1xi1> to vector<8x32xi1>
    %966 = vector.broadcast %cst_243 : f32 to vector<8x32xf32>
    %967 = arith.select %965, %952, %966 : vector<8x32xi1>, vector<8x32xf32>
    %968 = arith.index_cast %c23_i32 : i32 to index
    %c0_244 = arith.constant 0 : index
    %c0_245 = arith.constant 0 : index
    %969 = vector.load %arg4[%968, %c0_244, %c0_245] : memref<32x8x32xf32, #tpu.memory_space<vmem>>, vector<1x8x32xf32>
    %970 = vector.shape_cast %969 : vector<1x8x32xf32> to vector<8x32xf32>
    %971 = vector.shape_cast %967 : vector<8x32xf32> to vector<1x8x32xf32>
    tpu.vector_store %arg4[%968, %c0_244, %c0_245], %971 {strides = array<i32>} : memref<32x8x32xf32, #tpu.memory_space<vmem>>, vector<1x8x32xf32>,
    %c24_i32 = arith.constant 24 : i32
    %972 = arith.index_cast %c24_i32 : i32 to index
    %c0_246 = arith.constant 0 : index
    %c0_247 = arith.constant 0 : index
    %973 = vector.load %arg1[%972, %c0_246, %c0_247] : memref<32x8x128xf32, #tpu.memory_space<vmem>>, vector<1x8x128xf32>
    %974 = vector.shape_cast %973 : vector<1x8x128xf32> to vector<8x128xf32>
    %cst_248 = arith.constant dense<0.000000e+00> : vector<8x128xf32>
    %975 = tpu.matmul %960, %3, %cst_248 {dimension_numbers = #tpu.dot_dimension_numbers<[1], [0], [0], [1], [0, 0, 1, 1], [], []>} : vector<8x32xf32>, vector<32x128xf32>, vector<8x128xf32> -> vector<8x128xf32>
    %976 = arith.addf %974, %975 : vector<8x128xf32>
    %977 = math.tanh %976 : vector<8x128xf32>
    %978 = arith.negf %976 : vector<8x128xf32>
    %979 = math.exp %978 : vector<8x128xf32>
    %cst_249 = arith.constant 1.000000e+00 : f32
    %980 = vector.broadcast %cst_249 : f32 to vector<8x128xf32>
    %981 = arith.addf %980, %979 : vector<8x128xf32>
    %982 = arith.divf %980, %981 : vector<8x128xf32>
    %983 = arith.select %9, %977, %982 : vector<8x128xi1>, vector<8x128xf32>
    %984 = vector.extract_strided_slice %983 {offsets = [0, 0], sizes = [8, 32], strides = [1, 1]} : vector<8x128xf32> to vector<8x32xf32>
    %985 = vector.extract_strided_slice %983 {offsets = [0, 32], sizes = [8, 32], strides = [1, 1]} : vector<8x128xf32> to vector<8x32xf32>
    %986 = vector.extract_strided_slice %983 {offsets = [0, 64], sizes = [8, 32], strides = [1, 1]} : vector<8x128xf32> to vector<8x32xf32>
    %987 = vector.extract_strided_slice %983 {offsets = [0, 96], sizes = [8, 32], strides = [1, 1]} : vector<8x128xf32> to vector<8x32xf32>
    %988 = arith.mulf %985, %963 : vector<8x32xf32>
    %989 = arith.mulf %984, %986 : vector<8x32xf32>
    %990 = arith.addf %988, %989 : vector<8x32xf32>
    %991 = math.tanh %990 : vector<8x32xf32>
    %992 = arith.mulf %987, %991 : vector<8x32xf32>
    %993 = arith.index_cast %c24_i32 : i32 to index
    %c0_250 = arith.constant 0 : index
    %c0_251 = arith.constant 0 : index
    %994 = vector.load %arg2[%993, %c0_250, %c0_251] : memref<32x8x1xf32, #tpu.memory_space<vmem>>, vector<1x8x1xf32>
    %995 = vector.shape_cast %994 : vector<1x8x1xf32> to vector<8x1xf32>
    %cst_252 = arith.constant 5.000000e-01 : f32
    %996 = vector.broadcast %cst_252 : f32 to vector<8x1xf32>
    %997 = arith.cmpf ogt, %995, %996 : vector<8x1xf32>
    %998 = vector.shape_cast %997 : vector<8x1xi1> to vector<8x1xi1>
    %999 = vector.broadcast %998 : vector<8x1xi1> to vector<8x32xi1>
    %1000 = arith.select %999, %992, %960 : vector<8x32xi1>, vector<8x32xf32>
    %1001 = vector.shape_cast %997 : vector<8x1xi1> to vector<8x1xi1>
    %1002 = vector.broadcast %1001 : vector<8x1xi1> to vector<8x32xi1>
    %1003 = arith.select %1002, %990, %963 : vector<8x32xi1>, vector<8x32xf32>
    %cst_253 = arith.constant 0.000000e+00 : f32
    %1004 = vector.shape_cast %997 : vector<8x1xi1> to vector<8x1xi1>
    %1005 = vector.broadcast %1004 : vector<8x1xi1> to vector<8x32xi1>
    %1006 = vector.broadcast %cst_253 : f32 to vector<8x32xf32>
    %1007 = arith.select %1005, %992, %1006 : vector<8x32xi1>, vector<8x32xf32>
    %1008 = arith.index_cast %c24_i32 : i32 to index
    %c0_254 = arith.constant 0 : index
    %c0_255 = arith.constant 0 : index
    %1009 = vector.load %arg4[%1008, %c0_254, %c0_255] : memref<32x8x32xf32, #tpu.memory_space<vmem>>, vector<1x8x32xf32>
    %1010 = vector.shape_cast %1009 : vector<1x8x32xf32> to vector<8x32xf32>
    %1011 = vector.shape_cast %1007 : vector<8x32xf32> to vector<1x8x32xf32>
    tpu.vector_store %arg4[%1008, %c0_254, %c0_255], %1011 {strides = array<i32>} : memref<32x8x32xf32, #tpu.memory_space<vmem>>, vector<1x8x32xf32>,
    %c25_i32 = arith.constant 25 : i32
    %1012 = arith.index_cast %c25_i32 : i32 to index
    %c0_256 = arith.constant 0 : index
    %c0_257 = arith.constant 0 : index
    %1013 = vector.load %arg1[%1012, %c0_256, %c0_257] : memref<32x8x128xf32, #tpu.memory_space<vmem>>, vector<1x8x128xf32>
    %1014 = vector.shape_cast %1013 : vector<1x8x128xf32> to vector<8x128xf32>
    %cst_258 = arith.constant dense<0.000000e+00> : vector<8x128xf32>
    %1015 = tpu.matmul %1000, %3, %cst_258 {dimension_numbers = #tpu.dot_dimension_numbers<[1], [0], [0], [1], [0, 0, 1, 1], [], []>} : vector<8x32xf32>, vector<32x128xf32>, vector<8x128xf32> -> vector<8x128xf32>
    %1016 = arith.addf %1014, %1015 : vector<8x128xf32>
    %1017 = math.tanh %1016 : vector<8x128xf32>
    %1018 = arith.negf %1016 : vector<8x128xf32>
    %1019 = math.exp %1018 : vector<8x128xf32>
    %cst_259 = arith.constant 1.000000e+00 : f32
    %1020 = vector.broadcast %cst_259 : f32 to vector<8x128xf32>
    %1021 = arith.addf %1020, %1019 : vector<8x128xf32>
    %1022 = arith.divf %1020, %1021 : vector<8x128xf32>
    %1023 = arith.select %9, %1017, %1022 : vector<8x128xi1>, vector<8x128xf32>
    %1024 = vector.extract_strided_slice %1023 {offsets = [0, 0], sizes = [8, 32], strides = [1, 1]} : vector<8x128xf32> to vector<8x32xf32>
    %1025 = vector.extract_strided_slice %1023 {offsets = [0, 32], sizes = [8, 32], strides = [1, 1]} : vector<8x128xf32> to vector<8x32xf32>
    %1026 = vector.extract_strided_slice %1023 {offsets = [0, 64], sizes = [8, 32], strides = [1, 1]} : vector<8x128xf32> to vector<8x32xf32>
    %1027 = vector.extract_strided_slice %1023 {offsets = [0, 96], sizes = [8, 32], strides = [1, 1]} : vector<8x128xf32> to vector<8x32xf32>
    %1028 = arith.mulf %1025, %1003 : vector<8x32xf32>
    %1029 = arith.mulf %1024, %1026 : vector<8x32xf32>
    %1030 = arith.addf %1028, %1029 : vector<8x32xf32>
    %1031 = math.tanh %1030 : vector<8x32xf32>
    %1032 = arith.mulf %1027, %1031 : vector<8x32xf32>
    %1033 = arith.index_cast %c25_i32 : i32 to index
    %c0_260 = arith.constant 0 : index
    %c0_261 = arith.constant 0 : index
    %1034 = vector.load %arg2[%1033, %c0_260, %c0_261] : memref<32x8x1xf32, #tpu.memory_space<vmem>>, vector<1x8x1xf32>
    %1035 = vector.shape_cast %1034 : vector<1x8x1xf32> to vector<8x1xf32>
    %cst_262 = arith.constant 5.000000e-01 : f32
    %1036 = vector.broadcast %cst_262 : f32 to vector<8x1xf32>
    %1037 = arith.cmpf ogt, %1035, %1036 : vector<8x1xf32>
    %1038 = vector.shape_cast %1037 : vector<8x1xi1> to vector<8x1xi1>
    %1039 = vector.broadcast %1038 : vector<8x1xi1> to vector<8x32xi1>
    %1040 = arith.select %1039, %1032, %1000 : vector<8x32xi1>, vector<8x32xf32>
    %1041 = vector.shape_cast %1037 : vector<8x1xi1> to vector<8x1xi1>
    %1042 = vector.broadcast %1041 : vector<8x1xi1> to vector<8x32xi1>
    %1043 = arith.select %1042, %1030, %1003 : vector<8x32xi1>, vector<8x32xf32>
    %cst_263 = arith.constant 0.000000e+00 : f32
    %1044 = vector.shape_cast %1037 : vector<8x1xi1> to vector<8x1xi1>
    %1045 = vector.broadcast %1044 : vector<8x1xi1> to vector<8x32xi1>
    %1046 = vector.broadcast %cst_263 : f32 to vector<8x32xf32>
    %1047 = arith.select %1045, %1032, %1046 : vector<8x32xi1>, vector<8x32xf32>
    %1048 = arith.index_cast %c25_i32 : i32 to index
    %c0_264 = arith.constant 0 : index
    %c0_265 = arith.constant 0 : index
    %1049 = vector.load %arg4[%1048, %c0_264, %c0_265] : memref<32x8x32xf32, #tpu.memory_space<vmem>>, vector<1x8x32xf32>
    %1050 = vector.shape_cast %1049 : vector<1x8x32xf32> to vector<8x32xf32>
    %1051 = vector.shape_cast %1047 : vector<8x32xf32> to vector<1x8x32xf32>
    tpu.vector_store %arg4[%1048, %c0_264, %c0_265], %1051 {strides = array<i32>} : memref<32x8x32xf32, #tpu.memory_space<vmem>>, vector<1x8x32xf32>,
    %c26_i32 = arith.constant 26 : i32
    %1052 = arith.index_cast %c26_i32 : i32 to index
    %c0_266 = arith.constant 0 : index
    %c0_267 = arith.constant 0 : index
    %1053 = vector.load %arg1[%1052, %c0_266, %c0_267] : memref<32x8x128xf32, #tpu.memory_space<vmem>>, vector<1x8x128xf32>
    %1054 = vector.shape_cast %1053 : vector<1x8x128xf32> to vector<8x128xf32>
    %cst_268 = arith.constant dense<0.000000e+00> : vector<8x128xf32>
    %1055 = tpu.matmul %1040, %3, %cst_268 {dimension_numbers = #tpu.dot_dimension_numbers<[1], [0], [0], [1], [0, 0, 1, 1], [], []>} : vector<8x32xf32>, vector<32x128xf32>, vector<8x128xf32> -> vector<8x128xf32>
    %1056 = arith.addf %1054, %1055 : vector<8x128xf32>
    %1057 = math.tanh %1056 : vector<8x128xf32>
    %1058 = arith.negf %1056 : vector<8x128xf32>
    %1059 = math.exp %1058 : vector<8x128xf32>
    %cst_269 = arith.constant 1.000000e+00 : f32
    %1060 = vector.broadcast %cst_269 : f32 to vector<8x128xf32>
    %1061 = arith.addf %1060, %1059 : vector<8x128xf32>
    %1062 = arith.divf %1060, %1061 : vector<8x128xf32>
    %1063 = arith.select %9, %1057, %1062 : vector<8x128xi1>, vector<8x128xf32>
    %1064 = vector.extract_strided_slice %1063 {offsets = [0, 0], sizes = [8, 32], strides = [1, 1]} : vector<8x128xf32> to vector<8x32xf32>
    %1065 = vector.extract_strided_slice %1063 {offsets = [0, 32], sizes = [8, 32], strides = [1, 1]} : vector<8x128xf32> to vector<8x32xf32>
    %1066 = vector.extract_strided_slice %1063 {offsets = [0, 64], sizes = [8, 32], strides = [1, 1]} : vector<8x128xf32> to vector<8x32xf32>
    %1067 = vector.extract_strided_slice %1063 {offsets = [0, 96], sizes = [8, 32], strides = [1, 1]} : vector<8x128xf32> to vector<8x32xf32>
    %1068 = arith.mulf %1065, %1043 : vector<8x32xf32>
    %1069 = arith.mulf %1064, %1066 : vector<8x32xf32>
    %1070 = arith.addf %1068, %1069 : vector<8x32xf32>
    %1071 = math.tanh %1070 : vector<8x32xf32>
    %1072 = arith.mulf %1067, %1071 : vector<8x32xf32>
    %1073 = arith.index_cast %c26_i32 : i32 to index
    %c0_270 = arith.constant 0 : index
    %c0_271 = arith.constant 0 : index
    %1074 = vector.load %arg2[%1073, %c0_270, %c0_271] : memref<32x8x1xf32, #tpu.memory_space<vmem>>, vector<1x8x1xf32>
    %1075 = vector.shape_cast %1074 : vector<1x8x1xf32> to vector<8x1xf32>
    %cst_272 = arith.constant 5.000000e-01 : f32
    %1076 = vector.broadcast %cst_272 : f32 to vector<8x1xf32>
    %1077 = arith.cmpf ogt, %1075, %1076 : vector<8x1xf32>
    %1078 = vector.shape_cast %1077 : vector<8x1xi1> to vector<8x1xi1>
    %1079 = vector.broadcast %1078 : vector<8x1xi1> to vector<8x32xi1>
    %1080 = arith.select %1079, %1072, %1040 : vector<8x32xi1>, vector<8x32xf32>
    %1081 = vector.shape_cast %1077 : vector<8x1xi1> to vector<8x1xi1>
    %1082 = vector.broadcast %1081 : vector<8x1xi1> to vector<8x32xi1>
    %1083 = arith.select %1082, %1070, %1043 : vector<8x32xi1>, vector<8x32xf32>
    %cst_273 = arith.constant 0.000000e+00 : f32
    %1084 = vector.shape_cast %1077 : vector<8x1xi1> to vector<8x1xi1>
    %1085 = vector.broadcast %1084 : vector<8x1xi1> to vector<8x32xi1>
    %1086 = vector.broadcast %cst_273 : f32 to vector<8x32xf32>
    %1087 = arith.select %1085, %1072, %1086 : vector<8x32xi1>, vector<8x32xf32>
    %1088 = arith.index_cast %c26_i32 : i32 to index
    %c0_274 = arith.constant 0 : index
    %c0_275 = arith.constant 0 : index
    %1089 = vector.load %arg4[%1088, %c0_274, %c0_275] : memref<32x8x32xf32, #tpu.memory_space<vmem>>, vector<1x8x32xf32>
    %1090 = vector.shape_cast %1089 : vector<1x8x32xf32> to vector<8x32xf32>
    %1091 = vector.shape_cast %1087 : vector<8x32xf32> to vector<1x8x32xf32>
    tpu.vector_store %arg4[%1088, %c0_274, %c0_275], %1091 {strides = array<i32>} : memref<32x8x32xf32, #tpu.memory_space<vmem>>, vector<1x8x32xf32>,
    %c27_i32 = arith.constant 27 : i32
    %1092 = arith.index_cast %c27_i32 : i32 to index
    %c0_276 = arith.constant 0 : index
    %c0_277 = arith.constant 0 : index
    %1093 = vector.load %arg1[%1092, %c0_276, %c0_277] : memref<32x8x128xf32, #tpu.memory_space<vmem>>, vector<1x8x128xf32>
    %1094 = vector.shape_cast %1093 : vector<1x8x128xf32> to vector<8x128xf32>
    %cst_278 = arith.constant dense<0.000000e+00> : vector<8x128xf32>
    %1095 = tpu.matmul %1080, %3, %cst_278 {dimension_numbers = #tpu.dot_dimension_numbers<[1], [0], [0], [1], [0, 0, 1, 1], [], []>} : vector<8x32xf32>, vector<32x128xf32>, vector<8x128xf32> -> vector<8x128xf32>
    %1096 = arith.addf %1094, %1095 : vector<8x128xf32>
    %1097 = math.tanh %1096 : vector<8x128xf32>
    %1098 = arith.negf %1096 : vector<8x128xf32>
    %1099 = math.exp %1098 : vector<8x128xf32>
    %cst_279 = arith.constant 1.000000e+00 : f32
    %1100 = vector.broadcast %cst_279 : f32 to vector<8x128xf32>
    %1101 = arith.addf %1100, %1099 : vector<8x128xf32>
    %1102 = arith.divf %1100, %1101 : vector<8x128xf32>
    %1103 = arith.select %9, %1097, %1102 : vector<8x128xi1>, vector<8x128xf32>
    %1104 = vector.extract_strided_slice %1103 {offsets = [0, 0], sizes = [8, 32], strides = [1, 1]} : vector<8x128xf32> to vector<8x32xf32>
    %1105 = vector.extract_strided_slice %1103 {offsets = [0, 32], sizes = [8, 32], strides = [1, 1]} : vector<8x128xf32> to vector<8x32xf32>
    %1106 = vector.extract_strided_slice %1103 {offsets = [0, 64], sizes = [8, 32], strides = [1, 1]} : vector<8x128xf32> to vector<8x32xf32>
    %1107 = vector.extract_strided_slice %1103 {offsets = [0, 96], sizes = [8, 32], strides = [1, 1]} : vector<8x128xf32> to vector<8x32xf32>
    %1108 = arith.mulf %1105, %1083 : vector<8x32xf32>
    %1109 = arith.mulf %1104, %1106 : vector<8x32xf32>
    %1110 = arith.addf %1108, %1109 : vector<8x32xf32>
    %1111 = math.tanh %1110 : vector<8x32xf32>
    %1112 = arith.mulf %1107, %1111 : vector<8x32xf32>
    %1113 = arith.index_cast %c27_i32 : i32 to index
    %c0_280 = arith.constant 0 : index
    %c0_281 = arith.constant 0 : index
    %1114 = vector.load %arg2[%1113, %c0_280, %c0_281] : memref<32x8x1xf32, #tpu.memory_space<vmem>>, vector<1x8x1xf32>
    %1115 = vector.shape_cast %1114 : vector<1x8x1xf32> to vector<8x1xf32>
    %cst_282 = arith.constant 5.000000e-01 : f32
    %1116 = vector.broadcast %cst_282 : f32 to vector<8x1xf32>
    %1117 = arith.cmpf ogt, %1115, %1116 : vector<8x1xf32>
    %1118 = vector.shape_cast %1117 : vector<8x1xi1> to vector<8x1xi1>
    %1119 = vector.broadcast %1118 : vector<8x1xi1> to vector<8x32xi1>
    %1120 = arith.select %1119, %1112, %1080 : vector<8x32xi1>, vector<8x32xf32>
    %1121 = vector.shape_cast %1117 : vector<8x1xi1> to vector<8x1xi1>
    %1122 = vector.broadcast %1121 : vector<8x1xi1> to vector<8x32xi1>
    %1123 = arith.select %1122, %1110, %1083 : vector<8x32xi1>, vector<8x32xf32>
    %cst_283 = arith.constant 0.000000e+00 : f32
    %1124 = vector.shape_cast %1117 : vector<8x1xi1> to vector<8x1xi1>
    %1125 = vector.broadcast %1124 : vector<8x1xi1> to vector<8x32xi1>
    %1126 = vector.broadcast %cst_283 : f32 to vector<8x32xf32>
    %1127 = arith.select %1125, %1112, %1126 : vector<8x32xi1>, vector<8x32xf32>
    %1128 = arith.index_cast %c27_i32 : i32 to index
    %c0_284 = arith.constant 0 : index
    %c0_285 = arith.constant 0 : index
    %1129 = vector.load %arg4[%1128, %c0_284, %c0_285] : memref<32x8x32xf32, #tpu.memory_space<vmem>>, vector<1x8x32xf32>
    %1130 = vector.shape_cast %1129 : vector<1x8x32xf32> to vector<8x32xf32>
    %1131 = vector.shape_cast %1127 : vector<8x32xf32> to vector<1x8x32xf32>
    tpu.vector_store %arg4[%1128, %c0_284, %c0_285], %1131 {strides = array<i32>} : memref<32x8x32xf32, #tpu.memory_space<vmem>>, vector<1x8x32xf32>,
    %c28_i32 = arith.constant 28 : i32
    %1132 = arith.index_cast %c28_i32 : i32 to index
    %c0_286 = arith.constant 0 : index
    %c0_287 = arith.constant 0 : index
    %1133 = vector.load %arg1[%1132, %c0_286, %c0_287] : memref<32x8x128xf32, #tpu.memory_space<vmem>>, vector<1x8x128xf32>
    %1134 = vector.shape_cast %1133 : vector<1x8x128xf32> to vector<8x128xf32>
    %cst_288 = arith.constant dense<0.000000e+00> : vector<8x128xf32>
    %1135 = tpu.matmul %1120, %3, %cst_288 {dimension_numbers = #tpu.dot_dimension_numbers<[1], [0], [0], [1], [0, 0, 1, 1], [], []>} : vector<8x32xf32>, vector<32x128xf32>, vector<8x128xf32> -> vector<8x128xf32>
    %1136 = arith.addf %1134, %1135 : vector<8x128xf32>
    %1137 = math.tanh %1136 : vector<8x128xf32>
    %1138 = arith.negf %1136 : vector<8x128xf32>
    %1139 = math.exp %1138 : vector<8x128xf32>
    %cst_289 = arith.constant 1.000000e+00 : f32
    %1140 = vector.broadcast %cst_289 : f32 to vector<8x128xf32>
    %1141 = arith.addf %1140, %1139 : vector<8x128xf32>
    %1142 = arith.divf %1140, %1141 : vector<8x128xf32>
    %1143 = arith.select %9, %1137, %1142 : vector<8x128xi1>, vector<8x128xf32>
    %1144 = vector.extract_strided_slice %1143 {offsets = [0, 0], sizes = [8, 32], strides = [1, 1]} : vector<8x128xf32> to vector<8x32xf32>
    %1145 = vector.extract_strided_slice %1143 {offsets = [0, 32], sizes = [8, 32], strides = [1, 1]} : vector<8x128xf32> to vector<8x32xf32>
    %1146 = vector.extract_strided_slice %1143 {offsets = [0, 64], sizes = [8, 32], strides = [1, 1]} : vector<8x128xf32> to vector<8x32xf32>
    %1147 = vector.extract_strided_slice %1143 {offsets = [0, 96], sizes = [8, 32], strides = [1, 1]} : vector<8x128xf32> to vector<8x32xf32>
    %1148 = arith.mulf %1145, %1123 : vector<8x32xf32>
    %1149 = arith.mulf %1144, %1146 : vector<8x32xf32>
    %1150 = arith.addf %1148, %1149 : vector<8x32xf32>
    %1151 = math.tanh %1150 : vector<8x32xf32>
    %1152 = arith.mulf %1147, %1151 : vector<8x32xf32>
    %1153 = arith.index_cast %c28_i32 : i32 to index
    %c0_290 = arith.constant 0 : index
    %c0_291 = arith.constant 0 : index
    %1154 = vector.load %arg2[%1153, %c0_290, %c0_291] : memref<32x8x1xf32, #tpu.memory_space<vmem>>, vector<1x8x1xf32>
    %1155 = vector.shape_cast %1154 : vector<1x8x1xf32> to vector<8x1xf32>
    %cst_292 = arith.constant 5.000000e-01 : f32
    %1156 = vector.broadcast %cst_292 : f32 to vector<8x1xf32>
    %1157 = arith.cmpf ogt, %1155, %1156 : vector<8x1xf32>
    %1158 = vector.shape_cast %1157 : vector<8x1xi1> to vector<8x1xi1>
    %1159 = vector.broadcast %1158 : vector<8x1xi1> to vector<8x32xi1>
    %1160 = arith.select %1159, %1152, %1120 : vector<8x32xi1>, vector<8x32xf32>
    %1161 = vector.shape_cast %1157 : vector<8x1xi1> to vector<8x1xi1>
    %1162 = vector.broadcast %1161 : vector<8x1xi1> to vector<8x32xi1>
    %1163 = arith.select %1162, %1150, %1123 : vector<8x32xi1>, vector<8x32xf32>
    %cst_293 = arith.constant 0.000000e+00 : f32
    %1164 = vector.shape_cast %1157 : vector<8x1xi1> to vector<8x1xi1>
    %1165 = vector.broadcast %1164 : vector<8x1xi1> to vector<8x32xi1>
    %1166 = vector.broadcast %cst_293 : f32 to vector<8x32xf32>
    %1167 = arith.select %1165, %1152, %1166 : vector<8x32xi1>, vector<8x32xf32>
    %1168 = arith.index_cast %c28_i32 : i32 to index
    %c0_294 = arith.constant 0 : index
    %c0_295 = arith.constant 0 : index
    %1169 = vector.load %arg4[%1168, %c0_294, %c0_295] : memref<32x8x32xf32, #tpu.memory_space<vmem>>, vector<1x8x32xf32>
    %1170 = vector.shape_cast %1169 : vector<1x8x32xf32> to vector<8x32xf32>
    %1171 = vector.shape_cast %1167 : vector<8x32xf32> to vector<1x8x32xf32>
    tpu.vector_store %arg4[%1168, %c0_294, %c0_295], %1171 {strides = array<i32>} : memref<32x8x32xf32, #tpu.memory_space<vmem>>, vector<1x8x32xf32>,
    %c29_i32 = arith.constant 29 : i32
    %1172 = arith.index_cast %c29_i32 : i32 to index
    %c0_296 = arith.constant 0 : index
    %c0_297 = arith.constant 0 : index
    %1173 = vector.load %arg1[%1172, %c0_296, %c0_297] : memref<32x8x128xf32, #tpu.memory_space<vmem>>, vector<1x8x128xf32>
    %1174 = vector.shape_cast %1173 : vector<1x8x128xf32> to vector<8x128xf32>
    %cst_298 = arith.constant dense<0.000000e+00> : vector<8x128xf32>
    %1175 = tpu.matmul %1160, %3, %cst_298 {dimension_numbers = #tpu.dot_dimension_numbers<[1], [0], [0], [1], [0, 0, 1, 1], [], []>} : vector<8x32xf32>, vector<32x128xf32>, vector<8x128xf32> -> vector<8x128xf32>
    %1176 = arith.addf %1174, %1175 : vector<8x128xf32>
    %1177 = math.tanh %1176 : vector<8x128xf32>
    %1178 = arith.negf %1176 : vector<8x128xf32>
    %1179 = math.exp %1178 : vector<8x128xf32>
    %cst_299 = arith.constant 1.000000e+00 : f32
    %1180 = vector.broadcast %cst_299 : f32 to vector<8x128xf32>
    %1181 = arith.addf %1180, %1179 : vector<8x128xf32>
    %1182 = arith.divf %1180, %1181 : vector<8x128xf32>
    %1183 = arith.select %9, %1177, %1182 : vector<8x128xi1>, vector<8x128xf32>
    %1184 = vector.extract_strided_slice %1183 {offsets = [0, 0], sizes = [8, 32], strides = [1, 1]} : vector<8x128xf32> to vector<8x32xf32>
    %1185 = vector.extract_strided_slice %1183 {offsets = [0, 32], sizes = [8, 32], strides = [1, 1]} : vector<8x128xf32> to vector<8x32xf32>
    %1186 = vector.extract_strided_slice %1183 {offsets = [0, 64], sizes = [8, 32], strides = [1, 1]} : vector<8x128xf32> to vector<8x32xf32>
    %1187 = vector.extract_strided_slice %1183 {offsets = [0, 96], sizes = [8, 32], strides = [1, 1]} : vector<8x128xf32> to vector<8x32xf32>
    %1188 = arith.mulf %1185, %1163 : vector<8x32xf32>
    %1189 = arith.mulf %1184, %1186 : vector<8x32xf32>
    %1190 = arith.addf %1188, %1189 : vector<8x32xf32>
    %1191 = math.tanh %1190 : vector<8x32xf32>
    %1192 = arith.mulf %1187, %1191 : vector<8x32xf32>
    %1193 = arith.index_cast %c29_i32 : i32 to index
    %c0_300 = arith.constant 0 : index
    %c0_301 = arith.constant 0 : index
    %1194 = vector.load %arg2[%1193, %c0_300, %c0_301] : memref<32x8x1xf32, #tpu.memory_space<vmem>>, vector<1x8x1xf32>
    %1195 = vector.shape_cast %1194 : vector<1x8x1xf32> to vector<8x1xf32>
    %cst_302 = arith.constant 5.000000e-01 : f32
    %1196 = vector.broadcast %cst_302 : f32 to vector<8x1xf32>
    %1197 = arith.cmpf ogt, %1195, %1196 : vector<8x1xf32>
    %1198 = vector.shape_cast %1197 : vector<8x1xi1> to vector<8x1xi1>
    %1199 = vector.broadcast %1198 : vector<8x1xi1> to vector<8x32xi1>
    %1200 = arith.select %1199, %1192, %1160 : vector<8x32xi1>, vector<8x32xf32>
    %1201 = vector.shape_cast %1197 : vector<8x1xi1> to vector<8x1xi1>
    %1202 = vector.broadcast %1201 : vector<8x1xi1> to vector<8x32xi1>
    %1203 = arith.select %1202, %1190, %1163 : vector<8x32xi1>, vector<8x32xf32>
    %cst_303 = arith.constant 0.000000e+00 : f32
    %1204 = vector.shape_cast %1197 : vector<8x1xi1> to vector<8x1xi1>
    %1205 = vector.broadcast %1204 : vector<8x1xi1> to vector<8x32xi1>
    %1206 = vector.broadcast %cst_303 : f32 to vector<8x32xf32>
    %1207 = arith.select %1205, %1192, %1206 : vector<8x32xi1>, vector<8x32xf32>
    %1208 = arith.index_cast %c29_i32 : i32 to index
    %c0_304 = arith.constant 0 : index
    %c0_305 = arith.constant 0 : index
    %1209 = vector.load %arg4[%1208, %c0_304, %c0_305] : memref<32x8x32xf32, #tpu.memory_space<vmem>>, vector<1x8x32xf32>
    %1210 = vector.shape_cast %1209 : vector<1x8x32xf32> to vector<8x32xf32>
    %1211 = vector.shape_cast %1207 : vector<8x32xf32> to vector<1x8x32xf32>
    tpu.vector_store %arg4[%1208, %c0_304, %c0_305], %1211 {strides = array<i32>} : memref<32x8x32xf32, #tpu.memory_space<vmem>>, vector<1x8x32xf32>,
    %c30_i32 = arith.constant 30 : i32
    %1212 = arith.index_cast %c30_i32 : i32 to index
    %c0_306 = arith.constant 0 : index
    %c0_307 = arith.constant 0 : index
    %1213 = vector.load %arg1[%1212, %c0_306, %c0_307] : memref<32x8x128xf32, #tpu.memory_space<vmem>>, vector<1x8x128xf32>
    %1214 = vector.shape_cast %1213 : vector<1x8x128xf32> to vector<8x128xf32>
    %cst_308 = arith.constant dense<0.000000e+00> : vector<8x128xf32>
    %1215 = tpu.matmul %1200, %3, %cst_308 {dimension_numbers = #tpu.dot_dimension_numbers<[1], [0], [0], [1], [0, 0, 1, 1], [], []>} : vector<8x32xf32>, vector<32x128xf32>, vector<8x128xf32> -> vector<8x128xf32>
    %1216 = arith.addf %1214, %1215 : vector<8x128xf32>
    %1217 = math.tanh %1216 : vector<8x128xf32>
    %1218 = arith.negf %1216 : vector<8x128xf32>
    %1219 = math.exp %1218 : vector<8x128xf32>
    %cst_309 = arith.constant 1.000000e+00 : f32
    %1220 = vector.broadcast %cst_309 : f32 to vector<8x128xf32>
    %1221 = arith.addf %1220, %1219 : vector<8x128xf32>
    %1222 = arith.divf %1220, %1221 : vector<8x128xf32>
    %1223 = arith.select %9, %1217, %1222 : vector<8x128xi1>, vector<8x128xf32>
    %1224 = vector.extract_strided_slice %1223 {offsets = [0, 0], sizes = [8, 32], strides = [1, 1]} : vector<8x128xf32> to vector<8x32xf32>
    %1225 = vector.extract_strided_slice %1223 {offsets = [0, 32], sizes = [8, 32], strides = [1, 1]} : vector<8x128xf32> to vector<8x32xf32>
    %1226 = vector.extract_strided_slice %1223 {offsets = [0, 64], sizes = [8, 32], strides = [1, 1]} : vector<8x128xf32> to vector<8x32xf32>
    %1227 = vector.extract_strided_slice %1223 {offsets = [0, 96], sizes = [8, 32], strides = [1, 1]} : vector<8x128xf32> to vector<8x32xf32>
    %1228 = arith.mulf %1225, %1203 : vector<8x32xf32>
    %1229 = arith.mulf %1224, %1226 : vector<8x32xf32>
    %1230 = arith.addf %1228, %1229 : vector<8x32xf32>
    %1231 = math.tanh %1230 : vector<8x32xf32>
    %1232 = arith.mulf %1227, %1231 : vector<8x32xf32>
    %1233 = arith.index_cast %c30_i32 : i32 to index
    %c0_310 = arith.constant 0 : index
    %c0_311 = arith.constant 0 : index
    %1234 = vector.load %arg2[%1233, %c0_310, %c0_311] : memref<32x8x1xf32, #tpu.memory_space<vmem>>, vector<1x8x1xf32>
    %1235 = vector.shape_cast %1234 : vector<1x8x1xf32> to vector<8x1xf32>
    %cst_312 = arith.constant 5.000000e-01 : f32
    %1236 = vector.broadcast %cst_312 : f32 to vector<8x1xf32>
    %1237 = arith.cmpf ogt, %1235, %1236 : vector<8x1xf32>
    %1238 = vector.shape_cast %1237 : vector<8x1xi1> to vector<8x1xi1>
    %1239 = vector.broadcast %1238 : vector<8x1xi1> to vector<8x32xi1>
    %1240 = arith.select %1239, %1232, %1200 : vector<8x32xi1>, vector<8x32xf32>
    %1241 = vector.shape_cast %1237 : vector<8x1xi1> to vector<8x1xi1>
    %1242 = vector.broadcast %1241 : vector<8x1xi1> to vector<8x32xi1>
    %1243 = arith.select %1242, %1230, %1203 : vector<8x32xi1>, vector<8x32xf32>
    %cst_313 = arith.constant 0.000000e+00 : f32
    %1244 = vector.shape_cast %1237 : vector<8x1xi1> to vector<8x1xi1>
    %1245 = vector.broadcast %1244 : vector<8x1xi1> to vector<8x32xi1>
    %1246 = vector.broadcast %cst_313 : f32 to vector<8x32xf32>
    %1247 = arith.select %1245, %1232, %1246 : vector<8x32xi1>, vector<8x32xf32>
    %1248 = arith.index_cast %c30_i32 : i32 to index
    %c0_314 = arith.constant 0 : index
    %c0_315 = arith.constant 0 : index
    %1249 = vector.load %arg4[%1248, %c0_314, %c0_315] : memref<32x8x32xf32, #tpu.memory_space<vmem>>, vector<1x8x32xf32>
    %1250 = vector.shape_cast %1249 : vector<1x8x32xf32> to vector<8x32xf32>
    %1251 = vector.shape_cast %1247 : vector<8x32xf32> to vector<1x8x32xf32>
    tpu.vector_store %arg4[%1248, %c0_314, %c0_315], %1251 {strides = array<i32>} : memref<32x8x32xf32, #tpu.memory_space<vmem>>, vector<1x8x32xf32>,
    %c31_i32 = arith.constant 31 : i32
    %1252 = arith.index_cast %c31_i32 : i32 to index
    %c0_316 = arith.constant 0 : index
    %c0_317 = arith.constant 0 : index
    %1253 = vector.load %arg1[%1252, %c0_316, %c0_317] : memref<32x8x128xf32, #tpu.memory_space<vmem>>, vector<1x8x128xf32>
    %1254 = vector.shape_cast %1253 : vector<1x8x128xf32> to vector<8x128xf32>
    %cst_318 = arith.constant dense<0.000000e+00> : vector<8x128xf32>
    %1255 = tpu.matmul %1240, %3, %cst_318 {dimension_numbers = #tpu.dot_dimension_numbers<[1], [0], [0], [1], [0, 0, 1, 1], [], []>} : vector<8x32xf32>, vector<32x128xf32>, vector<8x128xf32> -> vector<8x128xf32>
    %1256 = arith.addf %1254, %1255 : vector<8x128xf32>
    %1257 = math.tanh %1256 : vector<8x128xf32>
    %1258 = arith.negf %1256 : vector<8x128xf32>
    %1259 = math.exp %1258 : vector<8x128xf32>
    %cst_319 = arith.constant 1.000000e+00 : f32
    %1260 = vector.broadcast %cst_319 : f32 to vector<8x128xf32>
    %1261 = arith.addf %1260, %1259 : vector<8x128xf32>
    %1262 = arith.divf %1260, %1261 : vector<8x128xf32>
    %1263 = arith.select %9, %1257, %1262 : vector<8x128xi1>, vector<8x128xf32>
    %1264 = vector.extract_strided_slice %1263 {offsets = [0, 0], sizes = [8, 32], strides = [1, 1]} : vector<8x128xf32> to vector<8x32xf32>
    %1265 = vector.extract_strided_slice %1263 {offsets = [0, 32], sizes = [8, 32], strides = [1, 1]} : vector<8x128xf32> to vector<8x32xf32>
    %1266 = vector.extract_strided_slice %1263 {offsets = [0, 64], sizes = [8, 32], strides = [1, 1]} : vector<8x128xf32> to vector<8x32xf32>
    %1267 = vector.extract_strided_slice %1263 {offsets = [0, 96], sizes = [8, 32], strides = [1, 1]} : vector<8x128xf32> to vector<8x32xf32>
    %1268 = arith.mulf %1265, %1243 : vector<8x32xf32>
    %1269 = arith.mulf %1264, %1266 : vector<8x32xf32>
    %1270 = arith.addf %1268, %1269 : vector<8x32xf32>
    %1271 = math.tanh %1270 : vector<8x32xf32>
    %1272 = arith.mulf %1267, %1271 : vector<8x32xf32>
    %1273 = arith.index_cast %c31_i32 : i32 to index
    %c0_320 = arith.constant 0 : index
    %c0_321 = arith.constant 0 : index
    %1274 = vector.load %arg2[%1273, %c0_320, %c0_321] : memref<32x8x1xf32, #tpu.memory_space<vmem>>, vector<1x8x1xf32>
    %1275 = vector.shape_cast %1274 : vector<1x8x1xf32> to vector<8x1xf32>
    %cst_322 = arith.constant 5.000000e-01 : f32
    %1276 = vector.broadcast %cst_322 : f32 to vector<8x1xf32>
    %1277 = arith.cmpf ogt, %1275, %1276 : vector<8x1xf32>
    %1278 = vector.shape_cast %1277 : vector<8x1xi1> to vector<8x1xi1>
    %1279 = vector.broadcast %1278 : vector<8x1xi1> to vector<8x32xi1>
    %1280 = arith.select %1279, %1272, %1240 : vector<8x32xi1>, vector<8x32xf32>
    %1281 = vector.shape_cast %1277 : vector<8x1xi1> to vector<8x1xi1>
    %1282 = vector.broadcast %1281 : vector<8x1xi1> to vector<8x32xi1>
    %1283 = arith.select %1282, %1270, %1243 : vector<8x32xi1>, vector<8x32xf32>
    %cst_323 = arith.constant 0.000000e+00 : f32
    %1284 = vector.shape_cast %1277 : vector<8x1xi1> to vector<8x1xi1>
    %1285 = vector.broadcast %1284 : vector<8x1xi1> to vector<8x32xi1>
    %1286 = vector.broadcast %cst_323 : f32 to vector<8x32xf32>
    %1287 = arith.select %1285, %1272, %1286 : vector<8x32xi1>, vector<8x32xf32>
    %1288 = arith.index_cast %c31_i32 : i32 to index
    %c0_324 = arith.constant 0 : index
    %c0_325 = arith.constant 0 : index
    %1289 = vector.load %arg4[%1288, %c0_324, %c0_325] : memref<32x8x32xf32, #tpu.memory_space<vmem>>, vector<1x8x32xf32>
    %1290 = vector.shape_cast %1289 : vector<1x8x32xf32> to vector<8x32xf32>
    %1291 = vector.shape_cast %1287 : vector<8x32xf32> to vector<1x8x32xf32>
    tpu.vector_store %arg4[%1288, %c0_324, %c0_325], %1291 {strides = array<i32>} : memref<32x8x32xf32, #tpu.memory_space<vmem>>, vector<1x8x32xf32>,
    %c32_i32 = arith.constant 32 : i32
    %c0_326 = arith.constant 0 : index
    %c0_327 = arith.constant 0 : index
    %1292 = vector.load %arg7[%c0_326, %c0_327] : memref<8x32xf32, #tpu.memory_space<vmem>>, vector<8x32xf32>
    tpu.vector_store %arg7[%c0_326, %c0_327], %1280 {strides = array<i32>} : memref<8x32xf32, #tpu.memory_space<vmem>>, vector<8x32xf32>,
    %c0_328 = arith.constant 0 : index
    %c0_329 = arith.constant 0 : index
    %1293 = vector.load %arg8[%c0_328, %c0_329] : memref<8x32xf32, #tpu.memory_space<vmem>>, vector<8x32xf32>
    tpu.vector_store %arg8[%c0_328, %c0_329], %1283 {strides = array<i32>} : memref<8x32xf32, #tpu.memory_space<vmem>>, vector<8x32xf32>,
    %c0_330 = arith.constant 0 : index
    %c0_331 = arith.constant 0 : index
    %1294 = vector.load %arg5[%c0_330, %c0_331] : memref<8x32xf32, #tpu.memory_space<vmem>>, vector<8x32xf32>
    tpu.vector_store %arg5[%c0_330, %c0_331], %1280 {strides = array<i32>} : memref<8x32xf32, #tpu.memory_space<vmem>>, vector<8x32xf32>,
    %c0_332 = arith.constant 0 : index
    %c0_333 = arith.constant 0 : index
    %1295 = vector.load %arg6[%c0_332, %c0_333] : memref<8x32xf32, #tpu.memory_space<vmem>>, vector<8x32xf32>
    tpu.vector_store %arg6[%c0_332, %c0_333], %1283 {strides = array<i32>} : memref<8x32xf32, #tpu.memory_space<vmem>>, vector<8x32xf32>,
    return
  }
  func.func @transform_0(%arg0: i32) -> (i32, i32, i32) {
    %c0_i32 = arith.constant 0 : i32
    %c0_i32_0 = arith.constant 0 : i32
    %c0_i32_1 = arith.constant 0 : i32
    return %arg0, %c0_i32, %c0_i32_0 : i32, i32, i32
  }
  func.func @transform_1(%arg0: i32) -> (i32, i32, i32) {
    %c0_i32 = arith.constant 0 : i32
    %c0_i32_0 = arith.constant 0 : i32
    %c0_i32_1 = arith.constant 0 : i32
    return %arg0, %c0_i32, %c0_i32_0 : i32, i32, i32
  }
  func.func @transform_2(%arg0: i32) -> (i32, i32) {
    %c0_i32 = arith.constant 0 : i32
    %c0_i32_0 = arith.constant 0 : i32
    %c0_i32_1 = arith.constant 0 : i32
    return %c0_i32, %c0_i32_0 : i32, i32
  }
  func.func @transform_3(%arg0: i32) -> (i32, i32, i32) {
    %c0_i32 = arith.constant 0 : i32
    %c0_i32_0 = arith.constant 0 : i32
    %c0_i32_1 = arith.constant 0 : i32
    return %arg0, %c0_i32, %c0_i32_0 : i32, i32, i32
  }
  func.func @transform_4(%arg0: i32) -> (i32, i32) {
    %c0_i32 = arith.constant 0 : i32
    %c0_i32_0 = arith.constant 0 : i32
    %c0_i32_1 = arith.constant 0 : i32
    return %c0_i32, %c0_i32_0 : i32, i32
  }
  func.func @transform_5(%arg0: i32) -> (i32, i32) {
    %c0_i32 = arith.constant 0 : i32
    %c0_i32_0 = arith.constant 0 : i32
    %c0_i32_1 = arith.constant 0 : i32
    return %c0_i32, %c0_i32_0 : i32, i32
  }
}

</mosaic_0001>

<llo_original>
// kernel: encoder_forward_arrays.1
$region0: #{encoder_forward_arrays.1}
  #allocation0 [shape = 'u32[]', space=smem, size = 0x4, offset = 0x4, fixed_abs, tag = 'smem constant byte address 0x4 - core index']
  #allocation1 [shape = 'u32[144,128]{1,0:T(1,128)}', space=vmem, size = 0x12000, scoped, tag = 'internal scratch']
  #allocation2 [shape = 'f32[8,32]{1,0:T(8,128)}', space=vmem, size = 0x1000, scoped, tag = 'scratch operand']
  #allocation3 [shape = 'f32[8,32]{1,0:T(8,128)}', space=vmem, size = 0x1000, scoped, tag = 'scratch operand']
  %s0 = inlined_call_operand.vmem [shape: f32[64,8,128], index: 0, kind: input, shape index: {}]
  %s1 = inlined_call_operand.vmem [shape: f32[64,8,1], index: 1, kind: input, shape index: {}]
  %s2 = inlined_call_operand.vmem [shape: f32[32,128], index: 2, kind: input, shape index: {}]
  %s3 = inlined_call_operand.vmem [shape: f32[64,8,32], index: 3, kind: output, shape index: {0}]
  %s4 = inlined_call_operand.hbm [shape: f32[8,32], index: 4, kind: output, shape index: {1}]
  %s5 = inlined_call_operand.hbm [shape: f32[8,32], index: 5, kind: output, shape index: {2}]
  %6 = xla_tuple %s3, %s4, %s5
  %s7 = sld [smem:[#allocation0]]
  $region65: #{encoder_forward_arrays.1} parent=0
    _
  %s9 = ssub.s32 1, %s7
  %s10 = scalar_select 0, %s9, %s7
  $region1: #{encoder_forward_arrays.1} parent=0
    #allocation4 [shape = 'u8[4096]{0}', space=vmem, size = 0x1000, scoped, tag = 'output window, operand 1, single buffered']
    #allocation5 [shape = 's32[2]{0}', space=sflag, size = 0x8, scoped, tag = 'scoped memory for encoder_forward_arrays.1']
    #allocation6 [shape = 'u8[4096]{0}', space=vmem, size = 0x1000, scoped, tag = 'output window, operand 2, single buffered']
    #allocation7 [shape = 's32[1]{0}', space=sflag, size = 0x4, scoped, tag = 'scoped memory for encoder_forward_arrays.1']
    %11 = vsyncpa [#allocation5], 0
    %12 = vsyncpa [#allocation7], 0
    loop: start=0, step=1, limit=4
    $region2: #{encoder_forward_arrays.1} parent=1 // loop_pre_header
      _
    $region3: #{encoder_forward_arrays.1} parent=1 // loop_header
      %s14 = sphi 0, %s18
      %p15 = scmp.ge.s32.totalorder %s14, 4
      %s24 = sphi 0, %s26
      %s27 = sphi 0, %s24
      %s28 = sphi 0, %s27
      %s44 = sphi 0, %s28
      %s50 = sphi 0, %s52
      %s53 = sphi 0, %s50
      %s54 = sphi 0, %s53
      %s70 = sphi 0, %s54
      %s74 = sphi 0, %s74
      %s76 = sphi 0, %s74
      %s77 = sphi 0, %s76
      %s91 = sphi 0, %s77
      %s97 = sphi 0, %s99
      %s100 = sphi 0, %s97
      %s101 = sphi 0, %s100
      %s117 = sphi 0, %s101
      %s121 = sphi 0, %s121
      %s123 = sphi 0, %s121
      %s124 = sphi 0, %s123
      %s138 = sphi 0, %s124
      %s142 = sphi 0, %s142
      %s144 = sphi 0, %s142
      %s145 = sphi 0, %s144
      %s159 = sphi 0, %s145
    $region4: #{encoder_forward_arrays.1} parent=1 // loop_header_branch
      %17 = sbr.rel (%p15) target = $region8
    $region5: #{encoder_forward_arrays.1} parent=1 // loop_body
      %s19 = ssub.s32 %s14, 1
      %s20 = ssub.s32 %s14, 2
      %s21 = sadd.s32 %s14, 1
      %s22 = ssub.s32 %s14, %s21
      %p23 = scmp.eq.s32.totalorder %s22, 0
      %s25 = sadd.s32 %s24, 1
      %s26 = scalar_select %p23, %s24, %s25
      %p29 = pneg %p23
      %p30 = scmp.eq.s32.totalorder %s14, 1
      %p31 = por %p29, %p30
      %p32 = scmp.ne.s32.totalorder %s24, %s27
      %p33 = scmp.eq.s32.totalorder %s14, 0
      %p34 = por %p32, %p33
      %p35 = scmp.ne.s32.totalorder %s24, %s27
      %p36 = scmp.eq.s32.totalorder %s19, 1
      %p37 = por %p35, %p36
      %p38 = scmp.ne.s32.totalorder %s27, %s28
      %p39 = scmp.eq.s32.totalorder %s19, 0
      %p40 = por %p38, %p39
      %p41 = scmp.ne.s32.totalorder %s27, %s28
      %p42 = scmp.eq.s32.totalorder %s20, 1
      %p43 = por %p41, %p42
      %p45 = scmp.ne.s32.totalorder %s28, %s44
      %p46 = scmp.eq.s32.totalorder %s20, 0
      %p47 = por %p45, %p46
      %s48 = ssub.s32 %s14, %s21
      %p49 = scmp.eq.s32.totalorder %s48, 0
      %s51 = sadd.s32 %s50, 1
      %s52 = scalar_select %p49, %s50, %s51
      %p55 = pneg %p49
      %p56 = scmp.eq.s32.totalorder %s14, 1
      %p57 = por %p55, %p56
      %p58 = scmp.ne.s32.totalorder %s50, %s53
      %p59 = scmp.eq.s32.totalorder %s14, 0
      %p60 = por %p58, %p59
      %p61 = scmp.ne.s32.totalorder %s50, %s53
      %p62 = scmp.eq.s32.totalorder %s19, 1
      %p63 = por %p61, %p62
      %p64 = scmp.ne.s32.totalorder %s53, %s54
      %p65 = scmp.eq.s32.totalorder %s19, 0
      %p66 = por %p64, %p65
      %p67 = scmp.ne.s32.totalorder %s53, %s54
      %p68 = scmp.eq.s32.totalorder %s20, 1
      %p69 = por %p67, %p68
      %p71 = scmp.ne.s32.totalorder %s54, %s70
      %p72 = scmp.eq.s32.totalorder %s20, 0
      %p73 = por %p71, %p72
      %s75 = sadd.s32 %s74, 1
      %p78 = scmp.eq.s32.totalorder %s14, 1
      %p79 = scmp.ne.s32.totalorder %s74, %s76
      %p80 = scmp.eq.s32.totalorder %s14, 0
      %p81 = por %p79, %p80
      %p82 = scmp.ne.s32.totalorder %s74, %s76
      %p83 = scmp.eq.s32.totalorder %s19, 1
      %p84 = por %p82, %p83
      %p85 = scmp.ne.s32.totalorder %s76, %s77
      %p86 = scmp.eq.s32.totalorder %s19, 0
      %p87 = por %p85, %p86
      %p88 = scmp.ne.s32.totalorder %s76, %s77
      %p89 = scmp.eq.s32.totalorder %s20, 1
      %p90 = por %p88, %p89
      %p92 = scmp.ne.s32.totalorder %s77, %s91
      %p93 = scmp.eq.s32.totalorder %s20, 0
      %p94 = por %p92, %p93
      %s95 = ssub.s32 %s14, %s21
      %p96 = scmp.eq.s32.totalorder %s95, 0
      %s98 = sadd.s32 %s97, 1
      %s99 = scalar_select %p96, %s97, %s98
      %p102 = pneg %p96
      %p103 = scmp.eq.s32.totalorder %s14, 1
      %p104 = por %p102, %p103
      %p105 = scmp.ne.s32.totalorder %s97, %s100
      %p106 = scmp.eq.s32.totalorder %s14, 0
      %p107 = por %p105, %p106
      %p108 = scmp.ne.s32.totalorder %s97, %s100
      %p109 = scmp.eq.s32.totalorder %s19, 1
      %p110 = por %p108, %p109
      %p111 = scmp.ne.s32.totalorder %s100, %s101
      %p112 = scmp.eq.s32.totalorder %s19, 0
      %p113 = por %p111, %p112
      %p114 = scmp.ne.s32.totalorder %s100, %s101
      %p115 = scmp.eq.s32.totalorder %s20, 1
      %p116 = por %p114, %p115
      %p118 = scmp.ne.s32.totalorder %s101, %s117
      %p119 = scmp.eq.s32.totalorder %s20, 0
      %p120 = por %p118, %p119
      %s122 = sadd.s32 %s121, 1
      %p125 = scmp.eq.s32.totalorder %s14, 1
      %p126 = scmp.ne.s32.totalorder %s121, %s123
      %p127 = scmp.eq.s32.totalorder %s14, 0
      %p128 = por %p126, %p127
      %p129 = scmp.ne.s32.totalorder %s121, %s123
      %p130 = scmp.eq.s32.totalorder %s19, 1
      %p131 = por %p129, %p130
      %p132 = scmp.ne.s32.totalorder %s123, %s124
      %p133 = scmp.eq.s32.totalorder %s19, 0
      %p134 = por %p132, %p133
      %p135 = scmp.ne.s32.totalorder %s123, %s124
      %p136 = scmp.eq.s32.totalorder %s20, 1
      %p137 = por %p135, %p136
      %p139 = scmp.ne.s32.totalorder %s124, %s138
      %p140 = scmp.eq.s32.totalorder %s20, 0
      %p141 = por %p139, %p140
      %s143 = sadd.s32 %s142, 1
      %p146 = scmp.eq.s32.totalorder %s14, 1
      %p147 = scmp.ne.s32.totalorder %s142, %s144
      %p148 = scmp.eq.s32.totalorder %s14, 0
      %p149 = por %p147, %p148
      %p150 = scmp.ne.s32.totalorder %s142, %s144
      %p151 = scmp.eq.s32.totalorder %s19, 1
      %p152 = por %p150, %p151
      %p153 = scmp.ne.s32.totalorder %s144, %s145
      %p154 = scmp.eq.s32.totalorder %s19, 0
      %p155 = por %p153, %p154
      %p156 = scmp.ne.s32.totalorder %s144, %s145
      %p157 = scmp.eq.s32.totalorder %s20, 1
      %p158 = por %p156, %p157
      %p160 = scmp.ne.s32.totalorder %s145, %s159
      %p161 = scmp.eq.s32.totalorder %s20, 0
      %p162 = por %p160, %p161
      %p163 = scmp.le.s32.totalorder 1, %s14
      %p164 = scmp.lt.s32.totalorder %s14, 3
      %p165 = pnand %p163, %p164
      %p166 = pneg %p165
      // Predicated region
      $region9: #{encoder_forward_arrays.1} parent=5 // pred_check
        _
      $region10: #{encoder_forward_arrays.1} parent=5 // pred_check_branch
        %168 = sbr.rel (%p165) target = $region12
      $region11: #{encoder_forward_arrays.1} parent=5 // pred_region
        %s169 = ssub.s32 %s14, 1
        // Predicated region
        $region13: #{encoder_forward_arrays.1} parent=11 // pred_check
          %p170 = pneg %p87
        $region14: #{encoder_forward_arrays.1} parent=11 // pred_check_branch
          %172 = sbr.rel (%p170) target = $region16
        $region15: #{encoder_forward_arrays.1} parent=11 // pred_region
          _
        $region16: #{encoder_forward_arrays.1} parent=11 // pred_fallthru
          _
      $region12: #{encoder_forward_arrays.1} parent=5 // pred_fallthru
        _
      %p173 = scmp.lt.s32.totalorder %s14, 2
      // Predicated region
      $region17: #{encoder_forward_arrays.1} parent=5 // pred_check
        %p174 = pneg %p173
      $region18: #{encoder_forward_arrays.1} parent=5 // pred_check_branch
        %176 = sbr.rel (%p174) target = $region20
      $region19: #{encoder_forward_arrays.1} parent=5 // pred_region
        // Predicated region
        $region21: #{encoder_forward_arrays.1} parent=19 // pred_check
          %p177 = pneg %p34
        $region22: #{encoder_forward_arrays.1} parent=19 // pred_check_branch
          %179 = sbr.rel (%p177) target = $region24
        $region23: #{encoder_forward_arrays.1} parent=19 // pred_region
          %s180 = smul.u32 32, %s14
          %p181 = scmp.lt.s32.totalorder %s180, 63
          %s182 = scalar_select %p181, %s180, 63
          %s183 = smul.addr %s182, 8
          %s184 = scalar_lea.vmem %s0, %s183
          %s185 = smul.u32 32, %s14
        $region24: #{encoder_forward_arrays.1} parent=19 // pred_fallthru
          _
        // Predicated region
        $region25: #{encoder_forward_arrays.1} parent=19 // pred_check
          %p186 = pneg %p60
        $region26: #{encoder_forward_arrays.1} parent=19 // pred_check_branch
          %188 = sbr.rel (%p186) target = $region28
        $region27: #{encoder_forward_arrays.1} parent=19 // pred_region
          %s189 = smul.u32 32, %s14
          %p190 = scmp.lt.s32.totalorder %s189, 63
          %s191 = scalar_select %p190, %s189, 63
          %s192 = smul.addr %s191, 8
          %s193 = scalar_lea.vmem %s1, %s192
          %s194 = smul.u32 32, %s14
        $region28: #{encoder_forward_arrays.1} parent=19 // pred_fallthru
          _
      $region20: #{encoder_forward_arrays.1} parent=5 // pred_fallthru
        _
      %p195 = scmp.le.s32.totalorder 1, %s14
      %p196 = scmp.lt.s32.totalorder %s14, 3
      %p197 = pnand %p195, %p196
      %p198 = pneg %p197
      // Predicated region
      $region29: #{encoder_forward_arrays.1} parent=5 // pred_check
        _
      $region30: #{encoder_forward_arrays.1} parent=5 // pred_check_branch
        %200 = sbr.rel (%p197) target = $region32
      $region31: #{encoder_forward_arrays.1} parent=5 // pred_region
        %s201 = ssub.s32 %s14, 1
        %s202 = smul.u32 32, %s19
        %p203 = scmp.lt.s32.totalorder %s202, 63
        %s204 = scalar_select %p203, %s202, 63
        %s205 = smul.addr %s204, 8
        %s206 = scalar_lea.vmem %s0, %s205
        %p207 = pneg %p40
        %p208 = pneg %p37
        %s209 = smul.u32 32, %s19
        %p210 = scmp.lt.s32.totalorder %s209, 63
        %s211 = scalar_select %p210, %s209, 63
        %s212 = smul.addr %s211, 8
        %s213 = scalar_lea.vmem %s1, %s212
        %p214 = pneg %p66
        %p215 = pneg %p63
        %p216 = pneg %p87
        %p217 = pneg %p84
        %p218 = pneg %p113
        %p219 = pneg %p110
        %s220 = smul.u32 32, %s19
        %p221 = scmp.lt.s32.totalorder %s220, 63
        %s222 = scalar_select %p221, %s220, 63
        %s223 = smul.addr %s222, 8
        %s224 = scalar_lea.vmem %s3, %s223
        %p225 = pneg %p134
        %p226 = pneg %p131
        %p227 = pneg %p155
        %p228 = pneg %p152
        %s229 = smul.u32 32, %s19
        %p230 = scmp.lt.s32.totalorder %s229, 63
        %s231 = scalar_select %p230, %s229, 63
        %s232 = smul.addr %s231, 8
        %s233 = scalar_lea.vmem %s0, %s232
        %s234 = smul.u32 32, %s19
        %s235 = smul.u32 32, %s19
        %p236 = scmp.lt.s32.totalorder %s235, 63
        %s237 = scalar_select %p236, %s235, 63
        %s238 = smul.addr %s237, 8
        %s239 = scalar_lea.vmem %s1, %s238
        %s240 = smul.u32 32, %s19
        %s241 = smul.u32 32, %s19
        %p242 = scmp.lt.s32.totalorder %s241, 63
        %s243 = scalar_select %p242, %s241, 63
        %s244 = smul.addr %s243, 8
        %s245 = scalar_lea.vmem %s3, %s244
        %s246 = smul.u32 32, %s19
        %p247 = scmp.eq.s32.totalorder %s19, 0
        // Predicated region
        $region33: #{encoder_forward_arrays.1} parent=31 // pred_check
          %p248 = pneg %p247
        $region34: #{encoder_forward_arrays.1} parent=31 // pred_check_branch
          %250 = sbr.rel (%p248) target = $region36
        $region35: #{encoder_forward_arrays.1} parent=31 // pred_region
          %vm251 = vcmask 261120
          %252 = vst.msk [vmem:[#allocation2] sm:$0xff] %vm251, 0.0
          %253 = vst.msk [vmem:[#allocation3] sm:$0xff] %vm251, 0.0
        $region36: #{encoder_forward_arrays.1} parent=31 // pred_fallthru
          _
        %v254 = vld [vmem:[%s2] sm:$0xff]
        %v255 = vld [vmem:[%s2 + $0x8] sm:$0xff]
        %v256 = vld [vmem:[%s2 + $0x10] sm:$0xff]
        %v257 = vld [vmem:[%s2 + $0x18] sm:$0xff]
        %v258 = vlaneseq
        %v259 = vand.u32 %v258, 127
        %vm260 = vcmp.ge.s32.totalorder %v259, 64
        %vm261 = vcmp.lt.s32.totalorder %v259, 96
        %vm262 = vmand %vm260, %vm261
        %v263 = vld [vmem:[#allocation2] sm:$0xff]
        %v264 = vld [vmem:[#allocation3] sm:$0xff]
        %v265 = vld [vmem:[%s233] sm:$0xff]
        %vm266 = vcmask 261120
        %v268 = vsel %vm266, %v263, 0
        %270 = vmatprep.subr.mxu0 0.0
        %271 = vmatpush1.msra.mxu0 %v254
        %272 = vmatprep.subr.mxu0 0.0
        %273 = vmatpush1.msra.mxu0 %v255
        %274 = vmatprep.subr.mxu0 0.0
        %275 = vmatpush1.msra.mxu0 %v256
        %276 = vmatprep.subr.mxu0 0.0
        %277 = vmatpush1.msra.mxu0 %v257
        %278 = vmatprep.subr.mxu0 0.0
        %279 = vmatpush1.msra.mxu0 0.0
        %280 = vmatprep.subr.mxu0 0.0
        %281 = vmatpush1.msra.mxu0 0.0
        %282 = vmatprep.subr.mxu0 0.0
        %283 = vmatpush1.msra.mxu0 0.0
        %284 = vmatprep.subr.mxu0 0.0
        %285 = vmatpush1.msra.mxu0 0.0
        %286 = vmatprep.subr.mxu0 0.0
        %287 = vmatpush1.msra.mxu0 0.0
        %288 = vmatprep.subr.mxu0 0.0
        %289 = vmatpush1.msra.mxu0 0.0
        %290 = vmatprep.subr.mxu0 0.0
        %291 = vmatpush1.msra.mxu0 0.0
        %292 = vmatprep.subr.mxu0 0.0
        %293 = vmatpush1.msra.mxu0 0.0
        %294 = vmatprep.subr.mxu0 0.0
        %295 = vmatpush1.msra.mxu0 0.0
        %296 = vmatprep.subr.mxu0 0.0
        %297 = vmatpush1.msra.mxu0 0.0
        %298 = vmatprep.subr.mxu0 0.0
        %299 = vmatpush1.msra.mxu0 0.0
        %300 = vmatprep.subr.mxu0 0.0
        %301 = vmatpush1.msra.mxu0 0.0
        %302 = vmatprep.subr.mxu0 0.0
        %303 = vmatpush1.msra.mxu0 0.0
        %304 = vmatprep.subr.mxu0 0.0
        %305 = vmatpush1.msra.mxu0 0.0
        %306 = vmatprep.subr.mxu0 0.0
        %307 = vmatpush1.msra.mxu0 0.0
        %308 = vmatprep.subr.mxu0 0.0
        %309 = vmatpush1.msra.mxu0 0.0
        %310 = vmatprep.subr.mxu0 0.0
        %311 = vmatpush1.msra.mxu0 0.0
        %312 = vmatprep.subr.mxu0 0.0
        %313 = vmatpush1.msra.mxu0 0.0
        %314 = vmatprep.subr.mxu0 0.0
        %315 = vmatpush1.msra.mxu0 0.0
        %316 = vmatprep.subr.mxu0 0.0
        %317 = vmatpush1.msra.mxu0 0.0
        %318 = vmatprep.subr.mxu0 0.0
        %319 = vmatpush1.msra.mxu0 0.0
        %320 = vmatprep.subr.mxu0 0.0
        %321 = vmatpush1.msra.mxu0 0.0
        %322 = vmatprep.subr.mxu0 0.0
        %323 = vmatpush1.msra.mxu0 0.0
        %324 = vmatprep.subr.mxu0 0.0
        %325 = vmatpush1.msra.mxu0 0.0
        %326 = vmatprep.subr.mxu0 0.0
        %327 = vmatpush1.msra.mxu0 0.0
        %328 = vmatprep.subr.mxu0 0.0
        %329 = vmatpush1.msra.mxu0 0.0
        %330 = vmatprep.subr.mxu0 0.0
        %331 = vmatpush1.msra.mxu0 0.0
        %332 = vmatprep.subr.mxu0 0.0
        %333 = vmatpush1.msra.mxu0 0.0
        %334 = vmatprep.mubr.f32.mxu0 0.0
        %335 = vmatmul.mubr.f32.gmra.mrb[0].mxu0 %v268
        %v336 = vpop.f32.mrb[0].mxu0
        %v337 = vadd.f32 0.0, %v336
        %v338 = vpop.f32.mrb[0].mxu0
        %339 = vdwg.mxu0
        %v340 = vadd.f32 %v265, %v337
        %v341 = vtanh.pop %v340
        %v342 = vxor.u32 %v340, 2147483648
        %v343 = vmul.f32 %v342, 1.442695
        %v344 = vpow.pop %v343
        %v345 = vadd.f32 %v344, 1.0
        %v346 = vrcp.pop %v345
        %v347 = vmul.f32 1.0, %v346
        %v348 = vsel %vm262, %v341, %v347
        %350 = vrot.lane.b32.xlu0 %v264, 32
        %v351 = vpop.permute.xlu0 %350
        %v353 = vmul.f32 %v348, %v351
        %355 = vrot.lane.b32.xlu0 %v348, 64
        %v356 = vpop.permute.xlu0 %355
        %v358 = vmul.f32 %v348, %v356
        %360 = vrot.lane.b32.xlu0 %v358, 32
        %v361 = vpop.permute.xlu0 %360
        %v363 = vadd.f32 %v353, %v361
        %v364 = vtanh.pop %v363
        %366 = vrot.lane.b32.xlu0 %v364, 64
        %v367 = vpop.permute.xlu0 %366
        %v369 = vmul.f32 %v348, %v367
        %v370 = vld [vmem:[%s239] sm:$0xff]
        %vm371 = vcmp.gt.f32.partialorder %v370, 0.5
        %v372 = vsel %vm371, 1, 0
        %373 = vset.pattern.permute.xlu0 0
        %374 = vperm.xlu0 %373, %v372
        %v375 = vpop.permute.xlu0 %374
        %vm376 = vcmp.eq.s32.totalorder %v375, 1
        %377 = vrot.lane.b32.xlu0 %v263, 96
        %v378 = vpop.permute.xlu0 %377
        %v380 = vsel %vm376, %v369, %v378
        %v381 = vsel %vm376, %v363, %v351
        %v382 = vsel %vm376, %v369, 0.0
        %384 = vrot.lane.b32.xlu0 %v382, 32
        %v385 = vpop.permute.xlu0 %384
        %387 = vst.msk [vmem:[%s245] sm:$0xff] %vm266, %v385
        %s388 = scalar_lea.vmem %s233, 8
        %v389 = vld [vmem:[%s388] sm:$0xff]
        %391 = vrot.lane.b32.xlu0 %v380, 32
        %v392 = vpop.permute.xlu0 %391
        %v393 = vsel %vm266, %v392, 0
        %395 = vmatprep.subr.mxu0 0.0
        %396 = vmatpush1.msra.mxu0 %v254
        %397 = vmatprep.subr.mxu0 0.0
        %398 = vmatpush1.msra.mxu0 %v255
        %399 = vmatprep.subr.mxu0 0.0
        %400 = vmatpush1.msra.mxu0 %v256
        %401 = vmatprep.subr.mxu0 0.0
        %402 = vmatpush1.msra.mxu0 %v257
        %403 = vmatprep.subr.mxu0 0.0
        %404 = vmatpush1.msra.mxu0 0.0
        %405 = vmatprep.subr.mxu0 0.0
        %406 = vmatpush1.msra.mxu0 0.0
        %407 = vmatprep.subr.mxu0 0.0
        %408 = vmatpush1.msra.mxu0 0.0
        %409 = vmatprep.subr.mxu0 0.0
        %410 = vmatpush1.msra.mxu0 0.0
        %411 = vmatprep.subr.mxu0 0.0
        %412 = vmatpush1.msra.mxu0 0.0
        %413 = vmatprep.subr.mxu0 0.0
        %414 = vmatpush1.msra.mxu0 0.0
        %415 = vmatprep.subr.mxu0 0.0
        %416 = vmatpush1.msra.mxu0 0.0
        %417 = vmatprep.subr.mxu0 0.0
        %418 = vmatpush1.msra.mxu0 0.0
        %419 = vmatprep.subr.mxu0 0.0
        %420 = vmatpush1.msra.mxu0 0.0
        %421 = vmatprep.subr.mxu0 0.0
        %422 = vmatpush1.msra.mxu0 0.0
        %423 = vmatprep.subr.mxu0 0.0
        %424 = vmatpush1.msra.mxu0 0.0
        %425 = vmatprep.subr.mxu0 0.0
        %426 = vmatpush1.msra.mxu0 0.0
        %427 = vmatprep.subr.mxu0 0.0
        %428 = vmatpush1.msra.mxu0 0.0
        %429 = vmatprep.subr.mxu0 0.0
        %430 = vmatpush1.msra.mxu0 0.0
        %431 = vmatprep.subr.mxu0 0.0
        %432 = vmatpush1.msra.mxu0 0.0
        %433 = vmatprep.subr.mxu0 0.0
        %434 = vmatpush1.msra.mxu0 0.0
        %435 = vmatprep.subr.mxu0 0.0
        %436 = vmatpush1.msra.mxu0 0.0
        %437 = vmatprep.subr.mxu0 0.0
        %438 = vmatpush1.msra.mxu0 0.0
        %439 = vmatprep.subr.mxu0 0.0
        %440 = vmatpush1.msra.mxu0 0.0
        %441 = vmatprep.subr.mxu0 0.0
        %442 = vmatpush1.msra.mxu0 0.0
        %443 = vmatprep.subr.mxu0 0.0
        %444 = vmatpush1.msra.mxu0 0.0
        %445 = vmatprep.subr.mxu0 0.0
        %446 = vmatpush1.msra.mxu0 0.0
        %447 = vmatprep.subr.mxu0 0.0
        %448 = vmatpush1.msra.mxu0 0.0
        %449 = vmatprep.subr.mxu0 0.0
        %450 = vmatpush1.msra.mxu0 0.0
        %451 = vmatprep.subr.mxu0 0.0
        %452 = vmatpush1.msra.mxu0 0.0
        %453 = vmatprep.subr.mxu0 0.0
        %454 = vmatpush1.msra.mxu0 0.0
        %455 = vmatprep.subr.mxu0 0.0
        %456 = vmatpush1.msra.mxu0 0.0
        %457 = vmatprep.subr.mxu0 0.0
        %458 = vmatpush1.msra.mxu0 0.0
        %459 = vmatprep.mubr.f32.mxu0 0.0
        %460 = vmatmul.mubr.f32.gmra.mrb[0].mxu0 %v393
        %v461 = vpop.f32.mrb[0].mxu0
        %v462 = vadd.f32 0.0, %v461
        %v463 = vpop.f32.mrb[0].mxu0
        %464 = vdwg.mxu0
        %v465 = vadd.f32 %v389, %v462
        %v466 = vtanh.pop %v465
        %v467 = vxor.u32 %v465, 2147483648
        %v468 = vmul.f32 %v467, 1.442695
        %v469 = vpow.pop %v468
        %v470 = vadd.f32 %v469, 1.0
        %v471 = vrcp.pop %v470
        %v472 = vmul.f32 1.0, %v471
        %v473 = vsel %vm262, %v466, %v472
        %v474 = vmul.f32 %v473, %v381
        %476 = vrot.lane.b32.xlu0 %v473, 64
        %v477 = vpop.permute.xlu0 %476
        %v479 = vmul.f32 %v473, %v477
        %481 = vrot.lane.b32.xlu0 %v479, 32
        %v482 = vpop.permute.xlu0 %481
        %v484 = vadd.f32 %v474, %v482
        %v485 = vtanh.pop %v484
        %487 = vrot.lane.b32.xlu0 %v485, 64
        %v488 = vpop.permute.xlu0 %487
        %v490 = vmul.f32 %v473, %v488
        %s491 = scalar_lea.vmem %s239, 8
        %v492 = vld [vmem:[%s491] sm:$0xff]
        %vm493 = vcmp.gt.f32.partialorder %v492, 0.5
        %v494 = vsel %vm493, 1, 0
        %495 = vset.pattern.permute.xlu0 0
        %496 = vperm.xlu0 %495, %v494
        %v497 = vpop.permute.xlu0 %496
        %vm498 = vcmp.eq.s32.totalorder %v497, 1
        %v499 = vsel %vm498, %v490, %v380
        %v500 = vsel %vm498, %v484, %v381
        %v501 = vsel %vm498, %v490, 0.0
        %503 = vrot.lane.b32.xlu0 %v501, 32
        %v504 = vpop.permute.xlu0 %503
        %s506 = scalar_lea.vmem %s245, 8
        %507 = vst.msk [vmem:[%s506] sm:$0xff] %vm266, %v504
        %s508 = scalar_lea.vmem %s233, 16
        %v509 = vld [vmem:[%s508] sm:$0xff]
        %511 = vrot.lane.b32.xlu0 %v499, 32
        %v512 = vpop.permute.xlu0 %511
        %v513 = vsel %vm266, %v512, 0
        %515 = vmatprep.subr.mxu0 0.0
        %516 = vmatpush1.msra.mxu0 %v254
        %517 = vmatprep.subr.mxu0 0.0
        %518 = vmatpush1.msra.mxu0 %v255
        %519 = vmatprep.subr.mxu0 0.0
        %520 = vmatpush1.msra.mxu0 %v256
        %521 = vmatprep.subr.mxu0 0.0
        %522 = vmatpush1.msra.mxu0 %v257
        %523 = vmatprep.subr.mxu0 0.0
        %524 = vmatpush1.msra.mxu0 0.0
        %525 = vmatprep.subr.mxu0 0.0
        %526 = vmatpush1.msra.mxu0 0.0
        %527 = vmatprep.subr.mxu0 0.0
        %528 = vmatpush1.msra.mxu0 0.0
        %529 = vmatprep.subr.mxu0 0.0
        %530 = vmatpush1.msra.mxu0 0.0
        %531 = vmatprep.subr.mxu0 0.0
        %532 = vmatpush1.msra.mxu0 0.0
        %533 = vmatprep.subr.mxu0 0.0
        %534 = vmatpush1.msra.mxu0 0.0
        %535 = vmatprep.subr.mxu0 0.0
        %536 = vmatpush1.msra.mxu0 0.0
        %537 = vmatprep.subr.mxu0 0.0
        %538 = vmatpush1.msra.mxu0 0.0
        %539 = vmatprep.subr.mxu0 0.0
        %540 = vmatpush1.msra.mxu0 0.0
        %541 = vmatprep.subr.mxu0 0.0
        %542 = vmatpush1.msra.mxu0 0.0
        %543 = vmatprep.subr.mxu0 0.0
        %544 = vmatpush1.msra.mxu0 0.0
        %545 = vmatprep.subr.mxu0 0.0
        %546 = vmatpush1.msra.mxu0 0.0
        %547 = vmatprep.subr.mxu0 0.0
        %548 = vmatpush1.msra.mxu0 0.0
        %549 = vmatprep.subr.mxu0 0.0
        %550 = vmatpush1.msra.mxu0 0.0
        %551 = vmatprep.subr.mxu0 0.0
        %552 = vmatpush1.msra.mxu0 0.0
        %553 = vmatprep.subr.mxu0 0.0
        %554 = vmatpush1.msra.mxu0 0.0
        %555 = vmatprep.subr.mxu0 0.0
        %556 = vmatpush1.msra.mxu0 0.0
        %557 = vmatprep.subr.mxu0 0.0
        %558 = vmatpush1.msra.mxu0 0.0
        %559 = vmatprep.subr.mxu0 0.0
        %560 = vmatpush1.msra.mxu0 0.0
        %561 = vmatprep.subr.mxu0 0.0
        %562 = vmatpush1.msra.mxu0 0.0
        %563 = vmatprep.subr.mxu0 0.0
        %564 = vmatpush1.msra.mxu0 0.0
        %565 = vmatprep.subr.mxu0 0.0
        %566 = vmatpush1.msra.mxu0 0.0
        %567 = vmatprep.subr.mxu0 0.0
        %568 = vmatpush1.msra.mxu0 0.0
        %569 = vmatprep.subr.mxu0 0.0
        %570 = vmatpush1.msra.mxu0 0.0
        %571 = vmatprep.subr.mxu0 0.0
        %572 = vmatpush1.msra.mxu0 0.0
        %573 = vmatprep.subr.mxu0 0.0
        %574 = vmatpush1.msra.mxu0 0.0
        %575 = vmatprep.subr.mxu0 0.0
        %576 = vmatpush1.msra.mxu0 0.0
        %577 = vmatprep.subr.mxu0 0.0
        %578 = vmatpush1.msra.mxu0 0.0
        %579 = vmatprep.mubr.f32.mxu0 0.0
        %580 = vmatmul.mubr.f32.gmra.mrb[0].mxu0 %v513
        %v581 = vpop.f32.mrb[0].mxu0
        %v582 = vadd.f32 0.0, %v581
        %v583 = vpop.f32.mrb[0].mxu0
        %584 = vdwg.mxu0
        %v585 = vadd.f32 %v509, %v582
        %v586 = vtanh.pop %v585
        %v587 = vxor.u32 %v585, 2147483648
        %v588 = vmul.f32 %v587, 1.442695
        %v589 = vpow.pop %v588
        %v590 = vadd.f32 %v589, 1.0
        %v591 = vrcp.pop %v590
        %v592 = vmul.f32 1.0, %v591
        %v593 = vsel %vm262, %v586, %v592
        %v594 = vmul.f32 %v593, %v500
        %596 = vrot.lane.b32.xlu0 %v593, 64
        %v597 = vpop.permute.xlu0 %596
        %v599 = vmul.f32 %v593, %v597
        %601 = vrot.lane.b32.xlu0 %v599, 32
        %v602 = vpop.permute.xlu0 %601
        %v604 = vadd.f32 %v594, %v602
        %v605 = vtanh.pop %v604
        %607 = vrot.lane.b32.xlu0 %v605, 64
        %v608 = vpop.permute.xlu0 %607
        %v610 = vmul.f32 %v593, %v608
        %s611 = scalar_lea.vmem %s239, 16
        %v612 = vld [vmem:[%s611] sm:$0xff]
        %vm613 = vcmp.gt.f32.partialorder %v612, 0.5
        %v614 = vsel %vm613, 1, 0
        %615 = vset.pattern.permute.xlu0 0
        %616 = vperm.xlu0 %615, %v614
        %v617 = vpop.permute.xlu0 %616
        %vm618 = vcmp.eq.s32.totalorder %v617, 1
        %v619 = vsel %vm618, %v610, %v499
        %v620 = vsel %vm618, %v604, %v500
        %v621 = vsel %vm618, %v610, 0.0
        %623 = vrot.lane.b32.xlu0 %v621, 32
        %v624 = vpop.permute.xlu0 %623
        %s626 = scalar_lea.vmem %s245, 16
        %627 = vst.msk [vmem:[%s626] sm:$0xff] %vm266, %v624
        %s628 = scalar_lea.vmem %s233, 24
        %v629 = vld [vmem:[%s628] sm:$0xff]
        %631 = vrot.lane.b32.xlu0 %v619, 32
        %v632 = vpop.permute.xlu0 %631
        %v633 = vsel %vm266, %v632, 0
        %635 = vmatprep.subr.mxu0 0.0
        %636 = vmatpush1.msra.mxu0 %v254
        %637 = vmatprep.subr.mxu0 0.0
        %638 = vmatpush1.msra.mxu0 %v255
        %639 = vmatprep.subr.mxu0 0.0
        %640 = vmatpush1.msra.mxu0 %v256
        %641 = vmatprep.subr.mxu0 0.0
        %642 = vmatpush1.msra.mxu0 %v257
        %643 = vmatprep.subr.mxu0 0.0
        %644 = vmatpush1.msra.mxu0 0.0
        %645 = vmatprep.subr.mxu0 0.0
        %646 = vmatpush1.msra.mxu0 0.0
        %647 = vmatprep.subr.mxu0 0.0
        %648 = vmatpush1.msra.mxu0 0.0
        %649 = vmatprep.subr.mxu0 0.0
        %650 = vmatpush1.msra.mxu0 0.0
        %651 = vmatprep.subr.mxu0 0.0
        %652 = vmatpush1.msra.mxu0 0.0
        %653 = vmatprep.subr.mxu0 0.0
        %654 = vmatpush1.msra.mxu0 0.0
        %655 = vmatprep.subr.mxu0 0.0
        %656 = vmatpush1.msra.mxu0 0.0
        %657 = vmatprep.subr.mxu0 0.0
        %658 = vmatpush1.msra.mxu0 0.0
        %659 = vmatprep.subr.mxu0 0.0
        %660 = vmatpush1.msra.mxu0 0.0
        %661 = vmatprep.subr.mxu0 0.0
        %662 = vmatpush1.msra.mxu0 0.0
        %663 = vmatprep.subr.mxu0 0.0
        %664 = vmatpush1.msra.mxu0 0.0
        %665 = vmatprep.subr.mxu0 0.0
        %666 = vmatpush1.msra.mxu0 0.0
        %667 = vmatprep.subr.mxu0 0.0
        %668 = vmatpush1.msra.mxu0 0.0
        %669 = vmatprep.subr.mxu0 0.0
        %670 = vmatpush1.msra.mxu0 0.0
        %671 = vmatprep.subr.mxu0 0.0
        %672 = vmatpush1.msra.mxu0 0.0
        %673 = vmatprep.subr.mxu0 0.0
        %674 = vmatpush1.msra.mxu0 0.0
        %675 = vmatprep.subr.mxu0 0.0
        %676 = vmatpush1.msra.mxu0 0.0
        %677 = vmatprep.subr.mxu0 0.0
        %678 = vmatpush1.msra.mxu0 0.0
        %679 = vmatprep.subr.mxu0 0.0
        %680 = vmatpush1.msra.mxu0 0.0
        %681 = vmatprep.subr.mxu0 0.0
        %682 = vmatpush1.msra.mxu0 0.0
        %683 = vmatprep.subr.mxu0 0.0
        %684 = vmatpush1.msra.mxu0 0.0
        %685 = vmatprep.subr.mxu0 0.0
        %686 = vmatpush1.msra.mxu0 0.0
        %687 = vmatprep.subr.mxu0 0.0
        %688 = vmatpush1.msra.mxu0 0.0
        %689 = vmatprep.subr.mxu0 0.0
        %690 = vmatpush1.msra.mxu0 0.0
        %691 = vmatprep.subr.mxu0 0.0
        %692 = vmatpush1.msra.mxu0 0.0
        %693 = vmatprep.subr.mxu0 0.0
        %694 = vmatpush1.msra.mxu0 0.0
        %695 = vmatprep.subr.mxu0 0.0
        %696 = vmatpush1.msra.mxu0 0.0
        %697 = vmatprep.subr.mxu0 0.0
        %698 = vmatpush1.msra.mxu0 0.0
        %699 = vmatprep.mubr.f32.mxu0 0.0
        %700 = vmatmul.mubr.f32.gmra.mrb[0].mxu0 %v633
        %v701 = vpop.f32.mrb[0].mxu0
        %v702 = vadd.f32 0.0, %v701
        %v703 = vpop.f32.mrb[0].mxu0
        %704 = vdwg.mxu0
        %v705 = vadd.f32 %v629, %v702
        %v706 = vtanh.pop %v705
        %v707 = vxor.u32 %v705, 2147483648
        %v708 = vmul.f32 %v707, 1.442695
        %v709 = vpow.pop %v708
        %v710 = vadd.f32 %v709, 1.0
        %v711 = vrcp.pop %v710
        %v712 = vmul.f32 1.0, %v711
        %v713 = vsel %vm262, %v706, %v712
        %v714 = vmul.f32 %v713, %v620
        %716 = vrot.lane.b32.xlu0 %v713, 64
        %v717 = vpop.permute.xlu0 %716
        %v719 = vmul.f32 %v713, %v717
        %721 = vrot.lane.b32.xlu0 %v719, 32
        %v722 = vpop.permute.xlu0 %721
        %v724 = vadd.f32 %v714, %v722
        %v725 = vtanh.pop %v724
        %727 = vrot.lane.b32.xlu0 %v725, 64
        %v728 = vpop.permute.xlu0 %727
        %v730 = vmul.f32 %v713, %v728
        %s731 = scalar_lea.vmem %s239, 24
        %v732 = vld [vmem:[%s731] sm:$0xff]
        %vm733 = vcmp.gt.f32.partialorder %v732, 0.5
        %v734 = vsel %vm733, 1, 0
        %735 = vset.pattern.permute.xlu0 0
        %736 = vperm.xlu0 %735, %v734
        %v737 = vpop.permute.xlu0 %736
        %vm738 = vcmp.eq.s32.totalorder %v737, 1
        %v739 = vsel %vm738, %v730, %v619
        %v740 = vsel %vm738, %v724, %v620
        %v741 = vsel %vm738, %v730, 0.0
        %743 = vrot.lane.b32.xlu0 %v741, 32
        %v744 = vpop.permute.xlu0 %743
        %s746 = scalar_lea.vmem %s245, 24
        %747 = vst.msk [vmem:[%s746] sm:$0xff] %vm266, %v744
        %s748 = scalar_lea.vmem %s233, 32
        %v749 = vld [vmem:[%s748] sm:$0xff]
        %751 = vrot.lane.b32.xlu0 %v739, 32
        %v752 = vpop.permute.xlu0 %751
        %v753 = vsel %vm266, %v752, 0
        %755 = vmatprep.subr.mxu0 0.0
        %756 = vmatpush1.msra.mxu0 %v254
        %757 = vmatprep.subr.mxu0 0.0
        %758 = vmatpush1.msra.mxu0 %v255
        %759 = vmatprep.subr.mxu0 0.0
        %760 = vmatpush1.msra.mxu0 %v256
        %761 = vmatprep.subr.mxu0 0.0
        %762 = vmatpush1.msra.mxu0 %v257
        %763 = vmatprep.subr.mxu0 0.0
        %764 = vmatpush1.msra.mxu0 0.0
        %765 = vmatprep.subr.mxu0 0.0
        %766 = vmatpush1.msra.mxu0 0.0
        %767 = vmatprep.subr.mxu0 0.0
        %768 = vmatpush1.msra.mxu0 0.0
        %769 = vmatprep.subr.mxu0 0.0
        %770 = vmatpush1.msra.mxu0 0.0
        %771 = vmatprep.subr.mxu0 0.0
        %772 = vmatpush1.msra.mxu0 0.0
        %773 = vmatprep.subr.mxu0 0.0
        %774 = vmatpush1.msra.mxu0 0.0
        %775 = vmatprep.subr.mxu0 0.0
        %776 = vmatpush1.msra.mxu0 0.0
        %777 = vmatprep.subr.mxu0 0.0
        %778 = vmatpush1.msra.mxu0 0.0
        %779 = vmatprep.subr.mxu0 0.0
        %780 = vmatpush1.msra.mxu0 0.0
        %781 = vmatprep.subr.mxu0 0.0
        %782 = vmatpush1.msra.mxu0 0.0
        %783 = vmatprep.subr.mxu0 0.0
        %784 = vmatpush1.msra.mxu0 0.0
        %785 = vmatprep.subr.mxu0 0.0
        %786 = vmatpush1.msra.mxu0 0.0
        %787 = vmatprep.subr.mxu0 0.0
        %788 = vmatpush1.msra.mxu0 0.0
        %789 = vmatprep.subr.mxu0 0.0
        %790 = vmatpush1.msra.mxu0 0.0
        %791 = vmatprep.subr.mxu0 0.0
        %792 = vmatpush1.msra.mxu0 0.0
        %793 = vmatprep.subr.mxu0 0.0
        %794 = vmatpush1.msra.mxu0 0.0
        %795 = vmatprep.subr.mxu0 0.0
        %796 = vmatpush1.msra.mxu0 0.0
        %797 = vmatprep.subr.mxu0 0.0
        %798 = vmatpush1.msra.mxu0 0.0
        %799 = vmatprep.subr.mxu0 0.0
        %800 = vmatpush1.msra.mxu0 0.0
        %801 = vmatprep.subr.mxu0 0.0
        %802 = vmatpush1.msra.mxu0 0.0
        %803 = vmatprep.subr.mxu0 0.0
        %804 = vmatpush1.msra.mxu0 0.0
        %805 = vmatprep.subr.mxu0 0.0
        %806 = vmatpush1.msra.mxu0 0.0
        %807 = vmatprep.subr.mxu0 0.0
        %808 = vmatpush1.msra.mxu0 0.0
        %809 = vmatprep.subr.mxu0 0.0
        %810 = vmatpush1.msra.mxu0 0.0
        %811 = vmatprep.subr.mxu0 0.0
        %812 = vmatpush1.msra.mxu0 0.0
        %813 = vmatprep.subr.mxu0 0.0
        %814 = vmatpush1.msra.mxu0 0.0
        %815 = vmatprep.subr.mxu0 0.0
        %816 = vmatpush1.msra.mxu0 0.0
        %817 = vmatprep.subr.mxu0 0.0
        %818 = vmatpush1.msra.mxu0 0.0
        %819 = vmatprep.mubr.f32.mxu0 0.0
        %820 = vmatmul.mubr.f32.gmra.mrb[0].mxu0 %v753
        %v821 = vpop.f32.mrb[0].mxu0
        %v822 = vadd.f32 0.0, %v821
        %v823 = vpop.f32.mrb[0].mxu0
        %824 = vdwg.mxu0
        %v825 = vadd.f32 %v749, %v822
        %v826 = vtanh.pop %v825
        %v827 = vxor.u32 %v825, 2147483648
        %v828 = vmul.f32 %v827, 1.442695
        %v829 = vpow.pop %v828
        %v830 = vadd.f32 %v829, 1.0
        %v831 = vrcp.pop %v830
        %v832 = vmul.f32 1.0, %v831
        %v833 = vsel %vm262, %v826, %v832
        %v834 = vmul.f32 %v833, %v740
        %836 = vrot.lane.b32.xlu0 %v833, 64
        %v837 = vpop.permute.xlu0 %836
        %v839 = vmul.f32 %v833, %v837
        %841 = vrot.lane.b32.xlu0 %v839, 32
        %v842 = vpop.permute.xlu0 %841
        %v844 = vadd.f32 %v834, %v842
        %v845 = vtanh.pop %v844
        %847 = vrot.lane.b32.xlu0 %v845, 64
        %v848 = vpop.permute.xlu0 %847
        %v850 = vmul.f32 %v833, %v848
        %s851 = scalar_lea.vmem %s239, 32
        %v852 = vld [vmem:[%s851] sm:$0xff]
        %vm853 = vcmp.gt.f32.partialorder %v852, 0.5
        %v854 = vsel %vm853, 1, 0
        %855 = vset.pattern.permute.xlu0 0
        %856 = vperm.xlu0 %855, %v854
        %v857 = vpop.permute.xlu0 %856
        %vm858 = vcmp.eq.s32.totalorder %v857, 1
        %v859 = vsel %vm858, %v850, %v739
        %v860 = vsel %vm858, %v844, %v740
        %v861 = vsel %vm858, %v850, 0.0
        %863 = vrot.lane.b32.xlu0 %v861, 32
        %v864 = vpop.permute.xlu0 %863
        %s866 = scalar_lea.vmem %s245, 32
        %867 = vst.msk [vmem:[%s866] sm:$0xff] %vm266, %v864
        %s868 = scalar_lea.vmem %s233, 40
        %v869 = vld [vmem:[%s868] sm:$0xff]
        %871 = vrot.lane.b32.xlu0 %v859, 32
        %v872 = vpop.permute.xlu0 %871
        %v873 = vsel %vm266, %v872, 0
        %875 = vmatprep.subr.mxu0 0.0
        %876 = vmatpush1.msra.mxu0 %v254
        %877 = vmatprep.subr.mxu0 0.0
        %878 = vmatpush1.msra.mxu0 %v255
        %879 = vmatprep.subr.mxu0 0.0
        %880 = vmatpush1.msra.mxu0 %v256
        %881 = vmatprep.subr.mxu0 0.0
        %882 = vmatpush1.msra.mxu0 %v257
        %883 = vmatprep.subr.mxu0 0.0
        %884 = vmatpush1.msra.mxu0 0.0
        %885 = vmatprep.subr.mxu0 0.0
        %886 = vmatpush1.msra.mxu0 0.0
        %887 = vmatprep.subr.mxu0 0.0
        %888 = vmatpush1.msra.mxu0 0.0
        %889 = vmatprep.subr.mxu0 0.0
        %890 = vmatpush1.msra.mxu0 0.0
        %891 = vmatprep.subr.mxu0 0.0
        %892 = vmatpush1.msra.mxu0 0.0
        %893 = vmatprep.subr.mxu0 0.0
        %894 = vmatpush1.msra.mxu0 0.0
        %895 = vmatprep.subr.mxu0 0.0
        %896 = vmatpush1.msra.mxu0 0.0
        %897 = vmatprep.subr.mxu0 0.0
        %898 = vmatpush1.msra.mxu0 0.0
        %899 = vmatprep.subr.mxu0 0.0
        %900 = vmatpush1.msra.mxu0 0.0
        %901 = vmatprep.subr.mxu0 0.0
        %902 = vmatpush1.msra.mxu0 0.0
        %903 = vmatprep.subr.mxu0 0.0
        %904 = vmatpush1.msra.mxu0 0.0
        %905 = vmatprep.subr.mxu0 0.0
        %906 = vmatpush1.msra.mxu0 0.0
        %907 = vmatprep.subr.mxu0 0.0
        %908 = vmatpush1.msra.mxu0 0.0
        %909 = vmatprep.subr.mxu0 0.0
        %910 = vmatpush1.msra.mxu0 0.0
        %911 = vmatprep.subr.mxu0 0.0
        %912 = vmatpush1.msra.mxu0 0.0
        %913 = vmatprep.subr.mxu0 0.0
        %914 = vmatpush1.msra.mxu0 0.0
        %915 = vmatprep.subr.mxu0 0.0
        %916 = vmatpush1.msra.mxu0 0.0
        %917 = vmatprep.subr.mxu0 0.0
        %918 = vmatpush1.msra.mxu0 0.0
        %919 = vmatprep.subr.mxu0 0.0
        %920 = vmatpush1.msra.mxu0 0.0
        %921 = vmatprep.subr.mxu0 0.0
        %922 = vmatpush1.msra.mxu0 0.0
        %923 = vmatprep.subr.mxu0 0.0
        %924 = vmatpush1.msra.mxu0 0.0
        %925 = vmatprep.subr.mxu0 0.0
        %926 = vmatpush1.msra.mxu0 0.0
        %927 = vmatprep.subr.mxu0 0.0
        %928 = vmatpush1.msra.mxu0 0.0
        %929 = vmatprep.subr.mxu0 0.0
        %930 = vmatpush1.msra.mxu0 0.0
        %931 = vmatprep.subr.mxu0 0.0
        %932 = vmatpush1.msra.mxu0 0.0
        %933 = vmatprep.subr.mxu0 0.0
        %934 = vmatpush1.msra.mxu0 0.0
        %935 = vmatprep.subr.mxu0 0.0
        %936 = vmatpush1.msra.mxu0 0.0
        %937 = vmatprep.subr.mxu0 0.0
        %938 = vmatpush1.msra.mxu0 0.0
        %939 = vmatprep.mubr.f32.mxu0 0.0
        %940 = vmatmul.mubr.f32.gmra.mrb[0].mxu0 %v873
        %v941 = vpop.f32.mrb[0].mxu0
        %v942 = vadd.f32 0.0, %v941
        %v943 = vpop.f32.mrb[0].mxu0
        %944 = vdwg.mxu0
        %v945 = vadd.f32 %v869, %v942
        %v946 = vtanh.pop %v945
        %v947 = vxor.u32 %v945, 2147483648
        %v948 = vmul.f32 %v947, 1.442695
        %v949 = vpow.pop %v948
        %v950 = vadd.f32 %v949, 1.0
        %v951 = vrcp.pop %v950
        %v952 = vmul.f32 1.0, %v951
        %v953 = vsel %vm262, %v946, %v952
        %v954 = vmul.f32 %v953, %v860
        %956 = vrot.lane.b32.xlu0 %v953, 64
        %v957 = vpop.permute.xlu0 %956
        %v959 = vmul.f32 %v953, %v957
        %961 = vrot.lane.b32.xlu0 %v959, 32
        %v962 = vpop.permute.xlu0 %961
        %v964 = vadd.f32 %v954, %v962
        %v965 = vtanh.pop %v964
        %967 = vrot.lane.b32.xlu0 %v965, 64
        %v968 = vpop.permute.xlu0 %967
        %v970 = vmul.f32 %v953, %v968
        %s971 = scalar_lea.vmem %s239, 40
        %v972 = vld [vmem:[%s971] sm:$0xff]
        %vm973 = vcmp.gt.f32.partialorder %v972, 0.5
        %v974 = vsel %vm973, 1, 0
        %975 = vset.pattern.permute.xlu0 0
        %976 = vperm.xlu0 %975, %v974
        %v977 = vpop.permute.xlu0 %976
        %vm978 = vcmp.eq.s32.totalorder %v977, 1
        %v979 = vsel %vm978, %v970, %v859
        %v980 = vsel %vm978, %v964, %v860
        %v981 = vsel %vm978, %v970, 0.0
        %983 = vrot.lane.b32.xlu0 %v981, 32
        %v984 = vpop.permute.xlu0 %983
        %s986 = scalar_lea.vmem %s245, 40
        %987 = vst.msk [vmem:[%s986] sm:$0xff] %vm266, %v984
        %s988 = scalar_lea.vmem %s233, 48
        %v989 = vld [vmem:[%s988] sm:$0xff]
        %991 = vrot.lane.b32.xlu0 %v979, 32
        %v992 = vpop.permute.xlu0 %991
        %v993 = vsel %vm266, %v992, 0
        %995 = vmatprep.subr.mxu0 0.0
        %996 = vmatpush1.msra.mxu0 %v254
        %997 = vmatprep.subr.mxu0 0.0
        %998 = vmatpush1.msra.mxu0 %v255
        %999 = vmatprep.subr.mxu0 0.0
        %1000 = vmatpush1.msra.mxu0 %v256
        %1001 = vmatprep.subr.mxu0 0.0
        %1002 = vmatpush1.msra.mxu0 %v257
        %1003 = vmatprep.subr.mxu0 0.0
        %1004 = vmatpush1.msra.mxu0 0.0
        %1005 = vmatprep.subr.mxu0 0.0
        %1006 = vmatpush1.msra.mxu0 0.0
        %1007 = vmatprep.subr.mxu0 0.0
        %1008 = vmatpush1.msra.mxu0 0.0
        %1009 = vmatprep.subr.mxu0 0.0
        %1010 = vmatpush1.msra.mxu0 0.0
        %1011 = vmatprep.subr.mxu0 0.0
        %1012 = vmatpush1.msra.mxu0 0.0
        %1013 = vmatprep.subr.mxu0 0.0
        %1014 = vmatpush1.msra.mxu0 0.0
        %1015 = vmatprep.subr.mxu0 0.0
        %1016 = vmatpush1.msra.mxu0 0.0
        %1017 = vmatprep.subr.mxu0 0.0
        %1018 = vmatpush1.msra.mxu0 0.0
        %1019 = vmatprep.subr.mxu0 0.0
        %1020 = vmatpush1.msra.mxu0 0.0
        %1021 = vmatprep.subr.mxu0 0.0
        %1022 = vmatpush1.msra.mxu0 0.0
        %1023 = vmatprep.subr.mxu0 0.0
        %1024 = vmatpush1.msra.mxu0 0.0
        %1025 = vmatprep.subr.mxu0 0.0
        %1026 = vmatpush1.msra.mxu0 0.0
        %1027 = vmatprep.subr.mxu0 0.0
        %1028 = vmatpush1.msra.mxu0 0.0
        %1029 = vmatprep.subr.mxu0 0.0
        %1030 = vmatpush1.msra.mxu0 0.0
        %1031 = vmatprep.subr.mxu0 0.0
        %1032 = vmatpush1.msra.mxu0 0.0
        %1033 = vmatprep.subr.mxu0 0.0
        %1034 = vmatpush1.msra.mxu0 0.0
        %1035 = vmatprep.subr.mxu0 0.0
        %1036 = vmatpush1.msra.mxu0 0.0
        %1037 = vmatprep.subr.mxu0 0.0
        %1038 = vmatpush1.msra.mxu0 0.0
        %1039 = vmatprep.subr.mxu0 0.0
        %1040 = vmatpush1.msra.mxu0 0.0
        %1041 = vmatprep.subr.mxu0 0.0
        %1042 = vmatpush1.msra.mxu0 0.0
        %1043 = vmatprep.subr.mxu0 0.0
        %1044 = vmatpush1.msra.mxu0 0.0
        %1045 = vmatprep.subr.mxu0 0.0
        %1046 = vmatpush1.msra.mxu0 0.0
        %1047 = vmatprep.subr.mxu0 0.0
        %1048 = vmatpush1.msra.mxu0 0.0
        %1049 = vmatprep.subr.mxu0 0.0
        %1050 = vmatpush1.msra.mxu0 0.0
        %1051 = vmatprep.subr.mxu0 0.0
        %1052 = vmatpush1.msra.mxu0 0.0
        %1053 = vmatprep.subr.mxu0 0.0
        %1054 = vmatpush1.msra.mxu0 0.0
        %1055 = vmatprep.subr.mxu0 0.0
        %1056 = vmatpush1.msra.mxu0 0.0
        %1057 = vmatprep.subr.mxu0 0.0
        %1058 = vmatpush1.msra.mxu0 0.0
        %1059 = vmatprep.mubr.f32.mxu0 0.0
        %1060 = vmatmul.mubr.f32.gmra.mrb[0].mxu0 %v993
        %v1061 = vpop.f32.mrb[0].mxu0
        %v1062 = vadd.f32 0.0, %v1061
        %v1063 = vpop.f32.mrb[0].mxu0
        %1064 = vdwg.mxu0
        %v1065 = vadd.f32 %v989, %v1062
        %v1066 = vtanh.pop %v1065
        %v1067 = vxor.u32 %v1065, 2147483648
        %v1068 = vmul.f32 %v1067, 1.442695
        %v1069 = vpow.pop %v1068
        %v1070 = vadd.f32 %v1069, 1.0
        %v1071 = vrcp.pop %v1070
        %v1072 = vmul.f32 1.0, %v1071
        %v1073 = vsel %vm262, %v1066, %v1072
        %v1074 = vmul.f32 %v1073, %v980
        %1076 = vrot.lane.b32.xlu0 %v1073, 64
        %v1077 = vpop.permute.xlu0 %1076
        %v1079 = vmul.f32 %v1073, %v1077
        %1081 = vrot.lane.b32.xlu0 %v1079, 32
        %v1082 = vpop.permute.xlu0 %1081
        %v1084 = vadd.f32 %v1074, %v1082
        %v1085 = vtanh.pop %v1084
        %1087 = vrot.lane.b32.xlu0 %v1085, 64
        %v1088 = vpop.permute.xlu0 %1087
        %v1090 = vmul.f32 %v1073, %v1088
        %s1091 = scalar_lea.vmem %s239, 48
        %v1092 = vld [vmem:[%s1091] sm:$0xff]
        %vm1093 = vcmp.gt.f32.partialorder %v1092, 0.5
        %v1094 = vsel %vm1093, 1, 0
        %1095 = vset.pattern.permute.xlu0 0
        %1096 = vperm.xlu0 %1095, %v1094
        %v1097 = vpop.permute.xlu0 %1096
        %vm1098 = vcmp.eq.s32.totalorder %v1097, 1
        %v1099 = vsel %vm1098, %v1090, %v979
        %v1100 = vsel %vm1098, %v1084, %v980
        %v1101 = vsel %vm1098, %v1090, 0.0
        %1103 = vrot.lane.b32.xlu0 %v1101, 32
        %v1104 = vpop.permute.xlu0 %1103
        %s1106 = scalar_lea.vmem %s245, 48
        %1107 = vst.msk [vmem:[%s1106] sm:$0xff] %vm266, %v1104
        %s1108 = scalar_lea.vmem %s233, 56
        %v1109 = vld [vmem:[%s1108] sm:$0xff]
        %1111 = vrot.lane.b32.xlu0 %v1099, 32
        %v1112 = vpop.permute.xlu0 %1111
        %v1113 = vsel %vm266, %v1112, 0
        %1115 = vmatprep.subr.mxu0 0.0
        %1116 = vmatpush1.msra.mxu0 %v254
        %1117 = vmatprep.subr.mxu0 0.0
        %1118 = vmatpush1.msra.mxu0 %v255
        %1119 = vmatprep.subr.mxu0 0.0
        %1120 = vmatpush1.msra.mxu0 %v256
        %1121 = vmatprep.subr.mxu0 0.0
        %1122 = vmatpush1.msra.mxu0 %v257
        %1123 = vmatprep.subr.mxu0 0.0
        %1124 = vmatpush1.msra.mxu0 0.0
        %1125 = vmatprep.subr.mxu0 0.0
        %1126 = vmatpush1.msra.mxu0 0.0
        %1127 = vmatprep.subr.mxu0 0.0
        %1128 = vmatpush1.msra.mxu0 0.0
        %1129 = vmatprep.subr.mxu0 0.0
        %1130 = vmatpush1.msra.mxu0 0.0
        %1131 = vmatprep.subr.mxu0 0.0
        %1132 = vmatpush1.msra.mxu0 0.0
        %1133 = vmatprep.subr.mxu0 0.0
        %1134 = vmatpush1.msra.mxu0 0.0
        %1135 = vmatprep.subr.mxu0 0.0
        %1136 = vmatpush1.msra.mxu0 0.0
        %1137 = vmatprep.subr.mxu0 0.0
        %1138 = vmatpush1.msra.mxu0 0.0
        %1139 = vmatprep.subr.mxu0 0.0
        %1140 = vmatpush1.msra.mxu0 0.0
        %1141 = vmatprep.subr.mxu0 0.0
        %1142 = vmatpush1.msra.mxu0 0.0
        %1143 = vmatprep.subr.mxu0 0.0
        %1144 = vmatpush1.msra.mxu0 0.0
        %1145 = vmatprep.subr.mxu0 0.0
        %1146 = vmatpush1.msra.mxu0 0.0
        %1147 = vmatprep.subr.mxu0 0.0
        %1148 = vmatpush1.msra.mxu0 0.0
        %1149 = vmatprep.subr.mxu0 0.0
        %1150 = vmatpush1.msra.mxu0 0.0
        %1151 = vmatprep.subr.mxu0 0.0
        %1152 = vmatpush1.msra.mxu0 0.0
        %1153 = vmatprep.subr.mxu0 0.0
        %1154 = vmatpush1.msra.mxu0 0.0
        %1155 = vmatprep.subr.mxu0 0.0
        %1156 = vmatpush1.msra.mxu0 0.0
        %1157 = vmatprep.subr.mxu0 0.0
        %1158 = vmatpush1.msra.mxu0 0.0
        %1159 = vmatprep.subr.mxu0 0.0
        %1160 = vmatpush1.msra.mxu0 0.0
        %1161 = vmatprep.subr.mxu0 0.0
        %1162 = vmatpush1.msra.mxu0 0.0
        %1163 = vmatprep.subr.mxu0 0.0
        %1164 = vmatpush1.msra.mxu0 0.0
        %1165 = vmatprep.subr.mxu0 0.0
        %1166 = vmatpush1.msra.mxu0 0.0
        %1167 = vmatprep.subr.mxu0 0.0
        %1168 = vmatpush1.msra.mxu0 0.0
        %1169 = vmatprep.subr.mxu0 0.0
        %1170 = vmatpush1.msra.mxu0 0.0
        %1171 = vmatprep.subr.mxu0 0.0
        %1172 = vmatpush1.msra.mxu0 0.0
        %1173 = vmatprep.subr.mxu0 0.0
        %1174 = vmatpush1.msra.mxu0 0.0
        %1175 = vmatprep.subr.mxu0 0.0
        %1176 = vmatpush1.msra.mxu0 0.0
        %1177 = vmatprep.subr.mxu0 0.0
        %1178 = vmatpush1.msra.mxu0 0.0
        %1179 = vmatprep.mubr.f32.mxu0 0.0
        %1180 = vmatmul.mubr.f32.gmra.mrb[0].mxu0 %v1113
        %v1181 = vpop.f32.mrb[0].mxu0
        %v1182 = vadd.f32 0.0, %v1181
        %v1183 = vpop.f32.mrb[0].mxu0
        %1184 = vdwg.mxu0
        %v1185 = vadd.f32 %v1109, %v1182
        %v1186 = vtanh.pop %v1185
        %v1187 = vxor.u32 %v1185, 2147483648
        %v1188 = vmul.f32 %v1187, 1.442695
        %v1189 = vpow.pop %v1188
        %v1190 = vadd.f32 %v1189, 1.0
        %v1191 = vrcp.pop %v1190
        %v1192 = vmul.f32 1.0, %v1191
        %v1193 = vsel %vm262, %v1186, %v1192
        %v1194 = vmul.f32 %v1193, %v1100
        %1196 = vrot.lane.b32.xlu0 %v1193, 64
        %v1197 = vpop.permute.xlu0 %1196
        %v1199 = vmul.f32 %v1193, %v1197
        %1201 = vrot.lane.b32.xlu0 %v1199, 32
        %v1202 = vpop.permute.xlu0 %1201
        %v1204 = vadd.f32 %v1194, %v1202
        %v1205 = vtanh.pop %v1204
        %1207 = vrot.lane.b32.xlu0 %v1205, 64
        %v1208 = vpop.permute.xlu0 %1207
        %v1210 = vmul.f32 %v1193, %v1208
        %s1211 = scalar_lea.vmem %s239, 56
        %v1212 = vld [vmem:[%s1211] sm:$0xff]
        %vm1213 = vcmp.gt.f32.partialorder %v1212, 0.5
        %v1214 = vsel %vm1213, 1, 0
        %1215 = vset.pattern.permute.xlu0 0
        %1216 = vperm.xlu0 %1215, %v1214
        %v1217 = vpop.permute.xlu0 %1216
        %vm1218 = vcmp.eq.s32.totalorder %v1217, 1
        %v1219 = vsel %vm1218, %v1210, %v1099
        %v1220 = vsel %vm1218, %v1204, %v1100
        %v1221 = vsel %vm1218, %v1210, 0.0
        %1223 = vrot.lane.b32.xlu0 %v1221, 32
        %v1224 = vpop.permute.xlu0 %1223
        %s1226 = scalar_lea.vmem %s245, 56
        %1227 = vst.msk [vmem:[%s1226] sm:$0xff] %vm266, %v1224
        %s1228 = scalar_lea.vmem %s233, 64
        %v1229 = vld [vmem:[%s1228] sm:$0xff]
        %1231 = vrot.lane.b32.xlu0 %v1219, 32
        %v1232 = vpop.permute.xlu0 %1231
        %v1233 = vsel %vm266, %v1232, 0
        %1235 = vmatprep.subr.mxu0 0.0
        %1236 = vmatpush1.msra.mxu0 %v254
        %1237 = vmatprep.subr.mxu0 0.0
        %1238 = vmatpush1.msra.mxu0 %v255
        %1239 = vmatprep.subr.mxu0 0.0
        %1240 = vmatpush1.msra.mxu0 %v256
        %1241 = vmatprep.subr.mxu0 0.0
        %1242 = vmatpush1.msra.mxu0 %v257
        %1243 = vmatprep.subr.mxu0 0.0
        %1244 = vmatpush1.msra.mxu0 0.0
        %1245 = vmatprep.subr.mxu0 0.0
        %1246 = vmatpush1.msra.mxu0 0.0
        %1247 = vmatprep.subr.mxu0 0.0
        %1248 = vmatpush1.msra.mxu0 0.0
        %1249 = vmatprep.subr.mxu0 0.0
        %1250 = vmatpush1.msra.mxu0 0.0
        %1251 = vmatprep.subr.mxu0 0.0
        %1252 = vmatpush1.msra.mxu0 0.0
        %1253 = vmatprep.subr.mxu0 0.0
        %1254 = vmatpush1.msra.mxu0 0.0
        %1255 = vmatprep.subr.mxu0 0.0
        %1256 = vmatpush1.msra.mxu0 0.0
        %1257 = vmatprep.subr.mxu0 0.0
        %1258 = vmatpush1.msra.mxu0 0.0
        %1259 = vmatprep.subr.mxu0 0.0
        %1260 = vmatpush1.msra.mxu0 0.0
        %1261 = vmatprep.subr.mxu0 0.0
        %1262 = vmatpush1.msra.mxu0 0.0
        %1263 = vmatprep.subr.mxu0 0.0
        %1264 = vmatpush1.msra.mxu0 0.0
        %1265 = vmatprep.subr.mxu0 0.0
        %1266 = vmatpush1.msra.mxu0 0.0
        %1267 = vmatprep.subr.mxu0 0.0
        %1268 = vmatpush1.msra.mxu0 0.0
        %1269 = vmatprep.subr.mxu0 0.0
        %1270 = vmatpush1.msra.mxu0 0.0
        %1271 = vmatprep.subr.mxu0 0.0
        %1272 = vmatpush1.msra.mxu0 0.0
        %1273 = vmatprep.subr.mxu0 0.0
        %1274 = vmatpush1.msra.mxu0 0.0
        %1275 = vmatprep.subr.mxu0 0.0
        %1276 = vmatpush1.msra.mxu0 0.0
        %1277 = vmatprep.subr.mxu0 0.0
        %1278 = vmatpush1.msra.mxu0 0.0
        %1279 = vmatprep.subr.mxu0 0.0
        %1280 = vmatpush1.msra.mxu0 0.0
        %1281 = vmatprep.subr.mxu0 0.0
        %1282 = vmatpush1.msra.mxu0 0.0
        %1283 = vmatprep.subr.mxu0 0.0
        %1284 = vmatpush1.msra.mxu0 0.0
        %1285 = vmatprep.subr.mxu0 0.0
        %1286 = vmatpush1.msra.mxu0 0.0
        %1287 = vmatprep.subr.mxu0 0.0
        %1288 = vmatpush1.msra.mxu0 0.0
        %1289 = vmatprep.subr.mxu0 0.0
        %1290 = vmatpush1.msra.mxu0 0.0
        %1291 = vmatprep.subr.mxu0 0.0
        %1292 = vmatpush1.msra.mxu0 0.0
        %1293 = vmatprep.subr.mxu0 0.0
        %1294 = vmatpush1.msra.mxu0 0.0
        %1295 = vmatprep.subr.mxu0 0.0
        %1296 = vmatpush1.msra.mxu0 0.0
        %1297 = vmatprep.subr.mxu0 0.0
        %1298 = vmatpush1.msra.mxu0 0.0
        %1299 = vmatprep.mubr.f32.mxu0 0.0
        %1300 = vmatmul.mubr.f32.gmra.mrb[0].mxu0 %v1233
        %v1301 = vpop.f32.mrb[0].mxu0
        %v1302 = vadd.f32 0.0, %v1301
        %v1303 = vpop.f32.mrb[0].mxu0
        %1304 = vdwg.mxu0
        %v1305 = vadd.f32 %v1229, %v1302
        %v1306 = vtanh.pop %v1305
        %v1307 = vxor.u32 %v1305, 2147483648
        %v1308 = vmul.f32 %v1307, 1.442695
        %v1309 = vpow.pop %v1308
        %v1310 = vadd.f32 %v1309, 1.0
        %v1311 = vrcp.pop %v1310
        %v1312 = vmul.f32 1.0, %v1311
        %v1313 = vsel %vm262, %v1306, %v1312
        %v1314 = vmul.f32 %v1313, %v1220
        %1316 = vrot.lane.b32.xlu0 %v1313, 64
        %v1317 = vpop.permute.xlu0 %1316
        %v1319 = vmul.f32 %v1313, %v1317
        %1321 = vrot.lane.b32.xlu0 %v1319, 32
        %v1322 = vpop.permute.xlu0 %1321
        %v1324 = vadd.f32 %v1314, %v1322
        %v1325 = vtanh.pop %v1324
        %1327 = vrot.lane.b32.xlu0 %v1325, 64
        %v1328 = vpop.permute.xlu0 %1327
        %v1330 = vmul.f32 %v1313, %v1328
        %s1331 = scalar_lea.vmem %s239, 64
        %v1332 = vld [vmem:[%s1331] sm:$0xff]
        %vm1333 = vcmp.gt.f32.partialorder %v1332, 0.5
        %v1334 = vsel %vm1333, 1, 0
        %1335 = vset.pattern.permute.xlu0 0
        %1336 = vperm.xlu0 %1335, %v1334
        %v1337 = vpop.permute.xlu0 %1336
        %vm1338 = vcmp.eq.s32.totalorder %v1337, 1
        %v1339 = vsel %vm1338, %v1330, %v1219
        %v1340 = vsel %vm1338, %v1324, %v1220
        %v1341 = vsel %vm1338, %v1330, 0.0
        %1343 = vrot.lane.b32.xlu0 %v1341, 32
        %v1344 = vpop.permute.xlu0 %1343
        %s1346 = scalar_lea.vmem %s245, 64
        %1347 = vst.msk [vmem:[%s1346] sm:$0xff] %vm266, %v1344
        %s1348 = scalar_lea.vmem %s233, 72
        %v1349 = vld [vmem:[%s1348] sm:$0xff]
        %1351 = vrot.lane.b32.xlu0 %v1339, 32
        %v1352 = vpop.permute.xlu0 %1351
        %v1353 = vsel %vm266, %v1352, 0
        %1355 = vmatprep.subr.mxu0 0.0
        %1356 = vmatpush1.msra.mxu0 %v254
        %1357 = vmatprep.subr.mxu0 0.0
        %1358 = vmatpush1.msra.mxu0 %v255
        %1359 = vmatprep.subr.mxu0 0.0
        %1360 = vmatpush1.msra.mxu0 %v256
        %1361 = vmatprep.subr.mxu0 0.0
        %1362 = vmatpush1.msra.mxu0 %v257
        %1363 = vmatprep.subr.mxu0 0.0
        %1364 = vmatpush1.msra.mxu0 0.0
        %1365 = vmatprep.subr.mxu0 0.0
        %1366 = vmatpush1.msra.mxu0 0.0
        %1367 = vmatprep.subr.mxu0 0.0
        %1368 = vmatpush1.msra.mxu0 0.0
        %1369 = vmatprep.subr.mxu0 0.0
        %1370 = vmatpush1.msra.mxu0 0.0
        %1371 = vmatprep.subr.mxu0 0.0
        %1372 = vmatpush1.msra.mxu0 0.0
        %1373 = vmatprep.subr.mxu0 0.0
        %1374 = vmatpush1.msra.mxu0 0.0
        %1375 = vmatprep.subr.mxu0 0.0
        %1376 = vmatpush1.msra.mxu0 0.0
        %1377 = vmatprep.subr.mxu0 0.0
        %1378 = vmatpush1.msra.mxu0 0.0
        %1379 = vmatprep.subr.mxu0 0.0
        %1380 = vmatpush1.msra.mxu0 0.0
        %1381 = vmatprep.subr.mxu0 0.0
        %1382 = vmatpush1.msra.mxu0 0.0
        %1383 = vmatprep.subr.mxu0 0.0
        %1384 = vmatpush1.msra.mxu0 0.0
        %1385 = vmatprep.subr.mxu0 0.0
        %1386 = vmatpush1.msra.mxu0 0.0
        %1387 = vmatprep.subr.mxu0 0.0
        %1388 = vmatpush1.msra.mxu0 0.0
        %1389 = vmatprep.subr.mxu0 0.0
        %1390 = vmatpush1.msra.mxu0 0.0
        %1391 = vmatprep.subr.mxu0 0.0
        %1392 = vmatpush1.msra.mxu0 0.0
        %1393 = vmatprep.subr.mxu0 0.0
        %1394 = vmatpush1.msra.mxu0 0.0
        %1395 = vmatprep.subr.mxu0 0.0
        %1396 = vmatpush1.msra.mxu0 0.0
        %1397 = vmatprep.subr.mxu0 0.0
        %1398 = vmatpush1.msra.mxu0 0.0
        %1399 = vmatprep.subr.mxu0 0.0
        %1400 = vmatpush1.msra.mxu0 0.0
        %1401 = vmatprep.subr.mxu0 0.0
        %1402 = vmatpush1.msra.mxu0 0.0
        %1403 = vmatprep.subr.mxu0 0.0
        %1404 = vmatpush1.msra.mxu0 0.0
        %1405 = vmatprep.subr.mxu0 0.0
        %1406 = vmatpush1.msra.mxu0 0.0
        %1407 = vmatprep.subr.mxu0 0.0
        %1408 = vmatpush1.msra.mxu0 0.0
        %1409 = vmatprep.subr.mxu0 0.0
        %1410 = vmatpush1.msra.mxu0 0.0
        %1411 = vmatprep.subr.mxu0 0.0
        %1412 = vmatpush1.msra.mxu0 0.0
        %1413 = vmatprep.subr.mxu0 0.0
        %1414 = vmatpush1.msra.mxu0 0.0
        %1415 = vmatprep.subr.mxu0 0.0
        %1416 = vmatpush1.msra.mxu0 0.0
        %1417 = vmatprep.subr.mxu0 0.0
        %1418 = vmatpush1.msra.mxu0 0.0
        %1419 = vmatprep.mubr.f32.mxu0 0.0
        %1420 = vmatmul.mubr.f32.gmra.mrb[0].mxu0 %v1353
        %v1421 = vpop.f32.mrb[0].mxu0
        %v1422 = vadd.f32 0.0, %v1421
        %v1423 = vpop.f32.mrb[0].mxu0
        %1424 = vdwg.mxu0
        %v1425 = vadd.f32 %v1349, %v1422
        %v1426 = vtanh.pop %v1425
        %v1427 = vxor.u32 %v1425, 2147483648
        %v1428 = vmul.f32 %v1427, 1.442695
        %v1429 = vpow.pop %v1428
        %v1430 = vadd.f32 %v1429, 1.0
        %v1431 = vrcp.pop %v1430
        %v1432 = vmul.f32 1.0, %v1431
        %v1433 = vsel %vm262, %v1426, %v1432
        %v1434 = vmul.f32 %v1433, %v1340
        %1436 = vrot.lane.b32.xlu0 %v1433, 64
        %v1437 = vpop.permute.xlu0 %1436
        %v1439 = vmul.f32 %v1433, %v1437
        %1441 = vrot.lane.b32.xlu0 %v1439, 32
        %v1442 = vpop.permute.xlu0 %1441
        %v1444 = vadd.f32 %v1434, %v1442
        %v1445 = vtanh.pop %v1444
        %1447 = vrot.lane.b32.xlu0 %v1445, 64
        %v1448 = vpop.permute.xlu0 %1447
        %v1450 = vmul.f32 %v1433, %v1448
        %s1451 = scalar_lea.vmem %s239, 72
        %v1452 = vld [vmem:[%s1451] sm:$0xff]
        %vm1453 = vcmp.gt.f32.partialorder %v1452, 0.5
        %v1454 = vsel %vm1453, 1, 0
        %1455 = vset.pattern.permute.xlu0 0
        %1456 = vperm.xlu0 %1455, %v1454
        %v1457 = vpop.permute.xlu0 %1456
        %vm1458 = vcmp.eq.s32.totalorder %v1457, 1
        %v1459 = vsel %vm1458, %v1450, %v1339
        %v1460 = vsel %vm1458, %v1444, %v1340
        %v1461 = vsel %vm1458, %v1450, 0.0
        %1463 = vrot.lane.b32.xlu0 %v1461, 32
        %v1464 = vpop.permute.xlu0 %1463
        %s1466 = scalar_lea.vmem %s245, 72
        %1467 = vst.msk [vmem:[%s1466] sm:$0xff] %vm266, %v1464
        %s1468 = scalar_lea.vmem %s233, 80
        %v1469 = vld [vmem:[%s1468] sm:$0xff]
        %1471 = vrot.lane.b32.xlu0 %v1459, 32
        %v1472 = vpop.permute.xlu0 %1471
        %v1473 = vsel %vm266, %v1472, 0
        %1475 = vmatprep.subr.mxu0 0.0
        %1476 = vmatpush1.msra.mxu0 %v254
        %1477 = vmatprep.subr.mxu0 0.0
        %1478 = vmatpush1.msra.mxu0 %v255
        %1479 = vmatprep.subr.mxu0 0.0
        %1480 = vmatpush1.msra.mxu0 %v256
        %1481 = vmatprep.subr.mxu0 0.0
        %1482 = vmatpush1.msra.mxu0 %v257
        %1483 = vmatprep.subr.mxu0 0.0
        %1484 = vmatpush1.msra.mxu0 0.0
        %1485 = vmatprep.subr.mxu0 0.0
        %1486 = vmatpush1.msra.mxu0 0.0
        %1487 = vmatprep.subr.mxu0 0.0
        %1488 = vmatpush1.msra.mxu0 0.0
        %1489 = vmatprep.subr.mxu0 0.0
        %1490 = vmatpush1.msra.mxu0 0.0
        %1491 = vmatprep.subr.mxu0 0.0
        %1492 = vmatpush1.msra.mxu0 0.0
        %1493 = vmatprep.subr.mxu0 0.0
        %1494 = vmatpush1.msra.mxu0 0.0
        %1495 = vmatprep.subr.mxu0 0.0
        %1496 = vmatpush1.msra.mxu0 0.0
        %1497 = vmatprep.subr.mxu0 0.0
        %1498 = vmatpush1.msra.mxu0 0.0
        %1499 = vmatprep.subr.mxu0 0.0
        %1500 = vmatpush1.msra.mxu0 0.0
        %1501 = vmatprep.subr.mxu0 0.0
        %1502 = vmatpush1.msra.mxu0 0.0
        %1503 = vmatprep.subr.mxu0 0.0
        %1504 = vmatpush1.msra.mxu0 0.0
        %1505 = vmatprep.subr.mxu0 0.0
        %1506 = vmatpush1.msra.mxu0 0.0
        %1507 = vmatprep.subr.mxu0 0.0
        %1508 = vmatpush1.msra.mxu0 0.0
        %1509 = vmatprep.subr.mxu0 0.0
        %1510 = vmatpush1.msra.mxu0 0.0
        %1511 = vmatprep.subr.mxu0 0.0
        %1512 = vmatpush1.msra.mxu0 0.0
        %1513 = vmatprep.subr.mxu0 0.0
        %1514 = vmatpush1.msra.mxu0 0.0
        %1515 = vmatprep.subr.mxu0 0.0
        %1516 = vmatpush1.msra.mxu0 0.0
        %1517 = vmatprep.subr.mxu0 0.0
        %1518 = vmatpush1.msra.mxu0 0.0
        %1519 = vmatprep.subr.mxu0 0.0
        %1520 = vmatpush1.msra.mxu0 0.0
        %1521 = vmatprep.subr.mxu0 0.0
        %1522 = vmatpush1.msra.mxu0 0.0
        %1523 = vmatprep.subr.mxu0 0.0
        %1524 = vmatpush1.msra.mxu0 0.0
        %1525 = vmatprep.subr.mxu0 0.0
        %1526 = vmatpush1.msra.mxu0 0.0
        %1527 = vmatprep.subr.mxu0 0.0
        %1528 = vmatpush1.msra.mxu0 0.0
        %1529 = vmatprep.subr.mxu0 0.0
        %1530 = vmatpush1.msra.mxu0 0.0
        %1531 = vmatprep.subr.mxu0 0.0
        %1532 = vmatpush1.msra.mxu0 0.0
        %1533 = vmatprep.subr.mxu0 0.0
        %1534 = vmatpush1.msra.mxu0 0.0
        %1535 = vmatprep.subr.mxu0 0.0
        %1536 = vmatpush1.msra.mxu0 0.0
        %1537 = vmatprep.subr.mxu0 0.0
        %1538 = vmatpush1.msra.mxu0 0.0
        %1539 = vmatprep.mubr.f32.mxu0 0.0
        %1540 = vmatmul.mubr.f32.gmra.mrb[0].mxu0 %v1473
        %v1541 = vpop.f32.mrb[0].mxu0
        %v1542 = vadd.f32 0.0, %v1541
        %v1543 = vpop.f32.mrb[0].mxu0
        %1544 = vdwg.mxu0
        %v1545 = vadd.f32 %v1469, %v1542
        %v1546 = vtanh.pop %v1545
        %v1547 = vxor.u32 %v1545, 2147483648
        %v1548 = vmul.f32 %v1547, 1.442695
        %v1549 = vpow.pop %v1548
        %v1550 = vadd.f32 %v1549, 1.0
        %v1551 = vrcp.pop %v1550
        %v1552 = vmul.f32 1.0, %v1551
        %v1553 = vsel %vm262, %v1546, %v1552
        %v1554 = vmul.f32 %v1553, %v1460
        %1556 = vrot.lane.b32.xlu0 %v1553, 64
        %v1557 = vpop.permute.xlu0 %1556
        %v1559 = vmul.f32 %v1553, %v1557
        %1561 = vrot.lane.b32.xlu0 %v1559, 32
        %v1562 = vpop.permute.xlu0 %1561
        %v1564 = vadd.f32 %v1554, %v1562
        %v1565 = vtanh.pop %v1564
        %1567 = vrot.lane.b32.xlu0 %v1565, 64
        %v1568 = vpop.permute.xlu0 %1567
        %v1570 = vmul.f32 %v1553, %v1568
        %s1571 = scalar_lea.vmem %s239, 80
        %v1572 = vld [vmem:[%s1571] sm:$0xff]
        %vm1573 = vcmp.gt.f32.partialorder %v1572, 0.5
        %v1574 = vsel %vm1573, 1, 0
        %1575 = vset.pattern.permute.xlu0 0
        %1576 = vperm.xlu0 %1575, %v1574
        %v1577 = vpop.permute.xlu0 %1576
        %vm1578 = vcmp.eq.s32.totalorder %v1577, 1
        %v1579 = vsel %vm1578, %v1570, %v1459
        %v1580 = vsel %vm1578, %v1564, %v1460
        %v1581 = vsel %vm1578, %v1570, 0.0
        %1583 = vrot.lane.b32.xlu0 %v1581, 32
        %v1584 = vpop.permute.xlu0 %1583
        %s1586 = scalar_lea.vmem %s245, 80
        %1587 = vst.msk [vmem:[%s1586] sm:$0xff] %vm266, %v1584
        %s1588 = scalar_lea.vmem %s233, 88
        %v1589 = vld [vmem:[%s1588] sm:$0xff]
        %1591 = vrot.lane.b32.xlu0 %v1579, 32
        %v1592 = vpop.permute.xlu0 %1591
        %v1593 = vsel %vm266, %v1592, 0
        %1595 = vmatprep.subr.mxu0 0.0
        %1596 = vmatpush1.msra.mxu0 %v254
        %1597 = vmatprep.subr.mxu0 0.0
        %1598 = vmatpush1.msra.mxu0 %v255
        %1599 = vmatprep.subr.mxu0 0.0
        %1600 = vmatpush1.msra.mxu0 %v256
        %1601 = vmatprep.subr.mxu0 0.0
        %1602 = vmatpush1.msra.mxu0 %v257
        %1603 = vmatprep.subr.mxu0 0.0
        %1604 = vmatpush1.msra.mxu0 0.0
        %1605 = vmatprep.subr.mxu0 0.0
        %1606 = vmatpush1.msra.mxu0 0.0
        %1607 = vmatprep.subr.mxu0 0.0
        %1608 = vmatpush1.msra.mxu0 0.0
        %1609 = vmatprep.subr.mxu0 0.0
        %1610 = vmatpush1.msra.mxu0 0.0
        %1611 = vmatprep.subr.mxu0 0.0
        %1612 = vmatpush1.msra.mxu0 0.0
        %1613 = vmatprep.subr.mxu0 0.0
        %1614 = vmatpush1.msra.mxu0 0.0
        %1615 = vmatprep.subr.mxu0 0.0
        %1616 = vmatpush1.msra.mxu0 0.0
        %1617 = vmatprep.subr.mxu0 0.0
        %1618 = vmatpush1.msra.mxu0 0.0
        %1619 = vmatprep.subr.mxu0 0.0
        %1620 = vmatpush1.msra.mxu0 0.0
        %1621 = vmatprep.subr.mxu0 0.0
        %1622 = vmatpush1.msra.mxu0 0.0
        %1623 = vmatprep.subr.mxu0 0.0
        %1624 = vmatpush1.msra.mxu0 0.0
        %1625 = vmatprep.subr.mxu0 0.0
        %1626 = vmatpush1.msra.mxu0 0.0
        %1627 = vmatprep.subr.mxu0 0.0
        %1628 = vmatpush1.msra.mxu0 0.0
        %1629 = vmatprep.subr.mxu0 0.0
        %1630 = vmatpush1.msra.mxu0 0.0
        %1631 = vmatprep.subr.mxu0 0.0
        %1632 = vmatpush1.msra.mxu0 0.0
        %1633 = vmatprep.subr.mxu0 0.0
        %1634 = vmatpush1.msra.mxu0 0.0
        %1635 = vmatprep.subr.mxu0 0.0
        %1636 = vmatpush1.msra.mxu0 0.0
        %1637 = vmatprep.subr.mxu0 0.0
        %1638 = vmatpush1.msra.mxu0 0.0
        %1639 = vmatprep.subr.mxu0 0.0
        %1640 = vmatpush1.msra.mxu0 0.0
        %1641 = vmatprep.subr.mxu0 0.0
        %1642 = vmatpush1.msra.mxu0 0.0
        %1643 = vmatprep.subr.mxu0 0.0
        %1644 = vmatpush1.msra.mxu0 0.0
        %1645 = vmatprep.subr.mxu0 0.0
        %1646 = vmatpush1.msra.mxu0 0.0
        %1647 = vmatprep.subr.mxu0 0.0
        %1648 = vmatpush1.msra.mxu0 0.0
        %1649 = vmatprep.subr.mxu0 0.0
        %1650 = vmatpush1.msra.mxu0 0.0
        %1651 = vmatprep.subr.mxu0 0.0
        %1652 = vmatpush1.msra.mxu0 0.0
        %1653 = vmatprep.subr.mxu0 0.0
        %1654 = vmatpush1.msra.mxu0 0.0
        %1655 = vmatprep.subr.mxu0 0.0
        %1656 = vmatpush1.msra.mxu0 0.0
        %1657 = vmatprep.subr.mxu0 0.0
        %1658 = vmatpush1.msra.mxu0 0.0
        %1659 = vmatprep.mubr.f32.mxu0 0.0
        %1660 = vmatmul.mubr.f32.gmra.mrb[0].mxu0 %v1593
        %v1661 = vpop.f32.mrb[0].mxu0
        %v1662 = vadd.f32 0.0, %v1661
        %v1663 = vpop.f32.mrb[0].mxu0
        %1664 = vdwg.mxu0
        %v1665 = vadd.f32 %v1589, %v1662
        %v1666 = vtanh.pop %v1665
        %v1667 = vxor.u32 %v1665, 2147483648
        %v1668 = vmul.f32 %v1667, 1.442695
        %v1669 = vpow.pop %v1668
        %v1670 = vadd.f32 %v1669, 1.0
        %v1671 = vrcp.pop %v1670
        %v1672 = vmul.f32 1.0, %v1671
        %v1673 = vsel %vm262, %v1666, %v1672
        %v1674 = vmul.f32 %v1673, %v1580
        %1676 = vrot.lane.b32.xlu0 %v1673, 64
        %v1677 = vpop.permute.xlu0 %1676
        %v1679 = vmul.f32 %v1673, %v1677
        %1681 = vrot.lane.b32.xlu0 %v1679, 32
        %v1682 = vpop.permute.xlu0 %1681
        %v1684 = vadd.f32 %v1674, %v1682
        %v1685 = vtanh.pop %v1684
        %1687 = vrot.lane.b32.xlu0 %v1685, 64
        %v1688 = vpop.permute.xlu0 %1687
        %v1690 = vmul.f32 %v1673, %v1688
        %s1691 = scalar_lea.vmem %s239, 88
        %v1692 = vld [vmem:[%s1691] sm:$0xff]
        %vm1693 = vcmp.gt.f32.partialorder %v1692, 0.5
        %v1694 = vsel %vm1693, 1, 0
        %1695 = vset.pattern.permute.xlu0 0
        %1696 = vperm.xlu0 %1695, %v1694
        %v1697 = vpop.permute.xlu0 %1696
        %vm1698 = vcmp.eq.s32.totalorder %v1697, 1
        %v1699 = vsel %vm1698, %v1690, %v1579
        %v1700 = vsel %vm1698, %v1684, %v1580
        %v1701 = vsel %vm1698, %v1690, 0.0
        %1703 = vrot.lane.b32.xlu0 %v1701, 32
        %v1704 = vpop.permute.xlu0 %1703
        %s1706 = scalar_lea.vmem %s245, 88
        %1707 = vst.msk [vmem:[%s1706] sm:$0xff] %vm266, %v1704
        %s1708 = scalar_lea.vmem %s233, 96
        %v1709 = vld [vmem:[%s1708] sm:$0xff]
        %1711 = vrot.lane.b32.xlu0 %v1699, 32
        %v1712 = vpop.permute.xlu0 %1711
        %v1713 = vsel %vm266, %v1712, 0
        %1715 = vmatprep.subr.mxu0 0.0
        %1716 = vmatpush1.msra.mxu0 %v254
        %1717 = vmatprep.subr.mxu0 0.0
        %1718 = vmatpush1.msra.mxu0 %v255
        %1719 = vmatprep.subr.mxu0 0.0
        %1720 = vmatpush1.msra.mxu0 %v256
        %1721 = vmatprep.subr.mxu0 0.0
        %1722 = vmatpush1.msra.mxu0 %v257
        %1723 = vmatprep.subr.mxu0 0.0
        %1724 = vmatpush1.msra.mxu0 0.0
        %1725 = vmatprep.subr.mxu0 0.0
        %1726 = vmatpush1.msra.mxu0 0.0
        %1727 = vmatprep.subr.mxu0 0.0
        %1728 = vmatpush1.msra.mxu0 0.0
        %1729 = vmatprep.subr.mxu0 0.0
        %1730 = vmatpush1.msra.mxu0 0.0
        %1731 = vmatprep.subr.mxu0 0.0
        %1732 = vmatpush1.msra.mxu0 0.0
        %1733 = vmatprep.subr.mxu0 0.0
        %1734 = vmatpush1.msra.mxu0 0.0
        %1735 = vmatprep.subr.mxu0 0.0
        %1736 = vmatpush1.msra.mxu0 0.0
        %1737 = vmatprep.subr.mxu0 0.0
        %1738 = vmatpush1.msra.mxu0 0.0
        %1739 = vmatprep.subr.mxu0 0.0
        %1740 = vmatpush1.msra.mxu0 0.0
        %1741 = vmatprep.subr.mxu0 0.0
        %1742 = vmatpush1.msra.mxu0 0.0
        %1743 = vmatprep.subr.mxu0 0.0
        %1744 = vmatpush1.msra.mxu0 0.0
        %1745 = vmatprep.subr.mxu0 0.0
        %1746 = vmatpush1.msra.mxu0 0.0
        %1747 = vmatprep.subr.mxu0 0.0
        %1748 = vmatpush1.msra.mxu0 0.0
        %1749 = vmatprep.subr.mxu0 0.0
        %1750 = vmatpush1.msra.mxu0 0.0
        %1751 = vmatprep.subr.mxu0 0.0
        %1752 = vmatpush1.msra.mxu0 0.0
        %1753 = vmatprep.subr.mxu0 0.0
        %1754 = vmatpush1.msra.mxu0 0.0
        %1755 = vmatprep.subr.mxu0 0.0
        %1756 = vmatpush1.msra.mxu0 0.0
        %1757 = vmatprep.subr.mxu0 0.0
        %1758 = vmatpush1.msra.mxu0 0.0
        %1759 = vmatprep.subr.mxu0 0.0
        %1760 = vmatpush1.msra.mxu0 0.0
        %1761 = vmatprep.subr.mxu0 0.0
        %1762 = vmatpush1.msra.mxu0 0.0
        %1763 = vmatprep.subr.mxu0 0.0
        %1764 = vmatpush1.msra.mxu0 0.0
        %1765 = vmatprep.subr.mxu0 0.0
        %1766 = vmatpush1.msra.mxu0 0.0
        %1767 = vmatprep.subr.mxu0 0.0
        %1768 = vmatpush1.msra.mxu0 0.0
        %1769 = vmatprep.subr.mxu0 0.0
        %1770 = vmatpush1.msra.mxu0 0.0
        %1771 = vmatprep.subr.mxu0 0.0
        %1772 = vmatpush1.msra.mxu0 0.0
        %1773 = vmatprep.subr.mxu0 0.0
        %1774 = vmatpush1.msra.mxu0 0.0
        %1775 = vmatprep.subr.mxu0 0.0
        %1776 = vmatpush1.msra.mxu0 0.0
        %1777 = vmatprep.subr.mxu0 0.0
        %1778 = vmatpush1.msra.mxu0 0.0
        %1779 = vmatprep.mubr.f32.mxu0 0.0
        %1780 = vmatmul.mubr.f32.gmra.mrb[0].mxu0 %v1713
        %v1781 = vpop.f32.mrb[0].mxu0
        %v1782 = vadd.f32 0.0, %v1781
        %v1783 = vpop.f32.mrb[0].mxu0
        %1784 = vdwg.mxu0
        %v1785 = vadd.f32 %v1709, %v1782
        %v1786 = vtanh.pop %v1785
        %v1787 = vxor.u32 %v1785, 2147483648
        %v1788 = vmul.f32 %v1787, 1.442695
        %v1789 = vpow.pop %v1788
        %v1790 = vadd.f32 %v1789, 1.0
        %v1791 = vrcp.pop %v1790
        %v1792 = vmul.f32 1.0, %v1791
        %v1793 = vsel %vm262, %v1786, %v1792
        %v1794 = vmul.f32 %v1793, %v1700
        %1796 = vrot.lane.b32.xlu0 %v1793, 64
        %v1797 = vpop.permute.xlu0 %1796
        %v1799 = vmul.f32 %v1793, %v1797
        %1801 = vrot.lane.b32.xlu0 %v1799, 32
        %v1802 = vpop.permute.xlu0 %1801
        %v1804 = vadd.f32 %v1794, %v1802
        %v1805 = vtanh.pop %v1804
        %1807 = vrot.lane.b32.xlu0 %v1805, 64
        %v1808 = vpop.permute.xlu0 %1807
        %v1810 = vmul.f32 %v1793, %v1808
        %s1811 = scalar_lea.vmem %s239, 96
        %v1812 = vld [vmem:[%s1811] sm:$0xff]
        %vm1813 = vcmp.gt.f32.partialorder %v1812, 0.5
        %v1814 = vsel %vm1813, 1, 0
        %1815 = vset.pattern.permute.xlu0 0
        %1816 = vperm.xlu0 %1815, %v1814
        %v1817 = vpop.permute.xlu0 %1816
        %vm1818 = vcmp.eq.s32.totalorder %v1817, 1
        %v1819 = vsel %vm1818, %v1810, %v1699
        %v1820 = vsel %vm1818, %v1804, %v1700
        %v1821 = vsel %vm1818, %v1810, 0.0
        %1823 = vrot.lane.b32.xlu0 %v1821, 32
        %v1824 = vpop.permute.xlu0 %1823
        %s1826 = scalar_lea.vmem %s245, 96
        %1827 = vst.msk [vmem:[%s1826] sm:$0xff] %vm266, %v1824
        %s1828 = scalar_lea.vmem %s233, 104
        %v1829 = vld [vmem:[%s1828] sm:$0xff]
        %1831 = vrot.lane.b32.xlu0 %v1819, 32
        %v1832 = vpop.permute.xlu0 %1831
        %v1833 = vsel %vm266, %v1832, 0
        %1835 = vmatprep.subr.mxu0 0.0
        %1836 = vmatpush1.msra.mxu0 %v254
        %1837 = vmatprep.subr.mxu0 0.0
        %1838 = vmatpush1.msra.mxu0 %v255
        %1839 = vmatprep.subr.mxu0 0.0
        %1840 = vmatpush1.msra.mxu0 %v256
        %1841 = vmatprep.subr.mxu0 0.0
        %1842 = vmatpush1.msra.mxu0 %v257
        %1843 = vmatprep.subr.mxu0 0.0
        %1844 = vmatpush1.msra.mxu0 0.0
        %1845 = vmatprep.subr.mxu0 0.0
        %1846 = vmatpush1.msra.mxu0 0.0
        %1847 = vmatprep.subr.mxu0 0.0
        %1848 = vmatpush1.msra.mxu0 0.0
        %1849 = vmatprep.subr.mxu0 0.0
        %1850 = vmatpush1.msra.mxu0 0.0
        %1851 = vmatprep.subr.mxu0 0.0
        %1852 = vmatpush1.msra.mxu0 0.0
        %1853 = vmatprep.subr.mxu0 0.0
        %1854 = vmatpush1.msra.mxu0 0.0
        %1855 = vmatprep.subr.mxu0 0.0
        %1856 = vmatpush1.msra.mxu0 0.0
        %1857 = vmatprep.subr.mxu0 0.0
        %1858 = vmatpush1.msra.mxu0 0.0
        %1859 = vmatprep.subr.mxu0 0.0
        %1860 = vmatpush1.msra.mxu0 0.0
        %1861 = vmatprep.subr.mxu0 0.0
        %1862 = vmatpush1.msra.mxu0 0.0
        %1863 = vmatprep.subr.mxu0 0.0
        %1864 = vmatpush1.msra.mxu0 0.0
        %1865 = vmatprep.subr.mxu0 0.0
        %1866 = vmatpush1.msra.mxu0 0.0
        %1867 = vmatprep.subr.mxu0 0.0
        %1868 = vmatpush1.msra.mxu0 0.0
        %1869 = vmatprep.subr.mxu0 0.0
        %1870 = vmatpush1.msra.mxu0 0.0
        %1871 = vmatprep.subr.mxu0 0.0
        %1872 = vmatpush1.msra.mxu0 0.0
        %1873 = vmatprep.subr.mxu0 0.0
        %1874 = vmatpush1.msra.mxu0 0.0
        %1875 = vmatprep.subr.mxu0 0.0
        %1876 = vmatpush1.msra.mxu0 0.0
        %1877 = vmatprep.subr.mxu0 0.0
        %1878 = vmatpush1.msra.mxu0 0.0
        %1879 = vmatprep.subr.mxu0 0.0
        %1880 = vmatpush1.msra.mxu0 0.0
        %1881 = vmatprep.subr.mxu0 0.0
        %1882 = vmatpush1.msra.mxu0 0.0
        %1883 = vmatprep.subr.mxu0 0.0
        %1884 = vmatpush1.msra.mxu0 0.0
        %1885 = vmatprep.subr.mxu0 0.0
        %1886 = vmatpush1.msra.mxu0 0.0
        %1887 = vmatprep.subr.mxu0 0.0
        %1888 = vmatpush1.msra.mxu0 0.0
        %1889 = vmatprep.subr.mxu0 0.0
        %1890 = vmatpush1.msra.mxu0 0.0
        %1891 = vmatprep.subr.mxu0 0.0
        %1892 = vmatpush1.msra.mxu0 0.0
        %1893 = vmatprep.subr.mxu0 0.0
        %1894 = vmatpush1.msra.mxu0 0.0
        %1895 = vmatprep.subr.mxu0 0.0
        %1896 = vmatpush1.msra.mxu0 0.0
        %1897 = vmatprep.subr.mxu0 0.0
        %1898 = vmatpush1.msra.mxu0 0.0
        %1899 = vmatprep.mubr.f32.mxu0 0.0
        %1900 = vmatmul.mubr.f32.gmra.mrb[0].mxu0 %v1833
        %v1901 = vpop.f32.mrb[0].mxu0
        %v1902 = vadd.f32 0.0, %v1901
        %v1903 = vpop.f32.mrb[0].mxu0
        %1904 = vdwg.mxu0
        %v1905 = vadd.f32 %v1829, %v1902
        %v1906 = vtanh.pop %v1905
        %v1907 = vxor.u32 %v1905, 2147483648
        %v1908 = vmul.f32 %v1907, 1.442695
        %v1909 = vpow.pop %v1908
        %v1910 = vadd.f32 %v1909, 1.0
        %v1911 = vrcp.pop %v1910
        %v1912 = vmul.f32 1.0, %v1911
        %v1913 = vsel %vm262, %v1906, %v1912
        %v1914 = vmul.f32 %v1913, %v1820
        %1916 = vrot.lane.b32.xlu0 %v1913, 64
        %v1917 = vpop.permute.xlu0 %1916
        %v1919 = vmul.f32 %v1913, %v1917
        %1921 = vrot.lane.b32.xlu0 %v1919, 32
        %v1922 = vpop.permute.xlu0 %1921
        %v1924 = vadd.f32 %v1914, %v1922
        %v1925 = vtanh.pop %v1924
        %1927 = vrot.lane.b32.xlu0 %v1925, 64
        %v1928 = vpop.permute.xlu0 %1927
        %v1930 = vmul.f32 %v1913, %v1928
        %s1931 = scalar_lea.vmem %s239, 104
        %v1932 = vld [vmem:[%s1931] sm:$0xff]
        %vm1933 = vcmp.gt.f32.partialorder %v1932, 0.5
        %v1934 = vsel %vm1933, 1, 0
        %1935 = vset.pattern.permute.xlu0 0
        %1936 = vperm.xlu0 %1935, %v1934
        %v1937 = vpop.permute.xlu0 %1936
        %vm1938 = vcmp.eq.s32.totalorder %v1937, 1
        %v1939 = vsel %vm1938, %v1930, %v1819
        %v1940 = vsel %vm1938, %v1924, %v1820
        %v1941 = vsel %vm1938, %v1930, 0.0
        %1943 = vrot.lane.b32.xlu0 %v1941, 32
        %v1944 = vpop.permute.xlu0 %1943
        %s1946 = scalar_lea.vmem %s245, 104
        %1947 = vst.msk [vmem:[%s1946] sm:$0xff] %vm266, %v1944
        %s1948 = scalar_lea.vmem %s233, 112
        %v1949 = vld [vmem:[%s1948] sm:$0xff]
        %1951 = vrot.lane.b32.xlu0 %v1939, 32
        %v1952 = vpop.permute.xlu0 %1951
        %v1953 = vsel %vm266, %v1952, 0
        %1955 = vmatprep.subr.mxu0 0.0
        %1956 = vmatpush1.msra.mxu0 %v254
        %1957 = vmatprep.subr.mxu0 0.0
        %1958 = vmatpush1.msra.mxu0 %v255
        %1959 = vmatprep.subr.mxu0 0.0
        %1960 = vmatpush1.msra.mxu0 %v256
        %1961 = vmatprep.subr.mxu0 0.0
        %1962 = vmatpush1.msra.mxu0 %v257
        %1963 = vmatprep.subr.mxu0 0.0
        %1964 = vmatpush1.msra.mxu0 0.0
        %1965 = vmatprep.subr.mxu0 0.0
        %1966 = vmatpush1.msra.mxu0 0.0
        %1967 = vmatprep.subr.mxu0 0.0
        %1968 = vmatpush1.msra.mxu0 0.0
        %1969 = vmatprep.subr.mxu0 0.0
        %1970 = vmatpush1.msra.mxu0 0.0
        %1971 = vmatprep.subr.mxu0 0.0
        %1972 = vmatpush1.msra.mxu0 0.0
        %1973 = vmatprep.subr.mxu0 0.0
        %1974 = vmatpush1.msra.mxu0 0.0
        %1975 = vmatprep.subr.mxu0 0.0
        %1976 = vmatpush1.msra.mxu0 0.0
        %1977 = vmatprep.subr.mxu0 0.0
        %1978 = vmatpush1.msra.mxu0 0.0
        %1979 = vmatprep.subr.mxu0 0.0
        %1980 = vmatpush1.msra.mxu0 0.0
        %1981 = vmatprep.subr.mxu0 0.0
        %1982 = vmatpush1.msra.mxu0 0.0
        %1983 = vmatprep.subr.mxu0 0.0
        %1984 = vmatpush1.msra.mxu0 0.0
        %1985 = vmatprep.subr.mxu0 0.0
        %1986 = vmatpush1.msra.mxu0 0.0
        %1987 = vmatprep.subr.mxu0 0.0
        %1988 = vmatpush1.msra.mxu0 0.0
        %1989 = vmatprep.subr.mxu0 0.0
        %1990 = vmatpush1.msra.mxu0 0.0
        %1991 = vmatprep.subr.mxu0 0.0
        %1992 = vmatpush1.msra.mxu0 0.0
        %1993 = vmatprep.subr.mxu0 0.0
        %1994 = vmatpush1.msra.mxu0 0.0
        %1995 = vmatprep.subr.mxu0 0.0
        %1996 = vmatpush1.msra.mxu0 0.0
        %1997 = vmatprep.subr.mxu0 0.0
        %1998 = vmatpush1.msra.mxu0 0.0
        %1999 = vmatprep.subr.mxu0 0.0
        %2000 = vmatpush1.msra.mxu0 0.0
        %2001 = vmatprep.subr.mxu0 0.0
        %2002 = vmatpush1.msra.mxu0 0.0
        %2003 = vmatprep.subr.mxu0 0.0
        %2004 = vmatpush1.msra.mxu0 0.0
        %2005 = vmatprep.subr.mxu0 0.0
        %2006 = vmatpush1.msra.mxu0 0.0
        %2007 = vmatprep.subr.mxu0 0.0
        %2008 = vmatpush1.msra.mxu0 0.0
        %2009 = vmatprep.subr.mxu0 0.0
        %2010 = vmatpush1.msra.mxu0 0.0
        %2011 = vmatprep.subr.mxu0 0.0
        %2012 = vmatpush1.msra.mxu0 0.0
        %2013 = vmatprep.subr.mxu0 0.0
        %2014 = vmatpush1.msra.mxu0 0.0
        %2015 = vmatprep.subr.mxu0 0.0
        %2016 = vmatpush1.msra.mxu0 0.0
        %2017 = vmatprep.subr.mxu0 0.0
        %2018 = vmatpush1.msra.mxu0 0.0
        %2019 = vmatprep.mubr.f32.mxu0 0.0
        %2020 = vmatmul.mubr.f32.gmra.mrb[0].mxu0 %v1953
        %v2021 = vpop.f32.mrb[0].mxu0
        %v2022 = vadd.f32 0.0, %v2021
        %v2023 = vpop.f32.mrb[0].mxu0
        %2024 = vdwg.mxu0
        %v2025 = vadd.f32 %v1949, %v2022
        %v2026 = vtanh.pop %v2025
        %v2027 = vxor.u32 %v2025, 2147483648
        %v2028 = vmul.f32 %v2027, 1.442695
        %v2029 = vpow.pop %v2028
        %v2030 = vadd.f32 %v2029, 1.0
        %v2031 = vrcp.pop %v2030
        %v2032 = vmul.f32 1.0, %v2031
        %v2033 = vsel %vm262, %v2026, %v2032
        %v2034 = vmul.f32 %v2033, %v1940
        %2036 = vrot.lane.b32.xlu0 %v2033, 64
        %v2037 = vpop.permute.xlu0 %2036
        %v2039 = vmul.f32 %v2033, %v2037
        %2041 = vrot.lane.b32.xlu0 %v2039, 32
        %v2042 = vpop.permute.xlu0 %2041
        %v2044 = vadd.f32 %v2034, %v2042
        %v2045 = vtanh.pop %v2044
        %2047 = vrot.lane.b32.xlu0 %v2045, 64
        %v2048 = vpop.permute.xlu0 %2047
        %v2050 = vmul.f32 %v2033, %v2048
        %s2051 = scalar_lea.vmem %s239, 112
        %v2052 = vld [vmem:[%s2051] sm:$0xff]
        %vm2053 = vcmp.gt.f32.partialorder %v2052, 0.5
        %v2054 = vsel %vm2053, 1, 0
        %2055 = vset.pattern.permute.xlu0 0
        %2056 = vperm.xlu0 %2055, %v2054
        %v2057 = vpop.permute.xlu0 %2056
        %vm2058 = vcmp.eq.s32.totalorder %v2057, 1
        %v2059 = vsel %vm2058, %v2050, %v1939
        %v2060 = vsel %vm2058, %v2044, %v1940
        %v2061 = vsel %vm2058, %v2050, 0.0
        %2063 = vrot.lane.b32.xlu0 %v2061, 32
        %v2064 = vpop.permute.xlu0 %2063
        %s2066 = scalar_lea.vmem %s245, 112
        %2067 = vst.msk [vmem:[%s2066] sm:$0xff] %vm266, %v2064
        %s2068 = scalar_lea.vmem %s233, 120
        %v2069 = vld [vmem:[%s2068] sm:$0xff]
        %2071 = vrot.lane.b32.xlu0 %v2059, 32
        %v2072 = vpop.permute.xlu0 %2071
        %v2073 = vsel %vm266, %v2072, 0
        %2075 = vmatprep.subr.mxu0 0.0
        %2076 = vmatpush1.msra.mxu0 %v254
        %2077 = vmatprep.subr.mxu0 0.0
        %2078 = vmatpush1.msra.mxu0 %v255
        %2079 = vmatprep.subr.mxu0 0.0
        %2080 = vmatpush1.msra.mxu0 %v256
        %2081 = vmatprep.subr.mxu0 0.0
        %2082 = vmatpush1.msra.mxu0 %v257
        %2083 = vmatprep.subr.mxu0 0.0
        %2084 = vmatpush1.msra.mxu0 0.0
        %2085 = vmatprep.subr.mxu0 0.0
        %2086 = vmatpush1.msra.mxu0 0.0
        %2087 = vmatprep.subr.mxu0 0.0
        %2088 = vmatpush1.msra.mxu0 0.0
        %2089 = vmatprep.subr.mxu0 0.0
        %2090 = vmatpush1.msra.mxu0 0.0
        %2091 = vmatprep.subr.mxu0 0.0
        %2092 = vmatpush1.msra.mxu0 0.0
        %2093 = vmatprep.subr.mxu0 0.0
        %2094 = vmatpush1.msra.mxu0 0.0
        %2095 = vmatprep.subr.mxu0 0.0
        %2096 = vmatpush1.msra.mxu0 0.0
        %2097 = vmatprep.subr.mxu0 0.0
        %2098 = vmatpush1.msra.mxu0 0.0
        %2099 = vmatprep.subr.mxu0 0.0
        %2100 = vmatpush1.msra.mxu0 0.0
        %2101 = vmatprep.subr.mxu0 0.0
        %2102 = vmatpush1.msra.mxu0 0.0
        %2103 = vmatprep.subr.mxu0 0.0
        %2104 = vmatpush1.msra.mxu0 0.0
        %2105 = vmatprep.subr.mxu0 0.0
        %2106 = vmatpush1.msra.mxu0 0.0
        %2107 = vmatprep.subr.mxu0 0.0
        %2108 = vmatpush1.msra.mxu0 0.0
        %2109 = vmatprep.subr.mxu0 0.0
        %2110 = vmatpush1.msra.mxu0 0.0
        %2111 = vmatprep.subr.mxu0 0.0
        %2112 = vmatpush1.msra.mxu0 0.0
        %2113 = vmatprep.subr.mxu0 0.0
        %2114 = vmatpush1.msra.mxu0 0.0
        %2115 = vmatprep.subr.mxu0 0.0
        %2116 = vmatpush1.msra.mxu0 0.0
        %2117 = vmatprep.subr.mxu0 0.0
        %2118 = vmatpush1.msra.mxu0 0.0
        %2119 = vmatprep.subr.mxu0 0.0
        %2120 = vmatpush1.msra.mxu0 0.0
        %2121 = vmatprep.subr.mxu0 0.0
        %2122 = vmatpush1.msra.mxu0 0.0
        %2123 = vmatprep.subr.mxu0 0.0
        %2124 = vmatpush1.msra.mxu0 0.0
        %2125 = vmatprep.subr.mxu0 0.0
        %2126 = vmatpush1.msra.mxu0 0.0
        %2127 = vmatprep.subr.mxu0 0.0
        %2128 = vmatpush1.msra.mxu0 0.0
        %2129 = vmatprep.subr.mxu0 0.0
        %2130 = vmatpush1.msra.mxu0 0.0
        %2131 = vmatprep.subr.mxu0 0.0
        %2132 = vmatpush1.msra.mxu0 0.0
        %2133 = vmatprep.subr.mxu0 0.0
        %2134 = vmatpush1.msra.mxu0 0.0
        %2135 = vmatprep.subr.mxu0 0.0
        %2136 = vmatpush1.msra.mxu0 0.0
        %2137 = vmatprep.subr.mxu0 0.0
        %2138 = vmatpush1.msra.mxu0 0.0
        %2139 = vmatprep.mubr.f32.mxu0 0.0
        %2140 = vmatmul.mubr.f32.gmra.mrb[0].mxu0 %v2073
        %v2141 = vpop.f32.mrb[0].mxu0
        %v2142 = vadd.f32 0.0, %v2141
        %v2143 = vpop.f32.mrb[0].mxu0
        %2144 = vdwg.mxu0
        %v2145 = vadd.f32 %v2069, %v2142
        %v2146 = vtanh.pop %v2145
        %v2147 = vxor.u32 %v2145, 2147483648
        %v2148 = vmul.f32 %v2147, 1.442695
        %v2149 = vpow.pop %v2148
        %v2150 = vadd.f32 %v2149, 1.0
        %v2151 = vrcp.pop %v2150
        %v2152 = vmul.f32 1.0, %v2151
        %v2153 = vsel %vm262, %v2146, %v2152
        %v2154 = vmul.f32 %v2153, %v2060
        %2156 = vrot.lane.b32.xlu0 %v2153, 64
        %v2157 = vpop.permute.xlu0 %2156
        %v2159 = vmul.f32 %v2153, %v2157
        %2161 = vrot.lane.b32.xlu0 %v2159, 32
        %v2162 = vpop.permute.xlu0 %2161
        %v2164 = vadd.f32 %v2154, %v2162
        %v2165 = vtanh.pop %v2164
        %2167 = vrot.lane.b32.xlu0 %v2165, 64
        %v2168 = vpop.permute.xlu0 %2167
        %v2170 = vmul.f32 %v2153, %v2168
        %s2171 = scalar_lea.vmem %s239, 120
        %v2172 = vld [vmem:[%s2171] sm:$0xff]
        %vm2173 = vcmp.gt.f32.partialorder %v2172, 0.5
        %v2174 = vsel %vm2173, 1, 0
        %2175 = vset.pattern.permute.xlu0 0
        %2176 = vperm.xlu0 %2175, %v2174
        %v2177 = vpop.permute.xlu0 %2176
        %vm2178 = vcmp.eq.s32.totalorder %v2177, 1
        %v2179 = vsel %vm2178, %v2170, %v2059
        %v2180 = vsel %vm2178, %v2164, %v2060
        %v2181 = vsel %vm2178, %v2170, 0.0
        %2183 = vrot.lane.b32.xlu0 %v2181, 32
        %v2184 = vpop.permute.xlu0 %2183
        %s2186 = scalar_lea.vmem %s245, 120
        %2187 = vst.msk [vmem:[%s2186] sm:$0xff] %vm266, %v2184
        %s2188 = scalar_lea.vmem %s233, 128
        %v2189 = vld [vmem:[%s2188] sm:$0xff]
        %2191 = vrot.lane.b32.xlu0 %v2179, 32
        %v2192 = vpop.permute.xlu0 %2191
        %v2193 = vsel %vm266, %v2192, 0
        %2195 = vmatprep.subr.mxu0 0.0
        %2196 = vmatpush1.msra.mxu0 %v254
        %2197 = vmatprep.subr.mxu0 0.0
        %2198 = vmatpush1.msra.mxu0 %v255
        %2199 = vmatprep.subr.mxu0 0.0
        %2200 = vmatpush1.msra.mxu0 %v256
        %2201 = vmatprep.subr.mxu0 0.0
        %2202 = vmatpush1.msra.mxu0 %v257
        %2203 = vmatprep.subr.mxu0 0.0
        %2204 = vmatpush1.msra.mxu0 0.0
        %2205 = vmatprep.subr.mxu0 0.0
        %2206 = vmatpush1.msra.mxu0 0.0
        %2207 = vmatprep.subr.mxu0 0.0
        %2208 = vmatpush1.msra.mxu0 0.0
        %2209 = vmatprep.subr.mxu0 0.0
        %2210 = vmatpush1.msra.mxu0 0.0
        %2211 = vmatprep.subr.mxu0 0.0
        %2212 = vmatpush1.msra.mxu0 0.0
        %2213 = vmatprep.subr.mxu0 0.0
        %2214 = vmatpush1.msra.mxu0 0.0
        %2215 = vmatprep.subr.mxu0 0.0
        %2216 = vmatpush1.msra.mxu0 0.0
        %2217 = vmatprep.subr.mxu0 0.0
        %2218 = vmatpush1.msra.mxu0 0.0
        %2219 = vmatprep.subr.mxu0 0.0
        %2220 = vmatpush1.msra.mxu0 0.0
        %2221 = vmatprep.subr.mxu0 0.0
        %2222 = vmatpush1.msra.mxu0 0.0
        %2223 = vmatprep.subr.mxu0 0.0
        %2224 = vmatpush1.msra.mxu0 0.0
        %2225 = vmatprep.subr.mxu0 0.0
        %2226 = vmatpush1.msra.mxu0 0.0
        %2227 = vmatprep.subr.mxu0 0.0
        %2228 = vmatpush1.msra.mxu0 0.0
        %2229 = vmatprep.subr.mxu0 0.0
        %2230 = vmatpush1.msra.mxu0 0.0
        %2231 = vmatprep.subr.mxu0 0.0
        %2232 = vmatpush1.msra.mxu0 0.0
        %2233 = vmatprep.subr.mxu0 0.0
        %2234 = vmatpush1.msra.mxu0 0.0
        %2235 = vmatprep.subr.mxu0 0.0
        %2236 = vmatpush1.msra.mxu0 0.0
        %2237 = vmatprep.subr.mxu0 0.0
        %2238 = vmatpush1.msra.mxu0 0.0
        %2239 = vmatprep.subr.mxu0 0.0
        %2240 = vmatpush1.msra.mxu0 0.0
        %2241 = vmatprep.subr.mxu0 0.0
        %2242 = vmatpush1.msra.mxu0 0.0
        %2243 = vmatprep.subr.mxu0 0.0
        %2244 = vmatpush1.msra.mxu0 0.0
        %2245 = vmatprep.subr.mxu0 0.0
        %2246 = vmatpush1.msra.mxu0 0.0
        %2247 = vmatprep.subr.mxu0 0.0
        %2248 = vmatpush1.msra.mxu0 0.0
        %2249 = vmatprep.subr.mxu0 0.0
        %2250 = vmatpush1.msra.mxu0 0.0
        %2251 = vmatprep.subr.mxu0 0.0
        %2252 = vmatpush1.msra.mxu0 0.0
        %2253 = vmatprep.subr.mxu0 0.0
        %2254 = vmatpush1.msra.mxu0 0.0
        %2255 = vmatprep.subr.mxu0 0.0
        %2256 = vmatpush1.msra.mxu0 0.0
        %2257 = vmatprep.subr.mxu0 0.0
        %2258 = vmatpush1.msra.mxu0 0.0
        %2259 = vmatprep.mubr.f32.mxu0 0.0
        %2260 = vmatmul.mubr.f32.gmra.mrb[0].mxu0 %v2193
        %v2261 = vpop.f32.mrb[0].mxu0
        %v2262 = vadd.f32 0.0, %v2261
        %v2263 = vpop.f32.mrb[0].mxu0
        %2264 = vdwg.mxu0
        %v2265 = vadd.f32 %v2189, %v2262
        %v2266 = vtanh.pop %v2265
        %v2267 = vxor.u32 %v2265, 2147483648
        %v2268 = vmul.f32 %v2267, 1.442695
        %v2269 = vpow.pop %v2268
        %v2270 = vadd.f32 %v2269, 1.0
        %v2271 = vrcp.pop %v2270
        %v2272 = vmul.f32 1.0, %v2271
        %v2273 = vsel %vm262, %v2266, %v2272
        %v2274 = vmul.f32 %v2273, %v2180
        %2276 = vrot.lane.b32.xlu0 %v2273, 64
        %v2277 = vpop.permute.xlu0 %2276
        %v2279 = vmul.f32 %v2273, %v2277
        %2281 = vrot.lane.b32.xlu0 %v2279, 32
        %v2282 = vpop.permute.xlu0 %2281
        %v2284 = vadd.f32 %v2274, %v2282
        %v2285 = vtanh.pop %v2284
        %2287 = vrot.lane.b32.xlu0 %v2285, 64
        %v2288 = vpop.permute.xlu0 %2287
        %v2290 = vmul.f32 %v2273, %v2288
        %s2291 = scalar_lea.vmem %s239, 128
        %v2292 = vld [vmem:[%s2291] sm:$0xff]
        %vm2293 = vcmp.gt.f32.partialorder %v2292, 0.5
        %v2294 = vsel %vm2293, 1, 0
        %2295 = vset.pattern.permute.xlu0 0
        %2296 = vperm.xlu0 %2295, %v2294
        %v2297 = vpop.permute.xlu0 %2296
        %vm2298 = vcmp.eq.s32.totalorder %v2297, 1
        %v2299 = vsel %vm2298, %v2290, %v2179
        %v2300 = vsel %vm2298, %v2284, %v2180
        %v2301 = vsel %vm2298, %v2290, 0.0
        %2303 = vrot.lane.b32.xlu0 %v2301, 32
        %v2304 = vpop.permute.xlu0 %2303
        %s2306 = scalar_lea.vmem %s245, 128
        %2307 = vst.msk [vmem:[%s2306] sm:$0xff] %vm266, %v2304
        %s2308 = scalar_lea.vmem %s233, 136
        %v2309 = vld [vmem:[%s2308] sm:$0xff]
        %2311 = vrot.lane.b32.xlu0 %v2299, 32
        %v2312 = vpop.permute.xlu0 %2311
        %v2313 = vsel %vm266, %v2312, 0
        %2315 = vmatprep.subr.mxu0 0.0
        %2316 = vmatpush1.msra.mxu0 %v254
        %2317 = vmatprep.subr.mxu0 0.0
        %2318 = vmatpush1.msra.mxu0 %v255
        %2319 = vmatprep.subr.mxu0 0.0
        %2320 = vmatpush1.msra.mxu0 %v256
        %2321 = vmatprep.subr.mxu0 0.0
        %2322 = vmatpush1.msra.mxu0 %v257
        %2323 = vmatprep.subr.mxu0 0.0
        %2324 = vmatpush1.msra.mxu0 0.0
        %2325 = vmatprep.subr.mxu0 0.0
        %2326 = vmatpush1.msra.mxu0 0.0
        %2327 = vmatprep.subr.mxu0 0.0
        %2328 = vmatpush1.msra.mxu0 0.0
        %2329 = vmatprep.subr.mxu0 0.0
        %2330 = vmatpush1.msra.mxu0 0.0
        %2331 = vmatprep.subr.mxu0 0.0
        %2332 = vmatpush1.msra.mxu0 0.0
        %2333 = vmatprep.subr.mxu0 0.0
        %2334 = vmatpush1.msra.mxu0 0.0
        %2335 = vmatprep.subr.mxu0 0.0
        %2336 = vmatpush1.msra.mxu0 0.0
        %2337 = vmatprep.subr.mxu0 0.0
        %2338 = vmatpush1.msra.mxu0 0.0
        %2339 = vmatprep.subr.mxu0 0.0
        %2340 = vmatpush1.msra.mxu0 0.0
        %2341 = vmatprep.subr.mxu0 0.0
        %2342 = vmatpush1.msra.mxu0 0.0
        %2343 = vmatprep.subr.mxu0 0.0
        %2344 = vmatpush1.msra.mxu0 0.0
        %2345 = vmatprep.subr.mxu0 0.0
        %2346 = vmatpush1.msra.mxu0 0.0
        %2347 = vmatprep.subr.mxu0 0.0
        %2348 = vmatpush1.msra.mxu0 0.0
        %2349 = vmatprep.subr.mxu0 0.0
        %2350 = vmatpush1.msra.mxu0 0.0
        %2351 = vmatprep.subr.mxu0 0.0
        %2352 = vmatpush1.msra.mxu0 0.0
        %2353 = vmatprep.subr.mxu0 0.0
        %2354 = vmatpush1.msra.mxu0 0.0
        %2355 = vmatprep.subr.mxu0 0.0
        %2356 = vmatpush1.msra.mxu0 0.0
        %2357 = vmatprep.subr.mxu0 0.0
        %2358 = vmatpush1.msra.mxu0 0.0
        %2359 = vmatprep.subr.mxu0 0.0
        %2360 = vmatpush1.msra.mxu0 0.0
        %2361 = vmatprep.subr.mxu0 0.0
        %2362 = vmatpush1.msra.mxu0 0.0
        %2363 = vmatprep.subr.mxu0 0.0
        %2364 = vmatpush1.msra.mxu0 0.0
        %2365 = vmatprep.subr.mxu0 0.0
        %2366 = vmatpush1.msra.mxu0 0.0
        %2367 = vmatprep.subr.mxu0 0.0
        %2368 = vmatpush1.msra.mxu0 0.0
        %2369 = vmatprep.subr.mxu0 0.0
        %2370 = vmatpush1.msra.mxu0 0.0
        %2371 = vmatprep.subr.mxu0 0.0
        %2372 = vmatpush1.msra.mxu0 0.0
        %2373 = vmatprep.subr.mxu0 0.0
        %2374 = vmatpush1.msra.mxu0 0.0
        %2375 = vmatprep.subr.mxu0 0.0
        %2376 = vmatpush1.msra.mxu0 0.0
        %2377 = vmatprep.subr.mxu0 0.0
        %2378 = vmatpush1.msra.mxu0 0.0
        %2379 = vmatprep.mubr.f32.mxu0 0.0
        %2380 = vmatmul.mubr.f32.gmra.mrb[0].mxu0 %v2313
        %v2381 = vpop.f32.mrb[0].mxu0
        %v2382 = vadd.f32 0.0, %v2381
        %v2383 = vpop.f32.mrb[0].mxu0
        %2384 = vdwg.mxu0
        %v2385 = vadd.f32 %v2309, %v2382
        %v2386 = vtanh.pop %v2385
        %v2387 = vxor.u32 %v2385, 2147483648
        %v2388 = vmul.f32 %v2387, 1.442695
        %v2389 = vpow.pop %v2388
        %v2390 = vadd.f32 %v2389, 1.0
        %v2391 = vrcp.pop %v2390
        %v2392 = vmul.f32 1.0, %v2391
        %v2393 = vsel %vm262, %v2386, %v2392
        %v2394 = vmul.f32 %v2393, %v2300
        %2396 = vrot.lane.b32.xlu0 %v2393, 64
        %v2397 = vpop.permute.xlu0 %2396
        %v2399 = vmul.f32 %v2393, %v2397
        %2401 = vrot.lane.b32.xlu0 %v2399, 32
        %v2402 = vpop.permute.xlu0 %2401
        %v2404 = vadd.f32 %v2394, %v2402
        %v2405 = vtanh.pop %v2404
        %2407 = vrot.lane.b32.xlu0 %v2405, 64
        %v2408 = vpop.permute.xlu0 %2407
        %v2410 = vmul.f32 %v2393, %v2408
        %s2411 = scalar_lea.vmem %s239, 136
        %v2412 = vld [vmem:[%s2411] sm:$0xff]
        %vm2413 = vcmp.gt.f32.partialorder %v2412, 0.5
        %v2414 = vsel %vm2413, 1, 0
        %2415 = vset.pattern.permute.xlu0 0
        %2416 = vperm.xlu0 %2415, %v2414
        %v2417 = vpop.permute.xlu0 %2416
        %vm2418 = vcmp.eq.s32.totalorder %v2417, 1
        %v2419 = vsel %vm2418, %v2410, %v2299
        %v2420 = vsel %vm2418, %v2404, %v2300
        %v2421 = vsel %vm2418, %v2410, 0.0
        %2423 = vrot.lane.b32.xlu0 %v2421, 32
        %v2424 = vpop.permute.xlu0 %2423
        %s2426 = scalar_lea.vmem %s245, 136
        %2427 = vst.msk [vmem:[%s2426] sm:$0xff] %vm266, %v2424
        %s2428 = scalar_lea.vmem %s233, 144
        %v2429 = vld [vmem:[%s2428] sm:$0xff]
        %2431 = vrot.lane.b32.xlu0 %v2419, 32
        %v2432 = vpop.permute.xlu0 %2431
        %v2433 = vsel %vm266, %v2432, 0
        %2435 = vmatprep.subr.mxu0 0.0
        %2436 = vmatpush1.msra.mxu0 %v254
        %2437 = vmatprep.subr.mxu0 0.0
        %2438 = vmatpush1.msra.mxu0 %v255
        %2439 = vmatprep.subr.mxu0 0.0
        %2440 = vmatpush1.msra.mxu0 %v256
        %2441 = vmatprep.subr.mxu0 0.0
        %2442 = vmatpush1.msra.mxu0 %v257
        %2443 = vmatprep.subr.mxu0 0.0
        %2444 = vmatpush1.msra.mxu0 0.0
        %2445 = vmatprep.subr.mxu0 0.0
        %2446 = vmatpush1.msra.mxu0 0.0
        %2447 = vmatprep.subr.mxu0 0.0
        %2448 = vmatpush1.msra.mxu0 0.0
        %2449 = vmatprep.subr.mxu0 0.0
        %2450 = vmatpush1.msra.mxu0 0.0
        %2451 = vmatprep.subr.mxu0 0.0
        %2452 = vmatpush1.msra.mxu0 0.0
        %2453 = vmatprep.subr.mxu0 0.0
        %2454 = vmatpush1.msra.mxu0 0.0
        %2455 = vmatprep.subr.mxu0 0.0
        %2456 = vmatpush1.msra.mxu0 0.0
        %2457 = vmatprep.subr.mxu0 0.0
        %2458 = vmatpush1.msra.mxu0 0.0
        %2459 = vmatprep.subr.mxu0 0.0
        %2460 = vmatpush1.msra.mxu0 0.0
        %2461 = vmatprep.subr.mxu0 0.0
        %2462 = vmatpush1.msra.mxu0 0.0
        %2463 = vmatprep.subr.mxu0 0.0
        %2464 = vmatpush1.msra.mxu0 0.0
        %2465 = vmatprep.subr.mxu0 0.0
        %2466 = vmatpush1.msra.mxu0 0.0
        %2467 = vmatprep.subr.mxu0 0.0
        %2468 = vmatpush1.msra.mxu0 0.0
        %2469 = vmatprep.subr.mxu0 0.0
        %2470 = vmatpush1.msra.mxu0 0.0
        %2471 = vmatprep.subr.mxu0 0.0
        %2472 = vmatpush1.msra.mxu0 0.0
        %2473 = vmatprep.subr.mxu0 0.0
        %2474 = vmatpush1.msra.mxu0 0.0
        %2475 = vmatprep.subr.mxu0 0.0
        %2476 = vmatpush1.msra.mxu0 0.0
        %2477 = vmatprep.subr.mxu0 0.0
        %2478 = vmatpush1.msra.mxu0 0.0
        %2479 = vmatprep.subr.mxu0 0.0
        %2480 = vmatpush1.msra.mxu0 0.0
        %2481 = vmatprep.subr.mxu0 0.0
        %2482 = vmatpush1.msra.mxu0 0.0
        %2483 = vmatprep.subr.mxu0 0.0
        %2484 = vmatpush1.msra.mxu0 0.0
        %2485 = vmatprep.subr.mxu0 0.0
        %2486 = vmatpush1.msra.mxu0 0.0
        %2487 = vmatprep.subr.mxu0 0.0
        %2488 = vmatpush1.msra.mxu0 0.0
        %2489 = vmatprep.subr.mxu0 0.0
        %2490 = vmatpush1.msra.mxu0 0.0
        %2491 = vmatprep.subr.mxu0 0.0
        %2492 = vmatpush1.msra.mxu0 0.0
        %2493 = vmatprep.subr.mxu0 0.0
        %2494 = vmatpush1.msra.mxu0 0.0
        %2495 = vmatprep.subr.mxu0 0.0
        %2496 = vmatpush1.msra.mxu0 0.0
        %2497 = vmatprep.subr.mxu0 0.0
        %2498 = vmatpush1.msra.mxu0 0.0
        %2499 = vmatprep.mubr.f32.mxu0 0.0
        %2500 = vmatmul.mubr.f32.gmra.mrb[0].mxu0 %v2433
        %v2501 = vpop.f32.mrb[0].mxu0
        %v2502 = vadd.f32 0.0, %v2501
        %v2503 = vpop.f32.mrb[0].mxu0
        %2504 = vdwg.mxu0
        %v2505 = vadd.f32 %v2429, %v2502
        %v2506 = vtanh.pop %v2505
        %v2507 = vxor.u32 %v2505, 2147483648
        %v2508 = vmul.f32 %v2507, 1.442695
        %v2509 = vpow.pop %v2508
        %v2510 = vadd.f32 %v2509, 1.0
        %v2511 = vrcp.pop %v2510
        %v2512 = vmul.f32 1.0, %v2511
        %v2513 = vsel %vm262, %v2506, %v2512
        %v2514 = vmul.f32 %v2513, %v2420
        %2516 = vrot.lane.b32.xlu0 %v2513, 64
        %v2517 = vpop.permute.xlu0 %2516
        %v2519 = vmul.f32 %v2513, %v2517
        %2521 = vrot.lane.b32.xlu0 %v2519, 32
        %v2522 = vpop.permute.xlu0 %2521
        %v2524 = vadd.f32 %v2514, %v2522
        %v2525 = vtanh.pop %v2524
        %2527 = vrot.lane.b32.xlu0 %v2525, 64
        %v2528 = vpop.permute.xlu0 %2527
        %v2530 = vmul.f32 %v2513, %v2528
        %s2531 = scalar_lea.vmem %s239, 144
        %v2532 = vld [vmem:[%s2531] sm:$0xff]
        %vm2533 = vcmp.gt.f32.partialorder %v2532, 0.5
        %v2534 = vsel %vm2533, 1, 0
        %2535 = vset.pattern.permute.xlu0 0
        %2536 = vperm.xlu0 %2535, %v2534
        %v2537 = vpop.permute.xlu0 %2536
        %vm2538 = vcmp.eq.s32.totalorder %v2537, 1
        %v2539 = vsel %vm2538, %v2530, %v2419
        %v2540 = vsel %vm2538, %v2524, %v2420
        %v2541 = vsel %vm2538, %v2530, 0.0
        %2543 = vrot.lane.b32.xlu0 %v2541, 32
        %v2544 = vpop.permute.xlu0 %2543
        %s2546 = scalar_lea.vmem %s245, 144
        %2547 = vst.msk [vmem:[%s2546] sm:$0xff] %vm266, %v2544
        %s2548 = scalar_lea.vmem %s233, 152
        %v2549 = vld [vmem:[%s2548] sm:$0xff]
        %2551 = vrot.lane.b32.xlu0 %v2539, 32
        %v2552 = vpop.permute.xlu0 %2551
        %v2553 = vsel %vm266, %v2552, 0
        %2555 = vmatprep.subr.mxu0 0.0
        %2556 = vmatpush1.msra.mxu0 %v254
        %2557 = vmatprep.subr.mxu0 0.0
        %2558 = vmatpush1.msra.mxu0 %v255
        %2559 = vmatprep.subr.mxu0 0.0
        %2560 = vmatpush1.msra.mxu0 %v256
        %2561 = vmatprep.subr.mxu0 0.0
        %2562 = vmatpush1.msra.mxu0 %v257
        %2563 = vmatprep.subr.mxu0 0.0
        %2564 = vmatpush1.msra.mxu0 0.0
        %2565 = vmatprep.subr.mxu0 0.0
        %2566 = vmatpush1.msra.mxu0 0.0
        %2567 = vmatprep.subr.mxu0 0.0
        %2568 = vmatpush1.msra.mxu0 0.0
        %2569 = vmatprep.subr.mxu0 0.0
        %2570 = vmatpush1.msra.mxu0 0.0
        %2571 = vmatprep.subr.mxu0 0.0
        %2572 = vmatpush1.msra.mxu0 0.0
        %2573 = vmatprep.subr.mxu0 0.0
        %2574 = vmatpush1.msra.mxu0 0.0
        %2575 = vmatprep.subr.mxu0 0.0
        %2576 = vmatpush1.msra.mxu0 0.0
        %2577 = vmatprep.subr.mxu0 0.0
        %2578 = vmatpush1.msra.mxu0 0.0
        %2579 = vmatprep.subr.mxu0 0.0
        %2580 = vmatpush1.msra.mxu0 0.0
        %2581 = vmatprep.subr.mxu0 0.0
        %2582 = vmatpush1.msra.mxu0 0.0
        %2583 = vmatprep.subr.mxu0 0.0
        %2584 = vmatpush1.msra.mxu0 0.0
        %2585 = vmatprep.subr.mxu0 0.0
        %2586 = vmatpush1.msra.mxu0 0.0
        %2587 = vmatprep.subr.mxu0 0.0
        %2588 = vmatpush1.msra.mxu0 0.0
        %2589 = vmatprep.subr.mxu0 0.0
        %2590 = vmatpush1.msra.mxu0 0.0
        %2591 = vmatprep.subr.mxu0 0.0
        %2592 = vmatpush1.msra.mxu0 0.0
        %2593 = vmatprep.subr.mxu0 0.0
        %2594 = vmatpush1.msra.mxu0 0.0
        %2595 = vmatprep.subr.mxu0 0.0
        %2596 = vmatpush1.msra.mxu0 0.0
        %2597 = vmatprep.subr.mxu0 0.0
        %2598 = vmatpush1.msra.mxu0 0.0
        %2599 = vmatprep.subr.mxu0 0.0
        %2600 = vmatpush1.msra.mxu0 0.0
        %2601 = vmatprep.subr.mxu0 0.0
        %2602 = vmatpush1.msra.mxu0 0.0
        %2603 = vmatprep.subr.mxu0 0.0
        %2604 = vmatpush1.msra.mxu0 0.0
        %2605 = vmatprep.subr.mxu0 0.0
        %2606 = vmatpush1.msra.mxu0 0.0
        %2607 = vmatprep.subr.mxu0 0.0
        %2608 = vmatpush1.msra.mxu0 0.0
        %2609 = vmatprep.subr.mxu0 0.0
        %2610 = vmatpush1.msra.mxu0 0.0
        %2611 = vmatprep.subr.mxu0 0.0
        %2612 = vmatpush1.msra.mxu0 0.0
        %2613 = vmatprep.subr.mxu0 0.0
        %2614 = vmatpush1.msra.mxu0 0.0
        %2615 = vmatprep.subr.mxu0 0.0
        %2616 = vmatpush1.msra.mxu0 0.0
        %2617 = vmatprep.subr.mxu0 0.0
        %2618 = vmatpush1.msra.mxu0 0.0
        %2619 = vmatprep.mubr.f32.mxu0 0.0
        %2620 = vmatmul.mubr.f32.gmra.mrb[0].mxu0 %v2553
        %v2621 = vpop.f32.mrb[0].mxu0
        %v2622 = vadd.f32 0.0, %v2621
        %v2623 = vpop.f32.mrb[0].mxu0
        %2624 = vdwg.mxu0
        %v2625 = vadd.f32 %v2549, %v2622
        %v2626 = vtanh.pop %v2625
        %v2627 = vxor.u32 %v2625, 2147483648
        %v2628 = vmul.f32 %v2627, 1.442695
        %v2629 = vpow.pop %v2628
        %v2630 = vadd.f32 %v2629, 1.0
        %v2631 = vrcp.pop %v2630
        %v2632 = vmul.f32 1.0, %v2631
        %v2633 = vsel %vm262, %v2626, %v2632
        %v2634 = vmul.f32 %v2633, %v2540
        %2636 = vrot.lane.b32.xlu0 %v2633, 64
        %v2637 = vpop.permute.xlu0 %2636
        %v2639 = vmul.f32 %v2633, %v2637
        %2641 = vrot.lane.b32.xlu0 %v2639, 32
        %v2642 = vpop.permute.xlu0 %2641
        %v2644 = vadd.f32 %v2634, %v2642
        %v2645 = vtanh.pop %v2644
        %2647 = vrot.lane.b32.xlu0 %v2645, 64
        %v2648 = vpop.permute.xlu0 %2647
        %v2650 = vmul.f32 %v2633, %v2648
        %s2651 = scalar_lea.vmem %s239, 152
        %v2652 = vld [vmem:[%s2651] sm:$0xff]
        %vm2653 = vcmp.gt.f32.partialorder %v2652, 0.5
        %v2654 = vsel %vm2653, 1, 0
        %2655 = vset.pattern.permute.xlu0 0
        %2656 = vperm.xlu0 %2655, %v2654
        %v2657 = vpop.permute.xlu0 %2656
        %vm2658 = vcmp.eq.s32.totalorder %v2657, 1
        %v2659 = vsel %vm2658, %v2650, %v2539
        %v2660 = vsel %vm2658, %v2644, %v2540
        %v2661 = vsel %vm2658, %v2650, 0.0
        %2663 = vrot.lane.b32.xlu0 %v2661, 32
        %v2664 = vpop.permute.xlu0 %2663
        %s2666 = scalar_lea.vmem %s245, 152
        %2667 = vst.msk [vmem:[%s2666] sm:$0xff] %vm266, %v2664
        %s2668 = scalar_lea.vmem %s233, 160
        %v2669 = vld [vmem:[%s2668] sm:$0xff]
        %2671 = vrot.lane.b32.xlu0 %v2659, 32
        %v2672 = vpop.permute.xlu0 %2671
        %v2673 = vsel %vm266, %v2672, 0
        %2675 = vmatprep.subr.mxu0 0.0
        %2676 = vmatpush1.msra.mxu0 %v254
        %2677 = vmatprep.subr.mxu0 0.0
        %2678 = vmatpush1.msra.mxu0 %v255
        %2679 = vmatprep.subr.mxu0 0.0
        %2680 = vmatpush1.msra.mxu0 %v256
        %2681 = vmatprep.subr.mxu0 0.0
        %2682 = vmatpush1.msra.mxu0 %v257
        %2683 = vmatprep.subr.mxu0 0.0
        %2684 = vmatpush1.msra.mxu0 0.0
        %2685 = vmatprep.subr.mxu0 0.0
        %2686 = vmatpush1.msra.mxu0 0.0
        %2687 = vmatprep.subr.mxu0 0.0
        %2688 = vmatpush1.msra.mxu0 0.0
        %2689 = vmatprep.subr.mxu0 0.0
        %2690 = vmatpush1.msra.mxu0 0.0
        %2691 = vmatprep.subr.mxu0 0.0
        %2692 = vmatpush1.msra.mxu0 0.0
        %2693 = vmatprep.subr.mxu0 0.0
        %2694 = vmatpush1.msra.mxu0 0.0
        %2695 = vmatprep.subr.mxu0 0.0
        %2696 = vmatpush1.msra.mxu0 0.0
        %2697 = vmatprep.subr.mxu0 0.0
        %2698 = vmatpush1.msra.mxu0 0.0
        %2699 = vmatprep.subr.mxu0 0.0
        %2700 = vmatpush1.msra.mxu0 0.0
        %2701 = vmatprep.subr.mxu0 0.0
        %2702 = vmatpush1.msra.mxu0 0.0
        %2703 = vmatprep.subr.mxu0 0.0
        %2704 = vmatpush1.msra.mxu0 0.0
        %2705 = vmatprep.subr.mxu0 0.0
        %2706 = vmatpush1.msra.mxu0 0.0
        %2707 = vmatprep.subr.mxu0 0.0
        %2708 = vmatpush1.msra.mxu0 0.0
        %2709 = vmatprep.subr.mxu0 0.0
        %2710 = vmatpush1.msra.mxu0 0.0
        %2711 = vmatprep.subr.mxu0 0.0
        %2712 = vmatpush1.msra.mxu0 0.0
        %2713 = vmatprep.subr.mxu0 0.0
        %2714 = vmatpush1.msra.mxu0 0.0
        %2715 = vmatprep.subr.mxu0 0.0
        %2716 = vmatpush1.msra.mxu0 0.0
        %2717 = vmatprep.subr.mxu0 0.0
        %2718 = vmatpush1.msra.mxu0 0.0
        %2719 = vmatprep.subr.mxu0 0.0
        %2720 = vmatpush1.msra.mxu0 0.0
        %2721 = vmatprep.subr.mxu0 0.0
        %2722 = vmatpush1.msra.mxu0 0.0
        %2723 = vmatprep.subr.mxu0 0.0
        %2724 = vmatpush1.msra.mxu0 0.0
        %2725 = vmatprep.subr.mxu0 0.0
        %2726 = vmatpush1.msra.mxu0 0.0
        %2727 = vmatprep.subr.mxu0 0.0
        %2728 = vmatpush1.msra.mxu0 0.0
        %2729 = vmatprep.subr.mxu0 0.0
        %2730 = vmatpush1.msra.mxu0 0.0
        %2731 = vmatprep.subr.mxu0 0.0
        %2732 = vmatpush1.msra.mxu0 0.0
        %2733 = vmatprep.subr.mxu0 0.0
        %2734 = vmatpush1.msra.mxu0 0.0
        %2735 = vmatprep.subr.mxu0 0.0
        %2736 = vmatpush1.msra.mxu0 0.0
        %2737 = vmatprep.subr.mxu0 0.0
        %2738 = vmatpush1.msra.mxu0 0.0
        %2739 = vmatprep.mubr.f32.mxu0 0.0
        %2740 = vmatmul.mubr.f32.gmra.mrb[0].mxu0 %v2673
        %v2741 = vpop.f32.mrb[0].mxu0
        %v2742 = vadd.f32 0.0, %v2741
        %v2743 = vpop.f32.mrb[0].mxu0
        %2744 = vdwg.mxu0
        %v2745 = vadd.f32 %v2669, %v2742
        %v2746 = vtanh.pop %v2745
        %v2747 = vxor.u32 %v2745, 2147483648
        %v2748 = vmul.f32 %v2747, 1.442695
        %v2749 = vpow.pop %v2748
        %v2750 = vadd.f32 %v2749, 1.0
        %v2751 = vrcp.pop %v2750
        %v2752 = vmul.f32 1.0, %v2751
        %v2753 = vsel %vm262, %v2746, %v2752
        %v2754 = vmul.f32 %v2753, %v2660
        %2756 = vrot.lane.b32.xlu0 %v2753, 64
        %v2757 = vpop.permute.xlu0 %2756
        %v2759 = vmul.f32 %v2753, %v2757
        %2761 = vrot.lane.b32.xlu0 %v2759, 32
        %v2762 = vpop.permute.xlu0 %2761
        %v2764 = vadd.f32 %v2754, %v2762
        %v2765 = vtanh.pop %v2764
        %2767 = vrot.lane.b32.xlu0 %v2765, 64
        %v2768 = vpop.permute.xlu0 %2767
        %v2770 = vmul.f32 %v2753, %v2768
        %s2771 = scalar_lea.vmem %s239, 160
        %v2772 = vld [vmem:[%s2771] sm:$0xff]
        %vm2773 = vcmp.gt.f32.partialorder %v2772, 0.5
        %v2774 = vsel %vm2773, 1, 0
        %2775 = vset.pattern.permute.xlu0 0
        %2776 = vperm.xlu0 %2775, %v2774
        %v2777 = vpop.permute.xlu0 %2776
        %vm2778 = vcmp.eq.s32.totalorder %v2777, 1
        %v2779 = vsel %vm2778, %v2770, %v2659
        %v2780 = vsel %vm2778, %v2764, %v2660
        %v2781 = vsel %vm2778, %v2770, 0.0
        %2783 = vrot.lane.b32.xlu0 %v2781, 32
        %v2784 = vpop.permute.xlu0 %2783
        %s2786 = scalar_lea.vmem %s245, 160
        %2787 = vst.msk [vmem:[%s2786] sm:$0xff] %vm266, %v2784
        %s2788 = scalar_lea.vmem %s233, 168
        %v2789 = vld [vmem:[%s2788] sm:$0xff]
        %2791 = vrot.lane.b32.xlu0 %v2779, 32
        %v2792 = vpop.permute.xlu0 %2791
        %v2793 = vsel %vm266, %v2792, 0
        %2795 = vmatprep.subr.mxu0 0.0
        %2796 = vmatpush1.msra.mxu0 %v254
        %2797 = vmatprep.subr.mxu0 0.0
        %2798 = vmatpush1.msra.mxu0 %v255
        %2799 = vmatprep.subr.mxu0 0.0
        %2800 = vmatpush1.msra.mxu0 %v256
        %2801 = vmatprep.subr.mxu0 0.0
        %2802 = vmatpush1.msra.mxu0 %v257
        %2803 = vmatprep.subr.mxu0 0.0
        %2804 = vmatpush1.msra.mxu0 0.0
        %2805 = vmatprep.subr.mxu0 0.0
        %2806 = vmatpush1.msra.mxu0 0.0
        %2807 = vmatprep.subr.mxu0 0.0
        %2808 = vmatpush1.msra.mxu0 0.0
        %2809 = vmatprep.subr.mxu0 0.0
        %2810 = vmatpush1.msra.mxu0 0.0
        %2811 = vmatprep.subr.mxu0 0.0
        %2812 = vmatpush1.msra.mxu0 0.0
        %2813 = vmatprep.subr.mxu0 0.0
        %2814 = vmatpush1.msra.mxu0 0.0
        %2815 = vmatprep.subr.mxu0 0.0
        %2816 = vmatpush1.msra.mxu0 0.0
        %2817 = vmatprep.subr.mxu0 0.0
        %2818 = vmatpush1.msra.mxu0 0.0
        %2819 = vmatprep.subr.mxu0 0.0
        %2820 = vmatpush1.msra.mxu0 0.0
        %2821 = vmatprep.subr.mxu0 0.0
        %2822 = vmatpush1.msra.mxu0 0.0
        %2823 = vmatprep.subr.mxu0 0.0
        %2824 = vmatpush1.msra.mxu0 0.0
        %2825 = vmatprep.subr.mxu0 0.0
        %2826 = vmatpush1.msra.mxu0 0.0
        %2827 = vmatprep.subr.mxu0 0.0
        %2828 = vmatpush1.msra.mxu0 0.0
        %2829 = vmatprep.subr.mxu0 0.0
        %2830 = vmatpush1.msra.mxu0 0.0
        %2831 = vmatprep.subr.mxu0 0.0
        %2832 = vmatpush1.msra.mxu0 0.0
        %2833 = vmatprep.subr.mxu0 0.0
        %2834 = vmatpush1.msra.mxu0 0.0
        %2835 = vmatprep.subr.mxu0 0.0
        %2836 = vmatpush1.msra.mxu0 0.0
        %2837 = vmatprep.subr.mxu0 0.0
        %2838 = vmatpush1.msra.mxu0 0.0
        %2839 = vmatprep.subr.mxu0 0.0
        %2840 = vmatpush1.msra.mxu0 0.0
        %2841 = vmatprep.subr.mxu0 0.0
        %2842 = vmatpush1.msra.mxu0 0.0
        %2843 = vmatprep.subr.mxu0 0.0
        %2844 = vmatpush1.msra.mxu0 0.0
        %2845 = vmatprep.subr.mxu0 0.0
        %2846 = vmatpush1.msra.mxu0 0.0
        %2847 = vmatprep.subr.mxu0 0.0
        %2848 = vmatpush1.msra.mxu0 0.0
        %2849 = vmatprep.subr.mxu0 0.0
        %2850 = vmatpush1.msra.mxu0 0.0
        %2851 = vmatprep.subr.mxu0 0.0
        %2852 = vmatpush1.msra.mxu0 0.0
        %2853 = vmatprep.subr.mxu0 0.0
        %2854 = vmatpush1.msra.mxu0 0.0
        %2855 = vmatprep.subr.mxu0 0.0
        %2856 = vmatpush1.msra.mxu0 0.0
        %2857 = vmatprep.subr.mxu0 0.0
        %2858 = vmatpush1.msra.mxu0 0.0
        %2859 = vmatprep.mubr.f32.mxu0 0.0
        %2860 = vmatmul.mubr.f32.gmra.mrb[0].mxu0 %v2793
        %v2861 = vpop.f32.mrb[0].mxu0
        %v2862 = vadd.f32 0.0, %v2861
        %v2863 = vpop.f32.mrb[0].mxu0
        %2864 = vdwg.mxu0
        %v2865 = vadd.f32 %v2789, %v2862
        %v2866 = vtanh.pop %v2865
        %v2867 = vxor.u32 %v2865, 2147483648
        %v2868 = vmul.f32 %v2867, 1.442695
        %v2869 = vpow.pop %v2868
        %v2870 = vadd.f32 %v2869, 1.0
        %v2871 = vrcp.pop %v2870
        %v2872 = vmul.f32 1.0, %v2871
        %v2873 = vsel %vm262, %v2866, %v2872
        %v2874 = vmul.f32 %v2873, %v2780
        %2876 = vrot.lane.b32.xlu0 %v2873, 64
        %v2877 = vpop.permute.xlu0 %2876
        %v2879 = vmul.f32 %v2873, %v2877
        %2881 = vrot.lane.b32.xlu0 %v2879, 32
        %v2882 = vpop.permute.xlu0 %2881
        %v2884 = vadd.f32 %v2874, %v2882
        %v2885 = vtanh.pop %v2884
        %2887 = vrot.lane.b32.xlu0 %v2885, 64
        %v2888 = vpop.permute.xlu0 %2887
        %v2890 = vmul.f32 %v2873, %v2888
        %s2891 = scalar_lea.vmem %s239, 168
        %v2892 = vld [vmem:[%s2891] sm:$0xff]
        %vm2893 = vcmp.gt.f32.partialorder %v2892, 0.5
        %v2894 = vsel %vm2893, 1, 0
        %2895 = vset.pattern.permute.xlu0 0
        %2896 = vperm.xlu0 %2895, %v2894
        %v2897 = vpop.permute.xlu0 %2896
        %vm2898 = vcmp.eq.s32.totalorder %v2897, 1
        %v2899 = vsel %vm2898, %v2890, %v2779
        %v2900 = vsel %vm2898, %v2884, %v2780
        %v2901 = vsel %vm2898, %v2890, 0.0
        %2903 = vrot.lane.b32.xlu0 %v2901, 32
        %v2904 = vpop.permute.xlu0 %2903
        %s2906 = scalar_lea.vmem %s245, 168
        %2907 = vst.msk [vmem:[%s2906] sm:$0xff] %vm266, %v2904
        %s2908 = scalar_lea.vmem %s233, 176
        %v2909 = vld [vmem:[%s2908] sm:$0xff]
        %2911 = vrot.lane.b32.xlu0 %v2899, 32
        %v2912 = vpop.permute.xlu0 %2911
        %v2913 = vsel %vm266, %v2912, 0
        %2915 = vmatprep.subr.mxu0 0.0
        %2916 = vmatpush1.msra.mxu0 %v254
        %2917 = vmatprep.subr.mxu0 0.0
        %2918 = vmatpush1.msra.mxu0 %v255
        %2919 = vmatprep.subr.mxu0 0.0
        %2920 = vmatpush1.msra.mxu0 %v256
        %2921 = vmatprep.subr.mxu0 0.0
        %2922 = vmatpush1.msra.mxu0 %v257
        %2923 = vmatprep.subr.mxu0 0.0
        %2924 = vmatpush1.msra.mxu0 0.0
        %2925 = vmatprep.subr.mxu0 0.0
        %2926 = vmatpush1.msra.mxu0 0.0
        %2927 = vmatprep.subr.mxu0 0.0
        %2928 = vmatpush1.msra.mxu0 0.0
        %2929 = vmatprep.subr.mxu0 0.0
        %2930 = vmatpush1.msra.mxu0 0.0
        %2931 = vmatprep.subr.mxu0 0.0
        %2932 = vmatpush1.msra.mxu0 0.0
        %2933 = vmatprep.subr.mxu0 0.0
        %2934 = vmatpush1.msra.mxu0 0.0
        %2935 = vmatprep.subr.mxu0 0.0
        %2936 = vmatpush1.msra.mxu0 0.0
        %2937 = vmatprep.subr.mxu0 0.0
        %2938 = vmatpush1.msra.mxu0 0.0
        %2939 = vmatprep.subr.mxu0 0.0
        %2940 = vmatpush1.msra.mxu0 0.0
        %2941 = vmatprep.subr.mxu0 0.0
        %2942 = vmatpush1.msra.mxu0 0.0
        %2943 = vmatprep.subr.mxu0 0.0
        %2944 = vmatpush1.msra.mxu0 0.0
        %2945 = vmatprep.subr.mxu0 0.0
        %2946 = vmatpush1.msra.mxu0 0.0
        %2947 = vmatprep.subr.mxu0 0.0
        %2948 = vmatpush1.msra.mxu0 0.0
        %2949 = vmatprep.subr.mxu0 0.0
        %2950 = vmatpush1.msra.mxu0 0.0
        %2951 = vmatprep.subr.mxu0 0.0
        %2952 = vmatpush1.msra.mxu0 0.0
        %2953 = vmatprep.subr.mxu0 0.0
        %2954 = vmatpush1.msra.mxu0 0.0
        %2955 = vmatprep.subr.mxu0 0.0
        %2956 = vmatpush1.msra.mxu0 0.0
        %2957 = vmatprep.subr.mxu0 0.0
        %2958 = vmatpush1.msra.mxu0 0.0
        %2959 = vmatprep.subr.mxu0 0.0
        %2960 = vmatpush1.msra.mxu0 0.0
        %2961 = vmatprep.subr.mxu0 0.0
        %2962 = vmatpush1.msra.mxu0 0.0
        %2963 = vmatprep.subr.mxu0 0.0
        %2964 = vmatpush1.msra.mxu0 0.0
        %2965 = vmatprep.subr.mxu0 0.0
        %2966 = vmatpush1.msra.mxu0 0.0
        %2967 = vmatprep.subr.mxu0 0.0
        %2968 = vmatpush1.msra.mxu0 0.0
        %2969 = vmatprep.subr.mxu0 0.0
        %2970 = vmatpush1.msra.mxu0 0.0
        %2971 = vmatprep.subr.mxu0 0.0
        %2972 = vmatpush1.msra.mxu0 0.0
        %2973 = vmatprep.subr.mxu0 0.0
        %2974 = vmatpush1.msra.mxu0 0.0
        %2975 = vmatprep.subr.mxu0 0.0
        %2976 = vmatpush1.msra.mxu0 0.0
        %2977 = vmatprep.subr.mxu0 0.0
        %2978 = vmatpush1.msra.mxu0 0.0
        %2979 = vmatprep.mubr.f32.mxu0 0.0
        %2980 = vmatmul.mubr.f32.gmra.mrb[0].mxu0 %v2913
        %v2981 = vpop.f32.mrb[0].mxu0
        %v2982 = vadd.f32 0.0, %v2981
        %v2983 = vpop.f32.mrb[0].mxu0
        %2984 = vdwg.mxu0
        %v2985 = vadd.f32 %v2909, %v2982
        %v2986 = vtanh.pop %v2985
        %v2987 = vxor.u32 %v2985, 2147483648
        %v2988 = vmul.f32 %v2987, 1.442695
        %v2989 = vpow.pop %v2988
        %v2990 = vadd.f32 %v2989, 1.0
        %v2991 = vrcp.pop %v2990
        %v2992 = vmul.f32 1.0, %v2991
        %v2993 = vsel %vm262, %v2986, %v2992
        %v2994 = vmul.f32 %v2993, %v2900
        %2996 = vrot.lane.b32.xlu0 %v2993, 64
        %v2997 = vpop.permute.xlu0 %2996
        %v2999 = vmul.f32 %v2993, %v2997
        %3001 = vrot.lane.b32.xlu0 %v2999, 32
        %v3002 = vpop.permute.xlu0 %3001
        %v3004 = vadd.f32 %v2994, %v3002
        %v3005 = vtanh.pop %v3004
        %3007 = vrot.lane.b32.xlu0 %v3005, 64
        %v3008 = vpop.permute.xlu0 %3007
        %v3010 = vmul.f32 %v2993, %v3008
        %s3011 = scalar_lea.vmem %s239, 176
        %v3012 = vld [vmem:[%s3011] sm:$0xff]
        %vm3013 = vcmp.gt.f32.partialorder %v3012, 0.5
        %v3014 = vsel %vm3013, 1, 0
        %3015 = vset.pattern.permute.xlu0 0
        %3016 = vperm.xlu0 %3015, %v3014
        %v3017 = vpop.permute.xlu0 %3016
        %vm3018 = vcmp.eq.s32.totalorder %v3017, 1
        %v3019 = vsel %vm3018, %v3010, %v2899
        %v3020 = vsel %vm3018, %v3004, %v2900
        %v3021 = vsel %vm3018, %v3010, 0.0
        %3023 = vrot.lane.b32.xlu0 %v3021, 32
        %v3024 = vpop.permute.xlu0 %3023
        %s3026 = scalar_lea.vmem %s245, 176
        %3027 = vst.msk [vmem:[%s3026] sm:$0xff] %vm266, %v3024
        %s3028 = scalar_lea.vmem %s233, 184
        %v3029 = vld [vmem:[%s3028] sm:$0xff]
        %3031 = vrot.lane.b32.xlu0 %v3019, 32
        %v3032 = vpop.permute.xlu0 %3031
        %v3033 = vsel %vm266, %v3032, 0
        %3035 = vmatprep.subr.mxu0 0.0
        %3036 = vmatpush1.msra.mxu0 %v254
        %3037 = vmatprep.subr.mxu0 0.0
        %3038 = vmatpush1.msra.mxu0 %v255
        %3039 = vmatprep.subr.mxu0 0.0
        %3040 = vmatpush1.msra.mxu0 %v256
        %3041 = vmatprep.subr.mxu0 0.0
        %3042 = vmatpush1.msra.mxu0 %v257
        %3043 = vmatprep.subr.mxu0 0.0
        %3044 = vmatpush1.msra.mxu0 0.0
        %3045 = vmatprep.subr.mxu0 0.0
        %3046 = vmatpush1.msra.mxu0 0.0
        %3047 = vmatprep.subr.mxu0 0.0
        %3048 = vmatpush1.msra.mxu0 0.0
        %3049 = vmatprep.subr.mxu0 0.0
        %3050 = vmatpush1.msra.mxu0 0.0
        %3051 = vmatprep.subr.mxu0 0.0
        %3052 = vmatpush1.msra.mxu0 0.0
        %3053 = vmatprep.subr.mxu0 0.0
        %3054 = vmatpush1.msra.mxu0 0.0
        %3055 = vmatprep.subr.mxu0 0.0
        %3056 = vmatpush1.msra.mxu0 0.0
        %3057 = vmatprep.subr.mxu0 0.0
        %3058 = vmatpush1.msra.mxu0 0.0
        %3059 = vmatprep.subr.mxu0 0.0
        %3060 = vmatpush1.msra.mxu0 0.0
        %3061 = vmatprep.subr.mxu0 0.0
        %3062 = vmatpush1.msra.mxu0 0.0
        %3063 = vmatprep.subr.mxu0 0.0
        %3064 = vmatpush1.msra.mxu0 0.0
        %3065 = vmatprep.subr.mxu0 0.0
        %3066 = vmatpush1.msra.mxu0 0.0
        %3067 = vmatprep.subr.mxu0 0.0
        %3068 = vmatpush1.msra.mxu0 0.0
        %3069 = vmatprep.subr.mxu0 0.0
        %3070 = vmatpush1.msra.mxu0 0.0
        %3071 = vmatprep.subr.mxu0 0.0
        %3072 = vmatpush1.msra.mxu0 0.0
        %3073 = vmatprep.subr.mxu0 0.0
        %3074 = vmatpush1.msra.mxu0 0.0
        %3075 = vmatprep.subr.mxu0 0.0
        %3076 = vmatpush1.msra.mxu0 0.0
        %3077 = vmatprep.subr.mxu0 0.0
        %3078 = vmatpush1.msra.mxu0 0.0
        %3079 = vmatprep.subr.mxu0 0.0
        %3080 = vmatpush1.msra.mxu0 0.0
        %3081 = vmatprep.subr.mxu0 0.0
        %3082 = vmatpush1.msra.mxu0 0.0
        %3083 = vmatprep.subr.mxu0 0.0
        %3084 = vmatpush1.msra.mxu0 0.0
        %3085 = vmatprep.subr.mxu0 0.0
        %3086 = vmatpush1.msra.mxu0 0.0
        %3087 = vmatprep.subr.mxu0 0.0
        %3088 = vmatpush1.msra.mxu0 0.0
        %3089 = vmatprep.subr.mxu0 0.0
        %3090 = vmatpush1.msra.mxu0 0.0
        %3091 = vmatprep.subr.mxu0 0.0
        %3092 = vmatpush1.msra.mxu0 0.0
        %3093 = vmatprep.subr.mxu0 0.0
        %3094 = vmatpush1.msra.mxu0 0.0
        %3095 = vmatprep.subr.mxu0 0.0
        %3096 = vmatpush1.msra.mxu0 0.0
        %3097 = vmatprep.subr.mxu0 0.0
        %3098 = vmatpush1.msra.mxu0 0.0
        %3099 = vmatprep.mubr.f32.mxu0 0.0
        %3100 = vmatmul.mubr.f32.gmra.mrb[0].mxu0 %v3033
        %v3101 = vpop.f32.mrb[0].mxu0
        %v3102 = vadd.f32 0.0, %v3101
        %v3103 = vpop.f32.mrb[0].mxu0
        %3104 = vdwg.mxu0
        %v3105 = vadd.f32 %v3029, %v3102
        %v3106 = vtanh.pop %v3105
        %v3107 = vxor.u32 %v3105, 2147483648
        %v3108 = vmul.f32 %v3107, 1.442695
        %v3109 = vpow.pop %v3108
        %v3110 = vadd.f32 %v3109, 1.0
        %v3111 = vrcp.pop %v3110
        %v3112 = vmul.f32 1.0, %v3111
        %v3113 = vsel %vm262, %v3106, %v3112
        %v3114 = vmul.f32 %v3113, %v3020
        %3116 = vrot.lane.b32.xlu0 %v3113, 64
        %v3117 = vpop.permute.xlu0 %3116
        %v3119 = vmul.f32 %v3113, %v3117
        %3121 = vrot.lane.b32.xlu0 %v3119, 32
        %v3122 = vpop.permute.xlu0 %3121
        %v3124 = vadd.f32 %v3114, %v3122
        %v3125 = vtanh.pop %v3124
        %3127 = vrot.lane.b32.xlu0 %v3125, 64
        %v3128 = vpop.permute.xlu0 %3127
        %v3130 = vmul.f32 %v3113, %v3128
        %s3131 = scalar_lea.vmem %s239, 184
        %v3132 = vld [vmem:[%s3131] sm:$0xff]
        %vm3133 = vcmp.gt.f32.partialorder %v3132, 0.5
        %v3134 = vsel %vm3133, 1, 0
        %3135 = vset.pattern.permute.xlu0 0
        %3136 = vperm.xlu0 %3135, %v3134
        %v3137 = vpop.permute.xlu0 %3136
        %vm3138 = vcmp.eq.s32.totalorder %v3137, 1
        %v3139 = vsel %vm3138, %v3130, %v3019
        %v3140 = vsel %vm3138, %v3124, %v3020
        %v3141 = vsel %vm3138, %v3130, 0.0
        %3143 = vrot.lane.b32.xlu0 %v3141, 32
        %v3144 = vpop.permute.xlu0 %3143
        %s3146 = scalar_lea.vmem %s245, 184
        %3147 = vst.msk [vmem:[%s3146] sm:$0xff] %vm266, %v3144
        %s3148 = scalar_lea.vmem %s233, 192
        %v3149 = vld [vmem:[%s3148] sm:$0xff]
        %3151 = vrot.lane.b32.xlu0 %v3139, 32
        %v3152 = vpop.permute.xlu0 %3151
        %v3153 = vsel %vm266, %v3152, 0
        %3155 = vmatprep.subr.mxu0 0.0
        %3156 = vmatpush1.msra.mxu0 %v254
        %3157 = vmatprep.subr.mxu0 0.0
        %3158 = vmatpush1.msra.mxu0 %v255
        %3159 = vmatprep.subr.mxu0 0.0
        %3160 = vmatpush1.msra.mxu0 %v256
        %3161 = vmatprep.subr.mxu0 0.0
        %3162 = vmatpush1.msra.mxu0 %v257
        %3163 = vmatprep.subr.mxu0 0.0
        %3164 = vmatpush1.msra.mxu0 0.0
        %3165 = vmatprep.subr.mxu0 0.0
        %3166 = vmatpush1.msra.mxu0 0.0
        %3167 = vmatprep.subr.mxu0 0.0
        %3168 = vmatpush1.msra.mxu0 0.0
        %3169 = vmatprep.subr.mxu0 0.0
        %3170 = vmatpush1.msra.mxu0 0.0
        %3171 = vmatprep.subr.mxu0 0.0
        %3172 = vmatpush1.msra.mxu0 0.0
        %3173 = vmatprep.subr.mxu0 0.0
        %3174 = vmatpush1.msra.mxu0 0.0
        %3175 = vmatprep.subr.mxu0 0.0
        %3176 = vmatpush1.msra.mxu0 0.0
        %3177 = vmatprep.subr.mxu0 0.0
        %3178 = vmatpush1.msra.mxu0 0.0
        %3179 = vmatprep.subr.mxu0 0.0
        %3180 = vmatpush1.msra.mxu0 0.0
        %3181 = vmatprep.subr.mxu0 0.0
        %3182 = vmatpush1.msra.mxu0 0.0
        %3183 = vmatprep.subr.mxu0 0.0
        %3184 = vmatpush1.msra.mxu0 0.0
        %3185 = vmatprep.subr.mxu0 0.0
        %3186 = vmatpush1.msra.mxu0 0.0
        %3187 = vmatprep.subr.mxu0 0.0
        %3188 = vmatpush1.msra.mxu0 0.0
        %3189 = vmatprep.subr.mxu0 0.0
        %3190 = vmatpush1.msra.mxu0 0.0
        %3191 = vmatprep.subr.mxu0 0.0
        %3192 = vmatpush1.msra.mxu0 0.0
        %3193 = vmatprep.subr.mxu0 0.0
        %3194 = vmatpush1.msra.mxu0 0.0
        %3195 = vmatprep.subr.mxu0 0.0
        %3196 = vmatpush1.msra.mxu0 0.0
        %3197 = vmatprep.subr.mxu0 0.0
        %3198 = vmatpush1.msra.mxu0 0.0
        %3199 = vmatprep.subr.mxu0 0.0
        %3200 = vmatpush1.msra.mxu0 0.0
        %3201 = vmatprep.subr.mxu0 0.0
        %3202 = vmatpush1.msra.mxu0 0.0
        %3203 = vmatprep.subr.mxu0 0.0
        %3204 = vmatpush1.msra.mxu0 0.0
        %3205 = vmatprep.subr.mxu0 0.0
        %3206 = vmatpush1.msra.mxu0 0.0
        %3207 = vmatprep.subr.mxu0 0.0
        %3208 = vmatpush1.msra.mxu0 0.0
        %3209 = vmatprep.subr.mxu0 0.0
        %3210 = vmatpush1.msra.mxu0 0.0
        %3211 = vmatprep.subr.mxu0 0.0
        %3212 = vmatpush1.msra.mxu0 0.0
        %3213 = vmatprep.subr.mxu0 0.0
        %3214 = vmatpush1.msra.mxu0 0.0
        %3215 = vmatprep.subr.mxu0 0.0
        %3216 = vmatpush1.msra.mxu0 0.0
        %3217 = vmatprep.subr.mxu0 0.0
        %3218 = vmatpush1.msra.mxu0 0.0
        %3219 = vmatprep.mubr.f32.mxu0 0.0
        %3220 = vmatmul.mubr.f32.gmra.mrb[0].mxu0 %v3153
        %v3221 = vpop.f32.mrb[0].mxu0
        %v3222 = vadd.f32 0.0, %v3221
        %v3223 = vpop.f32.mrb[0].mxu0
        %3224 = vdwg.mxu0
        %v3225 = vadd.f32 %v3149, %v3222
        %v3226 = vtanh.pop %v3225
        %v3227 = vxor.u32 %v3225, 2147483648
        %v3228 = vmul.f32 %v3227, 1.442695
        %v3229 = vpow.pop %v3228
        %v3230 = vadd.f32 %v3229, 1.0
        %v3231 = vrcp.pop %v3230
        %v3232 = vmul.f32 1.0, %v3231
        %v3233 = vsel %vm262, %v3226, %v3232
        %v3234 = vmul.f32 %v3233, %v3140
        %3236 = vrot.lane.b32.xlu0 %v3233, 64
        %v3237 = vpop.permute.xlu0 %3236
        %v3239 = vmul.f32 %v3233, %v3237
        %3241 = vrot.lane.b32.xlu0 %v3239, 32
        %v3242 = vpop.permute.xlu0 %3241
        %v3244 = vadd.f32 %v3234, %v3242
        %v3245 = vtanh.pop %v3244
        %3247 = vrot.lane.b32.xlu0 %v3245, 64
        %v3248 = vpop.permute.xlu0 %3247
        %v3250 = vmul.f32 %v3233, %v3248
        %s3251 = scalar_lea.vmem %s239, 192
        %v3252 = vld [vmem:[%s3251] sm:$0xff]
        %vm3253 = vcmp.gt.f32.partialorder %v3252, 0.5
        %v3254 = vsel %vm3253, 1, 0
        %3255 = vset.pattern.permute.xlu0 0
        %3256 = vperm.xlu0 %3255, %v3254
        %v3257 = vpop.permute.xlu0 %3256
        %vm3258 = vcmp.eq.s32.totalorder %v3257, 1
        %v3259 = vsel %vm3258, %v3250, %v3139
        %v3260 = vsel %vm3258, %v3244, %v3140
        %v3261 = vsel %vm3258, %v3250, 0.0
        %3263 = vrot.lane.b32.xlu0 %v3261, 32
        %v3264 = vpop.permute.xlu0 %3263
        %s3266 = scalar_lea.vmem %s245, 192
        %3267 = vst.msk [vmem:[%s3266] sm:$0xff] %vm266, %v3264
        %s3268 = scalar_lea.vmem %s233, 200
        %v3269 = vld [vmem:[%s3268] sm:$0xff]
        %3271 = vrot.lane.b32.xlu0 %v3259, 32
        %v3272 = vpop.permute.xlu0 %3271
        %v3273 = vsel %vm266, %v3272, 0
        %3275 = vmatprep.subr.mxu0 0.0
        %3276 = vmatpush1.msra.mxu0 %v254
        %3277 = vmatprep.subr.mxu0 0.0
        %3278 = vmatpush1.msra.mxu0 %v255
        %3279 = vmatprep.subr.mxu0 0.0
        %3280 = vmatpush1.msra.mxu0 %v256
        %3281 = vmatprep.subr.mxu0 0.0
        %3282 = vmatpush1.msra.mxu0 %v257
        %3283 = vmatprep.subr.mxu0 0.0
        %3284 = vmatpush1.msra.mxu0 0.0
        %3285 = vmatprep.subr.mxu0 0.0
        %3286 = vmatpush1.msra.mxu0 0.0
        %3287 = vmatprep.subr.mxu0 0.0
        %3288 = vmatpush1.msra.mxu0 0.0
        %3289 = vmatprep.subr.mxu0 0.0
        %3290 = vmatpush1.msra.mxu0 0.0
        %3291 = vmatprep.subr.mxu0 0.0
        %3292 = vmatpush1.msra.mxu0 0.0
        %3293 = vmatprep.subr.mxu0 0.0
        %3294 = vmatpush1.msra.mxu0 0.0
        %3295 = vmatprep.subr.mxu0 0.0
        %3296 = vmatpush1.msra.mxu0 0.0
        %3297 = vmatprep.subr.mxu0 0.0
        %3298 = vmatpush1.msra.mxu0 0.0
        %3299 = vmatprep.subr.mxu0 0.0
        %3300 = vmatpush1.msra.mxu0 0.0
        %3301 = vmatprep.subr.mxu0 0.0
        %3302 = vmatpush1.msra.mxu0 0.0
        %3303 = vmatprep.subr.mxu0 0.0
        %3304 = vmatpush1.msra.mxu0 0.0
        %3305 = vmatprep.subr.mxu0 0.0
        %3306 = vmatpush1.msra.mxu0 0.0
        %3307 = vmatprep.subr.mxu0 0.0
        %3308 = vmatpush1.msra.mxu0 0.0
        %3309 = vmatprep.subr.mxu0 0.0
        %3310 = vmatpush1.msra.mxu0 0.0
        %3311 = vmatprep.subr.mxu0 0.0
        %3312 = vmatpush1.msra.mxu0 0.0
        %3313 = vmatprep.subr.mxu0 0.0
        %3314 = vmatpush1.msra.mxu0 0.0
        %3315 = vmatprep.subr.mxu0 0.0
        %3316 = vmatpush1.msra.mxu0 0.0
        %3317 = vmatprep.subr.mxu0 0.0
        %3318 = vmatpush1.msra.mxu0 0.0
        %3319 = vmatprep.subr.mxu0 0.0
        %3320 = vmatpush1.msra.mxu0 0.0
        %3321 = vmatprep.subr.mxu0 0.0
        %3322 = vmatpush1.msra.mxu0 0.0
        %3323 = vmatprep.subr.mxu0 0.0
        %3324 = vmatpush1.msra.mxu0 0.0
        %3325 = vmatprep.subr.mxu0 0.0
        %3326 = vmatpush1.msra.mxu0 0.0
        %3327 = vmatprep.subr.mxu0 0.0
        %3328 = vmatpush1.msra.mxu0 0.0
        %3329 = vmatprep.subr.mxu0 0.0
        %3330 = vmatpush1.msra.mxu0 0.0
        %3331 = vmatprep.subr.mxu0 0.0
        %3332 = vmatpush1.msra.mxu0 0.0
        %3333 = vmatprep.subr.mxu0 0.0
        %3334 = vmatpush1.msra.mxu0 0.0
        %3335 = vmatprep.subr.mxu0 0.0
        %3336 = vmatpush1.msra.mxu0 0.0
        %3337 = vmatprep.subr.mxu0 0.0
        %3338 = vmatpush1.msra.mxu0 0.0
        %3339 = vmatprep.mubr.f32.mxu0 0.0
        %3340 = vmatmul.mubr.f32.gmra.mrb[0].mxu0 %v3273
        %v3341 = vpop.f32.mrb[0].mxu0
        %v3342 = vadd.f32 0.0, %v3341
        %v3343 = vpop.f32.mrb[0].mxu0
        %3344 = vdwg.mxu0
        %v3345 = vadd.f32 %v3269, %v3342
        %v3346 = vtanh.pop %v3345
        %v3347 = vxor.u32 %v3345, 2147483648
        %v3348 = vmul.f32 %v3347, 1.442695
        %v3349 = vpow.pop %v3348
        %v3350 = vadd.f32 %v3349, 1.0
        %v3351 = vrcp.pop %v3350
        %v3352 = vmul.f32 1.0, %v3351
        %v3353 = vsel %vm262, %v3346, %v3352
        %v3354 = vmul.f32 %v3353, %v3260
        %3356 = vrot.lane.b32.xlu0 %v3353, 64
        %v3357 = vpop.permute.xlu0 %3356
        %v3359 = vmul.f32 %v3353, %v3357
        %3361 = vrot.lane.b32.xlu0 %v3359, 32
        %v3362 = vpop.permute.xlu0 %3361
        %v3364 = vadd.f32 %v3354, %v3362
        %v3365 = vtanh.pop %v3364
        %3367 = vrot.lane.b32.xlu0 %v3365, 64
        %v3368 = vpop.permute.xlu0 %3367
        %v3370 = vmul.f32 %v3353, %v3368
        %s3371 = scalar_lea.vmem %s239, 200
        %v3372 = vld [vmem:[%s3371] sm:$0xff]
        %vm3373 = vcmp.gt.f32.partialorder %v3372, 0.5
        %v3374 = vsel %vm3373, 1, 0
        %3375 = vset.pattern.permute.xlu0 0
        %3376 = vperm.xlu0 %3375, %v3374
        %v3377 = vpop.permute.xlu0 %3376
        %vm3378 = vcmp.eq.s32.totalorder %v3377, 1
        %v3379 = vsel %vm3378, %v3370, %v3259
        %v3380 = vsel %vm3378, %v3364, %v3260
        %v3381 = vsel %vm3378, %v3370, 0.0
        %3383 = vrot.lane.b32.xlu0 %v3381, 32
        %v3384 = vpop.permute.xlu0 %3383
        %s3386 = scalar_lea.vmem %s245, 200
        %3387 = vst.msk [vmem:[%s3386] sm:$0xff] %vm266, %v3384
        %s3388 = scalar_lea.vmem %s233, 208
        %v3389 = vld [vmem:[%s3388] sm:$0xff]
        %3391 = vrot.lane.b32.xlu0 %v3379, 32
        %v3392 = vpop.permute.xlu0 %3391
        %v3393 = vsel %vm266, %v3392, 0
        %3395 = vmatprep.subr.mxu0 0.0
        %3396 = vmatpush1.msra.mxu0 %v254
        %3397 = vmatprep.subr.mxu0 0.0
        %3398 = vmatpush1.msra.mxu0 %v255
        %3399 = vmatprep.subr.mxu0 0.0
        %3400 = vmatpush1.msra.mxu0 %v256
        %3401 = vmatprep.subr.mxu0 0.0
        %3402 = vmatpush1.msra.mxu0 %v257
        %3403 = vmatprep.subr.mxu0 0.0
        %3404 = vmatpush1.msra.mxu0 0.0
        %3405 = vmatprep.subr.mxu0 0.0
        %3406 = vmatpush1.msra.mxu0 0.0
        %3407 = vmatprep.subr.mxu0 0.0
        %3408 = vmatpush1.msra.mxu0 0.0
        %3409 = vmatprep.subr.mxu0 0.0
        %3410 = vmatpush1.msra.mxu0 0.0
        %3411 = vmatprep.subr.mxu0 0.0
        %3412 = vmatpush1.msra.mxu0 0.0
        %3413 = vmatprep.subr.mxu0 0.0
        %3414 = vmatpush1.msra.mxu0 0.0
        %3415 = vmatprep.subr.mxu0 0.0
        %3416 = vmatpush1.msra.mxu0 0.0
        %3417 = vmatprep.subr.mxu0 0.0
        %3418 = vmatpush1.msra.mxu0 0.0
        %3419 = vmatprep.subr.mxu0 0.0
        %3420 = vmatpush1.msra.mxu0 0.0
        %3421 = vmatprep.subr.mxu0 0.0
        %3422 = vmatpush1.msra.mxu0 0.0
        %3423 = vmatprep.subr.mxu0 0.0
        %3424 = vmatpush1.msra.mxu0 0.0
        %3425 = vmatprep.subr.mxu0 0.0
        %3426 = vmatpush1.msra.mxu0 0.0
        %3427 = vmatprep.subr.mxu0 0.0
        %3428 = vmatpush1.msra.mxu0 0.0
        %3429 = vmatprep.subr.mxu0 0.0
        %3430 = vmatpush1.msra.mxu0 0.0
        %3431 = vmatprep.subr.mxu0 0.0
        %3432 = vmatpush1.msra.mxu0 0.0
        %3433 = vmatprep.subr.mxu0 0.0
        %3434 = vmatpush1.msra.mxu0 0.0
        %3435 = vmatprep.subr.mxu0 0.0
        %3436 = vmatpush1.msra.mxu0 0.0
        %3437 = vmatprep.subr.mxu0 0.0
        %3438 = vmatpush1.msra.mxu0 0.0
        %3439 = vmatprep.subr.mxu0 0.0
        %3440 = vmatpush1.msra.mxu0 0.0
        %3441 = vmatprep.subr.mxu0 0.0
        %3442 = vmatpush1.msra.mxu0 0.0
        %3443 = vmatprep.subr.mxu0 0.0
        %3444 = vmatpush1.msra.mxu0 0.0
        %3445 = vmatprep.subr.mxu0 0.0
        %3446 = vmatpush1.msra.mxu0 0.0
        %3447 = vmatprep.subr.mxu0 0.0
        %3448 = vmatpush1.msra.mxu0 0.0
        %3449 = vmatprep.subr.mxu0 0.0
        %3450 = vmatpush1.msra.mxu0 0.0
        %3451 = vmatprep.subr.mxu0 0.0
        %3452 = vmatpush1.msra.mxu0 0.0
        %3453 = vmatprep.subr.mxu0 0.0
        %3454 = vmatpush1.msra.mxu0 0.0
        %3455 = vmatprep.subr.mxu0 0.0
        %3456 = vmatpush1.msra.mxu0 0.0
        %3457 = vmatprep.subr.mxu0 0.0
        %3458 = vmatpush1.msra.mxu0 0.0
        %3459 = vmatprep.mubr.f32.mxu0 0.0
        %3460 = vmatmul.mubr.f32.gmra.mrb[0].mxu0 %v3393
        %v3461 = vpop.f32.mrb[0].mxu0
        %v3462 = vadd.f32 0.0, %v3461
        %v3463 = vpop.f32.mrb[0].mxu0
        %3464 = vdwg.mxu0
        %v3465 = vadd.f32 %v3389, %v3462
        %v3466 = vtanh.pop %v3465
        %v3467 = vxor.u32 %v3465, 2147483648
        %v3468 = vmul.f32 %v3467, 1.442695
        %v3469 = vpow.pop %v3468
        %v3470 = vadd.f32 %v3469, 1.0
        %v3471 = vrcp.pop %v3470
        %v3472 = vmul.f32 1.0, %v3471
        %v3473 = vsel %vm262, %v3466, %v3472
        %v3474 = vmul.f32 %v3473, %v3380
        %3476 = vrot.lane.b32.xlu0 %v3473, 64
        %v3477 = vpop.permute.xlu0 %3476
        %v3479 = vmul.f32 %v3473, %v3477
        %3481 = vrot.lane.b32.xlu0 %v3479, 32
        %v3482 = vpop.permute.xlu0 %3481
        %v3484 = vadd.f32 %v3474, %v3482
        %v3485 = vtanh.pop %v3484
        %3487 = vrot.lane.b32.xlu0 %v3485, 64
        %v3488 = vpop.permute.xlu0 %3487
        %v3490 = vmul.f32 %v3473, %v3488
        %s3491 = scalar_lea.vmem %s239, 208
        %v3492 = vld [vmem:[%s3491] sm:$0xff]
        %vm3493 = vcmp.gt.f32.partialorder %v3492, 0.5
        %v3494 = vsel %vm3493, 1, 0
        %3495 = vset.pattern.permute.xlu0 0
        %3496 = vperm.xlu0 %3495, %v3494
        %v3497 = vpop.permute.xlu0 %3496
        %vm3498 = vcmp.eq.s32.totalorder %v3497, 1
        %v3499 = vsel %vm3498, %v3490, %v3379
        %v3500 = vsel %vm3498, %v3484, %v3380
        %v3501 = vsel %vm3498, %v3490, 0.0
        %3503 = vrot.lane.b32.xlu0 %v3501, 32
        %v3504 = vpop.permute.xlu0 %3503
        %s3506 = scalar_lea.vmem %s245, 208
        %3507 = vst.msk [vmem:[%s3506] sm:$0xff] %vm266, %v3504
        %s3508 = scalar_lea.vmem %s233, 216
        %v3509 = vld [vmem:[%s3508] sm:$0xff]
        %3511 = vrot.lane.b32.xlu0 %v3499, 32
        %v3512 = vpop.permute.xlu0 %3511
        %v3513 = vsel %vm266, %v3512, 0
        %3515 = vmatprep.subr.mxu0 0.0
        %3516 = vmatpush1.msra.mxu0 %v254
        %3517 = vmatprep.subr.mxu0 0.0
        %3518 = vmatpush1.msra.mxu0 %v255
        %3519 = vmatprep.subr.mxu0 0.0
        %3520 = vmatpush1.msra.mxu0 %v256
        %3521 = vmatprep.subr.mxu0 0.0
        %3522 = vmatpush1.msra.mxu0 %v257
        %3523 = vmatprep.subr.mxu0 0.0
        %3524 = vmatpush1.msra.mxu0 0.0
        %3525 = vmatprep.subr.mxu0 0.0
        %3526 = vmatpush1.msra.mxu0 0.0
        %3527 = vmatprep.subr.mxu0 0.0
        %3528 = vmatpush1.msra.mxu0 0.0
        %3529 = vmatprep.subr.mxu0 0.0
        %3530 = vmatpush1.msra.mxu0 0.0
        %3531 = vmatprep.subr.mxu0 0.0
        %3532 = vmatpush1.msra.mxu0 0.0
        %3533 = vmatprep.subr.mxu0 0.0
        %3534 = vmatpush1.msra.mxu0 0.0
        %3535 = vmatprep.subr.mxu0 0.0
        %3536 = vmatpush1.msra.mxu0 0.0
        %3537 = vmatprep.subr.mxu0 0.0
        %3538 = vmatpush1.msra.mxu0 0.0
        %3539 = vmatprep.subr.mxu0 0.0
        %3540 = vmatpush1.msra.mxu0 0.0
        %3541 = vmatprep.subr.mxu0 0.0
        %3542 = vmatpush1.msra.mxu0 0.0
        %3543 = vmatprep.subr.mxu0 0.0
        %3544 = vmatpush1.msra.mxu0 0.0
        %3545 = vmatprep.subr.mxu0 0.0
        %3546 = vmatpush1.msra.mxu0 0.0
        %3547 = vmatprep.subr.mxu0 0.0
        %3548 = vmatpush1.msra.mxu0 0.0
        %3549 = vmatprep.subr.mxu0 0.0
        %3550 = vmatpush1.msra.mxu0 0.0
        %3551 = vmatprep.subr.mxu0 0.0
        %3552 = vmatpush1.msra.mxu0 0.0
        %3553 = vmatprep.subr.mxu0 0.0
        %3554 = vmatpush1.msra.mxu0 0.0
        %3555 = vmatprep.subr.mxu0 0.0
        %3556 = vmatpush1.msra.mxu0 0.0
        %3557 = vmatprep.subr.mxu0 0.0
        %3558 = vmatpush1.msra.mxu0 0.0
        %3559 = vmatprep.subr.mxu0 0.0
        %3560 = vmatpush1.msra.mxu0 0.0
        %3561 = vmatprep.subr.mxu0 0.0
        %3562 = vmatpush1.msra.mxu0 0.0
        %3563 = vmatprep.subr.mxu0 0.0
        %3564 = vmatpush1.msra.mxu0 0.0
        %3565 = vmatprep.subr.mxu0 0.0
        %3566 = vmatpush1.msra.mxu0 0.0
        %3567 = vmatprep.subr.mxu0 0.0
        %3568 = vmatpush1.msra.mxu0 0.0
        %3569 = vmatprep.subr.mxu0 0.0
        %3570 = vmatpush1.msra.mxu0 0.0
        %3571 = vmatprep.subr.mxu0 0.0
        %3572 = vmatpush1.msra.mxu0 0.0
        %3573 = vmatprep.subr.mxu0 0.0
        %3574 = vmatpush1.msra.mxu0 0.0
        %3575 = vmatprep.subr.mxu0 0.0
        %3576 = vmatpush1.msra.mxu0 0.0
        %3577 = vmatprep.subr.mxu0 0.0
        %3578 = vmatpush1.msra.mxu0 0.0
        %3579 = vmatprep.mubr.f32.mxu0 0.0
        %3580 = vmatmul.mubr.f32.gmra.mrb[0].mxu0 %v3513
        %v3581 = vpop.f32.mrb[0].mxu0
        %v3582 = vadd.f32 0.0, %v3581
        %v3583 = vpop.f32.mrb[0].mxu0
        %3584 = vdwg.mxu0
        %v3585 = vadd.f32 %v3509, %v3582
        %v3586 = vtanh.pop %v3585
        %v3587 = vxor.u32 %v3585, 2147483648
        %v3588 = vmul.f32 %v3587, 1.442695
        %v3589 = vpow.pop %v3588
        %v3590 = vadd.f32 %v3589, 1.0
        %v3591 = vrcp.pop %v3590
        %v3592 = vmul.f32 1.0, %v3591
        %v3593 = vsel %vm262, %v3586, %v3592
        %v3594 = vmul.f32 %v3593, %v3500
        %3596 = vrot.lane.b32.xlu0 %v3593, 64
        %v3597 = vpop.permute.xlu0 %3596
        %v3599 = vmul.f32 %v3593, %v3597
        %3601 = vrot.lane.b32.xlu0 %v3599, 32
        %v3602 = vpop.permute.xlu0 %3601
        %v3604 = vadd.f32 %v3594, %v3602
        %v3605 = vtanh.pop %v3604
        %3607 = vrot.lane.b32.xlu0 %v3605, 64
        %v3608 = vpop.permute.xlu0 %3607
        %v3610 = vmul.f32 %v3593, %v3608
        %s3611 = scalar_lea.vmem %s239, 216
        %v3612 = vld [vmem:[%s3611] sm:$0xff]
        %vm3613 = vcmp.gt.f32.partialorder %v3612, 0.5
        %v3614 = vsel %vm3613, 1, 0
        %3615 = vset.pattern.permute.xlu0 0
        %3616 = vperm.xlu0 %3615, %v3614
        %v3617 = vpop.permute.xlu0 %3616
        %vm3618 = vcmp.eq.s32.totalorder %v3617, 1
        %v3619 = vsel %vm3618, %v3610, %v3499
        %v3620 = vsel %vm3618, %v3604, %v3500
        %v3621 = vsel %vm3618, %v3610, 0.0
        %3623 = vrot.lane.b32.xlu0 %v3621, 32
        %v3624 = vpop.permute.xlu0 %3623
        %s3626 = scalar_lea.vmem %s245, 216
        %3627 = vst.msk [vmem:[%s3626] sm:$0xff] %vm266, %v3624
        %s3628 = scalar_lea.vmem %s233, 224
        %v3629 = vld [vmem:[%s3628] sm:$0xff]
        %3631 = vrot.lane.b32.xlu0 %v3619, 32
        %v3632 = vpop.permute.xlu0 %3631
        %v3633 = vsel %vm266, %v3632, 0
        %3635 = vmatprep.subr.mxu0 0.0
        %3636 = vmatpush1.msra.mxu0 %v254
        %3637 = vmatprep.subr.mxu0 0.0
        %3638 = vmatpush1.msra.mxu0 %v255
        %3639 = vmatprep.subr.mxu0 0.0
        %3640 = vmatpush1.msra.mxu0 %v256
        %3641 = vmatprep.subr.mxu0 0.0
        %3642 = vmatpush1.msra.mxu0 %v257
        %3643 = vmatprep.subr.mxu0 0.0
        %3644 = vmatpush1.msra.mxu0 0.0
        %3645 = vmatprep.subr.mxu0 0.0
        %3646 = vmatpush1.msra.mxu0 0.0
        %3647 = vmatprep.subr.mxu0 0.0
        %3648 = vmatpush1.msra.mxu0 0.0
        %3649 = vmatprep.subr.mxu0 0.0
        %3650 = vmatpush1.msra.mxu0 0.0
        %3651 = vmatprep.subr.mxu0 0.0
        %3652 = vmatpush1.msra.mxu0 0.0
        %3653 = vmatprep.subr.mxu0 0.0
        %3654 = vmatpush1.msra.mxu0 0.0
        %3655 = vmatprep.subr.mxu0 0.0
        %3656 = vmatpush1.msra.mxu0 0.0
        %3657 = vmatprep.subr.mxu0 0.0
        %3658 = vmatpush1.msra.mxu0 0.0
        %3659 = vmatprep.subr.mxu0 0.0
        %3660 = vmatpush1.msra.mxu0 0.0
        %3661 = vmatprep.subr.mxu0 0.0
        %3662 = vmatpush1.msra.mxu0 0.0
        %3663 = vmatprep.subr.mxu0 0.0
        %3664 = vmatpush1.msra.mxu0 0.0
        %3665 = vmatprep.subr.mxu0 0.0
        %3666 = vmatpush1.msra.mxu0 0.0
        %3667 = vmatprep.subr.mxu0 0.0
        %3668 = vmatpush1.msra.mxu0 0.0
        %3669 = vmatprep.subr.mxu0 0.0
        %3670 = vmatpush1.msra.mxu0 0.0
        %3671 = vmatprep.subr.mxu0 0.0
        %3672 = vmatpush1.msra.mxu0 0.0
        %3673 = vmatprep.subr.mxu0 0.0
        %3674 = vmatpush1.msra.mxu0 0.0
        %3675 = vmatprep.subr.mxu0 0.0
        %3676 = vmatpush1.msra.mxu0 0.0
        %3677 = vmatprep.subr.mxu0 0.0
        %3678 = vmatpush1.msra.mxu0 0.0
        %3679 = vmatprep.subr.mxu0 0.0
        %3680 = vmatpush1.msra.mxu0 0.0
        %3681 = vmatprep.subr.mxu0 0.0
        %3682 = vmatpush1.msra.mxu0 0.0
        %3683 = vmatprep.subr.mxu0 0.0
        %3684 = vmatpush1.msra.mxu0 0.0
        %3685 = vmatprep.subr.mxu0 0.0
        %3686 = vmatpush1.msra.mxu0 0.0
        %3687 = vmatprep.subr.mxu0 0.0
        %3688 = vmatpush1.msra.mxu0 0.0
        %3689 = vmatprep.subr.mxu0 0.0
        %3690 = vmatpush1.msra.mxu0 0.0
        %3691 = vmatprep.subr.mxu0 0.0
        %3692 = vmatpush1.msra.mxu0 0.0
        %3693 = vmatprep.subr.mxu0 0.0
        %3694 = vmatpush1.msra.mxu0 0.0
        %3695 = vmatprep.subr.mxu0 0.0
        %3696 = vmatpush1.msra.mxu0 0.0
        %3697 = vmatprep.subr.mxu0 0.0
        %3698 = vmatpush1.msra.mxu0 0.0
        %3699 = vmatprep.mubr.f32.mxu0 0.0
        %3700 = vmatmul.mubr.f32.gmra.mrb[0].mxu0 %v3633
        %v3701 = vpop.f32.mrb[0].mxu0
        %v3702 = vadd.f32 0.0, %v3701
        %v3703 = vpop.f32.mrb[0].mxu0
        %3704 = vdwg.mxu0
        %v3705 = vadd.f32 %v3629, %v3702
        %v3706 = vtanh.pop %v3705
        %v3707 = vxor.u32 %v3705, 2147483648
        %v3708 = vmul.f32 %v3707, 1.442695
        %v3709 = vpow.pop %v3708
        %v3710 = vadd.f32 %v3709, 1.0
        %v3711 = vrcp.pop %v3710
        %v3712 = vmul.f32 1.0, %v3711
        %v3713 = vsel %vm262, %v3706, %v3712
        %v3714 = vmul.f32 %v3713, %v3620
        %3716 = vrot.lane.b32.xlu0 %v3713, 64
        %v3717 = vpop.permute.xlu0 %3716
        %v3719 = vmul.f32 %v3713, %v3717
        %3721 = vrot.lane.b32.xlu0 %v3719, 32
        %v3722 = vpop.permute.xlu0 %3721
        %v3724 = vadd.f32 %v3714, %v3722
        %v3725 = vtanh.pop %v3724
        %3727 = vrot.lane.b32.xlu0 %v3725, 64
        %v3728 = vpop.permute.xlu0 %3727
        %v3730 = vmul.f32 %v3713, %v3728
        %s3731 = scalar_lea.vmem %s239, 224
        %v3732 = vld [vmem:[%s3731] sm:$0xff]
        %vm3733 = vcmp.gt.f32.partialorder %v3732, 0.5
        %v3734 = vsel %vm3733, 1, 0
        %3735 = vset.pattern.permute.xlu0 0
        %3736 = vperm.xlu0 %3735, %v3734
        %v3737 = vpop.permute.xlu0 %3736
        %vm3738 = vcmp.eq.s32.totalorder %v3737, 1
        %v3739 = vsel %vm3738, %v3730, %v3619
        %v3740 = vsel %vm3738, %v3724, %v3620
        %v3741 = vsel %vm3738, %v3730, 0.0
        %3743 = vrot.lane.b32.xlu0 %v3741, 32
        %v3744 = vpop.permute.xlu0 %3743
        %s3746 = scalar_lea.vmem %s245, 224
        %3747 = vst.msk [vmem:[%s3746] sm:$0xff] %vm266, %v3744
        %s3748 = scalar_lea.vmem %s233, 232
        %v3749 = vld [vmem:[%s3748] sm:$0xff]
        %3751 = vrot.lane.b32.xlu0 %v3739, 32
        %v3752 = vpop.permute.xlu0 %3751
        %v3753 = vsel %vm266, %v3752, 0
        %3755 = vmatprep.subr.mxu0 0.0
        %3756 = vmatpush1.msra.mxu0 %v254
        %3757 = vmatprep.subr.mxu0 0.0
        %3758 = vmatpush1.msra.mxu0 %v255
        %3759 = vmatprep.subr.mxu0 0.0
        %3760 = vmatpush1.msra.mxu0 %v256
        %3761 = vmatprep.subr.mxu0 0.0
        %3762 = vmatpush1.msra.mxu0 %v257
        %3763 = vmatprep.subr.mxu0 0.0
        %3764 = vmatpush1.msra.mxu0 0.0
        %3765 = vmatprep.subr.mxu0 0.0
        %3766 = vmatpush1.msra.mxu0 0.0
        %3767 = vmatprep.subr.mxu0 0.0
        %3768 = vmatpush1.msra.mxu0 0.0
        %3769 = vmatprep.subr.mxu0 0.0
        %3770 = vmatpush1.msra.mxu0 0.0
        %3771 = vmatprep.subr.mxu0 0.0
        %3772 = vmatpush1.msra.mxu0 0.0
        %3773 = vmatprep.subr.mxu0 0.0
        %3774 = vmatpush1.msra.mxu0 0.0
        %3775 = vmatprep.subr.mxu0 0.0
        %3776 = vmatpush1.msra.mxu0 0.0
        %3777 = vmatprep.subr.mxu0 0.0
        %3778 = vmatpush1.msra.mxu0 0.0
        %3779 = vmatprep.subr.mxu0 0.0
        %3780 = vmatpush1.msra.mxu0 0.0
        %3781 = vmatprep.subr.mxu0 0.0
        %3782 = vmatpush1.msra.mxu0 0.0
        %3783 = vmatprep.subr.mxu0 0.0
        %3784 = vmatpush1.msra.mxu0 0.0
        %3785 = vmatprep.subr.mxu0 0.0
        %3786 = vmatpush1.msra.mxu0 0.0
        %3787 = vmatprep.subr.mxu0 0.0
        %3788 = vmatpush1.msra.mxu0 0.0
        %3789 = vmatprep.subr.mxu0 0.0
        %3790 = vmatpush1.msra.mxu0 0.0
        %3791 = vmatprep.subr.mxu0 0.0
        %3792 = vmatpush1.msra.mxu0 0.0
        %3793 = vmatprep.subr.mxu0 0.0
        %3794 = vmatpush1.msra.mxu0 0.0
        %3795 = vmatprep.subr.mxu0 0.0
        %3796 = vmatpush1.msra.mxu0 0.0
        %3797 = vmatprep.subr.mxu0 0.0
        %3798 = vmatpush1.msra.mxu0 0.0
        %3799 = vmatprep.subr.mxu0 0.0
        %3800 = vmatpush1.msra.mxu0 0.0
        %3801 = vmatprep.subr.mxu0 0.0
        %3802 = vmatpush1.msra.mxu0 0.0
        %3803 = vmatprep.subr.mxu0 0.0
        %3804 = vmatpush1.msra.mxu0 0.0
        %3805 = vmatprep.subr.mxu0 0.0
        %3806 = vmatpush1.msra.mxu0 0.0
        %3807 = vmatprep.subr.mxu0 0.0
        %3808 = vmatpush1.msra.mxu0 0.0
        %3809 = vmatprep.subr.mxu0 0.0
        %3810 = vmatpush1.msra.mxu0 0.0
        %3811 = vmatprep.subr.mxu0 0.0
        %3812 = vmatpush1.msra.mxu0 0.0
        %3813 = vmatprep.subr.mxu0 0.0
        %3814 = vmatpush1.msra.mxu0 0.0
        %3815 = vmatprep.subr.mxu0 0.0
        %3816 = vmatpush1.msra.mxu0 0.0
        %3817 = vmatprep.subr.mxu0 0.0
        %3818 = vmatpush1.msra.mxu0 0.0
        %3819 = vmatprep.mubr.f32.mxu0 0.0
        %3820 = vmatmul.mubr.f32.gmra.mrb[0].mxu0 %v3753
        %v3821 = vpop.f32.mrb[0].mxu0
        %v3822 = vadd.f32 0.0, %v3821
        %v3823 = vpop.f32.mrb[0].mxu0
        %3824 = vdwg.mxu0
        %v3825 = vadd.f32 %v3749, %v3822
        %v3826 = vtanh.pop %v3825
        %v3827 = vxor.u32 %v3825, 2147483648
        %v3828 = vmul.f32 %v3827, 1.442695
        %v3829 = vpow.pop %v3828
        %v3830 = vadd.f32 %v3829, 1.0
        %v3831 = vrcp.pop %v3830
        %v3832 = vmul.f32 1.0, %v3831
        %v3833 = vsel %vm262, %v3826, %v3832
        %v3834 = vmul.f32 %v3833, %v3740
        %3836 = vrot.lane.b32.xlu0 %v3833, 64
        %v3837 = vpop.permute.xlu0 %3836
        %v3839 = vmul.f32 %v3833, %v3837
        %3841 = vrot.lane.b32.xlu0 %v3839, 32
        %v3842 = vpop.permute.xlu0 %3841
        %v3844 = vadd.f32 %v3834, %v3842
        %v3845 = vtanh.pop %v3844
        %3847 = vrot.lane.b32.xlu0 %v3845, 64
        %v3848 = vpop.permute.xlu0 %3847
        %v3850 = vmul.f32 %v3833, %v3848
        %s3851 = scalar_lea.vmem %s239, 232
        %v3852 = vld [vmem:[%s3851] sm:$0xff]
        %vm3853 = vcmp.gt.f32.partialorder %v3852, 0.5
        %v3854 = vsel %vm3853, 1, 0
        %3855 = vset.pattern.permute.xlu0 0
        %3856 = vperm.xlu0 %3855, %v3854
        %v3857 = vpop.permute.xlu0 %3856
        %vm3858 = vcmp.eq.s32.totalorder %v3857, 1
        %v3859 = vsel %vm3858, %v3850, %v3739
        %v3860 = vsel %vm3858, %v3844, %v3740
        %v3861 = vsel %vm3858, %v3850, 0.0
        %3863 = vrot.lane.b32.xlu0 %v3861, 32
        %v3864 = vpop.permute.xlu0 %3863
        %s3866 = scalar_lea.vmem %s245, 232
        %3867 = vst.msk [vmem:[%s3866] sm:$0xff] %vm266, %v3864
        %s3868 = scalar_lea.vmem %s233, 240
        %v3869 = vld [vmem:[%s3868] sm:$0xff]
        %3871 = vrot.lane.b32.xlu0 %v3859, 32
        %v3872 = vpop.permute.xlu0 %3871
        %v3873 = vsel %vm266, %v3872, 0
        %3875 = vmatprep.subr.mxu0 0.0
        %3876 = vmatpush1.msra.mxu0 %v254
        %3877 = vmatprep.subr.mxu0 0.0
        %3878 = vmatpush1.msra.mxu0 %v255
        %3879 = vmatprep.subr.mxu0 0.0
        %3880 = vmatpush1.msra.mxu0 %v256
        %3881 = vmatprep.subr.mxu0 0.0
        %3882 = vmatpush1.msra.mxu0 %v257
        %3883 = vmatprep.subr.mxu0 0.0
        %3884 = vmatpush1.msra.mxu0 0.0
        %3885 = vmatprep.subr.mxu0 0.0
        %3886 = vmatpush1.msra.mxu0 0.0
        %3887 = vmatprep.subr.mxu0 0.0
        %3888 = vmatpush1.msra.mxu0 0.0
        %3889 = vmatprep.subr.mxu0 0.0
        %3890 = vmatpush1.msra.mxu0 0.0
        %3891 = vmatprep.subr.mxu0 0.0
        %3892 = vmatpush1.msra.mxu0 0.0
        %3893 = vmatprep.subr.mxu0 0.0
        %3894 = vmatpush1.msra.mxu0 0.0
        %3895 = vmatprep.subr.mxu0 0.0
        %3896 = vmatpush1.msra.mxu0 0.0
        %3897 = vmatprep.subr.mxu0 0.0
        %3898 = vmatpush1.msra.mxu0 0.0
        %3899 = vmatprep.subr.mxu0 0.0
        %3900 = vmatpush1.msra.mxu0 0.0
        %3901 = vmatprep.subr.mxu0 0.0
        %3902 = vmatpush1.msra.mxu0 0.0
        %3903 = vmatprep.subr.mxu0 0.0
        %3904 = vmatpush1.msra.mxu0 0.0
        %3905 = vmatprep.subr.mxu0 0.0
        %3906 = vmatpush1.msra.mxu0 0.0
        %3907 = vmatprep.subr.mxu0 0.0
        %3908 = vmatpush1.msra.mxu0 0.0
        %3909 = vmatprep.subr.mxu0 0.0
        %3910 = vmatpush1.msra.mxu0 0.0
        %3911 = vmatprep.subr.mxu0 0.0
        %3912 = vmatpush1.msra.mxu0 0.0
        %3913 = vmatprep.subr.mxu0 0.0
        %3914 = vmatpush1.msra.mxu0 0.0
        %3915 = vmatprep.subr.mxu0 0.0
        %3916 = vmatpush1.msra.mxu0 0.0
        %3917 = vmatprep.subr.mxu0 0.0
        %3918 = vmatpush1.msra.mxu0 0.0
        %3919 = vmatprep.subr.mxu0 0.0
        %3920 = vmatpush1.msra.mxu0 0.0
        %3921 = vmatprep.subr.mxu0 0.0
        %3922 = vmatpush1.msra.mxu0 0.0
        %3923 = vmatprep.subr.mxu0 0.0
        %3924 = vmatpush1.msra.mxu0 0.0
        %3925 = vmatprep.subr.mxu0 0.0
        %3926 = vmatpush1.msra.mxu0 0.0
        %3927 = vmatprep.subr.mxu0 0.0
        %3928 = vmatpush1.msra.mxu0 0.0
        %3929 = vmatprep.subr.mxu0 0.0
        %3930 = vmatpush1.msra.mxu0 0.0
        %3931 = vmatprep.subr.mxu0 0.0
        %3932 = vmatpush1.msra.mxu0 0.0
        %3933 = vmatprep.subr.mxu0 0.0
        %3934 = vmatpush1.msra.mxu0 0.0
        %3935 = vmatprep.subr.mxu0 0.0
        %3936 = vmatpush1.msra.mxu0 0.0
        %3937 = vmatprep.subr.mxu0 0.0
        %3938 = vmatpush1.msra.mxu0 0.0
        %3939 = vmatprep.mubr.f32.mxu0 0.0
        %3940 = vmatmul.mubr.f32.gmra.mrb[0].mxu0 %v3873
        %v3941 = vpop.f32.mrb[0].mxu0
        %v3942 = vadd.f32 0.0, %v3941
        %v3943 = vpop.f32.mrb[0].mxu0
        %3944 = vdwg.mxu0
        %v3945 = vadd.f32 %v3869, %v3942
        %v3946 = vtanh.pop %v3945
        %v3947 = vxor.u32 %v3945, 2147483648
        %v3948 = vmul.f32 %v3947, 1.442695
        %v3949 = vpow.pop %v3948
        %v3950 = vadd.f32 %v3949, 1.0
        %v3951 = vrcp.pop %v3950
        %v3952 = vmul.f32 1.0, %v3951
        %v3953 = vsel %vm262, %v3946, %v3952
        %v3954 = vmul.f32 %v3953, %v3860
        %3956 = vrot.lane.b32.xlu0 %v3953, 64
        %v3957 = vpop.permute.xlu0 %3956
        %v3959 = vmul.f32 %v3953, %v3957
        %3961 = vrot.lane.b32.xlu0 %v3959, 32
        %v3962 = vpop.permute.xlu0 %3961
        %v3964 = vadd.f32 %v3954, %v3962
        %v3965 = vtanh.pop %v3964
        %3967 = vrot.lane.b32.xlu0 %v3965, 64
        %v3968 = vpop.permute.xlu0 %3967
        %v3970 = vmul.f32 %v3953, %v3968
        %s3971 = scalar_lea.vmem %s239, 240
        %v3972 = vld [vmem:[%s3971] sm:$0xff]
        %vm3973 = vcmp.gt.f32.partialorder %v3972, 0.5
        %v3974 = vsel %vm3973, 1, 0
        %3975 = vset.pattern.permute.xlu0 0
        %3976 = vperm.xlu0 %3975, %v3974
        %v3977 = vpop.permute.xlu0 %3976
        %vm3978 = vcmp.eq.s32.totalorder %v3977, 1
        %v3979 = vsel %vm3978, %v3970, %v3859
        %v3980 = vsel %vm3978, %v3964, %v3860
        %v3981 = vsel %vm3978, %v3970, 0.0
        %3983 = vrot.lane.b32.xlu0 %v3981, 32
        %v3984 = vpop.permute.xlu0 %3983
        %s3986 = scalar_lea.vmem %s245, 240
        %3987 = vst.msk [vmem:[%s3986] sm:$0xff] %vm266, %v3984
        %s3988 = scalar_lea.vmem %s233, 248
        %v3989 = vld [vmem:[%s3988] sm:$0xff]
        %3991 = vrot.lane.b32.xlu0 %v3979, 32
        %v3992 = vpop.permute.xlu0 %3991
        %v3993 = vsel %vm266, %v3992, 0
        %3995 = vmatprep.subr.mxu0 0.0
        %3996 = vmatpush1.msra.mxu0 %v254
        %3997 = vmatprep.subr.mxu0 0.0
        %3998 = vmatpush1.msra.mxu0 %v255
        %3999 = vmatprep.subr.mxu0 0.0
        %4000 = vmatpush1.msra.mxu0 %v256
        %4001 = vmatprep.subr.mxu0 0.0
        %4002 = vmatpush1.msra.mxu0 %v257
        %4003 = vmatprep.subr.mxu0 0.0
        %4004 = vmatpush1.msra.mxu0 0.0
        %4005 = vmatprep.subr.mxu0 0.0
        %4006 = vmatpush1.msra.mxu0 0.0
        %4007 = vmatprep.subr.mxu0 0.0
        %4008 = vmatpush1.msra.mxu0 0.0
        %4009 = vmatprep.subr.mxu0 0.0
        %4010 = vmatpush1.msra.mxu0 0.0
        %4011 = vmatprep.subr.mxu0 0.0
        %4012 = vmatpush1.msra.mxu0 0.0
        %4013 = vmatprep.subr.mxu0 0.0
        %4014 = vmatpush1.msra.mxu0 0.0
        %4015 = vmatprep.subr.mxu0 0.0
        %4016 = vmatpush1.msra.mxu0 0.0
        %4017 = vmatprep.subr.mxu0 0.0
        %4018 = vmatpush1.msra.mxu0 0.0
        %4019 = vmatprep.subr.mxu0 0.0
        %4020 = vmatpush1.msra.mxu0 0.0
        %4021 = vmatprep.subr.mxu0 0.0
        %4022 = vmatpush1.msra.mxu0 0.0
        %4023 = vmatprep.subr.mxu0 0.0
        %4024 = vmatpush1.msra.mxu0 0.0
        %4025 = vmatprep.subr.mxu0 0.0
        %4026 = vmatpush1.msra.mxu0 0.0
        %4027 = vmatprep.subr.mxu0 0.0
        %4028 = vmatpush1.msra.mxu0 0.0
        %4029 = vmatprep.subr.mxu0 0.0
        %4030 = vmatpush1.msra.mxu0 0.0
        %4031 = vmatprep.subr.mxu0 0.0
        %4032 = vmatpush1.msra.mxu0 0.0
        %4033 = vmatprep.subr.mxu0 0.0
        %4034 = vmatpush1.msra.mxu0 0.0
        %4035 = vmatprep.subr.mxu0 0.0
        %4036 = vmatpush1.msra.mxu0 0.0
        %4037 = vmatprep.subr.mxu0 0.0
        %4038 = vmatpush1.msra.mxu0 0.0
        %4039 = vmatprep.subr.mxu0 0.0
        %4040 = vmatpush1.msra.mxu0 0.0
        %4041 = vmatprep.subr.mxu0 0.0
        %4042 = vmatpush1.msra.mxu0 0.0
        %4043 = vmatprep.subr.mxu0 0.0
        %4044 = vmatpush1.msra.mxu0 0.0
        %4045 = vmatprep.subr.mxu0 0.0
        %4046 = vmatpush1.msra.mxu0 0.0
        %4047 = vmatprep.subr.mxu0 0.0
        %4048 = vmatpush1.msra.mxu0 0.0
        %4049 = vmatprep.subr.mxu0 0.0
        %4050 = vmatpush1.msra.mxu0 0.0
        %4051 = vmatprep.subr.mxu0 0.0
        %4052 = vmatpush1.msra.mxu0 0.0
        %4053 = vmatprep.subr.mxu0 0.0
        %4054 = vmatpush1.msra.mxu0 0.0
        %4055 = vmatprep.subr.mxu0 0.0
        %4056 = vmatpush1.msra.mxu0 0.0
        %4057 = vmatprep.subr.mxu0 0.0
        %4058 = vmatpush1.msra.mxu0 0.0
        %4059 = vmatprep.mubr.f32.mxu0 0.0
        %4060 = vmatmul.mubr.f32.gmra.mrb[0].mxu0 %v3993
        %v4061 = vpop.f32.mrb[0].mxu0
        %v4062 = vadd.f32 0.0, %v4061
        %v4063 = vpop.f32.mrb[0].mxu0
        %4064 = vdwg.mxu0
        %v4065 = vadd.f32 %v3989, %v4062
        %v4066 = vtanh.pop %v4065
        %v4067 = vxor.u32 %v4065, 2147483648
        %v4068 = vmul.f32 %v4067, 1.442695
        %v4069 = vpow.pop %v4068
        %v4070 = vadd.f32 %v4069, 1.0
        %v4071 = vrcp.pop %v4070
        %v4072 = vmul.f32 1.0, %v4071
        %v4073 = vsel %vm262, %v4066, %v4072
        %v4074 = vmul.f32 %v4073, %v3980
        %4076 = vrot.lane.b32.xlu0 %v4073, 64
        %v4077 = vpop.permute.xlu0 %4076
        %v4079 = vmul.f32 %v4073, %v4077
        %4081 = vrot.lane.b32.xlu0 %v4079, 32
        %v4082 = vpop.permute.xlu0 %4081
        %v4084 = vadd.f32 %v4074, %v4082
        %v4085 = vtanh.pop %v4084
        %4087 = vrot.lane.b32.xlu0 %v4085, 64
        %v4088 = vpop.permute.xlu0 %4087
        %v4090 = vmul.f32 %v4073, %v4088
        %s4091 = scalar_lea.vmem %s239, 248
        %v4092 = vld [vmem:[%s4091] sm:$0xff]
        %vm4093 = vcmp.gt.f32.partialorder %v4092, 0.5
        %v4094 = vsel %vm4093, 1, 0
        %4095 = vset.pattern.permute.xlu0 0
        %4096 = vperm.xlu0 %4095, %v4094
        %v4097 = vpop.permute.xlu0 %4096
        %vm4098 = vcmp.eq.s32.totalorder %v4097, 1
        %v4099 = vsel %vm4098, %v4090, %v3979
        %v4100 = vsel %vm4098, %v4084, %v3980
        %v4101 = vsel %vm4098, %v4090, 0.0
        %4103 = vrot.lane.b32.xlu0 %v4101, 32
        %v4104 = vpop.permute.xlu0 %4103
        %s4106 = scalar_lea.vmem %s245, 248
        %4107 = vst.msk [vmem:[%s4106] sm:$0xff] %vm266, %v4104
        %4109 = vrot.lane.b32.xlu0 %v4099, 32
        %v4110 = vpop.permute.xlu0 %4109
        %4112 = vst.msk [vmem:[#allocation2] sm:$0xff] %vm266, %v4110
        %4114 = vrot.lane.b32.xlu0 %v4100, 96
        %v4115 = vpop.permute.xlu0 %4114
        %4117 = vst.msk [vmem:[#allocation3] sm:$0xff] %vm266, %v4115
        %4118 = vst.msk [vmem:[#allocation4] sm:$0xff] %vm266, %v4110
        %4119 = vst.msk [vmem:[#allocation6] sm:$0xff] %vm266, %v4115
        %s4120 = smul.u32 32, %s19
        %p4121 = scmp.lt.s32.totalorder %s4120, 63
        %s4122 = scalar_select %p4121, %s4120, 63
        %s4123 = smul.addr %s4122, 8
        %s4124 = scalar_lea.vmem %s3, %s4123
        // Predicated region
        $region37: #{encoder_forward_arrays.1} parent=31 // pred_check
          %p4125 = pneg %p110
        $region38: #{encoder_forward_arrays.1} parent=31 // pred_check_branch
          %4127 = sbr.rel (%p4125) target = $region40
        $region39: #{encoder_forward_arrays.1} parent=31 // pred_region
          %s4128 = smul.u32 32, %s19
        $region40: #{encoder_forward_arrays.1} parent=31 // pred_fallthru
          _
        // Predicated region
        $region41: #{encoder_forward_arrays.1} parent=31 // pred_check
          %p4129 = pneg %p131
        $region42: #{encoder_forward_arrays.1} parent=31 // pred_check_branch
          %4131 = sbr.rel (%p4129) target = $region44
        $region43: #{encoder_forward_arrays.1} parent=31 // pred_region
          %s4133 = ssub.s32 128, 128
          %4134 = vsyncadd [#allocation5], %s4133
          %s4136 = sshll.u32 [#allocation4], 4
          %s4137 = int_to_ptr.vmem [resolvable:$true] %s4136
          %4139 = dma.vmem_to_hbm [thread:$0]  %s4137, 128, %s4, [#allocation5]
        $region44: #{encoder_forward_arrays.1} parent=31 // pred_fallthru
          _
        // Predicated region
        $region45: #{encoder_forward_arrays.1} parent=31 // pred_check
          %p4140 = pneg %p152
        $region46: #{encoder_forward_arrays.1} parent=31 // pred_check_branch
          %4142 = sbr.rel (%p4140) target = $region48
        $region47: #{encoder_forward_arrays.1} parent=31 // pred_region
          %s4144 = ssub.s32 128, 128
          %4145 = vsyncadd [#allocation7], %s4144
          %s4147 = sshll.u32 [#allocation6], 4
          %s4148 = int_to_ptr.vmem [resolvable:$true] %s4147
          %4150 = dma.vmem_to_hbm [thread:$0]  %s4148, 128, %s5, [#allocation7]
        $region48: #{encoder_forward_arrays.1} parent=31 // pred_fallthru
          _
        // Predicated region
        $region49: #{encoder_forward_arrays.1} parent=31 // pred_check
          %p4151 = pneg %p131
        $region50: #{encoder_forward_arrays.1} parent=31 // pred_check_branch
          %4153 = sbr.rel (%p4151) target = $region52
        $region51: #{encoder_forward_arrays.1} parent=31 // pred_region
          %4154 = dma.done [#allocation5], 128
        $region52: #{encoder_forward_arrays.1} parent=31 // pred_fallthru
          _
        // Predicated region
        $region53: #{encoder_forward_arrays.1} parent=31 // pred_check
          %p4155 = pneg %p152
        $region54: #{encoder_forward_arrays.1} parent=31 // pred_check_branch
          %4157 = sbr.rel (%p4155) target = $region56
        $region55: #{encoder_forward_arrays.1} parent=31 // pred_region
          %4158 = dma.done [#allocation7], 128
        $region56: #{encoder_forward_arrays.1} parent=31 // pred_fallthru
          _
      $region32: #{encoder_forward_arrays.1} parent=5 // pred_fallthru
        _
      %p4159 = scmp.le.s32.totalorder 2, %s14
      // Predicated region
      $region57: #{encoder_forward_arrays.1} parent=5 // pred_check
        %p4160 = pneg %p4159
      $region58: #{encoder_forward_arrays.1} parent=5 // pred_check_branch
        %4162 = sbr.rel (%p4160) target = $region60
      $region59: #{encoder_forward_arrays.1} parent=5 // pred_region
        %s4163 = ssub.s32 %s14, 2
        // Predicated region
        $region61: #{encoder_forward_arrays.1} parent=59 // pred_check
          %p4164 = pneg %p116
        $region62: #{encoder_forward_arrays.1} parent=59 // pred_check_branch
          %4166 = sbr.rel (%p4164) target = $region64
        $region63: #{encoder_forward_arrays.1} parent=59 // pred_region
          %s4167 = smul.u32 32, %s20
          %p4168 = scmp.lt.s32.totalorder %s4167, 63
          %s4169 = scalar_select %p4168, %s4167, 63
          %s4170 = smul.addr %s4169, 8
          %s4171 = scalar_lea.vmem %s3, %s4170
        $region64: #{encoder_forward_arrays.1} parent=59 // pred_fallthru
          _
      $region60: #{encoder_forward_arrays.1} parent=5 // pred_fallthru
        _
    $region6: #{encoder_forward_arrays.1} parent=1 // loop_footer
      %s18 = sadd.s32 1, %s14
    $region7: #{encoder_forward_arrays.1} parent=1 // loop_footer_branch
      %13 = sbr.rel target = $region3
    $region8: #{encoder_forward_arrays.1} parent=1 // loop_exit
      _
    %4172 = vsyncpa [#allocation5], 1
    %s4173 = scalar_lea.sflag [#allocation5], 1
    %4174 = vsyncpa %s4173, 1
    %4175 = vsyncpa [#allocation7], 1

</llo_original>
